<compile_context>
chip_gen: v6e
topology: v6e:2x2x1
jax: 0.10.0
libtpu: 0.0.40
codegen_flags: <defaults>
</compile_context>

<pallas_src>
import math
from functools import partial

import jax
import jax.numpy as jnp
from jax.experimental import pallas as pl
from jax.experimental.pallas import tpu as pltpu

LN_EPS = 1e-12                 # torch.nn.LayerNorm(eps=1e-12)
MXU_DTYPE = jnp.bfloat16       # MXU matmul inputs / stored weights
NEG_INF = -1e30


def _vmem_limit_bytes():
    """Generation-aware scoped-VMEM limit (~75% of physical, capped at 100 MiB)."""
    try:
        cap = int(pltpu.get_tpu_info().vmem_capacity_bytes)
    except Exception:
        cap = 64 * 1024 * 1024
    return max(32 * 1024 * 1024, min(cap * 3 // 4, 100 * 1024 * 1024))


VMEM_LIMIT = _vmem_limit_bytes()


# ----------------------------- in-kernel helpers -----------------------------

def _layernorm(x, g, b):
    mean = jnp.mean(x, axis=-1, keepdims=True)
    cen = x - mean
    var = jnp.mean(cen * cen, axis=-1, keepdims=True)   # biased, like torch LN
    return cen * jax.lax.rsqrt(var + LN_EPS) * g + b


def _mxu(a, w_bf16):
    """bf16 MXU matmul with f32 accumulation (weights already stored in bf16)."""
    return jnp.dot(a.astype(MXU_DTYPE), w_bf16, preferred_element_type=jnp.float32)


def _attn_heads(q_bf, k_bf, v_bf, mask_f, neg_bias, heads, dk):
    """Multi-head masked attention.

    q_bf: (Tq, D) bf16, already scaled by 1/sqrt(dk).
    k_bf, v_bf: (Tk, D) bf16.  mask_f / neg_bias: (Mq, Tk) f32, Mq in {1, Tq}.
    Returns the lane-dense (Tq, D) f32 context with all heads concatenated.
    """
    kT = k_bf.T                               # one relayout for ALL heads (not per head)
    ctxs = []
    for h in range(heads):                    # static, unrolled
        lo = h * dk
        s = jnp.dot(q_bf[:, lo:lo + dk], kT[lo:lo + dk, :],
                    preferred_element_type=jnp.float32) + neg_bias
        m = jnp.max(s, axis=-1, keepdims=True)
        p = jnp.exp(s - m)
        denom = jnp.sum(p, axis=-1, keepdims=True)
        attn = p * pl.reciprocal(denom, approx=True) * mask_f   # EUP recip; post-softmax zeroing
        ctxs.append(jnp.dot(attn.astype(MXU_DTYPE), v_bf[:, lo:lo + dk],
                            preferred_element_type=jnp.float32))
    return jnp.concatenate(ctxs, axis=-1)     # (Tq, D) — feeds ONE K=D output projection


# ------------------------------- fused kernels -------------------------------

def _decoder_layer_kernel(x_ref, tgtm_ref, mem_ref, memm_ref,
                          n1g, n1b, wqkv, bqkv, wo1, bo1,
                          n2g, n2b, wq, bq, wkv, bkv, wo2, bo2,
                          n3g, n3b, w1, b1, w2, b2,
                          o_ref, *, heads, scale):
    """One full DecoderLayer (normalize_before=True, concat_after=False, no adapter)
    for one batch element, activation kept resident in VMEM."""
    x = x_ref[0]                                        # (T, D) f32
    D = x.shape[-1]
    dk = D // heads

    # ---- self-attention: LN -> fused QKV -> MHA -> single out proj -> residual ----
    tgt_mask = tgtm_ref[0].astype(jnp.float32)          # (Mq, T), values {0,1}
    neg_bias = (1.0 - tgt_mask) * NEG_INF               # hoisted: computed once, not per head
    xn = _layernorm(x, n1g[...], n1b[...])
    qkv = _mxu(xn, wqkv[...]) + bqkv[...]               # (T, 3D), one fused QKV matmul
    q_bf = (qkv[:, :D] * scale).astype(MXU_DTYPE)       # softmax scale folded into q once
    k_bf = qkv[:, D:2 * D].astype(MXU_DTYPE)
    v_bf = qkv[:, 2 * D:].astype(MXU_DTYPE)
    ctx = _attn_heads(q_bf, k_bf, v_bf, tgt_mask, neg_bias, heads, dk)
    x = x + _mxu(ctx, wo1[...]) + bo1[...]              # single K=D output projection

    # ---- cross-attention: LN -> Q proj / fused KV proj -> MHA -> out proj -> residual ----
    mem = mem_ref[0]                                    # (S, D) f32
    mem_mask = memm_ref[0].astype(jnp.float32)          # (1, S)
    neg_bias2 = (1.0 - mem_mask) * NEG_INF
    xn = _layernorm(x, n2g[...], n2b[...])
    q_bf = ((_mxu(xn, wq[...]) + bq[...]) * scale).astype(MXU_DTYPE)
    kv = _mxu(mem, wkv[...]) + bkv[...]                 # (S, 2D), one fused KV matmul
    k_bf = kv[:, :D].astype(MXU_DTYPE)
    v_bf = kv[:, D:].astype(MXU_DTYPE)
    ctx = _attn_heads(q_bf, k_bf, v_bf, mem_mask, neg_bias2, heads, dk)
    x = x + _mxu(ctx, wo2[...]) + bo2[...]

    # ---- feed-forward: LN -> Linear -> ReLU -> Linear -> residual ----
    xn = _layernorm(x, n3g[...], n3b[...])
    h1 = jnp.maximum(_mxu(xn, w1[...]) + b1[...], 0.0)  # ReLU in f32
    x = x + _mxu(h1, w2[...]) + b2[...]

    o_ref[0] = x                                        # lane-dense (T, D) store


def _final_kernel(x_ref, g_ref, b_ref, w_ref, bv_ref, pre_ref, out_ref):
    """after_norm -> output_layer; vocab-tiled along grid axis j."""
    xn = _layernorm(x_ref[...], g_ref[...], b_ref[...])
    pre_ref[...] = xn                                   # pre_x (identical across vocab tiles)
    out_ref[...] = _mxu(xn, w_ref[...]) + bv_ref[...]


# ------------------------------- kernel wrappers -------------------------------

def _row_tile(m, cap=1024):
    """Row tile for (M, D) slabs: whole slab when small, else the largest divisor of M
    that is a multiple of 8 and <= cap (falls back to the full slab)."""
    if m <= cap:
        return m
    for bm in range(cap - (cap % 8), 7, -8):
        if m % bm == 0:
            return bm
    return m


def _col_tile(v, cap=2048):
    """Vocab tile for the output projection: full V when small, else the largest divisor
    of V that is a multiple of 128 and <= cap (falls back to full V)."""
    if v <= cap:
        return v
    for bv in range(cap - (cap % 128), 127, -128):
        if v % bv == 0:
            return bv
    return v


def decoder_layer_call(x, tgt_mask_bf, memory, mem_mask_bf, lp, heads):
    """One fused pallas_call for a whole DecoderLayer, grid over the batch."""
    B, T, D = x.shape
    S = memory.shape[1]
    Mq = tgt_mask_bf.shape[1]
    Mm = mem_mask_bf.shape[1]
    U = lp["w1"].shape[1]
    kern = partial(_decoder_layer_kernel, heads=heads,
                   scale=1.0 / math.sqrt(D // heads))

    def full2(shape):
        return pl.BlockSpec(shape, lambda i: (0, 0))

    # TODO(synk): for very long T (or B=1 on 2-TC v7x) add a Tq grid axis / flash-style
    # Tk loop; at decoder-typical T the whole (T, D) working set fits VMEM.
    return pl.pallas_call(
        kern,
        out_shape=jax.ShapeDtypeStruct((B, T, D), jnp.float32),
        grid=(B,),
        in_specs=[
            pl.BlockSpec((1, T, D), lambda i: (i, 0, 0)),     # x
            pl.BlockSpec((1, Mq, T), lambda i: (i, 0, 0)),    # tgt_mask (bf16)
            pl.BlockSpec((1, S, D), lambda i: (i, 0, 0)),     # memory
            pl.BlockSpec((1, Mm, S), lambda i: (i, 0, 0)),    # memory_mask (bf16)
            full2((1, D)), full2((1, D)),                     # norm1
            full2((D, 3 * D)), full2((1, 3 * D)),             # wqkv (bf16), bqkv
            full2((D, D)), full2((1, D)),                     # wo_sa (bf16), bo_sa
            full2((1, D)), full2((1, D)),                     # norm2
            full2((D, D)), full2((1, D)),                     # wq (bf16), bq
            full2((D, 2 * D)), full2((1, 2 * D)),             # wkv (bf16), bkv
            full2((D, D)), full2((1, D)),                     # wo_ca (bf16), bo_ca
            full2((1, D)), full2((1, D)),                     # norm3
            full2((D, U)), full2((1, U)),                     # w1 (bf16), b1
            full2((U, D)), full2((1, D)),                     # w2 (bf16), b2
        ],
        out_specs=pl.BlockSpec((1, T, D), lambda i: (i, 0, 0)),
        compiler_params=pltpu.CompilerParams(
            dimension_semantics=("parallel",), vmem_limit_bytes=VMEM_LIMIT),
    )(x, tgt_mask_bf, memory, mem_mask_bf,
      lp["norm1_g"], lp["norm1_b"], lp["wqkv"], lp["bqkv"], lp["wo_sa"], lp["bo_sa"],
      lp["norm2_g"], lp["norm2_b"], lp["wq"], lp["bq"], lp["wkv"], lp["bkv"],
      lp["wo_ca"], lp["bo_ca"],
      lp["norm3_g"], lp["norm3_b"], lp["w1"], lp["b1"], lp["w2"], lp["b2"])


def final_block(x2d, g, b, w_bf, bv):
    M, D = x2d.shape
    V = w_bf.shape[1]
    bm = _row_tile(M)
    bvt = _col_tile(V)
    return pl.pallas_call(
        _final_kernel,
        out_shape=(jax.ShapeDtypeStruct((M, D), jnp.float32),
                   jax.ShapeDtypeStruct((M, V), jnp.float32)),
        grid=(M // bm, V // bvt),
        in_specs=[
            pl.BlockSpec((bm, D), lambda i, j: (i, 0)),
            pl.BlockSpec((1, D), lambda i, j: (0, 0)),
            pl.BlockSpec((1, D), lambda i, j: (0, 0)),
            pl.BlockSpec((D, bvt), lambda i, j: (0, j)),      # vocab-tiled weight (bf16)
            pl.BlockSpec((1, bvt), lambda i, j: (0, j)),
        ],
        out_specs=(pl.BlockSpec((bm, D), lambda i, j: (i, 0)),   # pre_x (resident over j)
                   pl.BlockSpec((bm, bvt), lambda i, j: (i, j))),
        compiler_params=pltpu.CompilerParams(
            dimension_semantics=("parallel", "arbitrary"),
            vmem_limit_bytes=VMEM_LIMIT),
    )(x2d, g, b, w_bf, bv)


# ------------------------------- model (glue) -------------------------------

def positional_encoding(max_len, d_model):
    pos = jnp.arange(max_len, dtype=jnp.float32)[:, None]
    div = jnp.exp(jnp.arange(0, d_model, 2, dtype=jnp.float32)
                  * -(math.log(10000.0) / d_model))
    pe = jnp.zeros((max_len, d_model), jnp.float32)
    pe = pe.at[:, 0::2].set(jnp.sin(pos * div))
    pe = pe.at[:, 1::2].set(jnp.cos(pos * div))
    return pe


def transformer_decoder_forward(params, tgt, tgt_mask, memory, memory_mask, pe,
                                *, d_model, heads, num_blocks_share=1):
    B, T = tgt.shape
    # embed: Embedding gather + x*sqrt(d_model) + precomputed PositionalEncoding (glue)
    emb = params["embed"][tgt]
    x = emb * math.sqrt(d_model) + pe[:T][None]
    # mask preprocessing once per forward; bf16 is lossless for {0,1} and halves mask DMA
    tgt_mask_bf = tgt_mask.astype(MXU_DTYPE)
    mem_mask_bf = memory_mask.astype(MXU_DTYPE)
    for lp in params["layers"]:
        for _ in range(num_blocks_share):
            x = decoder_layer_call(x, tgt_mask_bf, memory, mem_mask_bf, lp, heads)
    pre2d, out2d = final_block(x.reshape(B * T, d_model),
                               params["after_norm_g"], params["after_norm_b"],
                               params["out_w"], params["out_b"])
    out = out2d.reshape(B, T, -1)
    pre_x = pre2d.reshape(B, T, d_model)
    olens = tgt_mask.sum(1)
    return out, olens, pre_x


# ------------------------------ parameter init ------------------------------

def _init_linear(key, din, dout, scale=0.05):
    kw, kb = jax.random.split(key)
    w = (jax.random.normal(kw, (din, dout)) * scale).astype(jnp.float32)
    b = (jax.random.normal(kb, (1, dout)) * scale).astype(jnp.float32)
    return w, b


def _init_layer(key, d, units):
    ks = jax.random.split(key, 10)
    wq1, bq1 = _init_linear(ks[0], d, d)
    wk1, bk1 = _init_linear(ks[1], d, d)
    wv1, bv1 = _init_linear(ks[2], d, d)
    wo1, bo1 = _init_linear(ks[3], d, d)
    wq2, bq2 = _init_linear(ks[4], d, d)
    wk2, bk2 = _init_linear(ks[5], d, d)
    wv2, bv2 = _init_linear(ks[6], d, d)
    wo2, bo2 = _init_linear(ks[7], d, d)
    w1, b1 = _init_linear(ks[8], d, units)
    w2, b2 = _init_linear(ks[9], units, d)
    ones = jnp.ones((1, d), jnp.float32)
    zeros = jnp.zeros((1, d), jnp.float32)
    return dict(
        norm1_g=ones, norm1_b=zeros,
        norm2_g=ones, norm2_b=zeros,
        norm3_g=ones, norm3_b=zeros,
        # weights stored in bf16 once (half the HBM->VMEM traffic), biases f32
        wqkv=jnp.concatenate([wq1, wk1, wv1], axis=1).astype(MXU_DTYPE),
        bqkv=jnp.concatenate([bq1, bk1, bv1], axis=1),
        wo_sa=wo1.astype(MXU_DTYPE), bo_sa=bo1,
        wq=wq2.astype(MXU_DTYPE), bq=bq2,
        wkv=jnp.concatenate([wk2, wv2], axis=1).astype(MXU_DTYPE),
        bkv=jnp.concatenate([bk2, bv2], axis=1),
        wo_ca=wo2.astype(MXU_DTYPE), bo_ca=bo2,
        w1=w1.astype(MXU_DTYPE), b1=b1,
        w2=w2.astype(MXU_DTYPE), b2=b2,
    )


def _init_transformer_decoder(key, vocab, d, units, num_blocks):
    keys = jax.random.split(key, num_blocks + 2)
    embed = (jax.random.normal(keys[0], (vocab, d)) * 0.1).astype(jnp.float32)
    layers = [_init_layer(keys[1 + i], d, units) for i in range(num_blocks)]
    out_w, out_b = _init_linear(keys[-1], d, vocab)
    return dict(embed=embed, layers=layers,
                after_norm_g=jnp.ones((1, d), jnp.float32),
                after_norm_b=jnp.zeros((1, d), jnp.float32),
                out_w=out_w.astype(MXU_DTYPE), out_b=out_b)


# ---------------------------------- main ----------------------------------

if __name__ == "__main__":
    VOCAB = 64
    D_MODEL = 32
    HEADS = 4
    UNITS = 64
    NUM_BLOCKS = 2
    B, T, S = 2, 8, 12
    MAX_LEN = 64

    root = jax.random.PRNGKey(0)
    k_par, k_mem, k_tok = jax.random.split(root, 3)

    params = _init_transformer_decoder(k_par, VOCAB, D_MODEL, UNITS, NUM_BLOCKS)
    pe = positional_encoding(MAX_LEN, D_MODEL)       # precomputed once, reused

    memory = jax.random.normal(k_mem, (B, S, D_MODEL), jnp.float32)
    memory_mask = jnp.ones((B, 1, S), jnp.float32)
    tgt = jax.random.randint(k_tok, (B, T), 0, VOCAB, dtype=jnp.int32)
    # causal (subsequent) mask, all sequences full-length
    tgt_mask = jnp.tril(jnp.ones((T, T), jnp.float32))[None].repeat(B, axis=0)

    fwd = jax.jit(partial(transformer_decoder_forward,
                          d_model=D_MODEL, heads=HEADS))
    x, olens, pre_x = fwd(params, tgt, tgt_mask, memory, memory_mask, pe)
    jax.block_until_ready((x, olens, pre_x))

    assert x.shape == (B, T, VOCAB)
    assert pre_x.shape == (B, T, D_MODEL)
    assert olens.shape == (B, T)
    assert bool(jnp.all(jnp.isfinite(x)))
    assert bool(jnp.all(jnp.isfinite(pre_x)))
    print("KERNEL_OK")
</pallas_src>

<mosaic_0001>
module attributes {stable_mosaic.version = 11 : i64} {
  func.func @_final_kernel(%arg0: i32, %arg1: i32, %arg2: memref<16x32xf32, #tpu.memory_space<vmem>>, %arg3: memref<1x32xf32, #tpu.memory_space<vmem>>, %arg4: memref<1x32xf32, #tpu.memory_space<vmem>>, %arg5: memref<32x64xbf16, #tpu.memory_space<vmem>>, %arg6: memref<1x64xf32, #tpu.memory_space<vmem>>, %arg7: memref<16x32xf32, #tpu.memory_space<vmem>>, %arg8: memref<16x64xf32, #tpu.memory_space<vmem>>) attributes {dimension_semantics = [#tpu.dimension_semantics<parallel>, #tpu.dimension_semantics<arbitrary>], iteration_bounds = array<i64: 1, 1>, scalar_prefetch = 0 : i64, scratch_operands = 0 : i64, tpu.core_type = #tpu.core_type<tc>, window_params = [{transform_indices = @transform_0, window_bounds = array<i64: 16, 32>}, {pipeline_mode = #tpu.pipeline_mode<synchronous>, transform_indices = @transform_1, window_bounds = array<i64: 1, 32>}, {pipeline_mode = #tpu.pipeline_mode<synchronous>, transform_indices = @transform_2, window_bounds = array<i64: 1, 32>}, {transform_indices = @transform_3, window_bounds = array<i64: 32, 64>}, {transform_indices = @transform_4, window_bounds = array<i64: 1, 64>}, {transform_indices = @transform_5, window_bounds = array<i64: 16, 32>}, {transform_indices = @transform_6, window_bounds = array<i64: 16, 64>}]} {
    %c0 = arith.constant 0 : index
    %c0_0 = arith.constant 0 : index
    %0 = vector.load %arg2[%c0, %c0_0] : memref<16x32xf32, #tpu.memory_space<vmem>>, vector<16x32xf32>
    %c0_1 = arith.constant 0 : index
    %c0_2 = arith.constant 0 : index
    %1 = vector.load %arg3[%c0_1, %c0_2] : memref<1x32xf32, #tpu.memory_space<vmem>>, vector<1x32xf32>
    %c0_3 = arith.constant 0 : index
    %c0_4 = arith.constant 0 : index
    %2 = vector.load %arg4[%c0_3, %c0_4] : memref<1x32xf32, #tpu.memory_space<vmem>>, vector<1x32xf32>
    %cst = arith.constant dense<0.000000e+00> : vector<16xf32>
    %3 = vector.multi_reduction <add>, %0, %cst [1] : vector<16x32xf32> to vector<16xf32>
    %4 = vector.shape_cast %3 : vector<16xf32> to vector<16x1xf32>
    %cst_5 = arith.constant 3.200000e+01 : f32
    %5 = vector.broadcast %cst_5 : f32 to vector<16x1xf32>
    %6 = arith.divf %4, %5 : vector<16x1xf32>
    %7 = vector.broadcast %6 : vector<16x1xf32> to vector<16x32xf32>
    %8 = arith.subf %0, %7 : vector<16x32xf32>
    %9 = arith.mulf %8, %8 : vector<16x32xf32>
    %cst_6 = arith.constant dense<0.000000e+00> : vector<16xf32>
    %10 = vector.multi_reduction <add>, %9, %cst_6 [1] : vector<16x32xf32> to vector<16xf32>
    %11 = vector.shape_cast %10 : vector<16xf32> to vector<16x1xf32>
    %cst_7 = arith.constant 3.200000e+01 : f32
    %12 = vector.broadcast %cst_7 : f32 to vector<16x1xf32>
    %13 = arith.divf %11, %12 : vector<16x1xf32>
    %cst_8 = arith.constant 9.99999996E-13 : f32
    %14 = vector.broadcast %cst_8 : f32 to vector<16x1xf32>
    %15 = arith.addf %13, %14 : vector<16x1xf32>
    %16 = math.rsqrt %15 : vector<16x1xf32>
    %17 = vector.broadcast %16 : vector<16x1xf32> to vector<16x32xf32>
    %18 = arith.mulf %8, %17 : vector<16x32xf32>
    %19 = vector.broadcast %1 : vector<1x32xf32> to vector<16x32xf32>
    %20 = arith.mulf %18, %19 : vector<16x32xf32>
    %21 = vector.broadcast %2 : vector<1x32xf32> to vector<16x32xf32>
    %22 = arith.addf %20, %21 : vector<16x32xf32>
    %c0_9 = arith.constant 0 : index
    %c0_10 = arith.constant 0 : index
    %23 = vector.load %arg7[%c0_9, %c0_10] : memref<16x32xf32, #tpu.memory_space<vmem>>, vector<16x32xf32>
    tpu.vector_store %arg7[%c0_9, %c0_10], %22 {strides = array<i32>} : memref<16x32xf32, #tpu.memory_space<vmem>>, vector<16x32xf32>,
    %c0_11 = arith.constant 0 : index
    %c0_12 = arith.constant 0 : index
    %24 = vector.load %arg5[%c0_11, %c0_12] : memref<32x64xbf16, #tpu.memory_space<vmem>>, vector<32x64xbf16>
    %25 = arith.truncf %22 : vector<16x32xf32> to vector<16x32xbf16>
    %cst_13 = arith.constant dense<0.000000e+00> : vector<16x64xf32>
    %26 = tpu.matmul %25, %24, %cst_13 {dimension_numbers = #tpu.dot_dimension_numbers<[1], [0], [0], [1], [0, 0, 1, 1], [], []>} : vector<16x32xbf16>, vector<32x64xbf16>, vector<16x64xf32> -> vector<16x64xf32>
    %c0_14 = arith.constant 0 : index
    %c0_15 = arith.constant 0 : index
    %27 = vector.load %arg6[%c0_14, %c0_15] : memref<1x64xf32, #tpu.memory_space<vmem>>, vector<1x64xf32>
    %28 = vector.broadcast %27 : vector<1x64xf32> to vector<16x64xf32>
    %29 = arith.addf %26, %28 : vector<16x64xf32>
    %c0_16 = arith.constant 0 : index
    %c0_17 = arith.constant 0 : index
    %30 = vector.load %arg8[%c0_16, %c0_17] : memref<16x64xf32, #tpu.memory_space<vmem>>, vector<16x64xf32>
    tpu.vector_store %arg8[%c0_16, %c0_17], %29 {strides = array<i32>} : memref<16x64xf32, #tpu.memory_space<vmem>>, vector<16x64xf32>,
    return
  }
  func.func @transform_0(%arg0: i32, %arg1: i32) -> (i32, i32) {
    %c0_i32 = arith.constant 0 : i32
    %c0_i32_0 = arith.constant 0 : i32
    return %arg0, %c0_i32 : i32, i32
  }
  func.func @transform_1(%arg0: i32, %arg1: i32) -> (i32, i32) {
    %c0_i32 = arith.constant 0 : i32
    %c0_i32_0 = arith.constant 0 : i32
    %c0_i32_1 = arith.constant 0 : i32
    return %c0_i32, %c0_i32_0 : i32, i32
  }
  func.func @transform_2(%arg0: i32, %arg1: i32) -> (i32, i32) {
    %c0_i32 = arith.constant 0 : i32
    %c0_i32_0 = arith.constant 0 : i32
    %c0_i32_1 = arith.constant 0 : i32
    return %c0_i32, %c0_i32_0 : i32, i32
  }
  func.func @transform_3(%arg0: i32, %arg1: i32) -> (i32, i32) {
    %c0_i32 = arith.constant 0 : i32
    %c0_i32_0 = arith.constant 0 : i32
    return %c0_i32, %arg1 : i32, i32
  }
  func.func @transform_4(%arg0: i32, %arg1: i32) -> (i32, i32) {
    %c0_i32 = arith.constant 0 : i32
    %c0_i32_0 = arith.constant 0 : i32
    return %c0_i32, %arg1 : i32, i32
  }
  func.func @transform_5(%arg0: i32, %arg1: i32) -> (i32, i32) {
    %c0_i32 = arith.constant 0 : i32
    %c0_i32_0 = arith.constant 0 : i32
    return %arg0, %c0_i32 : i32, i32
  }
  func.func @transform_6(%arg0: i32, %arg1: i32) -> (i32, i32) {
    %c0_i32 = arith.constant 0 : i32
    return %arg0, %arg1 : i32, i32
  }
}

module attributes {stable_mosaic.version = 11 : i64} {
  func.func @_decoder_layer_kernel(%arg0: i32, %arg1: memref<1x8x32xf32, #tpu.memory_space<vmem>>, %arg2: memref<1x8x8xbf16, #tpu.memory_space<vmem>>, %arg3: memref<1x12x32xf32, #tpu.memory_space<vmem>>, %arg4: memref<1x1x12xbf16, #tpu.memory_space<vmem>>, %arg5: memref<1x32xf32, #tpu.memory_space<vmem>>, %arg6: memref<1x32xf32, #tpu.memory_space<vmem>>, %arg7: memref<32x96xbf16, #tpu.memory_space<vmem>>, %arg8: memref<1x96xf32, #tpu.memory_space<vmem>>, %arg9: memref<32x32xbf16, #tpu.memory_space<vmem>>, %arg10: memref<1x32xf32, #tpu.memory_space<vmem>>, %arg11: memref<1x32xf32, #tpu.memory_space<vmem>>, %arg12: memref<1x32xf32, #tpu.memory_space<vmem>>, %arg13: memref<32x32xbf16, #tpu.memory_space<vmem>>, %arg14: memref<1x32xf32, #tpu.memory_space<vmem>>, %arg15: memref<32x64xbf16, #tpu.memory_space<vmem>>, %arg16: memref<1x64xf32, #tpu.memory_space<vmem>>, %arg17: memref<32x32xbf16, #tpu.memory_space<vmem>>, %arg18: memref<1x32xf32, #tpu.memory_space<vmem>>, %arg19: memref<1x32xf32, #tpu.memory_space<vmem>>, %arg20: memref<1x32xf32, #tpu.memory_space<vmem>>, %arg21: memref<32x64xbf16, #tpu.memory_space<vmem>>, %arg22: memref<1x64xf32, #tpu.memory_space<vmem>>, %arg23: memref<64x32xbf16, #tpu.memory_space<vmem>>, %arg24: memref<1x32xf32, #tpu.memory_space<vmem>>, %arg25: memref<1x8x32xf32, #tpu.memory_space<vmem>>) attributes {dimension_semantics = [#tpu.dimension_semantics<parallel>], iteration_bounds = array<i64: 2>, scalar_prefetch = 0 : i64, scratch_operands = 0 : i64, tpu.core_type = #tpu.core_type<tc>, window_params = [{transform_indices = @transform_0, window_bounds = array<i64: 1, 8, 32>}, {transform_indices = @transform_1, window_bounds = array<i64: 1, 8, 8>}, {transform_indices = @transform_2, window_bounds = array<i64: 1, 12, 32>}, {transform_indices = @transform_3, window_bounds = array<i64: 1, 1, 12>}, {pipeline_mode = #tpu.pipeline_mode<synchronous>, transform_indices = @transform_4, window_bounds = array<i64: 1, 32>}, {pipeline_mode = #tpu.pipeline_mode<synchronous>, transform_indices = @transform_5, window_bounds = array<i64: 1, 32>}, {pipeline_mode = #tpu.pipeline_mode<synchronous>, transform_indices = @transform_6, window_bounds = array<i64: 32, 96>}, {pipeline_mode = #tpu.pipeline_mode<synchronous>, transform_indices = @transform_7, window_bounds = array<i64: 1, 96>}, {pipeline_mode = #tpu.pipeline_mode<synchronous>, transform_indices = @transform_8, window_bounds = array<i64: 32, 32>}, {pipeline_mode = #tpu.pipeline_mode<synchronous>, transform_indices = @transform_9, window_bounds = array<i64: 1, 32>}, {pipeline_mode = #tpu.pipeline_mode<synchronous>, transform_indices = @transform_10, window_bounds = array<i64: 1, 32>}, {pipeline_mode = #tpu.pipeline_mode<synchronous>, transform_indices = @transform_11, window_bounds = array<i64: 1, 32>}, {pipeline_mode = #tpu.pipeline_mode<synchronous>, transform_indices = @transform_12, window_bounds = array<i64: 32, 32>}, {pipeline_mode = #tpu.pipeline_mode<synchronous>, transform_indices = @transform_13, window_bounds = array<i64: 1, 32>}, {pipeline_mode = #tpu.pipeline_mode<synchronous>, transform_indices = @transform_14, window_bounds = array<i64: 32, 64>}, {pipeline_mode = #tpu.pipeline_mode<synchronous>, transform_indices = @transform_15, window_bounds = array<i64: 1, 64>}, {pipeline_mode = #tpu.pipeline_mode<synchronous>, transform_indices = @transform_16, window_bounds = array<i64: 32, 32>}, {pipeline_mode = #tpu.pipeline_mode<synchronous>, transform_indices = @transform_17, window_bounds = array<i64: 1, 32>}, {pipeline_mode = #tpu.pipeline_mode<synchronous>, transform_indices = @transform_18, window_bounds = array<i64: 1, 32>}, {pipeline_mode = #tpu.pipeline_mode<synchronous>, transform_indices = @transform_19, window_bounds = array<i64: 1, 32>}, {pipeline_mode = #tpu.pipeline_mode<synchronous>, transform_indices = @transform_20, window_bounds = array<i64: 32, 64>}, {pipeline_mode = #tpu.pipeline_mode<synchronous>, transform_indices = @transform_21, window_bounds = array<i64: 1, 64>}, {pipeline_mode = #tpu.pipeline_mode<synchronous>, transform_indices = @transform_22, window_bounds = array<i64: 64, 32>}, {pipeline_mode = #tpu.pipeline_mode<synchronous>, transform_indices = @transform_23, window_bounds = array<i64: 1, 32>}, {transform_indices = @transform_24, window_bounds = array<i64: 1, 8, 32>}]} {
    %c0 = arith.constant 0 : index
    %c0_0 = arith.constant 0 : index
    %c0_1 = arith.constant 0 : index
    %0 = vector.load %arg1[%c0, %c0_0, %c0_1] : memref<1x8x32xf32, #tpu.memory_space<vmem>>, vector<1x8x32xf32>
    %1 = vector.shape_cast %0 : vector<1x8x32xf32> to vector<8x32xf32>
    %c0_2 = arith.constant 0 : index
    %c0_3 = arith.constant 0 : index
    %c0_4 = arith.constant 0 : index
    %2 = vector.load %arg2[%c0_2, %c0_3, %c0_4] : memref<1x8x8xbf16, #tpu.memory_space<vmem>>, vector<1x8x8xbf16>
    %3 = vector.shape_cast %2 : vector<1x8x8xbf16> to vector<8x8xbf16>
    %4 = arith.extf %3 : vector<8x8xbf16> to vector<8x8xf32>
    %cst = arith.constant 1.000000e+00 : f32
    %5 = vector.broadcast %cst : f32 to vector<8x8xf32>
    %6 = arith.subf %5, %4 : vector<8x8xf32>
    %cst_5 = arith.constant -1.000000e+30 : f32
    %7 = vector.broadcast %cst_5 : f32 to vector<8x8xf32>
    %8 = arith.mulf %6, %7 : vector<8x8xf32>
    %c0_6 = arith.constant 0 : index
    %c0_7 = arith.constant 0 : index
    %9 = vector.load %arg5[%c0_6, %c0_7] : memref<1x32xf32, #tpu.memory_space<vmem>>, vector<1x32xf32>
    %c0_8 = arith.constant 0 : index
    %c0_9 = arith.constant 0 : index
    %10 = vector.load %arg6[%c0_8, %c0_9] : memref<1x32xf32, #tpu.memory_space<vmem>>, vector<1x32xf32>
    %cst_10 = arith.constant dense<0.000000e+00> : vector<8xf32>
    %11 = vector.multi_reduction <add>, %1, %cst_10 [1] : vector<8x32xf32> to vector<8xf32>
    %12 = vector.shape_cast %11 : vector<8xf32> to vector<8x1xf32>
    %cst_11 = arith.constant 3.200000e+01 : f32
    %13 = vector.broadcast %cst_11 : f32 to vector<8x1xf32>
    %14 = arith.divf %12, %13 : vector<8x1xf32>
    %15 = vector.broadcast %14 : vector<8x1xf32> to vector<8x32xf32>
    %16 = arith.subf %1, %15 : vector<8x32xf32>
    %17 = arith.mulf %16, %16 : vector<8x32xf32>
    %cst_12 = arith.constant dense<0.000000e+00> : vector<8xf32>
    %18 = vector.multi_reduction <add>, %17, %cst_12 [1] : vector<8x32xf32> to vector<8xf32>
    %19 = vector.shape_cast %18 : vector<8xf32> to vector<8x1xf32>
    %cst_13 = arith.constant 3.200000e+01 : f32
    %20 = vector.broadcast %cst_13 : f32 to vector<8x1xf32>
    %21 = arith.divf %19, %20 : vector<8x1xf32>
    %cst_14 = arith.constant 9.99999996E-13 : f32
    %22 = vector.broadcast %cst_14 : f32 to vector<8x1xf32>
    %23 = arith.addf %21, %22 : vector<8x1xf32>
    %24 = math.rsqrt %23 : vector<8x1xf32>
    %25 = vector.broadcast %24 : vector<8x1xf32> to vector<8x32xf32>
    %26 = arith.mulf %16, %25 : vector<8x32xf32>
    %27 = vector.broadcast %9 : vector<1x32xf32> to vector<8x32xf32>
    %28 = arith.mulf %26, %27 : vector<8x32xf32>
    %29 = vector.broadcast %10 : vector<1x32xf32> to vector<8x32xf32>
    %30 = arith.addf %28, %29 : vector<8x32xf32>
    %c0_15 = arith.constant 0 : index
    %c0_16 = arith.constant 0 : index
    %31 = vector.load %arg7[%c0_15, %c0_16] : memref<32x96xbf16, #tpu.memory_space<vmem>>, vector<32x96xbf16>
    %32 = arith.truncf %30 : vector<8x32xf32> to vector<8x32xbf16>
    %cst_17 = arith.constant dense<0.000000e+00> : vector<8x96xf32>
    %33 = tpu.matmul %32, %31, %cst_17 {dimension_numbers = #tpu.dot_dimension_numbers<[1], [0], [0], [1], [0, 0, 1, 1], [], []>} : vector<8x32xbf16>, vector<32x96xbf16>, vector<8x96xf32> -> vector<8x96xf32>
    %c0_18 = arith.constant 0 : index
    %c0_19 = arith.constant 0 : index
    %34 = vector.load %arg8[%c0_18, %c0_19] : memref<1x96xf32, #tpu.memory_space<vmem>>, vector<1x96xf32>
    %35 = vector.broadcast %34 : vector<1x96xf32> to vector<8x96xf32>
    %36 = arith.addf %33, %35 : vector<8x96xf32>
    %37 = vector.extract_strided_slice %36 {offsets = [0, 0], sizes = [8, 32], strides = [1, 1]} : vector<8x96xf32> to vector<8x32xf32>
    %cst_20 = arith.constant 0.353553385 : f32
    %38 = vector.broadcast %cst_20 : f32 to vector<8x32xf32>
    %39 = arith.mulf %37, %38 : vector<8x32xf32>
    %40 = arith.truncf %39 : vector<8x32xf32> to vector<8x32xbf16>
    %41 = vector.extract_strided_slice %36 {offsets = [0, 32], sizes = [8, 32], strides = [1, 1]} : vector<8x96xf32> to vector<8x32xf32>
    %42 = arith.truncf %41 : vector<8x32xf32> to vector<8x32xbf16>
    %43 = vector.extract_strided_slice %36 {offsets = [0, 64], sizes = [8, 32], strides = [1, 1]} : vector<8x96xf32> to vector<8x32xf32>
    %44 = arith.truncf %43 : vector<8x32xf32> to vector<8x32xbf16>
    %45 = tpu.transpose %42, [1, 0] : vector<8x32xbf16> -> vector<32x8xbf16>
    %46 = vector.extract_strided_slice %40 {offsets = [0, 0], sizes = [8, 8], strides = [1, 1]} : vector<8x32xbf16> to vector<8x8xbf16>
    %47 = vector.extract_strided_slice %45 {offsets = [0, 0], sizes = [8, 8], strides = [1, 1]} : vector<32x8xbf16> to vector<8x8xbf16>
    %cst_21 = arith.constant dense<0.000000e+00> : vector<8x8xf32>
    %48 = tpu.matmul %46, %47, %cst_21 {dimension_numbers = #tpu.dot_dimension_numbers<[1], [0], [0], [1], [0, 0, 1, 1], [], []>} : vector<8x8xbf16>, vector<8x8xbf16>, vector<8x8xf32> -> vector<8x8xf32>
    %49 = arith.addf %48, %8 : vector<8x8xf32>
    %cst_22 = arith.constant dense<0xFF800000> : vector<8xf32>
    %50 = vector.multi_reduction <maximumf>, %49, %cst_22 [1] : vector<8x8xf32> to vector<8xf32>
    %51 = vector.shape_cast %50 : vector<8xf32> to vector<8x1xf32>
    %52 = vector.broadcast %51 : vector<8x1xf32> to vector<8x8xf32>
    %53 = arith.subf %49, %52 : vector<8x8xf32>
    %54 = math.exp %53 : vector<8x8xf32>
    %cst_23 = arith.constant dense<0.000000e+00> : vector<8xf32>
    %55 = vector.multi_reduction <add>, %54, %cst_23 [1] : vector<8x8xf32> to vector<8xf32>
    %56 = vector.shape_cast %55 : vector<8xf32> to vector<8x1xf32>
    %57 = tpu.reciprocal %56 {approx = true} : vector<8x1xf32> -> vector<8x1xf32>
    %58 = vector.broadcast %57 : vector<8x1xf32> to vector<8x8xf32>
    %59 = arith.mulf %54, %58 : vector<8x8xf32>
    %60 = arith.mulf %59, %4 : vector<8x8xf32>
    %61 = arith.truncf %60 : vector<8x8xf32> to vector<8x8xbf16>
    %62 = vector.extract_strided_slice %44 {offsets = [0, 0], sizes = [8, 8], strides = [1, 1]} : vector<8x32xbf16> to vector<8x8xbf16>
    %cst_24 = arith.constant dense<0.000000e+00> : vector<8x8xf32>
    %63 = tpu.matmul %61, %62, %cst_24 {dimension_numbers = #tpu.dot_dimension_numbers<[1], [0], [0], [1], [0, 0, 1, 1], [], []>} : vector<8x8xbf16>, vector<8x8xbf16>, vector<8x8xf32> -> vector<8x8xf32>
    %64 = vector.extract_strided_slice %40 {offsets = [0, 8], sizes = [8, 8], strides = [1, 1]} : vector<8x32xbf16> to vector<8x8xbf16>
    %65 = vector.extract_strided_slice %45 {offsets = [8, 0], sizes = [8, 8], strides = [1, 1]} : vector<32x8xbf16> to vector<8x8xbf16>
    %cst_25 = arith.constant dense<0.000000e+00> : vector<8x8xf32>
    %66 = tpu.matmul %64, %65, %cst_25 {dimension_numbers = #tpu.dot_dimension_numbers<[1], [0], [0], [1], [0, 0, 1, 1], [], []>} : vector<8x8xbf16>, vector<8x8xbf16>, vector<8x8xf32> -> vector<8x8xf32>
    %67 = arith.addf %66, %8 : vector<8x8xf32>
    %cst_26 = arith.constant dense<0xFF800000> : vector<8xf32>
    %68 = vector.multi_reduction <maximumf>, %67, %cst_26 [1] : vector<8x8xf32> to vector<8xf32>
    %69 = vector.shape_cast %68 : vector<8xf32> to vector<8x1xf32>
    %70 = vector.broadcast %69 : vector<8x1xf32> to vector<8x8xf32>
    %71 = arith.subf %67, %70 : vector<8x8xf32>
    %72 = math.exp %71 : vector<8x8xf32>
    %cst_27 = arith.constant dense<0.000000e+00> : vector<8xf32>
    %73 = vector.multi_reduction <add>, %72, %cst_27 [1] : vector<8x8xf32> to vector<8xf32>
    %74 = vector.shape_cast %73 : vector<8xf32> to vector<8x1xf32>
    %75 = tpu.reciprocal %74 {approx = true} : vector<8x1xf32> -> vector<8x1xf32>
    %76 = vector.broadcast %75 : vector<8x1xf32> to vector<8x8xf32>
    %77 = arith.mulf %72, %76 : vector<8x8xf32>
    %78 = arith.mulf %77, %4 : vector<8x8xf32>
    %79 = arith.truncf %78 : vector<8x8xf32> to vector<8x8xbf16>
    %80 = vector.extract_strided_slice %44 {offsets = [0, 8], sizes = [8, 8], strides = [1, 1]} : vector<8x32xbf16> to vector<8x8xbf16>
    %cst_28 = arith.constant dense<0.000000e+00> : vector<8x8xf32>
    %81 = tpu.matmul %79, %80, %cst_28 {dimension_numbers = #tpu.dot_dimension_numbers<[1], [0], [0], [1], [0, 0, 1, 1], [], []>} : vector<8x8xbf16>, vector<8x8xbf16>, vector<8x8xf32> -> vector<8x8xf32>
    %82 = vector.extract_strided_slice %40 {offsets = [0, 16], sizes = [8, 8], strides = [1, 1]} : vector<8x32xbf16> to vector<8x8xbf16>
    %83 = vector.extract_strided_slice %45 {offsets = [16, 0], sizes = [8, 8], strides = [1, 1]} : vector<32x8xbf16> to vector<8x8xbf16>
    %cst_29 = arith.constant dense<0.000000e+00> : vector<8x8xf32>
    %84 = tpu.matmul %82, %83, %cst_29 {dimension_numbers = #tpu.dot_dimension_numbers<[1], [0], [0], [1], [0, 0, 1, 1], [], []>} : vector<8x8xbf16>, vector<8x8xbf16>, vector<8x8xf32> -> vector<8x8xf32>
    %85 = arith.addf %84, %8 : vector<8x8xf32>
    %cst_30 = arith.constant dense<0xFF800000> : vector<8xf32>
    %86 = vector.multi_reduction <maximumf>, %85, %cst_30 [1] : vector<8x8xf32> to vector<8xf32>
    %87 = vector.shape_cast %86 : vector<8xf32> to vector<8x1xf32>
    %88 = vector.broadcast %87 : vector<8x1xf32> to vector<8x8xf32>
    %89 = arith.subf %85, %88 : vector<8x8xf32>
    %90 = math.exp %89 : vector<8x8xf32>
    %cst_31 = arith.constant dense<0.000000e+00> : vector<8xf32>
    %91 = vector.multi_reduction <add>, %90, %cst_31 [1] : vector<8x8xf32> to vector<8xf32>
    %92 = vector.shape_cast %91 : vector<8xf32> to vector<8x1xf32>
    %93 = tpu.reciprocal %92 {approx = true} : vector<8x1xf32> -> vector<8x1xf32>
    %94 = vector.broadcast %93 : vector<8x1xf32> to vector<8x8xf32>
    %95 = arith.mulf %90, %94 : vector<8x8xf32>
    %96 = arith.mulf %95, %4 : vector<8x8xf32>
    %97 = arith.truncf %96 : vector<8x8xf32> to vector<8x8xbf16>
    %98 = vector.extract_strided_slice %44 {offsets = [0, 16], sizes = [8, 8], strides = [1, 1]} : vector<8x32xbf16> to vector<8x8xbf16>
    %cst_32 = arith.constant dense<0.000000e+00> : vector<8x8xf32>
    %99 = tpu.matmul %97, %98, %cst_32 {dimension_numbers = #tpu.dot_dimension_numbers<[1], [0], [0], [1], [0, 0, 1, 1], [], []>} : vector<8x8xbf16>, vector<8x8xbf16>, vector<8x8xf32> -> vector<8x8xf32>
    %100 = vector.extract_strided_slice %40 {offsets = [0, 24], sizes = [8, 8], strides = [1, 1]} : vector<8x32xbf16> to vector<8x8xbf16>
    %101 = vector.extract_strided_slice %45 {offsets = [24, 0], sizes = [8, 8], strides = [1, 1]} : vector<32x8xbf16> to vector<8x8xbf16>
    %cst_33 = arith.constant dense<0.000000e+00> : vector<8x8xf32>
    %102 = tpu.matmul %100, %101, %cst_33 {dimension_numbers = #tpu.dot_dimension_numbers<[1], [0], [0], [1], [0, 0, 1, 1], [], []>} : vector<8x8xbf16>, vector<8x8xbf16>, vector<8x8xf32> -> vector<8x8xf32>
    %103 = arith.addf %102, %8 : vector<8x8xf32>
    %cst_34 = arith.constant dense<0xFF800000> : vector<8xf32>
    %104 = vector.multi_reduction <maximumf>, %103, %cst_34 [1] : vector<8x8xf32> to vector<8xf32>
    %105 = vector.shape_cast %104 : vector<8xf32> to vector<8x1xf32>
    %106 = vector.broadcast %105 : vector<8x1xf32> to vector<8x8xf32>
    %107 = arith.subf %103, %106 : vector<8x8xf32>
    %108 = math.exp %107 : vector<8x8xf32>
    %cst_35 = arith.constant dense<0.000000e+00> : vector<8xf32>
    %109 = vector.multi_reduction <add>, %108, %cst_35 [1] : vector<8x8xf32> to vector<8xf32>
    %110 = vector.shape_cast %109 : vector<8xf32> to vector<8x1xf32>
    %111 = tpu.reciprocal %110 {approx = true} : vector<8x1xf32> -> vector<8x1xf32>
    %112 = vector.broadcast %111 : vector<8x1xf32> to vector<8x8xf32>
    %113 = arith.mulf %108, %112 : vector<8x8xf32>
    %114 = arith.mulf %113, %4 : vector<8x8xf32>
    %115 = arith.truncf %114 : vector<8x8xf32> to vector<8x8xbf16>
    %116 = vector.extract_strided_slice %44 {offsets = [0, 24], sizes = [8, 8], strides = [1, 1]} : vector<8x32xbf16> to vector<8x8xbf16>
    %cst_36 = arith.constant dense<0.000000e+00> : vector<8x8xf32>
    %117 = tpu.matmul %115, %116, %cst_36 {dimension_numbers = #tpu.dot_dimension_numbers<[1], [0], [0], [1], [0, 0, 1, 1], [], []>} : vector<8x8xbf16>, vector<8x8xbf16>, vector<8x8xf32> -> vector<8x8xf32>
    %118 = tpu.concatenate %63, %81, %99, %117 in 1 : vector<8x8xf32>, vector<8x8xf32>, vector<8x8xf32>, vector<8x8xf32> -> vector<8x32xf32>
    %c0_37 = arith.constant 0 : index
    %c0_38 = arith.constant 0 : index
    %119 = vector.load %arg9[%c0_37, %c0_38] : memref<32x32xbf16, #tpu.memory_space<vmem>>, vector<32x32xbf16>
    %120 = arith.truncf %118 : vector<8x32xf32> to vector<8x32xbf16>
    %cst_39 = arith.constant dense<0.000000e+00> : vector<8x32xf32>
    %121 = tpu.matmul %120, %119, %cst_39 {dimension_numbers = #tpu.dot_dimension_numbers<[1], [0], [0], [1], [0, 0, 1, 1], [], []>} : vector<8x32xbf16>, vector<32x32xbf16>, vector<8x32xf32> -> vector<8x32xf32>
    %122 = arith.addf %1, %121 : vector<8x32xf32>
    %c0_40 = arith.constant 0 : index
    %c0_41 = arith.constant 0 : index
    %123 = vector.load %arg10[%c0_40, %c0_41] : memref<1x32xf32, #tpu.memory_space<vmem>>, vector<1x32xf32>
    %124 = vector.broadcast %123 : vector<1x32xf32> to vector<8x32xf32>
    %125 = arith.addf %122, %124 : vector<8x32xf32>
    %c0_42 = arith.constant 0 : index
    %c0_43 = arith.constant 0 : index
    %c0_44 = arith.constant 0 : index
    %126 = vector.load %arg3[%c0_42, %c0_43, %c0_44] : memref<1x12x32xf32, #tpu.memory_space<vmem>>, vector<1x12x32xf32>
    %127 = vector.shape_cast %126 : vector<1x12x32xf32> to vector<12x32xf32>
    %c0_45 = arith.constant 0 : index
    %c0_46 = arith.constant 0 : index
    %c0_47 = arith.constant 0 : index
    %128 = vector.load %arg4[%c0_45, %c0_46, %c0_47] : memref<1x1x12xbf16, #tpu.memory_space<vmem>>, vector<1x1x12xbf16>
    %129 = vector.shape_cast %128 : vector<1x1x12xbf16> to vector<1x12xbf16>
    %130 = arith.extf %129 : vector<1x12xbf16> to vector<1x12xf32>
    %cst_48 = arith.constant 1.000000e+00 : f32
    %131 = vector.broadcast %cst_48 : f32 to vector<1x12xf32>
    %132 = arith.subf %131, %130 : vector<1x12xf32>
    %cst_49 = arith.constant -1.000000e+30 : f32
    %133 = vector.broadcast %cst_49 : f32 to vector<1x12xf32>
    %134 = arith.mulf %132, %133 : vector<1x12xf32>
    %c0_50 = arith.constant 0 : index
    %c0_51 = arith.constant 0 : index
    %135 = vector.load %arg11[%c0_50, %c0_51] : memref<1x32xf32, #tpu.memory_space<vmem>>, vector<1x32xf32>
    %c0_52 = arith.constant 0 : index
    %c0_53 = arith.constant 0 : index
    %136 = vector.load %arg12[%c0_52, %c0_53] : memref<1x32xf32, #tpu.memory_space<vmem>>, vector<1x32xf32>
    %cst_54 = arith.constant dense<0.000000e+00> : vector<8xf32>
    %137 = vector.multi_reduction <add>, %125, %cst_54 [1] : vector<8x32xf32> to vector<8xf32>
    %138 = vector.shape_cast %137 : vector<8xf32> to vector<8x1xf32>
    %cst_55 = arith.constant 3.200000e+01 : f32
    %139 = vector.broadcast %cst_55 : f32 to vector<8x1xf32>
    %140 = arith.divf %138, %139 : vector<8x1xf32>
    %141 = vector.broadcast %140 : vector<8x1xf32> to vector<8x32xf32>
    %142 = arith.subf %125, %141 : vector<8x32xf32>
    %143 = arith.mulf %142, %142 : vector<8x32xf32>
    %cst_56 = arith.constant dense<0.000000e+00> : vector<8xf32>
    %144 = vector.multi_reduction <add>, %143, %cst_56 [1] : vector<8x32xf32> to vector<8xf32>
    %145 = vector.shape_cast %144 : vector<8xf32> to vector<8x1xf32>
    %cst_57 = arith.constant 3.200000e+01 : f32
    %146 = vector.broadcast %cst_57 : f32 to vector<8x1xf32>
    %147 = arith.divf %145, %146 : vector<8x1xf32>
    %cst_58 = arith.constant 9.99999996E-13 : f32
    %148 = vector.broadcast %cst_58 : f32 to vector<8x1xf32>
    %149 = arith.addf %147, %148 : vector<8x1xf32>
    %150 = math.rsqrt %149 : vector<8x1xf32>
    %151 = vector.broadcast %150 : vector<8x1xf32> to vector<8x32xf32>
    %152 = arith.mulf %142, %151 : vector<8x32xf32>
    %153 = vector.broadcast %135 : vector<1x32xf32> to vector<8x32xf32>
    %154 = arith.mulf %152, %153 : vector<8x32xf32>
    %155 = vector.broadcast %136 : vector<1x32xf32> to vector<8x32xf32>
    %156 = arith.addf %154, %155 : vector<8x32xf32>
    %c0_59 = arith.constant 0 : index
    %c0_60 = arith.constant 0 : index
    %157 = vector.load %arg13[%c0_59, %c0_60] : memref<32x32xbf16, #tpu.memory_space<vmem>>, vector<32x32xbf16>
    %158 = arith.truncf %156 : vector<8x32xf32> to vector<8x32xbf16>
    %cst_61 = arith.constant dense<0.000000e+00> : vector<8x32xf32>
    %159 = tpu.matmul %158, %157, %cst_61 {dimension_numbers = #tpu.dot_dimension_numbers<[1], [0], [0], [1], [0, 0, 1, 1], [], []>} : vector<8x32xbf16>, vector<32x32xbf16>, vector<8x32xf32> -> vector<8x32xf32>
    %c0_62 = arith.constant 0 : index
    %c0_63 = arith.constant 0 : index
    %160 = vector.load %arg14[%c0_62, %c0_63] : memref<1x32xf32, #tpu.memory_space<vmem>>, vector<1x32xf32>
    %161 = vector.broadcast %160 : vector<1x32xf32> to vector<8x32xf32>
    %162 = arith.addf %159, %161 : vector<8x32xf32>
    %cst_64 = arith.constant 0.353553385 : f32
    %163 = vector.broadcast %cst_64 : f32 to vector<8x32xf32>
    %164 = arith.mulf %162, %163 : vector<8x32xf32>
    %165 = arith.truncf %164 : vector<8x32xf32> to vector<8x32xbf16>
    %c0_65 = arith.constant 0 : index
    %c0_66 = arith.constant 0 : index
    %166 = vector.load %arg15[%c0_65, %c0_66] : memref<32x64xbf16, #tpu.memory_space<vmem>>, vector<32x64xbf16>
    %167 = arith.truncf %127 : vector<12x32xf32> to vector<12x32xbf16>
    %cst_67 = arith.constant dense<0.000000e+00> : vector<12x64xf32>
    %168 = tpu.matmul %167, %166, %cst_67 {dimension_numbers = #tpu.dot_dimension_numbers<[1], [0], [0], [1], [0, 0, 1, 1], [], []>} : vector<12x32xbf16>, vector<32x64xbf16>, vector<12x64xf32> -> vector<12x64xf32>
    %c0_68 = arith.constant 0 : index
    %c0_69 = arith.constant 0 : index
    %169 = vector.load %arg16[%c0_68, %c0_69] : memref<1x64xf32, #tpu.memory_space<vmem>>, vector<1x64xf32>
    %170 = vector.broadcast %169 : vector<1x64xf32> to vector<12x64xf32>
    %171 = arith.addf %168, %170 : vector<12x64xf32>
    %172 = vector.extract_strided_slice %171 {offsets = [0, 0], sizes = [12, 32], strides = [1, 1]} : vector<12x64xf32> to vector<12x32xf32>
    %173 = arith.truncf %172 : vector<12x32xf32> to vector<12x32xbf16>
    %174 = vector.extract_strided_slice %171 {offsets = [0, 32], sizes = [12, 32], strides = [1, 1]} : vector<12x64xf32> to vector<12x32xf32>
    %175 = arith.truncf %174 : vector<12x32xf32> to vector<12x32xbf16>
    %176 = tpu.transpose %173, [1, 0] : vector<12x32xbf16> -> vector<32x12xbf16>
    %177 = vector.extract_strided_slice %165 {offsets = [0, 0], sizes = [8, 8], strides = [1, 1]} : vector<8x32xbf16> to vector<8x8xbf16>
    %178 = vector.extract_strided_slice %176 {offsets = [0, 0], sizes = [8, 12], strides = [1, 1]} : vector<32x12xbf16> to vector<8x12xbf16>
    %cst_70 = arith.constant dense<0.000000e+00> : vector<8x12xf32>
    %179 = tpu.matmul %177, %178, %cst_70 {dimension_numbers = #tpu.dot_dimension_numbers<[1], [0], [0], [1], [0, 0, 1, 1], [], []>} : vector<8x8xbf16>, vector<8x12xbf16>, vector<8x12xf32> -> vector<8x12xf32>
    %180 = vector.broadcast %134 : vector<1x12xf32> to vector<8x12xf32>
    %181 = arith.addf %179, %180 : vector<8x12xf32>
    %cst_71 = arith.constant dense<0xFF800000> : vector<8xf32>
    %182 = vector.multi_reduction <maximumf>, %181, %cst_71 [1] : vector<8x12xf32> to vector<8xf32>
    %183 = vector.shape_cast %182 : vector<8xf32> to vector<8x1xf32>
    %184 = vector.broadcast %183 : vector<8x1xf32> to vector<8x12xf32>
    %185 = arith.subf %181, %184 : vector<8x12xf32>
    %186 = math.exp %185 : vector<8x12xf32>
    %cst_72 = arith.constant dense<0.000000e+00> : vector<8xf32>
    %187 = vector.multi_reduction <add>, %186, %cst_72 [1] : vector<8x12xf32> to vector<8xf32>
    %188 = vector.shape_cast %187 : vector<8xf32> to vector<8x1xf32>
    %189 = tpu.reciprocal %188 {approx = true} : vector<8x1xf32> -> vector<8x1xf32>
    %190 = vector.broadcast %189 : vector<8x1xf32> to vector<8x12xf32>
    %191 = arith.mulf %186, %190 : vector<8x12xf32>
    %192 = vector.broadcast %130 : vector<1x12xf32> to vector<8x12xf32>
    %193 = arith.mulf %191, %192 : vector<8x12xf32>
    %194 = arith.truncf %193 : vector<8x12xf32> to vector<8x12xbf16>
    %195 = vector.extract_strided_slice %175 {offsets = [0, 0], sizes = [12, 8], strides = [1, 1]} : vector<12x32xbf16> to vector<12x8xbf16>
    %cst_73 = arith.constant dense<0.000000e+00> : vector<8x8xf32>
    %196 = tpu.matmul %194, %195, %cst_73 {dimension_numbers = #tpu.dot_dimension_numbers<[1], [0], [0], [1], [0, 0, 1, 1], [], []>} : vector<8x12xbf16>, vector<12x8xbf16>, vector<8x8xf32> -> vector<8x8xf32>
    %197 = vector.extract_strided_slice %165 {offsets = [0, 8], sizes = [8, 8], strides = [1, 1]} : vector<8x32xbf16> to vector<8x8xbf16>
    %198 = vector.extract_strided_slice %176 {offsets = [8, 0], sizes = [8, 12], strides = [1, 1]} : vector<32x12xbf16> to vector<8x12xbf16>
    %cst_74 = arith.constant dense<0.000000e+00> : vector<8x12xf32>
    %199 = tpu.matmul %197, %198, %cst_74 {dimension_numbers = #tpu.dot_dimension_numbers<[1], [0], [0], [1], [0, 0, 1, 1], [], []>} : vector<8x8xbf16>, vector<8x12xbf16>, vector<8x12xf32> -> vector<8x12xf32>
    %200 = vector.broadcast %134 : vector<1x12xf32> to vector<8x12xf32>
    %201 = arith.addf %199, %200 : vector<8x12xf32>
    %cst_75 = arith.constant dense<0xFF800000> : vector<8xf32>
    %202 = vector.multi_reduction <maximumf>, %201, %cst_75 [1] : vector<8x12xf32> to vector<8xf32>
    %203 = vector.shape_cast %202 : vector<8xf32> to vector<8x1xf32>
    %204 = vector.broadcast %203 : vector<8x1xf32> to vector<8x12xf32>
    %205 = arith.subf %201, %204 : vector<8x12xf32>
    %206 = math.exp %205 : vector<8x12xf32>
    %cst_76 = arith.constant dense<0.000000e+00> : vector<8xf32>
    %207 = vector.multi_reduction <add>, %206, %cst_76 [1] : vector<8x12xf32> to vector<8xf32>
    %208 = vector.shape_cast %207 : vector<8xf32> to vector<8x1xf32>
    %209 = tpu.reciprocal %208 {approx = true} : vector<8x1xf32> -> vector<8x1xf32>
    %210 = vector.broadcast %209 : vector<8x1xf32> to vector<8x12xf32>
    %211 = arith.mulf %206, %210 : vector<8x12xf32>
    %212 = vector.broadcast %130 : vector<1x12xf32> to vector<8x12xf32>
    %213 = arith.mulf %211, %212 : vector<8x12xf32>
    %214 = arith.truncf %213 : vector<8x12xf32> to vector<8x12xbf16>
    %215 = vector.extract_strided_slice %175 {offsets = [0, 8], sizes = [12, 8], strides = [1, 1]} : vector<12x32xbf16> to vector<12x8xbf16>
    %cst_77 = arith.constant dense<0.000000e+00> : vector<8x8xf32>
    %216 = tpu.matmul %214, %215, %cst_77 {dimension_numbers = #tpu.dot_dimension_numbers<[1], [0], [0], [1], [0, 0, 1, 1], [], []>} : vector<8x12xbf16>, vector<12x8xbf16>, vector<8x8xf32> -> vector<8x8xf32>
    %217 = vector.extract_strided_slice %165 {offsets = [0, 16], sizes = [8, 8], strides = [1, 1]} : vector<8x32xbf16> to vector<8x8xbf16>
    %218 = vector.extract_strided_slice %176 {offsets = [16, 0], sizes = [8, 12], strides = [1, 1]} : vector<32x12xbf16> to vector<8x12xbf16>
    %cst_78 = arith.constant dense<0.000000e+00> : vector<8x12xf32>
    %219 = tpu.matmul %217, %218, %cst_78 {dimension_numbers = #tpu.dot_dimension_numbers<[1], [0], [0], [1], [0, 0, 1, 1], [], []>} : vector<8x8xbf16>, vector<8x12xbf16>, vector<8x12xf32> -> vector<8x12xf32>
    %220 = vector.broadcast %134 : vector<1x12xf32> to vector<8x12xf32>
    %221 = arith.addf %219, %220 : vector<8x12xf32>
    %cst_79 = arith.constant dense<0xFF800000> : vector<8xf32>
    %222 = vector.multi_reduction <maximumf>, %221, %cst_79 [1] : vector<8x12xf32> to vector<8xf32>
    %223 = vector.shape_cast %222 : vector<8xf32> to vector<8x1xf32>
    %224 = vector.broadcast %223 : vector<8x1xf32> to vector<8x12xf32>
    %225 = arith.subf %221, %224 : vector<8x12xf32>
    %226 = math.exp %225 : vector<8x12xf32>
    %cst_80 = arith.constant dense<0.000000e+00> : vector<8xf32>
    %227 = vector.multi_reduction <add>, %226, %cst_80 [1] : vector<8x12xf32> to vector<8xf32>
    %228 = vector.shape_cast %227 : vector<8xf32> to vector<8x1xf32>
    %229 = tpu.reciprocal %228 {approx = true} : vector<8x1xf32> -> vector<8x1xf32>
    %230 = vector.broadcast %229 : vector<8x1xf32> to vector<8x12xf32>
    %231 = arith.mulf %226, %230 : vector<8x12xf32>
    %232 = vector.broadcast %130 : vector<1x12xf32> to vector<8x12xf32>
    %233 = arith.mulf %231, %232 : vector<8x12xf32>
    %234 = arith.truncf %233 : vector<8x12xf32> to vector<8x12xbf16>
    %235 = vector.extract_strided_slice %175 {offsets = [0, 16], sizes = [12, 8], strides = [1, 1]} : vector<12x32xbf16> to vector<12x8xbf16>
    %cst_81 = arith.constant dense<0.000000e+00> : vector<8x8xf32>
    %236 = tpu.matmul %234, %235, %cst_81 {dimension_numbers = #tpu.dot_dimension_numbers<[1], [0], [0], [1], [0, 0, 1, 1], [], []>} : vector<8x12xbf16>, vector<12x8xbf16>, vector<8x8xf32> -> vector<8x8xf32>
    %237 = vector.extract_strided_slice %165 {offsets = [0, 24], sizes = [8, 8], strides = [1, 1]} : vector<8x32xbf16> to vector<8x8xbf16>
    %238 = vector.extract_strided_slice %176 {offsets = [24, 0], sizes = [8, 12], strides = [1, 1]} : vector<32x12xbf16> to vector<8x12xbf16>
    %cst_82 = arith.constant dense<0.000000e+00> : vector<8x12xf32>
    %239 = tpu.matmul %237, %238, %cst_82 {dimension_numbers = #tpu.dot_dimension_numbers<[1], [0], [0], [1], [0, 0, 1, 1], [], []>} : vector<8x8xbf16>, vector<8x12xbf16>, vector<8x12xf32> -> vector<8x12xf32>
    %240 = vector.broadcast %134 : vector<1x12xf32> to vector<8x12xf32>
    %241 = arith.addf %239, %240 : vector<8x12xf32>
    %cst_83 = arith.constant dense<0xFF800000> : vector<8xf32>
    %242 = vector.multi_reduction <maximumf>, %241, %cst_83 [1] : vector<8x12xf32> to vector<8xf32>
    %243 = vector.shape_cast %242 : vector<8xf32> to vector<8x1xf32>
    %244 = vector.broadcast %243 : vector<8x1xf32> to vector<8x12xf32>
    %245 = arith.subf %241, %244 : vector<8x12xf32>
    %246 = math.exp %245 : vector<8x12xf32>
    %cst_84 = arith.constant dense<0.000000e+00> : vector<8xf32>
    %247 = vector.multi_reduction <add>, %246, %cst_84 [1] : vector<8x12xf32> to vector<8xf32>
    %248 = vector.shape_cast %247 : vector<8xf32> to vector<8x1xf32>
    %249 = tpu.reciprocal %248 {approx = true} : vector<8x1xf32> -> vector<8x1xf32>
    %250 = vector.broadcast %249 : vector<8x1xf32> to vector<8x12xf32>
    %251 = arith.mulf %246, %250 : vector<8x12xf32>
    %252 = vector.broadcast %130 : vector<1x12xf32> to vector<8x12xf32>
    %253 = arith.mulf %251, %252 : vector<8x12xf32>
    %254 = arith.truncf %253 : vector<8x12xf32> to vector<8x12xbf16>
    %255 = vector.extract_strided_slice %175 {offsets = [0, 24], sizes = [12, 8], strides = [1, 1]} : vector<12x32xbf16> to vector<12x8xbf16>
    %cst_85 = arith.constant dense<0.000000e+00> : vector<8x8xf32>
    %256 = tpu.matmul %254, %255, %cst_85 {dimension_numbers = #tpu.dot_dimension_numbers<[1], [0], [0], [1], [0, 0, 1, 1], [], []>} : vector<8x12xbf16>, vector<12x8xbf16>, vector<8x8xf32> -> vector<8x8xf32>
    %257 = tpu.concatenate %196, %216, %236, %256 in 1 : vector<8x8xf32>, vector<8x8xf32>, vector<8x8xf32>, vector<8x8xf32> -> vector<8x32xf32>
    %c0_86 = arith.constant 0 : index
    %c0_87 = arith.constant 0 : index
    %258 = vector.load %arg17[%c0_86, %c0_87] : memref<32x32xbf16, #tpu.memory_space<vmem>>, vector<32x32xbf16>
    %259 = arith.truncf %257 : vector<8x32xf32> to vector<8x32xbf16>
    %cst_88 = arith.constant dense<0.000000e+00> : vector<8x32xf32>
    %260 = tpu.matmul %259, %258, %cst_88 {dimension_numbers = #tpu.dot_dimension_numbers<[1], [0], [0], [1], [0, 0, 1, 1], [], []>} : vector<8x32xbf16>, vector<32x32xbf16>, vector<8x32xf32> -> vector<8x32xf32>
    %261 = arith.addf %125, %260 : vector<8x32xf32>
    %c0_89 = arith.constant 0 : index
    %c0_90 = arith.constant 0 : index
    %262 = vector.load %arg18[%c0_89, %c0_90] : memref<1x32xf32, #tpu.memory_space<vmem>>, vector<1x32xf32>
    %263 = vector.broadcast %262 : vector<1x32xf32> to vector<8x32xf32>
    %264 = arith.addf %261, %263 : vector<8x32xf32>
    %c0_91 = arith.constant 0 : index
    %c0_92 = arith.constant 0 : index
    %265 = vector.load %arg19[%c0_91, %c0_92] : memref<1x32xf32, #tpu.memory_space<vmem>>, vector<1x32xf32>
    %c0_93 = arith.constant 0 : index
    %c0_94 = arith.constant 0 : index
    %266 = vector.load %arg20[%c0_93, %c0_94] : memref<1x32xf32, #tpu.memory_space<vmem>>, vector<1x32xf32>
    %cst_95 = arith.constant dense<0.000000e+00> : vector<8xf32>
    %267 = vector.multi_reduction <add>, %264, %cst_95 [1] : vector<8x32xf32> to vector<8xf32>
    %268 = vector.shape_cast %267 : vector<8xf32> to vector<8x1xf32>
    %cst_96 = arith.constant 3.200000e+01 : f32
    %269 = vector.broadcast %cst_96 : f32 to vector<8x1xf32>
    %270 = arith.divf %268, %269 : vector<8x1xf32>
    %271 = vector.broadcast %270 : vector<8x1xf32> to vector<8x32xf32>
    %272 = arith.subf %264, %271 : vector<8x32xf32>
    %273 = arith.mulf %272, %272 : vector<8x32xf32>
    %cst_97 = arith.constant dense<0.000000e+00> : vector<8xf32>
    %274 = vector.multi_reduction <add>, %273, %cst_97 [1] : vector<8x32xf32> to vector<8xf32>
    %275 = vector.shape_cast %274 : vector<8xf32> to vector<8x1xf32>
    %cst_98 = arith.constant 3.200000e+01 : f32
    %276 = vector.broadcast %cst_98 : f32 to vector<8x1xf32>
    %277 = arith.divf %275, %276 : vector<8x1xf32>
    %cst_99 = arith.constant 9.99999996E-13 : f32
    %278 = vector.broadcast %cst_99 : f32 to vector<8x1xf32>
    %279 = arith.addf %277, %278 : vector<8x1xf32>
    %280 = math.rsqrt %279 : vector<8x1xf32>
    %281 = vector.broadcast %280 : vector<8x1xf32> to vector<8x32xf32>
    %282 = arith.mulf %272, %281 : vector<8x32xf32>
    %283 = vector.broadcast %265 : vector<1x32xf32> to vector<8x32xf32>
    %284 = arith.mulf %282, %283 : vector<8x32xf32>
    %285 = vector.broadcast %266 : vector<1x32xf32> to vector<8x32xf32>
    %286 = arith.addf %284, %285 : vector<8x32xf32>
    %c0_100 = arith.constant 0 : index
    %c0_101 = arith.constant 0 : index
    %287 = vector.load %arg21[%c0_100, %c0_101] : memref<32x64xbf16, #tpu.memory_space<vmem>>, vector<32x64xbf16>
    %288 = arith.truncf %286 : vector<8x32xf32> to vector<8x32xbf16>
    %cst_102 = arith.constant dense<0.000000e+00> : vector<8x64xf32>
    %289 = tpu.matmul %288, %287, %cst_102 {dimension_numbers = #tpu.dot_dimension_numbers<[1], [0], [0], [1], [0, 0, 1, 1], [], []>} : vector<8x32xbf16>, vector<32x64xbf16>, vector<8x64xf32> -> vector<8x64xf32>
    %c0_103 = arith.constant 0 : index
    %c0_104 = arith.constant 0 : index
    %290 = vector.load %arg22[%c0_103, %c0_104] : memref<1x64xf32, #tpu.memory_space<vmem>>, vector<1x64xf32>
    %291 = vector.broadcast %290 : vector<1x64xf32> to vector<8x64xf32>
    %292 = arith.addf %289, %291 : vector<8x64xf32>
    %cst_105 = arith.constant 0.000000e+00 : f32
    %293 = vector.broadcast %cst_105 : f32 to vector<8x64xf32>
    %294 = arith.maximumf %292, %293 : vector<8x64xf32>
    %c0_106 = arith.constant 0 : index
    %c0_107 = arith.constant 0 : index
    %295 = vector.load %arg23[%c0_106, %c0_107] : memref<64x32xbf16, #tpu.memory_space<vmem>>, vector<64x32xbf16>
    %296 = arith.truncf %294 : vector<8x64xf32> to vector<8x64xbf16>
    %cst_108 = arith.constant dense<0.000000e+00> : vector<8x32xf32>
    %297 = tpu.matmul %296, %295, %cst_108 {dimension_numbers = #tpu.dot_dimension_numbers<[1], [0], [0], [1], [0, 0, 1, 1], [], []>} : vector<8x64xbf16>, vector<64x32xbf16>, vector<8x32xf32> -> vector<8x32xf32>
    %298 = arith.addf %264, %297 : vector<8x32xf32>
    %c0_109 = arith.constant 0 : index
    %c0_110 = arith.constant 0 : index
    %299 = vector.load %arg24[%c0_109, %c0_110] : memref<1x32xf32, #tpu.memory_space<vmem>>, vector<1x32xf32>
    %300 = vector.broadcast %299 : vector<1x32xf32> to vector<8x32xf32>
    %301 = arith.addf %298, %300 : vector<8x32xf32>
    %c0_111 = arith.constant 0 : index
    %c0_112 = arith.constant 0 : index
    %c0_113 = arith.constant 0 : index
    %302 = vector.load %arg25[%c0_111, %c0_112, %c0_113] : memref<1x8x32xf32, #tpu.memory_space<vmem>>, vector<1x8x32xf32>
    %303 = vector.shape_cast %302 : vector<1x8x32xf32> to vector<8x32xf32>
    %304 = vector.shape_cast %301 : vector<8x32xf32> to vector<1x8x32xf32>
    tpu.vector_store %arg25[%c0_111, %c0_112, %c0_113], %304 {strides = array<i32>} : memref<1x8x32xf32, #tpu.memory_space<vmem>>, vector<1x8x32xf32>,
    return
  }
  func.func @transform_0(%arg0: i32) -> (i32, i32, i32) {
    %c0_i32 = arith.constant 0 : i32
    %c0_i32_0 = arith.constant 0 : i32
    %c0_i32_1 = arith.constant 0 : i32
    return %arg0, %c0_i32, %c0_i32_0 : i32, i32, i32
  }
  func.func @transform_1(%arg0: i32) -> (i32, i32, i32) {
    %c0_i32 = arith.constant 0 : i32
    %c0_i32_0 = arith.constant 0 : i32
    %c0_i32_1 = arith.constant 0 : i32
    return %arg0, %c0_i32, %c0_i32_0 : i32, i32, i32
  }
  func.func @transform_2(%arg0: i32) -> (i32, i32, i32) {
    %c0_i32 = arith.constant 0 : i32
    %c0_i32_0 = arith.constant 0 : i32
    %c0_i32_1 = arith.constant 0 : i32
    return %arg0, %c0_i32, %c0_i32_0 : i32, i32, i32
  }
  func.func @transform_3(%arg0: i32) -> (i32, i32, i32) {
    %c0_i32 = arith.constant 0 : i32
    %c0_i32_0 = arith.constant 0 : i32
    %c0_i32_1 = arith.constant 0 : i32
    return %arg0, %c0_i32, %c0_i32_0 : i32, i32, i32
  }
  func.func @transform_4(%arg0: i32) -> (i32, i32) {
    %c0_i32 = arith.constant 0 : i32
    %c0_i32_0 = arith.constant 0 : i32
    %c0_i32_1 = arith.constant 0 : i32
    return %c0_i32, %c0_i32_0 : i32, i32
  }
  func.func @transform_5(%arg0: i32) -> (i32, i32) {
    %c0_i32 = arith.constant 0 : i32
    %c0_i32_0 = arith.constant 0 : i32
    %c0_i32_1 = arith.constant 0 : i32
    return %c0_i32, %c0_i32_0 : i32, i32
  }
  func.func @transform_6(%arg0: i32) -> (i32, i32) {
    %c0_i32 = arith.constant 0 : i32
    %c0_i32_0 = arith.constant 0 : i32
    %c0_i32_1 = arith.constant 0 : i32
    return %c0_i32, %c0_i32_0 : i32, i32
  }
  func.func @transform_7(%arg0: i32) -> (i32, i32) {
    %c0_i32 = arith.constant 0 : i32
    %c0_i32_0 = arith.constant 0 : i32
    %c0_i32_1 = arith.constant 0 : i32
    return %c0_i32, %c0_i32_0 : i32, i32
  }
  func.func @transform_8(%arg0: i32) -> (i32, i32) {
    %c0_i32 = arith.constant 0 : i32
    %c0_i32_0 = arith.constant 0 : i32
    %c0_i32_1 = arith.constant 0 : i32
    return %c0_i32, %c0_i32_0 : i32, i32
  }
  func.func @transform_9(%arg0: i32) -> (i32, i32) {
    %c0_i32 = arith.constant 0 : i32
    %c0_i32_0 = arith.constant 0 : i32
    %c0_i32_1 = arith.constant 0 : i32
    return %c0_i32, %c0_i32_0 : i32, i32
  }
  func.func @transform_10(%arg0: i32) -> (i32, i32) {
    %c0_i32 = arith.constant 0 : i32
    %c0_i32_0 = arith.constant 0 : i32
    %c0_i32_1 = arith.constant 0 : i32
    return %c0_i32, %c0_i32_0 : i32, i32
  }
  func.func @transform_11(%arg0: i32) -> (i32, i32) {
    %c0_i32 = arith.constant 0 : i32
    %c0_i32_0 = arith.constant 0 : i32
    %c0_i32_1 = arith.constant 0 : i32
    return %c0_i32, %c0_i32_0 : i32, i32
  }
  func.func @transform_12(%arg0: i32) -> (i32, i32) {
    %c0_i32 = arith.constant 0 : i32
    %c0_i32_0 = arith.constant 0 : i32
    %c0_i32_1 = arith.constant 0 : i32
    return %c0_i32, %c0_i32_0 : i32, i32
  }
  func.func @transform_13(%arg0: i32) -> (i32, i32) {
    %c0_i32 = arith.constant 0 : i32
    %c0_i32_0 = arith.constant 0 : i32
    %c0_i32_1 = arith.constant 0 : i32
    return %c0_i32, %c0_i32_0 : i32, i32
  }
  func.func @transform_14(%arg0: i32) -> (i32, i32) {
    %c0_i32 = arith.constant 0 : i32
    %c0_i32_0 = arith.constant 0 : i32
    %c0_i32_1 = arith.constant 0 : i32
    return %c0_i32, %c0_i32_0 : i32, i32
  }
  func.func @transform_15(%arg0: i32) -> (i32, i32) {
    %c0_i32 = arith.constant 0 : i32
    %c0_i32_0 = arith.constant 0 : i32
    %c0_i32_1 = arith.constant 0 : i32
    return %c0_i32, %c0_i32_0 : i32, i32
  }
  func.func @transform_16(%arg0: i32) -> (i32, i32) {
    %c0_i32 = arith.constant 0 : i32
    %c0_i32_0 = arith.constant 0 : i32
    %c0_i32_1 = arith.constant 0 : i32
    return %c0_i32, %c0_i32_0 : i32, i32
  }
  func.func @transform_17(%arg0: i32) -> (i32, i32) {
    %c0_i32 = arith.constant 0 : i32
    %c0_i32_0 = arith.constant 0 : i32
    %c0_i32_1 = arith.constant 0 : i32
    return %c0_i32, %c0_i32_0 : i32, i32
  }
  func.func @transform_18(%arg0: i32) -> (i32, i32) {
    %c0_i32 = arith.constant 0 : i32
    %c0_i32_0 = arith.constant 0 : i32
    %c0_i32_1 = arith.constant 0 : i32
    return %c0_i32, %c0_i32_0 : i32, i32
  }
  func.func @transform_19(%arg0: i32) -> (i32, i32) {
    %c0_i32 = arith.constant 0 : i32
    %c0_i32_0 = arith.constant 0 : i32
    %c0_i32_1 = arith.constant 0 : i32
    return %c0_i32, %c0_i32_0 : i32, i32
  }
  func.func @transform_20(%arg0: i32) -> (i32, i32) {
    %c0_i32 = arith.constant 0 : i32
    %c0_i32_0 = arith.constant 0 : i32
    %c0_i32_1 = arith.constant 0 : i32
    return %c0_i32, %c0_i32_0 : i32, i32
  }
  func.func @transform_21(%arg0: i32) -> (i32, i32) {
    %c0_i32 = arith.constant 0 : i32
    %c0_i32_0 = arith.constant 0 : i32
    %c0_i32_1 = arith.constant 0 : i32
    return %c0_i32, %c0_i32_0 : i32, i32
  }
  func.func @transform_22(%arg0: i32) -> (i32, i32) {
    %c0_i32 = arith.constant 0 : i32
    %c0_i32_0 = arith.constant 0 : i32
    %c0_i32_1 = arith.constant 0 : i32
    return %c0_i32, %c0_i32_0 : i32, i32
  }
  func.func @transform_23(%arg0: i32) -> (i32, i32) {
    %c0_i32 = arith.constant 0 : i32
    %c0_i32_0 = arith.constant 0 : i32
    %c0_i32_1 = arith.constant 0 : i32
    return %c0_i32, %c0_i32_0 : i32, i32
  }
  func.func @transform_24(%arg0: i32) -> (i32, i32, i32) {
    %c0_i32 = arith.constant 0 : i32
    %c0_i32_0 = arith.constant 0 : i32
    %c0_i32_1 = arith.constant 0 : i32
    return %arg0, %c0_i32, %c0_i32_0 : i32, i32, i32
  }
}

module attributes {stable_mosaic.version = 11 : i64} {
  func.func @_decoder_layer_kernel(%arg0: i32, %arg1: memref<1x8x32xf32, #tpu.memory_space<vmem>>, %arg2: memref<1x8x8xbf16, #tpu.memory_space<vmem>>, %arg3: memref<1x12x32xf32, #tpu.memory_space<vmem>>, %arg4: memref<1x1x12xbf16, #tpu.memory_space<vmem>>, %arg5: memref<1x32xf32, #tpu.memory_space<vmem>>, %arg6: memref<1x32xf32, #tpu.memory_space<vmem>>, %arg7: memref<32x96xbf16, #tpu.memory_space<vmem>>, %arg8: memref<1x96xf32, #tpu.memory_space<vmem>>, %arg9: memref<32x32xbf16, #tpu.memory_space<vmem>>, %arg10: memref<1x32xf32, #tpu.memory_space<vmem>>, %arg11: memref<1x32xf32, #tpu.memory_space<vmem>>, %arg12: memref<1x32xf32, #tpu.memory_space<vmem>>, %arg13: memref<32x32xbf16, #tpu.memory_space<vmem>>, %arg14: memref<1x32xf32, #tpu.memory_space<vmem>>, %arg15: memref<32x64xbf16, #tpu.memory_space<vmem>>, %arg16: memref<1x64xf32, #tpu.memory_space<vmem>>, %arg17: memref<32x32xbf16, #tpu.memory_space<vmem>>, %arg18: memref<1x32xf32, #tpu.memory_space<vmem>>, %arg19: memref<1x32xf32, #tpu.memory_space<vmem>>, %arg20: memref<1x32xf32, #tpu.memory_space<vmem>>, %arg21: memref<32x64xbf16, #tpu.memory_space<vmem>>, %arg22: memref<1x64xf32, #tpu.memory_space<vmem>>, %arg23: memref<64x32xbf16, #tpu.memory_space<vmem>>, %arg24: memref<1x32xf32, #tpu.memory_space<vmem>>, %arg25: memref<1x8x32xf32, #tpu.memory_space<vmem>>) attributes {dimension_semantics = [#tpu.dimension_semantics<parallel>], iteration_bounds = array<i64: 2>, scalar_prefetch = 0 : i64, scratch_operands = 0 : i64, tpu.core_type = #tpu.core_type<tc>, window_params = [{transform_indices = @transform_0, window_bounds = array<i64: 1, 8, 32>}, {transform_indices = @transform_1, window_bounds = array<i64: 1, 8, 8>}, {transform_indices = @transform_2, window_bounds = array<i64: 1, 12, 32>}, {transform_indices = @transform_3, window_bounds = array<i64: 1, 1, 12>}, {pipeline_mode = #tpu.pipeline_mode<synchronous>, transform_indices = @transform_4, window_bounds = array<i64: 1, 32>}, {pipeline_mode = #tpu.pipeline_mode<synchronous>, transform_indices = @transform_5, window_bounds = array<i64: 1, 32>}, {pipeline_mode = #tpu.pipeline_mode<synchronous>, transform_indices = @transform_6, window_bounds = array<i64: 32, 96>}, {pipeline_mode = #tpu.pipeline_mode<synchronous>, transform_indices = @transform_7, window_bounds = array<i64: 1, 96>}, {pipeline_mode = #tpu.pipeline_mode<synchronous>, transform_indices = @transform_8, window_bounds = array<i64: 32, 32>}, {pipeline_mode = #tpu.pipeline_mode<synchronous>, transform_indices = @transform_9, window_bounds = array<i64: 1, 32>}, {pipeline_mode = #tpu.pipeline_mode<synchronous>, transform_indices = @transform_10, window_bounds = array<i64: 1, 32>}, {pipeline_mode = #tpu.pipeline_mode<synchronous>, transform_indices = @transform_11, window_bounds = array<i64: 1, 32>}, {pipeline_mode = #tpu.pipeline_mode<synchronous>, transform_indices = @transform_12, window_bounds = array<i64: 32, 32>}, {pipeline_mode = #tpu.pipeline_mode<synchronous>, transform_indices = @transform_13, window_bounds = array<i64: 1, 32>}, {pipeline_mode = #tpu.pipeline_mode<synchronous>, transform_indices = @transform_14, window_bounds = array<i64: 32, 64>}, {pipeline_mode = #tpu.pipeline_mode<synchronous>, transform_indices = @transform_15, window_bounds = array<i64: 1, 64>}, {pipeline_mode = #tpu.pipeline_mode<synchronous>, transform_indices = @transform_16, window_bounds = array<i64: 32, 32>}, {pipeline_mode = #tpu.pipeline_mode<synchronous>, transform_indices = @transform_17, window_bounds = array<i64: 1, 32>}, {pipeline_mode = #tpu.pipeline_mode<synchronous>, transform_indices = @transform_18, window_bounds = array<i64: 1, 32>}, {pipeline_mode = #tpu.pipeline_mode<synchronous>, transform_indices = @transform_19, window_bounds = array<i64: 1, 32>}, {pipeline_mode = #tpu.pipeline_mode<synchronous>, transform_indices = @transform_20, window_bounds = array<i64: 32, 64>}, {pipeline_mode = #tpu.pipeline_mode<synchronous>, transform_indices = @transform_21, window_bounds = array<i64: 1, 64>}, {pipeline_mode = #tpu.pipeline_mode<synchronous>, transform_indices = @transform_22, window_bounds = array<i64: 64, 32>}, {pipeline_mode = #tpu.pipeline_mode<synchronous>, transform_indices = @transform_23, window_bounds = array<i64: 1, 32>}, {transform_indices = @transform_24, window_bounds = array<i64: 1, 8, 32>}]} {
    %c0 = arith.constant 0 : index
    %c0_0 = arith.constant 0 : index
    %c0_1 = arith.constant 0 : index
    %0 = vector.load %arg1[%c0, %c0_0, %c0_1] : memref<1x8x32xf32, #tpu.memory_space<vmem>>, vector<1x8x32xf32>
    %1 = vector.shape_cast %0 : vector<1x8x32xf32> to vector<8x32xf32>
    %c0_2 = arith.constant 0 : index
    %c0_3 = arith.constant 0 : index
    %c0_4 = arith.constant 0 : index
    %2 = vector.load %arg2[%c0_2, %c0_3, %c0_4] : memref<1x8x8xbf16, #tpu.memory_space<vmem>>, vector<1x8x8xbf16>
    %3 = vector.shape_cast %2 : vector<1x8x8xbf16> to vector<8x8xbf16>
    %4 = arith.extf %3 : vector<8x8xbf16> to vector<8x8xf32>
    %cst = arith.constant 1.000000e+00 : f32
    %5 = vector.broadcast %cst : f32 to vector<8x8xf32>
    %6 = arith.subf %5, %4 : vector<8x8xf32>
    %cst_5 = arith.constant -1.000000e+30 : f32
    %7 = vector.broadcast %cst_5 : f32 to vector<8x8xf32>
    %8 = arith.mulf %6, %7 : vector<8x8xf32>
    %c0_6 = arith.constant 0 : index
    %c0_7 = arith.constant 0 : index
    %9 = vector.load %arg5[%c0_6, %c0_7] : memref<1x32xf32, #tpu.memory_space<vmem>>, vector<1x32xf32>
    %c0_8 = arith.constant 0 : index
    %c0_9 = arith.constant 0 : index
    %10 = vector.load %arg6[%c0_8, %c0_9] : memref<1x32xf32, #tpu.memory_space<vmem>>, vector<1x32xf32>
    %cst_10 = arith.constant dense<0.000000e+00> : vector<8xf32>
    %11 = vector.multi_reduction <add>, %1, %cst_10 [1] : vector<8x32xf32> to vector<8xf32>
    %12 = vector.shape_cast %11 : vector<8xf32> to vector<8x1xf32>
    %cst_11 = arith.constant 3.200000e+01 : f32
    %13 = vector.broadcast %cst_11 : f32 to vector<8x1xf32>
    %14 = arith.divf %12, %13 : vector<8x1xf32>
    %15 = vector.broadcast %14 : vector<8x1xf32> to vector<8x32xf32>
    %16 = arith.subf %1, %15 : vector<8x32xf32>
    %17 = arith.mulf %16, %16 : vector<8x32xf32>
    %cst_12 = arith.constant dense<0.000000e+00> : vector<8xf32>
    %18 = vector.multi_reduction <add>, %17, %cst_12 [1] : vector<8x32xf32> to vector<8xf32>
    %19 = vector.shape_cast %18 : vector<8xf32> to vector<8x1xf32>
    %cst_13 = arith.constant 3.200000e+01 : f32
    %20 = vector.broadcast %cst_13 : f32 to vector<8x1xf32>
    %21 = arith.divf %19, %20 : vector<8x1xf32>
    %cst_14 = arith.constant 9.99999996E-13 : f32
    %22 = vector.broadcast %cst_14 : f32 to vector<8x1xf32>
    %23 = arith.addf %21, %22 : vector<8x1xf32>
    %24 = math.rsqrt %23 : vector<8x1xf32>
    %25 = vector.broadcast %24 : vector<8x1xf32> to vector<8x32xf32>
    %26 = arith.mulf %16, %25 : vector<8x32xf32>
    %27 = vector.broadcast %9 : vector<1x32xf32> to vector<8x32xf32>
    %28 = arith.mulf %26, %27 : vector<8x32xf32>
    %29 = vector.broadcast %10 : vector<1x32xf32> to vector<8x32xf32>
    %30 = arith.addf %28, %29 : vector<8x32xf32>
    %c0_15 = arith.constant 0 : index
    %c0_16 = arith.constant 0 : index
    %31 = vector.load %arg7[%c0_15, %c0_16] : memref<32x96xbf16, #tpu.memory_space<vmem>>, vector<32x96xbf16>
    %32 = arith.truncf %30 : vector<8x32xf32> to vector<8x32xbf16>
    %cst_17 = arith.constant dense<0.000000e+00> : vector<8x96xf32>
    %33 = tpu.matmul %32, %31, %cst_17 {dimension_numbers = #tpu.dot_dimension_numbers<[1], [0], [0], [1], [0, 0, 1, 1], [], []>} : vector<8x32xbf16>, vector<32x96xbf16>, vector<8x96xf32> -> vector<8x96xf32>
    %c0_18 = arith.constant 0 : index
    %c0_19 = arith.constant 0 : index
    %34 = vector.load %arg8[%c0_18, %c0_19] : memref<1x96xf32, #tpu.memory_space<vmem>>, vector<1x96xf32>
    %35 = vector.broadcast %34 : vector<1x96xf32> to vector<8x96xf32>
    %36 = arith.addf %33, %35 : vector<8x96xf32>
    %37 = vector.extract_strided_slice %36 {offsets = [0, 0], sizes = [8, 32], strides = [1, 1]} : vector<8x96xf32> to vector<8x32xf32>
    %cst_20 = arith.constant 0.353553385 : f32
    %38 = vector.broadcast %cst_20 : f32 to vector<8x32xf32>
    %39 = arith.mulf %37, %38 : vector<8x32xf32>
    %40 = arith.truncf %39 : vector<8x32xf32> to vector<8x32xbf16>
    %41 = vector.extract_strided_slice %36 {offsets = [0, 32], sizes = [8, 32], strides = [1, 1]} : vector<8x96xf32> to vector<8x32xf32>
    %42 = arith.truncf %41 : vector<8x32xf32> to vector<8x32xbf16>
    %43 = vector.extract_strided_slice %36 {offsets = [0, 64], sizes = [8, 32], strides = [1, 1]} : vector<8x96xf32> to vector<8x32xf32>
    %44 = arith.truncf %43 : vector<8x32xf32> to vector<8x32xbf16>
    %45 = tpu.transpose %42, [1, 0] : vector<8x32xbf16> -> vector<32x8xbf16>
    %46 = vector.extract_strided_slice %40 {offsets = [0, 0], sizes = [8, 8], strides = [1, 1]} : vector<8x32xbf16> to vector<8x8xbf16>
    %47 = vector.extract_strided_slice %45 {offsets = [0, 0], sizes = [8, 8], strides = [1, 1]} : vector<32x8xbf16> to vector<8x8xbf16>
    %cst_21 = arith.constant dense<0.000000e+00> : vector<8x8xf32>
    %48 = tpu.matmul %46, %47, %cst_21 {dimension_numbers = #tpu.dot_dimension_numbers<[1], [0], [0], [1], [0, 0, 1, 1], [], []>} : vector<8x8xbf16>, vector<8x8xbf16>, vector<8x8xf32> -> vector<8x8xf32>
    %49 = arith.addf %48, %8 : vector<8x8xf32>
    %cst_22 = arith.constant dense<0xFF800000> : vector<8xf32>
    %50 = vector.multi_reduction <maximumf>, %49, %cst_22 [1] : vector<8x8xf32> to vector<8xf32>
    %51 = vector.shape_cast %50 : vector<8xf32> to vector<8x1xf32>
    %52 = vector.broadcast %51 : vector<8x1xf32> to vector<8x8xf32>
    %53 = arith.subf %49, %52 : vector<8x8xf32>
    %54 = math.exp %53 : vector<8x8xf32>
    %cst_23 = arith.constant dense<0.000000e+00> : vector<8xf32>
    %55 = vector.multi_reduction <add>, %54, %cst_23 [1] : vector<8x8xf32> to vector<8xf32>
    %56 = vector.shape_cast %55 : vector<8xf32> to vector<8x1xf32>
    %57 = tpu.reciprocal %56 {approx = true} : vector<8x1xf32> -> vector<8x1xf32>
    %58 = vector.broadcast %57 : vector<8x1xf32> to vector<8x8xf32>
    %59 = arith.mulf %54, %58 : vector<8x8xf32>
    %60 = arith.mulf %59, %4 : vector<8x8xf32>
    %61 = arith.truncf %60 : vector<8x8xf32> to vector<8x8xbf16>
    %62 = vector.extract_strided_slice %44 {offsets = [0, 0], sizes = [8, 8], strides = [1, 1]} : vector<8x32xbf16> to vector<8x8xbf16>
    %cst_24 = arith.constant dense<0.000000e+00> : vector<8x8xf32>
    %63 = tpu.matmul %61, %62, %cst_24 {dimension_numbers = #tpu.dot_dimension_numbers<[1], [0], [0], [1], [0, 0, 1, 1], [], []>} : vector<8x8xbf16>, vector<8x8xbf16>, vector<8x8xf32> -> vector<8x8xf32>
    %64 = vector.extract_strided_slice %40 {offsets = [0, 8], sizes = [8, 8], strides = [1, 1]} : vector<8x32xbf16> to vector<8x8xbf16>
    %65 = vector.extract_strided_slice %45 {offsets = [8, 0], sizes = [8, 8], strides = [1, 1]} : vector<32x8xbf16> to vector<8x8xbf16>
    %cst_25 = arith.constant dense<0.000000e+00> : vector<8x8xf32>
    %66 = tpu.matmul %64, %65, %cst_25 {dimension_numbers = #tpu.dot_dimension_numbers<[1], [0], [0], [1], [0, 0, 1, 1], [], []>} : vector<8x8xbf16>, vector<8x8xbf16>, vector<8x8xf32> -> vector<8x8xf32>
    %67 = arith.addf %66, %8 : vector<8x8xf32>
    %cst_26 = arith.constant dense<0xFF800000> : vector<8xf32>
    %68 = vector.multi_reduction <maximumf>, %67, %cst_26 [1] : vector<8x8xf32> to vector<8xf32>
    %69 = vector.shape_cast %68 : vector<8xf32> to vector<8x1xf32>
    %70 = vector.broadcast %69 : vector<8x1xf32> to vector<8x8xf32>
    %71 = arith.subf %67, %70 : vector<8x8xf32>
    %72 = math.exp %71 : vector<8x8xf32>
    %cst_27 = arith.constant dense<0.000000e+00> : vector<8xf32>
    %73 = vector.multi_reduction <add>, %72, %cst_27 [1] : vector<8x8xf32> to vector<8xf32>
    %74 = vector.shape_cast %73 : vector<8xf32> to vector<8x1xf32>
    %75 = tpu.reciprocal %74 {approx = true} : vector<8x1xf32> -> vector<8x1xf32>
    %76 = vector.broadcast %75 : vector<8x1xf32> to vector<8x8xf32>
    %77 = arith.mulf %72, %76 : vector<8x8xf32>
    %78 = arith.mulf %77, %4 : vector<8x8xf32>
    %79 = arith.truncf %78 : vector<8x8xf32> to vector<8x8xbf16>
    %80 = vector.extract_strided_slice %44 {offsets = [0, 8], sizes = [8, 8], strides = [1, 1]} : vector<8x32xbf16> to vector<8x8xbf16>
    %cst_28 = arith.constant dense<0.000000e+00> : vector<8x8xf32>
    %81 = tpu.matmul %79, %80, %cst_28 {dimension_numbers = #tpu.dot_dimension_numbers<[1], [0], [0], [1], [0, 0, 1, 1], [], []>} : vector<8x8xbf16>, vector<8x8xbf16>, vector<8x8xf32> -> vector<8x8xf32>
    %82 = vector.extract_strided_slice %40 {offsets = [0, 16], sizes = [8, 8], strides = [1, 1]} : vector<8x32xbf16> to vector<8x8xbf16>
    %83 = vector.extract_strided_slice %45 {offsets = [16, 0], sizes = [8, 8], strides = [1, 1]} : vector<32x8xbf16> to vector<8x8xbf16>
    %cst_29 = arith.constant dense<0.000000e+00> : vector<8x8xf32>
    %84 = tpu.matmul %82, %83, %cst_29 {dimension_numbers = #tpu.dot_dimension_numbers<[1], [0], [0], [1], [0, 0, 1, 1], [], []>} : vector<8x8xbf16>, vector<8x8xbf16>, vector<8x8xf32> -> vector<8x8xf32>
    %85 = arith.addf %84, %8 : vector<8x8xf32>
    %cst_30 = arith.constant dense<0xFF800000> : vector<8xf32>
    %86 = vector.multi_reduction <maximumf>, %85, %cst_30 [1] : vector<8x8xf32> to vector<8xf32>
    %87 = vector.shape_cast %86 : vector<8xf32> to vector<8x1xf32>
    %88 = vector.broadcast %87 : vector<8x1xf32> to vector<8x8xf32>
    %89 = arith.subf %85, %88 : vector<8x8xf32>
    %90 = math.exp %89 : vector<8x8xf32>
    %cst_31 = arith.constant dense<0.000000e+00> : vector<8xf32>
    %91 = vector.multi_reduction <add>, %90, %cst_31 [1] : vector<8x8xf32> to vector<8xf32>
    %92 = vector.shape_cast %91 : vector<8xf32> to vector<8x1xf32>
    %93 = tpu.reciprocal %92 {approx = true} : vector<8x1xf32> -> vector<8x1xf32>
    %94 = vector.broadcast %93 : vector<8x1xf32> to vector<8x8xf32>
    %95 = arith.mulf %90, %94 : vector<8x8xf32>
    %96 = arith.mulf %95, %4 : vector<8x8xf32>
    %97 = arith.truncf %96 : vector<8x8xf32> to vector<8x8xbf16>
    %98 = vector.extract_strided_slice %44 {offsets = [0, 16], sizes = [8, 8], strides = [1, 1]} : vector<8x32xbf16> to vector<8x8xbf16>
    %cst_32 = arith.constant dense<0.000000e+00> : vector<8x8xf32>
    %99 = tpu.matmul %97, %98, %cst_32 {dimension_numbers = #tpu.dot_dimension_numbers<[1], [0], [0], [1], [0, 0, 1, 1], [], []>} : vector<8x8xbf16>, vector<8x8xbf16>, vector<8x8xf32> -> vector<8x8xf32>
    %100 = vector.extract_strided_slice %40 {offsets = [0, 24], sizes = [8, 8], strides = [1, 1]} : vector<8x32xbf16> to vector<8x8xbf16>
    %101 = vector.extract_strided_slice %45 {offsets = [24, 0], sizes = [8, 8], strides = [1, 1]} : vector<32x8xbf16> to vector<8x8xbf16>
    %cst_33 = arith.constant dense<0.000000e+00> : vector<8x8xf32>
    %102 = tpu.matmul %100, %101, %cst_33 {dimension_numbers = #tpu.dot_dimension_numbers<[1], [0], [0], [1], [0, 0, 1, 1], [], []>} : vector<8x8xbf16>, vector<8x8xbf16>, vector<8x8xf32> -> vector<8x8xf32>
    %103 = arith.addf %102, %8 : vector<8x8xf32>
    %cst_34 = arith.constant dense<0xFF800000> : vector<8xf32>
    %104 = vector.multi_reduction <maximumf>, %103, %cst_34 [1] : vector<8x8xf32> to vector<8xf32>
    %105 = vector.shape_cast %104 : vector<8xf32> to vector<8x1xf32>
    %106 = vector.broadcast %105 : vector<8x1xf32> to vector<8x8xf32>
    %107 = arith.subf %103, %106 : vector<8x8xf32>
    %108 = math.exp %107 : vector<8x8xf32>
    %cst_35 = arith.constant dense<0.000000e+00> : vector<8xf32>
    %109 = vector.multi_reduction <add>, %108, %cst_35 [1] : vector<8x8xf32> to vector<8xf32>
    %110 = vector.shape_cast %109 : vector<8xf32> to vector<8x1xf32>
    %111 = tpu.reciprocal %110 {approx = true} : vector<8x1xf32> -> vector<8x1xf32>
    %112 = vector.broadcast %111 : vector<8x1xf32> to vector<8x8xf32>
    %113 = arith.mulf %108, %112 : vector<8x8xf32>
    %114 = arith.mulf %113, %4 : vector<8x8xf32>
    %115 = arith.truncf %114 : vector<8x8xf32> to vector<8x8xbf16>
    %116 = vector.extract_strided_slice %44 {offsets = [0, 24], sizes = [8, 8], strides = [1, 1]} : vector<8x32xbf16> to vector<8x8xbf16>
    %cst_36 = arith.constant dense<0.000000e+00> : vector<8x8xf32>
    %117 = tpu.matmul %115, %116, %cst_36 {dimension_numbers = #tpu.dot_dimension_numbers<[1], [0], [0], [1], [0, 0, 1, 1], [], []>} : vector<8x8xbf16>, vector<8x8xbf16>, vector<8x8xf32> -> vector<8x8xf32>
    %118 = tpu.concatenate %63, %81, %99, %117 in 1 : vector<8x8xf32>, vector<8x8xf32>, vector<8x8xf32>, vector<8x8xf32> -> vector<8x32xf32>
    %c0_37 = arith.constant 0 : index
    %c0_38 = arith.constant 0 : index
    %119 = vector.load %arg9[%c0_37, %c0_38] : memref<32x32xbf16, #tpu.memory_space<vmem>>, vector<32x32xbf16>
    %120 = arith.truncf %118 : vector<8x32xf32> to vector<8x32xbf16>
    %cst_39 = arith.constant dense<0.000000e+00> : vector<8x32xf32>
    %121 = tpu.matmul %120, %119, %cst_39 {dimension_numbers = #tpu.dot_dimension_numbers<[1], [0], [0], [1], [0, 0, 1, 1], [], []>} : vector<8x32xbf16>, vector<32x32xbf16>, vector<8x32xf32> -> vector<8x32xf32>
    %122 = arith.addf %1, %121 : vector<8x32xf32>
    %c0_40 = arith.constant 0 : index
    %c0_41 = arith.constant 0 : index
    %123 = vector.load %arg10[%c0_40, %c0_41] : memref<1x32xf32, #tpu.memory_space<vmem>>, vector<1x32xf32>
    %124 = vector.broadcast %123 : vector<1x32xf32> to vector<8x32xf32>
    %125 = arith.addf %122, %124 : vector<8x32xf32>
    %c0_42 = arith.constant 0 : index
    %c0_43 = arith.constant 0 : index
    %c0_44 = arith.constant 0 : index
    %126 = vector.load %arg3[%c0_42, %c0_43, %c0_44] : memref<1x12x32xf32, #tpu.memory_space<vmem>>, vector<1x12x32xf32>
    %127 = vector.shape_cast %126 : vector<1x12x32xf32> to vector<12x32xf32>
    %c0_45 = arith.constant 0 : index
    %c0_46 = arith.constant 0 : index
    %c0_47 = arith.constant 0 : index
    %128 = vector.load %arg4[%c0_45, %c0_46, %c0_47] : memref<1x1x12xbf16, #tpu.memory_space<vmem>>, vector<1x1x12xbf16>
    %129 = vector.shape_cast %128 : vector<1x1x12xbf16> to vector<1x12xbf16>
    %130 = arith.extf %129 : vector<1x12xbf16> to vector<1x12xf32>
    %cst_48 = arith.constant 1.000000e+00 : f32
    %131 = vector.broadcast %cst_48 : f32 to vector<1x12xf32>
    %132 = arith.subf %131, %130 : vector<1x12xf32>
    %cst_49 = arith.constant -1.000000e+30 : f32
    %133 = vector.broadcast %cst_49 : f32 to vector<1x12xf32>
    %134 = arith.mulf %132, %133 : vector<1x12xf32>
    %c0_50 = arith.constant 0 : index
    %c0_51 = arith.constant 0 : index
    %135 = vector.load %arg11[%c0_50, %c0_51] : memref<1x32xf32, #tpu.memory_space<vmem>>, vector<1x32xf32>
    %c0_52 = arith.constant 0 : index
    %c0_53 = arith.constant 0 : index
    %136 = vector.load %arg12[%c0_52, %c0_53] : memref<1x32xf32, #tpu.memory_space<vmem>>, vector<1x32xf32>
    %cst_54 = arith.constant dense<0.000000e+00> : vector<8xf32>
    %137 = vector.multi_reduction <add>, %125, %cst_54 [1] : vector<8x32xf32> to vector<8xf32>
    %138 = vector.shape_cast %137 : vector<8xf32> to vector<8x1xf32>
    %cst_55 = arith.constant 3.200000e+01 : f32
    %139 = vector.broadcast %cst_55 : f32 to vector<8x1xf32>
    %140 = arith.divf %138, %139 : vector<8x1xf32>
    %141 = vector.broadcast %140 : vector<8x1xf32> to vector<8x32xf32>
    %142 = arith.subf %125, %141 : vector<8x32xf32>
    %143 = arith.mulf %142, %142 : vector<8x32xf32>
    %cst_56 = arith.constant dense<0.000000e+00> : vector<8xf32>
    %144 = vector.multi_reduction <add>, %143, %cst_56 [1] : vector<8x32xf32> to vector<8xf32>
    %145 = vector.shape_cast %144 : vector<8xf32> to vector<8x1xf32>
    %cst_57 = arith.constant 3.200000e+01 : f32
    %146 = vector.broadcast %cst_57 : f32 to vector<8x1xf32>
    %147 = arith.divf %145, %146 : vector<8x1xf32>
    %cst_58 = arith.constant 9.99999996E-13 : f32
    %148 = vector.broadcast %cst_58 : f32 to vector<8x1xf32>
    %149 = arith.addf %147, %148 : vector<8x1xf32>
    %150 = math.rsqrt %149 : vector<8x1xf32>
    %151 = vector.broadcast %150 : vector<8x1xf32> to vector<8x32xf32>
    %152 = arith.mulf %142, %151 : vector<8x32xf32>
    %153 = vector.broadcast %135 : vector<1x32xf32> to vector<8x32xf32>
    %154 = arith.mulf %152, %153 : vector<8x32xf32>
    %155 = vector.broadcast %136 : vector<1x32xf32> to vector<8x32xf32>
    %156 = arith.addf %154, %155 : vector<8x32xf32>
    %c0_59 = arith.constant 0 : index
    %c0_60 = arith.constant 0 : index
    %157 = vector.load %arg13[%c0_59, %c0_60] : memref<32x32xbf16, #tpu.memory_space<vmem>>, vector<32x32xbf16>
    %158 = arith.truncf %156 : vector<8x32xf32> to vector<8x32xbf16>
    %cst_61 = arith.constant dense<0.000000e+00> : vector<8x32xf32>
    %159 = tpu.matmul %158, %157, %cst_61 {dimension_numbers = #tpu.dot_dimension_numbers<[1], [0], [0], [1], [0, 0, 1, 1], [], []>} : vector<8x32xbf16>, vector<32x32xbf16>, vector<8x32xf32> -> vector<8x32xf32>
    %c0_62 = arith.constant 0 : index
    %c0_63 = arith.constant 0 : index
    %160 = vector.load %arg14[%c0_62, %c0_63] : memref<1x32xf32, #tpu.memory_space<vmem>>, vector<1x32xf32>
    %161 = vector.broadcast %160 : vector<1x32xf32> to vector<8x32xf32>
    %162 = arith.addf %159, %161 : vector<8x32xf32>
    %cst_64 = arith.constant 0.353553385 : f32
    %163 = vector.broadcast %cst_64 : f32 to vector<8x32xf32>
    %164 = arith.mulf %162, %163 : vector<8x32xf32>
    %165 = arith.truncf %164 : vector<8x32xf32> to vector<8x32xbf16>
    %c0_65 = arith.constant 0 : index
    %c0_66 = arith.constant 0 : index
    %166 = vector.load %arg15[%c0_65, %c0_66] : memref<32x64xbf16, #tpu.memory_space<vmem>>, vector<32x64xbf16>
    %167 = arith.truncf %127 : vector<12x32xf32> to vector<12x32xbf16>
    %cst_67 = arith.constant dense<0.000000e+00> : vector<12x64xf32>
    %168 = tpu.matmul %167, %166, %cst_67 {dimension_numbers = #tpu.dot_dimension_numbers<[1], [0], [0], [1], [0, 0, 1, 1], [], []>} : vector<12x32xbf16>, vector<32x64xbf16>, vector<12x64xf32> -> vector<12x64xf32>
    %c0_68 = arith.constant 0 : index
    %c0_69 = arith.constant 0 : index
    %169 = vector.load %arg16[%c0_68, %c0_69] : memref<1x64xf32, #tpu.memory_space<vmem>>, vector<1x64xf32>
    %170 = vector.broadcast %169 : vector<1x64xf32> to vector<12x64xf32>
    %171 = arith.addf %168, %170 : vector<12x64xf32>
    %172 = vector.extract_strided_slice %171 {offsets = [0, 0], sizes = [12, 32], strides = [1, 1]} : vector<12x64xf32> to vector<12x32xf32>
    %173 = arith.truncf %172 : vector<12x32xf32> to vector<12x32xbf16>
    %174 = vector.extract_strided_slice %171 {offsets = [0, 32], sizes = [12, 32], strides = [1, 1]} : vector<12x64xf32> to vector<12x32xf32>
    %175 = arith.truncf %174 : vector<12x32xf32> to vector<12x32xbf16>
    %176 = tpu.transpose %173, [1, 0] : vector<12x32xbf16> -> vector<32x12xbf16>
    %177 = vector.extract_strided_slice %165 {offsets = [0, 0], sizes = [8, 8], strides = [1, 1]} : vector<8x32xbf16> to vector<8x8xbf16>
    %178 = vector.extract_strided_slice %176 {offsets = [0, 0], sizes = [8, 12], strides = [1, 1]} : vector<32x12xbf16> to vector<8x12xbf16>
    %cst_70 = arith.constant dense<0.000000e+00> : vector<8x12xf32>
    %179 = tpu.matmul %177, %178, %cst_70 {dimension_numbers = #tpu.dot_dimension_numbers<[1], [0], [0], [1], [0, 0, 1, 1], [], []>} : vector<8x8xbf16>, vector<8x12xbf16>, vector<8x12xf32> -> vector<8x12xf32>
    %180 = vector.broadcast %134 : vector<1x12xf32> to vector<8x12xf32>
    %181 = arith.addf %179, %180 : vector<8x12xf32>
    %cst_71 = arith.constant dense<0xFF800000> : vector<8xf32>
    %182 = vector.multi_reduction <maximumf>, %181, %cst_71 [1] : vector<8x12xf32> to vector<8xf32>
    %183 = vector.shape_cast %182 : vector<8xf32> to vector<8x1xf32>
    %184 = vector.broadcast %183 : vector<8x1xf32> to vector<8x12xf32>
    %185 = arith.subf %181, %184 : vector<8x12xf32>
    %186 = math.exp %185 : vector<8x12xf32>
    %cst_72 = arith.constant dense<0.000000e+00> : vector<8xf32>
    %187 = vector.multi_reduction <add>, %186, %cst_72 [1] : vector<8x12xf32> to vector<8xf32>
    %188 = vector.shape_cast %187 : vector<8xf32> to vector<8x1xf32>
    %189 = tpu.reciprocal %188 {approx = true} : vector<8x1xf32> -> vector<8x1xf32>
    %190 = vector.broadcast %189 : vector<8x1xf32> to vector<8x12xf32>
    %191 = arith.mulf %186, %190 : vector<8x12xf32>
    %192 = vector.broadcast %130 : vector<1x12xf32> to vector<8x12xf32>
    %193 = arith.mulf %191, %192 : vector<8x12xf32>
    %194 = arith.truncf %193 : vector<8x12xf32> to vector<8x12xbf16>
    %195 = vector.extract_strided_slice %175 {offsets = [0, 0], sizes = [12, 8], strides = [1, 1]} : vector<12x32xbf16> to vector<12x8xbf16>
    %cst_73 = arith.constant dense<0.000000e+00> : vector<8x8xf32>
    %196 = tpu.matmul %194, %195, %cst_73 {dimension_numbers = #tpu.dot_dimension_numbers<[1], [0], [0], [1], [0, 0, 1, 1], [], []>} : vector<8x12xbf16>, vector<12x8xbf16>, vector<8x8xf32> -> vector<8x8xf32>
    %197 = vector.extract_strided_slice %165 {offsets = [0, 8], sizes = [8, 8], strides = [1, 1]} : vector<8x32xbf16> to vector<8x8xbf16>
    %198 = vector.extract_strided_slice %176 {offsets = [8, 0], sizes = [8, 12], strides = [1, 1]} : vector<32x12xbf16> to vector<8x12xbf16>
    %cst_74 = arith.constant dense<0.000000e+00> : vector<8x12xf32>
    %199 = tpu.matmul %197, %198, %cst_74 {dimension_numbers = #tpu.dot_dimension_numbers<[1], [0], [0], [1], [0, 0, 1, 1], [], []>} : vector<8x8xbf16>, vector<8x12xbf16>, vector<8x12xf32> -> vector<8x12xf32>
    %200 = vector.broadcast %134 : vector<1x12xf32> to vector<8x12xf32>
    %201 = arith.addf %199, %200 : vector<8x12xf32>
    %cst_75 = arith.constant dense<0xFF800000> : vector<8xf32>
    %202 = vector.multi_reduction <maximumf>, %201, %cst_75 [1] : vector<8x12xf32> to vector<8xf32>
    %203 = vector.shape_cast %202 : vector<8xf32> to vector<8x1xf32>
    %204 = vector.broadcast %203 : vector<8x1xf32> to vector<8x12xf32>
    %205 = arith.subf %201, %204 : vector<8x12xf32>
    %206 = math.exp %205 : vector<8x12xf32>
    %cst_76 = arith.constant dense<0.000000e+00> : vector<8xf32>
    %207 = vector.multi_reduction <add>, %206, %cst_76 [1] : vector<8x12xf32> to vector<8xf32>
    %208 = vector.shape_cast %207 : vector<8xf32> to vector<8x1xf32>
    %209 = tpu.reciprocal %208 {approx = true} : vector<8x1xf32> -> vector<8x1xf32>
    %210 = vector.broadcast %209 : vector<8x1xf32> to vector<8x12xf32>
    %211 = arith.mulf %206, %210 : vector<8x12xf32>
    %212 = vector.broadcast %130 : vector<1x12xf32> to vector<8x12xf32>
    %213 = arith.mulf %211, %212 : vector<8x12xf32>
    %214 = arith.truncf %213 : vector<8x12xf32> to vector<8x12xbf16>
    %215 = vector.extract_strided_slice %175 {offsets = [0, 8], sizes = [12, 8], strides = [1, 1]} : vector<12x32xbf16> to vector<12x8xbf16>
    %cst_77 = arith.constant dense<0.000000e+00> : vector<8x8xf32>
    %216 = tpu.matmul %214, %215, %cst_77 {dimension_numbers = #tpu.dot_dimension_numbers<[1], [0], [0], [1], [0, 0, 1, 1], [], []>} : vector<8x12xbf16>, vector<12x8xbf16>, vector<8x8xf32> -> vector<8x8xf32>
    %217 = vector.extract_strided_slice %165 {offsets = [0, 16], sizes = [8, 8], strides = [1, 1]} : vector<8x32xbf16> to vector<8x8xbf16>
    %218 = vector.extract_strided_slice %176 {offsets = [16, 0], sizes = [8, 12], strides = [1, 1]} : vector<32x12xbf16> to vector<8x12xbf16>
    %cst_78 = arith.constant dense<0.000000e+00> : vector<8x12xf32>
    %219 = tpu.matmul %217, %218, %cst_78 {dimension_numbers = #tpu.dot_dimension_numbers<[1], [0], [0], [1], [0, 0, 1, 1], [], []>} : vector<8x8xbf16>, vector<8x12xbf16>, vector<8x12xf32> -> vector<8x12xf32>
    %220 = vector.broadcast %134 : vector<1x12xf32> to vector<8x12xf32>
    %221 = arith.addf %219, %220 : vector<8x12xf32>
    %cst_79 = arith.constant dense<0xFF800000> : vector<8xf32>
    %222 = vector.multi_reduction <maximumf>, %221, %cst_79 [1] : vector<8x12xf32> to vector<8xf32>
    %223 = vector.shape_cast %222 : vector<8xf32> to vector<8x1xf32>
    %224 = vector.broadcast %223 : vector<8x1xf32> to vector<8x12xf32>
    %225 = arith.subf %221, %224 : vector<8x12xf32>
    %226 = math.exp %225 : vector<8x12xf32>
    %cst_80 = arith.constant dense<0.000000e+00> : vector<8xf32>
    %227 = vector.multi_reduction <add>, %226, %cst_80 [1] : vector<8x12xf32> to vector<8xf32>
    %228 = vector.shape_cast %227 : vector<8xf32> to vector<8x1xf32>
    %229 = tpu.reciprocal %228 {approx = true} : vector<8x1xf32> -> vector<8x1xf32>
    %230 = vector.broadcast %229 : vector<8x1xf32> to vector<8x12xf32>
    %231 = arith.mulf %226, %230 : vector<8x12xf32>
    %232 = vector.broadcast %130 : vector<1x12xf32> to vector<8x12xf32>
    %233 = arith.mulf %231, %232 : vector<8x12xf32>
    %234 = arith.truncf %233 : vector<8x12xf32> to vector<8x12xbf16>
    %235 = vector.extract_strided_slice %175 {offsets = [0, 16], sizes = [12, 8], strides = [1, 1]} : vector<12x32xbf16> to vector<12x8xbf16>
    %cst_81 = arith.constant dense<0.000000e+00> : vector<8x8xf32>
    %236 = tpu.matmul %234, %235, %cst_81 {dimension_numbers = #tpu.dot_dimension_numbers<[1], [0], [0], [1], [0, 0, 1, 1], [], []>} : vector<8x12xbf16>, vector<12x8xbf16>, vector<8x8xf32> -> vector<8x8xf32>
    %237 = vector.extract_strided_slice %165 {offsets = [0, 24], sizes = [8, 8], strides = [1, 1]} : vector<8x32xbf16> to vector<8x8xbf16>
    %238 = vector.extract_strided_slice %176 {offsets = [24, 0], sizes = [8, 12], strides = [1, 1]} : vector<32x12xbf16> to vector<8x12xbf16>
    %cst_82 = arith.constant dense<0.000000e+00> : vector<8x12xf32>
    %239 = tpu.matmul %237, %238, %cst_82 {dimension_numbers = #tpu.dot_dimension_numbers<[1], [0], [0], [1], [0, 0, 1, 1], [], []>} : vector<8x8xbf16>, vector<8x12xbf16>, vector<8x12xf32> -> vector<8x12xf32>
    %240 = vector.broadcast %134 : vector<1x12xf32> to vector<8x12xf32>
    %241 = arith.addf %239, %240 : vector<8x12xf32>
    %cst_83 = arith.constant dense<0xFF800000> : vector<8xf32>
    %242 = vector.multi_reduction <maximumf>, %241, %cst_83 [1] : vector<8x12xf32> to vector<8xf32>
    %243 = vector.shape_cast %242 : vector<8xf32> to vector<8x1xf32>
    %244 = vector.broadcast %243 : vector<8x1xf32> to vector<8x12xf32>
    %245 = arith.subf %241, %244 : vector<8x12xf32>
    %246 = math.exp %245 : vector<8x12xf32>
    %cst_84 = arith.constant dense<0.000000e+00> : vector<8xf32>
    %247 = vector.multi_reduction <add>, %246, %cst_84 [1] : vector<8x12xf32> to vector<8xf32>
    %248 = vector.shape_cast %247 : vector<8xf32> to vector<8x1xf32>
    %249 = tpu.reciprocal %248 {approx = true} : vector<8x1xf32> -> vector<8x1xf32>
    %250 = vector.broadcast %249 : vector<8x1xf32> to vector<8x12xf32>
    %251 = arith.mulf %246, %250 : vector<8x12xf32>
    %252 = vector.broadcast %130 : vector<1x12xf32> to vector<8x12xf32>
    %253 = arith.mulf %251, %252 : vector<8x12xf32>
    %254 = arith.truncf %253 : vector<8x12xf32> to vector<8x12xbf16>
    %255 = vector.extract_strided_slice %175 {offsets = [0, 24], sizes = [12, 8], strides = [1, 1]} : vector<12x32xbf16> to vector<12x8xbf16>
    %cst_85 = arith.constant dense<0.000000e+00> : vector<8x8xf32>
    %256 = tpu.matmul %254, %255, %cst_85 {dimension_numbers = #tpu.dot_dimension_numbers<[1], [0], [0], [1], [0, 0, 1, 1], [], []>} : vector<8x12xbf16>, vector<12x8xbf16>, vector<8x8xf32> -> vector<8x8xf32>
    %257 = tpu.concatenate %196, %216, %236, %256 in 1 : vector<8x8xf32>, vector<8x8xf32>, vector<8x8xf32>, vector<8x8xf32> -> vector<8x32xf32>
    %c0_86 = arith.constant 0 : index
    %c0_87 = arith.constant 0 : index
    %258 = vector.load %arg17[%c0_86, %c0_87] : memref<32x32xbf16, #tpu.memory_space<vmem>>, vector<32x32xbf16>
    %259 = arith.truncf %257 : vector<8x32xf32> to vector<8x32xbf16>
    %cst_88 = arith.constant dense<0.000000e+00> : vector<8x32xf32>
    %260 = tpu.matmul %259, %258, %cst_88 {dimension_numbers = #tpu.dot_dimension_numbers<[1], [0], [0], [1], [0, 0, 1, 1], [], []>} : vector<8x32xbf16>, vector<32x32xbf16>, vector<8x32xf32> -> vector<8x32xf32>
    %261 = arith.addf %125, %260 : vector<8x32xf32>
    %c0_89 = arith.constant 0 : index
    %c0_90 = arith.constant 0 : index
    %262 = vector.load %arg18[%c0_89, %c0_90] : memref<1x32xf32, #tpu.memory_space<vmem>>, vector<1x32xf32>
    %263 = vector.broadcast %262 : vector<1x32xf32> to vector<8x32xf32>
    %264 = arith.addf %261, %263 : vector<8x32xf32>
    %c0_91 = arith.constant 0 : index
    %c0_92 = arith.constant 0 : index
    %265 = vector.load %arg19[%c0_91, %c0_92] : memref<1x32xf32, #tpu.memory_space<vmem>>, vector<1x32xf32>
    %c0_93 = arith.constant 0 : index
    %c0_94 = arith.constant 0 : index
    %266 = vector.load %arg20[%c0_93, %c0_94] : memref<1x32xf32, #tpu.memory_space<vmem>>, vector<1x32xf32>
    %cst_95 = arith.constant dense<0.000000e+00> : vector<8xf32>
    %267 = vector.multi_reduction <add>, %264, %cst_95 [1] : vector<8x32xf32> to vector<8xf32>
    %268 = vector.shape_cast %267 : vector<8xf32> to vector<8x1xf32>
    %cst_96 = arith.constant 3.200000e+01 : f32
    %269 = vector.broadcast %cst_96 : f32 to vector<8x1xf32>
    %270 = arith.divf %268, %269 : vector<8x1xf32>
    %271 = vector.broadcast %270 : vector<8x1xf32> to vector<8x32xf32>
    %272 = arith.subf %264, %271 : vector<8x32xf32>
    %273 = arith.mulf %272, %272 : vector<8x32xf32>
    %cst_97 = arith.constant dense<0.000000e+00> : vector<8xf32>
    %274 = vector.multi_reduction <add>, %273, %cst_97 [1] : vector<8x32xf32> to vector<8xf32>
    %275 = vector.shape_cast %274 : vector<8xf32> to vector<8x1xf32>
    %cst_98 = arith.constant 3.200000e+01 : f32
    %276 = vector.broadcast %cst_98 : f32 to vector<8x1xf32>
    %277 = arith.divf %275, %276 : vector<8x1xf32>
    %cst_99 = arith.constant 9.99999996E-13 : f32
    %278 = vector.broadcast %cst_99 : f32 to vector<8x1xf32>
    %279 = arith.addf %277, %278 : vector<8x1xf32>
    %280 = math.rsqrt %279 : vector<8x1xf32>
    %281 = vector.broadcast %280 : vector<8x1xf32> to vector<8x32xf32>
    %282 = arith.mulf %272, %281 : vector<8x32xf32>
    %283 = vector.broadcast %265 : vector<1x32xf32> to vector<8x32xf32>
    %284 = arith.mulf %282, %283 : vector<8x32xf32>
    %285 = vector.broadcast %266 : vector<1x32xf32> to vector<8x32xf32>
    %286 = arith.addf %284, %285 : vector<8x32xf32>
    %c0_100 = arith.constant 0 : index
    %c0_101 = arith.constant 0 : index
    %287 = vector.load %arg21[%c0_100, %c0_101] : memref<32x64xbf16, #tpu.memory_space<vmem>>, vector<32x64xbf16>
    %288 = arith.truncf %286 : vector<8x32xf32> to vector<8x32xbf16>
    %cst_102 = arith.constant dense<0.000000e+00> : vector<8x64xf32>
    %289 = tpu.matmul %288, %287, %cst_102 {dimension_numbers = #tpu.dot_dimension_numbers<[1], [0], [0], [1], [0, 0, 1, 1], [], []>} : vector<8x32xbf16>, vector<32x64xbf16>, vector<8x64xf32> -> vector<8x64xf32>
    %c0_103 = arith.constant 0 : index
    %c0_104 = arith.constant 0 : index
    %290 = vector.load %arg22[%c0_103, %c0_104] : memref<1x64xf32, #tpu.memory_space<vmem>>, vector<1x64xf32>
    %291 = vector.broadcast %290 : vector<1x64xf32> to vector<8x64xf32>
    %292 = arith.addf %289, %291 : vector<8x64xf32>
    %cst_105 = arith.constant 0.000000e+00 : f32
    %293 = vector.broadcast %cst_105 : f32 to vector<8x64xf32>
    %294 = arith.maximumf %292, %293 : vector<8x64xf32>
    %c0_106 = arith.constant 0 : index
    %c0_107 = arith.constant 0 : index
    %295 = vector.load %arg23[%c0_106, %c0_107] : memref<64x32xbf16, #tpu.memory_space<vmem>>, vector<64x32xbf16>
    %296 = arith.truncf %294 : vector<8x64xf32> to vector<8x64xbf16>
    %cst_108 = arith.constant dense<0.000000e+00> : vector<8x32xf32>
    %297 = tpu.matmul %296, %295, %cst_108 {dimension_numbers = #tpu.dot_dimension_numbers<[1], [0], [0], [1], [0, 0, 1, 1], [], []>} : vector<8x64xbf16>, vector<64x32xbf16>, vector<8x32xf32> -> vector<8x32xf32>
    %298 = arith.addf %264, %297 : vector<8x32xf32>
    %c0_109 = arith.constant 0 : index
    %c0_110 = arith.constant 0 : index
    %299 = vector.load %arg24[%c0_109, %c0_110] : memref<1x32xf32, #tpu.memory_space<vmem>>, vector<1x32xf32>
    %300 = vector.broadcast %299 : vector<1x32xf32> to vector<8x32xf32>
    %301 = arith.addf %298, %300 : vector<8x32xf32>
    %c0_111 = arith.constant 0 : index
    %c0_112 = arith.constant 0 : index
    %c0_113 = arith.constant 0 : index
    %302 = vector.load %arg25[%c0_111, %c0_112, %c0_113] : memref<1x8x32xf32, #tpu.memory_space<vmem>>, vector<1x8x32xf32>
    %303 = vector.shape_cast %302 : vector<1x8x32xf32> to vector<8x32xf32>
    %304 = vector.shape_cast %301 : vector<8x32xf32> to vector<1x8x32xf32>
    tpu.vector_store %arg25[%c0_111, %c0_112, %c0_113], %304 {strides = array<i32>} : memref<1x8x32xf32, #tpu.memory_space<vmem>>, vector<1x8x32xf32>,
    return
  }
  func.func @transform_0(%arg0: i32) -> (i32, i32, i32) {
    %c0_i32 = arith.constant 0 : i32
    %c0_i32_0 = arith.constant 0 : i32
    %c0_i32_1 = arith.constant 0 : i32
    return %arg0, %c0_i32, %c0_i32_0 : i32, i32, i32
  }
  func.func @transform_1(%arg0: i32) -> (i32, i32, i32) {
    %c0_i32 = arith.constant 0 : i32
    %c0_i32_0 = arith.constant 0 : i32
    %c0_i32_1 = arith.constant 0 : i32
    return %arg0, %c0_i32, %c0_i32_0 : i32, i32, i32
  }
  func.func @transform_2(%arg0: i32) -> (i32, i32, i32) {
    %c0_i32 = arith.constant 0 : i32
    %c0_i32_0 = arith.constant 0 : i32
    %c0_i32_1 = arith.constant 0 : i32
    return %arg0, %c0_i32, %c0_i32_0 : i32, i32, i32
  }
  func.func @transform_3(%arg0: i32) -> (i32, i32, i32) {
    %c0_i32 = arith.constant 0 : i32
    %c0_i32_0 = arith.constant 0 : i32
    %c0_i32_1 = arith.constant 0 : i32
    return %arg0, %c0_i32, %c0_i32_0 : i32, i32, i32
  }
  func.func @transform_4(%arg0: i32) -> (i32, i32) {
    %c0_i32 = arith.constant 0 : i32
    %c0_i32_0 = arith.constant 0 : i32
    %c0_i32_1 = arith.constant 0 : i32
    return %c0_i32, %c0_i32_0 : i32, i32
  }
  func.func @transform_5(%arg0: i32) -> (i32, i32) {
    %c0_i32 = arith.constant 0 : i32
    %c0_i32_0 = arith.constant 0 : i32
    %c0_i32_1 = arith.constant 0 : i32
    return %c0_i32, %c0_i32_0 : i32, i32
  }
  func.func @transform_6(%arg0: i32) -> (i32, i32) {
    %c0_i32 = arith.constant 0 : i32
    %c0_i32_0 = arith.constant 0 : i32
    %c0_i32_1 = arith.constant 0 : i32
    return %c0_i32, %c0_i32_0 : i32, i32
  }
  func.func @transform_7(%arg0: i32) -> (i32, i32) {
    %c0_i32 = arith.constant 0 : i32
    %c0_i32_0 = arith.constant 0 : i32
    %c0_i32_1 = arith.constant 0 : i32
    return %c0_i32, %c0_i32_0 : i32, i32
  }
  func.func @transform_8(%arg0: i32) -> (i32, i32) {
    %c0_i32 = arith.constant 0 : i32
    %c0_i32_0 = arith.constant 0 : i32
    %c0_i32_1 = arith.constant 0 : i32
    return %c0_i32, %c0_i32_0 : i32, i32
  }
  func.func @transform_9(%arg0: i32) -> (i32, i32) {
    %c0_i32 = arith.constant 0 : i32
    %c0_i32_0 = arith.constant 0 : i32
    %c0_i32_1 = arith.constant 0 : i32
    return %c0_i32, %c0_i32_0 : i32, i32
  }
  func.func @transform_10(%arg0: i32) -> (i32, i32) {
    %c0_i32 = arith.constant 0 : i32
    %c0_i32_0 = arith.constant 0 : i32
    %c0_i32_1 = arith.constant 0 : i32
    return %c0_i32, %c0_i32_0 : i32, i32
  }
  func.func @transform_11(%arg0: i32) -> (i32, i32) {
    %c0_i32 = arith.constant 0 : i32
    %c0_i32_0 = arith.constant 0 : i32
    %c0_i32_1 = arith.constant 0 : i32
    return %c0_i32, %c0_i32_0 : i32, i32
  }
  func.func @transform_12(%arg0: i32) -> (i32, i32) {
    %c0_i32 = arith.constant 0 : i32
    %c0_i32_0 = arith.constant 0 : i32
    %c0_i32_1 = arith.constant 0 : i32
    return %c0_i32, %c0_i32_0 : i32, i32
  }
  func.func @transform_13(%arg0: i32) -> (i32, i32) {
    %c0_i32 = arith.constant 0 : i32
    %c0_i32_0 = arith.constant 0 : i32
    %c0_i32_1 = arith.constant 0 : i32
    return %c0_i32, %c0_i32_0 : i32, i32
  }
  func.func @transform_14(%arg0: i32) -> (i32, i32) {
    %c0_i32 = arith.constant 0 : i32
    %c0_i32_0 = arith.constant 0 : i32
    %c0_i32_1 = arith.constant 0 : i32
    return %c0_i32, %c0_i32_0 : i32, i32
  }
  func.func @transform_15(%arg0: i32) -> (i32, i32) {
    %c0_i32 = arith.constant 0 : i32
    %c0_i32_0 = arith.constant 0 : i32
    %c0_i32_1 = arith.constant 0 : i32
    return %c0_i32, %c0_i32_0 : i32, i32
  }
  func.func @transform_16(%arg0: i32) -> (i32, i32) {
    %c0_i32 = arith.constant 0 : i32
    %c0_i32_0 = arith.constant 0 : i32
    %c0_i32_1 = arith.constant 0 : i32
    return %c0_i32, %c0_i32_0 : i32, i32
  }
  func.func @transform_17(%arg0: i32) -> (i32, i32) {
    %c0_i32 = arith.constant 0 : i32
    %c0_i32_0 = arith.constant 0 : i32
    %c0_i32_1 = arith.constant 0 : i32
    return %c0_i32, %c0_i32_0 : i32, i32
  }
  func.func @transform_18(%arg0: i32) -> (i32, i32) {
    %c0_i32 = arith.constant 0 : i32
    %c0_i32_0 = arith.constant 0 : i32
    %c0_i32_1 = arith.constant 0 : i32
    return %c0_i32, %c0_i32_0 : i32, i32
  }
  func.func @transform_19(%arg0: i32) -> (i32, i32) {
    %c0_i32 = arith.constant 0 : i32
    %c0_i32_0 = arith.constant 0 : i32
    %c0_i32_1 = arith.constant 0 : i32
    return %c0_i32, %c0_i32_0 : i32, i32
  }
  func.func @transform_20(%arg0: i32) -> (i32, i32) {
    %c0_i32 = arith.constant 0 : i32
    %c0_i32_0 = arith.constant 0 : i32
    %c0_i32_1 = arith.constant 0 : i32
    return %c0_i32, %c0_i32_0 : i32, i32
  }
  func.func @transform_21(%arg0: i32) -> (i32, i32) {
    %c0_i32 = arith.constant 0 : i32
    %c0_i32_0 = arith.constant 0 : i32
    %c0_i32_1 = arith.constant 0 : i32
    return %c0_i32, %c0_i32_0 : i32, i32
  }
  func.func @transform_22(%arg0: i32) -> (i32, i32) {
    %c0_i32 = arith.constant 0 : i32
    %c0_i32_0 = arith.constant 0 : i32
    %c0_i32_1 = arith.constant 0 : i32
    return %c0_i32, %c0_i32_0 : i32, i32
  }
  func.func @transform_23(%arg0: i32) -> (i32, i32) {
    %c0_i32 = arith.constant 0 : i32
    %c0_i32_0 = arith.constant 0 : i32
    %c0_i32_1 = arith.constant 0 : i32
    return %c0_i32, %c0_i32_0 : i32, i32
  }
  func.func @transform_24(%arg0: i32) -> (i32, i32, i32) {
    %c0_i32 = arith.constant 0 : i32
    %c0_i32_0 = arith.constant 0 : i32
    %c0_i32_1 = arith.constant 0 : i32
    return %arg0, %c0_i32, %c0_i32_0 : i32, i32, i32
  }
}

</mosaic_0001>

<llo_original>
// kernel: transformer_decoder_forward.5
$region0: #{transformer_decoder_forward.5}
  #allocation0 [shape = 'u32[]', space=smem, size = 0x4, offset = 0x4, fixed_abs, tag = 'smem constant byte address 0x4 - core index']
  #allocation1 [shape = 'u32[144,128]{1,0:T(1,128)}', space=vmem, size = 0x12000, scoped, tag = 'internal scratch']
  %s0 = inlined_call_operand.vmem [shape: f32[16,32], index: 0, kind: input, shape index: {}]
  %s1 = inlined_call_operand.vmem [shape: f32[1,32], index: 1, kind: input, shape index: {}]
  %s2 = inlined_call_operand.vmem [shape: f32[1,32], index: 2, kind: input, shape index: {}]
  %s3 = inlined_call_operand.vmem [shape: bf16[32,64], index: 3, kind: input, shape index: {}]
  %s4 = inlined_call_operand.vmem [shape: f32[1,64], index: 4, kind: input, shape index: {}]
  %s5 = inlined_call_operand.hbm [shape: f32[16,32], index: 5, kind: output, shape index: {0}]
  %s6 = inlined_call_operand.hbm [shape: f32[16,64], index: 6, kind: output, shape index: {1}]
  %7 = xla_tuple %s5, %s6
  %s8 = sld [smem:[#allocation0]]
  $region38: #{transformer_decoder_forward.5} parent=0
    _
  %s10 = ssub.s32 1, %s8
  %s11 = scalar_select 0, %s10, %s8
  $region1: #{transformer_decoder_forward.5} parent=0
    #allocation2 [shape = 'u8[8192]{0}', space=vmem, size = 0x2000, scoped, tag = 'output window, operand 0, single buffered']
    #allocation3 [shape = 's32[1]{0}', space=sflag, size = 0x4, scoped, tag = 'scoped memory for transformer_decoder_forward.5']
    #allocation4 [shape = 'u8[8192]{0}', space=vmem, size = 0x2000, scoped, tag = 'output window, operand 1, single buffered']
    #allocation5 [shape = 's32[1]{0}', space=sflag, size = 0x4, scoped, tag = 'scoped memory for transformer_decoder_forward.5']
    %12 = vsyncpa [#allocation3], 0
    %13 = vsyncpa [#allocation5], 0
    // Predicated region
    $region2: #{transformer_decoder_forward.5} parent=1 // pred_check
      _
    $region3: #{transformer_decoder_forward.5} parent=1 // pred_check_branch
      %15 = sbr.rel (0) target = $region5
    $region4: #{transformer_decoder_forward.5} parent=1 // pred_region
      _
    $region5: #{transformer_decoder_forward.5} parent=1 // pred_fallthru
      _
    // Predicated region
    $region6: #{transformer_decoder_forward.5} parent=1 // pred_check
      _
    $region7: #{transformer_decoder_forward.5} parent=1 // pred_check_branch
      %17 = sbr.rel (0) target = $region9
    $region8: #{transformer_decoder_forward.5} parent=1 // pred_region
      _
    $region9: #{transformer_decoder_forward.5} parent=1 // pred_fallthru
      _
    // Predicated region
    $region10: #{transformer_decoder_forward.5} parent=1 // pred_check
      _
    $region11: #{transformer_decoder_forward.5} parent=1 // pred_check_branch
      %19 = sbr.rel (0) target = $region13
    $region12: #{transformer_decoder_forward.5} parent=1 // pred_region
      _
    $region13: #{transformer_decoder_forward.5} parent=1 // pred_fallthru
      _
    // Predicated region
    $region14: #{transformer_decoder_forward.5} parent=1 // pred_check
      _
    $region15: #{transformer_decoder_forward.5} parent=1 // pred_check_branch
      %21 = sbr.rel (0) target = $region17
    $region16: #{transformer_decoder_forward.5} parent=1 // pred_region
      _
    $region17: #{transformer_decoder_forward.5} parent=1 // pred_fallthru
      _
    // Predicated region
    $region18: #{transformer_decoder_forward.5} parent=1 // pred_check
      _
    $region19: #{transformer_decoder_forward.5} parent=1 // pred_check_branch
      %23 = sbr.rel (0) target = $region21
    $region20: #{transformer_decoder_forward.5} parent=1 // pred_region
      _
    $region21: #{transformer_decoder_forward.5} parent=1 // pred_fallthru
      _
    %v25 = vld [vmem:[%s0] sm:$0xff]
    %v26 = vld [vmem:[%s0 + $0x8] sm:$0xff]
    %v27 = vld [vmem:[%s1] sm:$0x1]
    %v28 = vld [vmem:[%s2] sm:$0x1]
    %vm29 = vcmask 261120
    %v30 = vsel %vm29, %v25, 0.0
    %31 = vadd.xlane.f32.xlu0 %v30
    %v32 = vpop.xlane.xlu0 %31
    %v33 = vsel %vm29, %v26, 0.0
    %34 = vadd.xlane.f32.xlu0 %v33
    %v35 = vpop.xlane.xlu0 %34
    %v36 = vrcp.pop 32.0
    %v37 = vmul.f32 %v32, %v36
    %v38 = vmul.f32 %v35, %v36
    %v39 = vsub.f32 %v25, %v37
    %v40 = vsub.f32 %v26, %v38
    %v41 = vmul.f32 %v39, %v39
    %v42 = vmul.f32 %v40, %v40
    %v43 = vsel %vm29, %v41, 0.0
    %44 = vadd.xlane.f32.xlu0 %v43
    %v45 = vpop.xlane.xlu0 %44
    %v46 = vsel %vm29, %v42, 0.0
    %47 = vadd.xlane.f32.xlu0 %v46
    %v48 = vpop.xlane.xlu0 %47
    %v49 = vmul.f32 %v45, %v36
    %v50 = vmul.f32 %v48, %v36
    %v51 = vadd.f32 %v49, 1e-12
    %v52 = vadd.f32 %v50, 1e-12
    %v53 = vrsqrt.pop %v51
    %v54 = vrsqrt.pop %v52
    %v55 = vmul.f32 %v39, %v53
    %v56 = vmul.f32 %v40, %v54
    %v58 = vlaneseq
    %v59 = vshrl.u32 %v58, 7
    %v60 = vsub.s32 0, %v59
    %v61 = vrot.slane %v27, %v60
    %v63 = vmul.f32 %v55, %v61
    %v64 = vmul.f32 %v56, %v61
    %v66 = vlaneseq
    %v67 = vshrl.u32 %v66, 7
    %v68 = vsub.s32 0, %v67
    %v69 = vrot.slane %v28, %v68
    %v71 = vadd.f32 %v63, %v69
    %v72 = vadd.f32 %v64, %v69
    %73 = vst.msk [vmem:[#allocation2] sm:$0xff] %vm29, %v71
    %74 = vst.msk [vmem:[#allocation2 + $0x8] sm:$0xff] %vm29, %v72
    %v75 = vld [vmem:[%s3] sm:$0xf]
    %v76 = vld [vmem:[%s3 + $0x4] sm:$0xf]
    %v77 = vld [vmem:[%s3 + $0x8] sm:$0xf]
    %v78 = vld [vmem:[%s3 + $0xc] sm:$0xf]
    %v79 = vpack.c.bf16 %v72, %v71
    %v80 = vld [vmem:[%s4] sm:$0x1]
    %v82 = vlaneseq
    %v83 = vshrl.u32 %v82, 7
    %v84 = vsub.s32 0, %v83
    %v85 = vrot.slane %v80, %v84
    %v91 = vunpack.c.l.b16 %v75
    %v92 = vunpack.c.l.b16 %v76
    %v93 = vunpack.c.l.b16 %v77
    %v94 = vunpack.c.l.b16 %v78
    %v95 = vpack.c.b16 %v92, %v91
    %v96 = vpack.c.b16 %v94, %v93
    %v100 = vsel %vm29, %v79, 0
    %102 = vmatprep.subr.bf16.mxu0 0
    %103 = vmatpush1.bf16.msra.mxu0 0
    %104 = vmatprep.subr.bf16.mxu0 0
    %105 = vmatpush1.bf16.msra.mxu0 0
    %106 = vmatprep.subr.bf16.mxu0 0
    %107 = vmatpush1.bf16.msra.mxu0 0
    %108 = vmatprep.subr.bf16.mxu0 0
    %109 = vmatpush1.bf16.msra.mxu0 0
    %110 = vmatprep.subr.bf16.mxu0 0
    %111 = vmatpush1.bf16.msra.mxu0 0
    %112 = vmatprep.subr.bf16.mxu0 0
    %113 = vmatpush1.bf16.msra.mxu0 0
    %114 = vmatprep.subr.bf16.mxu0 0
    %115 = vmatpush1.bf16.msra.mxu0 %v96
    %116 = vmatprep.subr.bf16.mxu0 0
    %117 = vmatpush1.bf16.msra.mxu0 %v95
    %118 = vmatprep.subr.bf16.mxu0 0
    %119 = vmatpush2.bf16.msra.mxu0 0
    %120 = vmatprep.subr.bf16.mxu0 0
    %121 = vmatpush2.bf16.msra.mxu0 0
    %122 = vmatprep.subr.bf16.mxu0 0
    %123 = vmatpush2.bf16.msra.mxu0 0
    %124 = vmatprep.subr.bf16.mxu0 0
    %125 = vmatpush2.bf16.msra.mxu0 0
    %126 = vmatprep.subr.bf16.mxu0 0
    %127 = vmatpush2.bf16.msra.mxu0 0
    %128 = vmatprep.subr.bf16.mxu0 0
    %129 = vmatpush2.bf16.msra.mxu0 0
    %130 = vmatprep.subr.bf16.mxu0 0
    %131 = vmatpush2.bf16.msra.mxu0 0
    %132 = vmatprep.subr.bf16.mxu0 0
    %133 = vmatpush2.bf16.msra.mxu0 0
    %134 = vmatprep.mubr.bf16.mxu0 0
    %135 = vmatmul.mubr.bf16.gmra.mxu0 %v100
    %v136 = vpop.f32.mrf.mxu0
    %v137 = vadd.f32 %v85, %v136
    %v138 = vpop.f32.mrf.mxu0
    %v139 = vpop.f32.mrf.mxu0
    %v140 = vadd.f32 %v85, %v139
    %v141 = vpop.f32.mrf.mxu0
    %142 = vdwg.mxu0
    %vm143 = vcmask 523264
    %144 = vst.msk [vmem:[#allocation4] sm:$0xff] %vm143, %v137
    %145 = vst.msk [vmem:[#allocation4 + $0x8] sm:$0xff] %vm143, %v140
    // Predicated region
    $region22: #{transformer_decoder_forward.5} parent=1 // pred_check
      _
    $region23: #{transformer_decoder_forward.5} parent=1 // pred_check_branch
      %147 = sbr.rel (0) target = $region25
    $region24: #{transformer_decoder_forward.5} parent=1 // pred_region
      %s149 = ssub.s32 256, 256
      %150 = vsyncadd [#allocation3], %s149
      %s151 = sshll.u32 [#allocation2], 4
      %s152 = int_to_ptr.vmem [resolvable:$true] %s151
      %157 = dma.vmem_to_hbm [thread:$0]  %s152, 256, %s5, [#allocation3], 128, 128, 8
    $region25: #{transformer_decoder_forward.5} parent=1 // pred_fallthru
      _
    // Predicated region
    $region26: #{transformer_decoder_forward.5} parent=1 // pred_check
      _
    $region27: #{transformer_decoder_forward.5} parent=1 // pred_check_branch
      %159 = sbr.rel (0) target = $region29
    $region28: #{transformer_decoder_forward.5} parent=1 // pred_region
      %s161 = ssub.s32 256, 256
      %162 = vsyncadd [#allocation5], %s161
      %s163 = sshll.u32 [#allocation4], 4
      %s164 = int_to_ptr.vmem [resolvable:$true] %s163
      %169 = dma.vmem_to_hbm [thread:$0]  %s164, 256, %s6, [#allocation5], 128, 128, 8
    $region29: #{transformer_decoder_forward.5} parent=1 // pred_fallthru
      _
    // Predicated region
    $region30: #{transformer_decoder_forward.5} parent=1 // pred_check
      _
    $region31: #{transformer_decoder_forward.5} parent=1 // pred_check_branch
      %171 = sbr.rel (0) target = $region33
    $region32: #{transformer_decoder_forward.5} parent=1 // pred_region
      %172 = dma.done [#allocation3], 256
    $region33: #{transformer_decoder_forward.5} parent=1 // pred_fallthru
      _
    // Predicated region
    $region34: #{transformer_decoder_forward.5} parent=1 // pred_check
      _
    $region35: #{transformer_decoder_forward.5} parent=1 // pred_check_branch
      %174 = sbr.rel (0) target = $region37
    $region36: #{transformer_decoder_forward.5} parent=1 // pred_region
      %175 = dma.done [#allocation5], 256
    $region37: #{transformer_decoder_forward.5} parent=1 // pred_fallthru
      _
    %176 = vsyncpa [#allocation3], 1
    %177 = vsyncpa [#allocation5], 1

// kernel: transformer_decoder_forward.3
$region0: #{transformer_decoder_forward.3}
  #allocation0 [shape = 'u32[]', space=smem, size = 0x4, offset = 0x4, fixed_abs, tag = 'smem constant byte address 0x4 - core index']
  #allocation1 [shape = 'u32[144,128]{1,0:T(1,128)}', space=vmem, size = 0x12000, scoped, tag = 'internal scratch']
  %s0 = inlined_call_operand.vmem [shape: f32[2,8,32], index: 0, kind: input, shape index: {}]
  %s1 = inlined_call_operand.vmem [shape: bf16[2,8,8], index: 1, kind: input, shape index: {}]
  %s2 = inlined_call_operand.vmem [shape: f32[2,12,32], index: 2, kind: input, shape index: {}]
  %s3 = inlined_call_operand.vmem [shape: bf16[2,1,12], index: 3, kind: input, shape index: {}]
  %s4 = inlined_call_operand.vmem [shape: f32[1,32], index: 4, kind: input, shape index: {}]
  %s5 = inlined_call_operand.vmem [shape: f32[1,32], index: 5, kind: input, shape index: {}]
  %s6 = inlined_call_operand.vmem [shape: bf16[32,96], index: 6, kind: input, shape index: {}]
  %s7 = inlined_call_operand.vmem [shape: f32[1,96], index: 7, kind: input, shape index: {}]
  %s8 = inlined_call_operand.vmem [shape: bf16[32,32], index: 8, kind: input, shape index: {}]
  %s9 = inlined_call_operand.vmem [shape: f32[1,32], index: 9, kind: input, shape index: {}]
  %s10 = inlined_call_operand.vmem [shape: f32[1,32], index: 10, kind: input, shape index: {}]
  %s11 = inlined_call_operand.vmem [shape: f32[1,32], index: 11, kind: input, shape index: {}]
  %s12 = inlined_call_operand.vmem [shape: bf16[32,32], index: 12, kind: input, shape index: {}]
  %s13 = inlined_call_operand.vmem [shape: f32[1,32], index: 13, kind: input, shape index: {}]
  %s14 = inlined_call_operand.vmem [shape: bf16[32,64], index: 14, kind: input, shape index: {}]
  %s15 = inlined_call_operand.vmem [shape: f32[1,64], index: 15, kind: input, shape index: {}]
  %s16 = inlined_call_operand.vmem [shape: bf16[32,32], index: 16, kind: input, shape index: {}]
  %s17 = inlined_call_operand.vmem [shape: f32[1,32], index: 17, kind: input, shape index: {}]
  %s18 = inlined_call_operand.vmem [shape: f32[1,32], index: 18, kind: input, shape index: {}]
  %s19 = inlined_call_operand.vmem [shape: f32[1,32], index: 19, kind: input, shape index: {}]
  %s20 = inlined_call_operand.vmem [shape: bf16[32,64], index: 20, kind: input, shape index: {}]
  %s21 = inlined_call_operand.vmem [shape: f32[1,64], index: 21, kind: input, shape index: {}]
  %s22 = inlined_call_operand.vmem [shape: bf16[64,32], index: 22, kind: input, shape index: {}]
  %s23 = inlined_call_operand.vmem [shape: f32[1,32], index: 23, kind: input, shape index: {}]
  %s24 = inlined_call_operand.vmem [shape: f32[2,8,32], index: 24, kind: output, shape index: {}]
  %s25 = sld [smem:[#allocation0]]
  $region129: #{transformer_decoder_forward.3} parent=0
    _
  %s27 = ssub.s32 1, %s25
  %s28 = scalar_select 0, %s27, %s25
  loop: start=0, step=1, limit=4
  $region2: #{transformer_decoder_forward.3} parent=0 // loop_pre_header
    _
  $region3: #{transformer_decoder_forward.3} parent=0 // loop_header
    %s30 = sphi 0, %s34
    %p31 = scmp.ge.s32.totalorder %s30, 4
    %s40 = sphi 0, %s42
    %s43 = sphi 0, %s40
    %s44 = sphi 0, %s43
    %s60 = sphi 0, %s44
    %s66 = sphi 0, %s68
    %s69 = sphi 0, %s66
    %s70 = sphi 0, %s69
    %s86 = sphi 0, %s70
    %s92 = sphi 0, %s94
    %s95 = sphi 0, %s92
    %s96 = sphi 0, %s95
    %s112 = sphi 0, %s96
    %s118 = sphi 0, %s120
    %s121 = sphi 0, %s118
    %s122 = sphi 0, %s121
    %s138 = sphi 0, %s122
    %s142 = sphi 0, %s142
    %s144 = sphi 0, %s142
    %s145 = sphi 0, %s144
    %s159 = sphi 0, %s145
    %s163 = sphi 0, %s163
    %s165 = sphi 0, %s163
    %s166 = sphi 0, %s165
    %s180 = sphi 0, %s166
    %s184 = sphi 0, %s184
    %s186 = sphi 0, %s184
    %s187 = sphi 0, %s186
    %s201 = sphi 0, %s187
    %s205 = sphi 0, %s205
    %s207 = sphi 0, %s205
    %s208 = sphi 0, %s207
    %s222 = sphi 0, %s208
    %s226 = sphi 0, %s226
    %s228 = sphi 0, %s226
    %s229 = sphi 0, %s228
    %s243 = sphi 0, %s229
    %s247 = sphi 0, %s247
    %s249 = sphi 0, %s247
    %s250 = sphi 0, %s249
    %s264 = sphi 0, %s250
    %s268 = sphi 0, %s268
    %s270 = sphi 0, %s268
    %s271 = sphi 0, %s270
    %s285 = sphi 0, %s271
    %s289 = sphi 0, %s289
    %s291 = sphi 0, %s289
    %s292 = sphi 0, %s291
    %s306 = sphi 0, %s292
    %s310 = sphi 0, %s310
    %s312 = sphi 0, %s310
    %s313 = sphi 0, %s312
    %s327 = sphi 0, %s313
    %s331 = sphi 0, %s331
    %s333 = sphi 0, %s331
    %s334 = sphi 0, %s333
    %s348 = sphi 0, %s334
    %s352 = sphi 0, %s352
    %s354 = sphi 0, %s352
    %s355 = sphi 0, %s354
    %s369 = sphi 0, %s355
    %s373 = sphi 0, %s373
    %s375 = sphi 0, %s373
    %s376 = sphi 0, %s375
    %s390 = sphi 0, %s376
    %s394 = sphi 0, %s394
    %s396 = sphi 0, %s394
    %s397 = sphi 0, %s396
    %s411 = sphi 0, %s397
    %s415 = sphi 0, %s415
    %s417 = sphi 0, %s415
    %s418 = sphi 0, %s417
    %s432 = sphi 0, %s418
    %s436 = sphi 0, %s436
    %s438 = sphi 0, %s436
    %s439 = sphi 0, %s438
    %s453 = sphi 0, %s439
    %s457 = sphi 0, %s457
    %s459 = sphi 0, %s457
    %s460 = sphi 0, %s459
    %s474 = sphi 0, %s460
    %s478 = sphi 0, %s478
    %s480 = sphi 0, %s478
    %s481 = sphi 0, %s480
    %s495 = sphi 0, %s481
    %s499 = sphi 0, %s499
    %s501 = sphi 0, %s499
    %s502 = sphi 0, %s501
    %s516 = sphi 0, %s502
    %s520 = sphi 0, %s520
    %s522 = sphi 0, %s520
    %s523 = sphi 0, %s522
    %s537 = sphi 0, %s523
    %s541 = sphi 0, %s541
    %s543 = sphi 0, %s541
    %s544 = sphi 0, %s543
    %s558 = sphi 0, %s544
    %s564 = sphi 0, %s566
    %s567 = sphi 0, %s564
    %s568 = sphi 0, %s567
    %s584 = sphi 0, %s568
  $region4: #{transformer_decoder_forward.3} parent=0 // loop_header_branch
    %33 = sbr.rel (%p31) target = $region8
  $region5: #{transformer_decoder_forward.3} parent=0 // loop_body
    %s35 = ssub.s32 %s30, 1
    %s36 = ssub.s32 %s30, 2
    %s37 = sadd.s32 %s30, 1
    %s38 = ssub.s32 %s30, %s37
    %p39 = scmp.eq.s32.totalorder %s38, 0
    %s41 = sadd.s32 %s40, 1
    %s42 = scalar_select %p39, %s40, %s41
    %p45 = pneg %p39
    %p46 = scmp.eq.s32.totalorder %s30, 1
    %p47 = por %p45, %p46
    %p48 = scmp.ne.s32.totalorder %s40, %s43
    %p49 = scmp.eq.s32.totalorder %s30, 0
    %p50 = por %p48, %p49
    %p51 = scmp.ne.s32.totalorder %s40, %s43
    %p52 = scmp.eq.s32.totalorder %s35, 1
    %p53 = por %p51, %p52
    %p54 = scmp.ne.s32.totalorder %s43, %s44
    %p55 = scmp.eq.s32.totalorder %s35, 0
    %p56 = por %p54, %p55
    %p57 = scmp.ne.s32.totalorder %s43, %s44
    %p58 = scmp.eq.s32.totalorder %s36, 1
    %p59 = por %p57, %p58
    %p61 = scmp.ne.s32.totalorder %s44, %s60
    %p62 = scmp.eq.s32.totalorder %s36, 0
    %p63 = por %p61, %p62
    %s64 = ssub.s32 %s30, %s37
    %p65 = scmp.eq.s32.totalorder %s64, 0
    %s67 = sadd.s32 %s66, 1
    %s68 = scalar_select %p65, %s66, %s67
    %p71 = pneg %p65
    %p72 = scmp.eq.s32.totalorder %s30, 1
    %p73 = por %p71, %p72
    %p74 = scmp.ne.s32.totalorder %s66, %s69
    %p75 = scmp.eq.s32.totalorder %s30, 0
    %p76 = por %p74, %p75
    %p77 = scmp.ne.s32.totalorder %s66, %s69
    %p78 = scmp.eq.s32.totalorder %s35, 1
    %p79 = por %p77, %p78
    %p80 = scmp.ne.s32.totalorder %s69, %s70
    %p81 = scmp.eq.s32.totalorder %s35, 0
    %p82 = por %p80, %p81
    %p83 = scmp.ne.s32.totalorder %s69, %s70
    %p84 = scmp.eq.s32.totalorder %s36, 1
    %p85 = por %p83, %p84
    %p87 = scmp.ne.s32.totalorder %s70, %s86
    %p88 = scmp.eq.s32.totalorder %s36, 0
    %p89 = por %p87, %p88
    %s90 = ssub.s32 %s30, %s37
    %p91 = scmp.eq.s32.totalorder %s90, 0
    %s93 = sadd.s32 %s92, 1
    %s94 = scalar_select %p91, %s92, %s93
    %p97 = pneg %p91
    %p98 = scmp.eq.s32.totalorder %s30, 1
    %p99 = por %p97, %p98
    %p100 = scmp.ne.s32.totalorder %s92, %s95
    %p101 = scmp.eq.s32.totalorder %s30, 0
    %p102 = por %p100, %p101
    %p103 = scmp.ne.s32.totalorder %s92, %s95
    %p104 = scmp.eq.s32.totalorder %s35, 1
    %p105 = por %p103, %p104
    %p106 = scmp.ne.s32.totalorder %s95, %s96
    %p107 = scmp.eq.s32.totalorder %s35, 0
    %p108 = por %p106, %p107
    %p109 = scmp.ne.s32.totalorder %s95, %s96
    %p110 = scmp.eq.s32.totalorder %s36, 1
    %p111 = por %p109, %p110
    %p113 = scmp.ne.s32.totalorder %s96, %s112
    %p114 = scmp.eq.s32.totalorder %s36, 0
    %p115 = por %p113, %p114
    %s116 = ssub.s32 %s30, %s37
    %p117 = scmp.eq.s32.totalorder %s116, 0
    %s119 = sadd.s32 %s118, 1
    %s120 = scalar_select %p117, %s118, %s119
    %p123 = pneg %p117
    %p124 = scmp.eq.s32.totalorder %s30, 1
    %p125 = por %p123, %p124
    %p126 = scmp.ne.s32.totalorder %s118, %s121
    %p127 = scmp.eq.s32.totalorder %s30, 0
    %p128 = por %p126, %p127
    %p129 = scmp.ne.s32.totalorder %s118, %s121
    %p130 = scmp.eq.s32.totalorder %s35, 1
    %p131 = por %p129, %p130
    %p132 = scmp.ne.s32.totalorder %s121, %s122
    %p133 = scmp.eq.s32.totalorder %s35, 0
    %p134 = por %p132, %p133
    %p135 = scmp.ne.s32.totalorder %s121, %s122
    %p136 = scmp.eq.s32.totalorder %s36, 1
    %p137 = por %p135, %p136
    %p139 = scmp.ne.s32.totalorder %s122, %s138
    %p140 = scmp.eq.s32.totalorder %s36, 0
    %p141 = por %p139, %p140
    %s143 = sadd.s32 %s142, 1
    %p146 = scmp.eq.s32.totalorder %s30, 1
    %p147 = scmp.ne.s32.totalorder %s142, %s144
    %p148 = scmp.eq.s32.totalorder %s30, 0
    %p149 = por %p147, %p148
    %p150 = scmp.ne.s32.totalorder %s142, %s144
    %p151 = scmp.eq.s32.totalorder %s35, 1
    %p152 = por %p150, %p151
    %p153 = scmp.ne.s32.totalorder %s144, %s145
    %p154 = scmp.eq.s32.totalorder %s35, 0
    %p155 = por %p153, %p154
    %p156 = scmp.ne.s32.totalorder %s144, %s145
    %p157 = scmp.eq.s32.totalorder %s36, 1
    %p158 = por %p156, %p157
    %p160 = scmp.ne.s32.totalorder %s145, %s159
    %p161 = scmp.eq.s32.totalorder %s36, 0
    %p162 = por %p160, %p161
    %s164 = sadd.s32 %s163, 1
    %p167 = scmp.eq.s32.totalorder %s30, 1
    %p168 = scmp.ne.s32.totalorder %s163, %s165
    %p169 = scmp.eq.s32.totalorder %s30, 0
    %p170 = por %p168, %p169
    %p171 = scmp.ne.s32.totalorder %s163, %s165
    %p172 = scmp.eq.s32.totalorder %s35, 1
    %p173 = por %p171, %p172
    %p174 = scmp.ne.s32.totalorder %s165, %s166
    %p175 = scmp.eq.s32.totalorder %s35, 0
    %p176 = por %p174, %p175
    %p177 = scmp.ne.s32.totalorder %s165, %s166
    %p178 = scmp.eq.s32.totalorder %s36, 1
    %p179 = por %p177, %p178
    %p181 = scmp.ne.s32.totalorder %s166, %s180
    %p182 = scmp.eq.s32.totalorder %s36, 0
    %p183 = por %p181, %p182
    %s185 = sadd.s32 %s184, 1
    %p188 = scmp.eq.s32.totalorder %s30, 1
    %p189 = scmp.ne.s32.totalorder %s184, %s186
    %p190 = scmp.eq.s32.totalorder %s30, 0
    %p191 = por %p189, %p190
    %p192 = scmp.ne.s32.totalorder %s184, %s186
    %p193 = scmp.eq.s32.totalorder %s35, 1
    %p194 = por %p192, %p193
    %p195 = scmp.ne.s32.totalorder %s186, %s187
    %p196 = scmp.eq.s32.totalorder %s35, 0
    %p197 = por %p195, %p196
    %p198 = scmp.ne.s32.totalorder %s186, %s187
    %p199 = scmp.eq.s32.totalorder %s36, 1
    %p200 = por %p198, %p199
    %p202 = scmp.ne.s32.totalorder %s187, %s201
    %p203 = scmp.eq.s32.totalorder %s36, 0
    %p204 = por %p202, %p203
    %s206 = sadd.s32 %s205, 1
    %p209 = scmp.eq.s32.totalorder %s30, 1
    %p210 = scmp.ne.s32.totalorder %s205, %s207
    %p211 = scmp.eq.s32.totalorder %s30, 0
    %p212 = por %p210, %p211
    %p213 = scmp.ne.s32.totalorder %s205, %s207
    %p214 = scmp.eq.s32.totalorder %s35, 1
    %p215 = por %p213, %p214
    %p216 = scmp.ne.s32.totalorder %s207, %s208
    %p217 = scmp.eq.s32.totalorder %s35, 0
    %p218 = por %p216, %p217
    %p219 = scmp.ne.s32.totalorder %s207, %s208
    %p220 = scmp.eq.s32.totalorder %s36, 1
    %p221 = por %p219, %p220
    %p223 = scmp.ne.s32.totalorder %s208, %s222
    %p224 = scmp.eq.s32.totalorder %s36, 0
    %p225 = por %p223, %p224
    %s227 = sadd.s32 %s226, 1
    %p230 = scmp.eq.s32.totalorder %s30, 1
    %p231 = scmp.ne.s32.totalorder %s226, %s228
    %p232 = scmp.eq.s32.totalorder %s30, 0
    %p233 = por %p231, %p232
    %p234 = scmp.ne.s32.totalorder %s226, %s228
    %p235 = scmp.eq.s32.totalorder %s35, 1
    %p236 = por %p234, %p235
    %p237 = scmp.ne.s32.totalorder %s228, %s229
    %p238 = scmp.eq.s32.totalorder %s35, 0
    %p239 = por %p237, %p238
    %p240 = scmp.ne.s32.totalorder %s228, %s229
    %p241 = scmp.eq.s32.totalorder %s36, 1
    %p242 = por %p240, %p241
    %p244 = scmp.ne.s32.totalorder %s229, %s243
    %p245 = scmp.eq.s32.totalorder %s36, 0
    %p246 = por %p244, %p245
    %s248 = sadd.s32 %s247, 1
    %p251 = scmp.eq.s32.totalorder %s30, 1
    %p252 = scmp.ne.s32.totalorder %s247, %s249
    %p253 = scmp.eq.s32.totalorder %s30, 0
    %p254 = por %p252, %p253
    %p255 = scmp.ne.s32.totalorder %s247, %s249
    %p256 = scmp.eq.s32.totalorder %s35, 1
    %p257 = por %p255, %p256
    %p258 = scmp.ne.s32.totalorder %s249, %s250
    %p259 = scmp.eq.s32.totalorder %s35, 0
    %p260 = por %p258, %p259
    %p261 = scmp.ne.s32.totalorder %s249, %s250
    %p262 = scmp.eq.s32.totalorder %s36, 1
    %p263 = por %p261, %p262
    %p265 = scmp.ne.s32.totalorder %s250, %s264
    %p266 = scmp.eq.s32.totalorder %s36, 0
    %p267 = por %p265, %p266
    %s269 = sadd.s32 %s268, 1
    %p272 = scmp.eq.s32.totalorder %s30, 1
    %p273 = scmp.ne.s32.totalorder %s268, %s270
    %p274 = scmp.eq.s32.totalorder %s30, 0
    %p275 = por %p273, %p274
    %p276 = scmp.ne.s32.totalorder %s268, %s270
    %p277 = scmp.eq.s32.totalorder %s35, 1
    %p278 = por %p276, %p277
    %p279 = scmp.ne.s32.totalorder %s270, %s271
    %p280 = scmp.eq.s32.totalorder %s35, 0
    %p281 = por %p279, %p280
    %p282 = scmp.ne.s32.totalorder %s270, %s271
    %p283 = scmp.eq.s32.totalorder %s36, 1
    %p284 = por %p282, %p283
    %p286 = scmp.ne.s32.totalorder %s271, %s285
    %p287 = scmp.eq.s32.totalorder %s36, 0
    %p288 = por %p286, %p287
    %s290 = sadd.s32 %s289, 1
    %p293 = scmp.eq.s32.totalorder %s30, 1
    %p294 = scmp.ne.s32.totalorder %s289, %s291
    %p295 = scmp.eq.s32.totalorder %s30, 0
    %p296 = por %p294, %p295
    %p297 = scmp.ne.s32.totalorder %s289, %s291
    %p298 = scmp.eq.s32.totalorder %s35, 1
    %p299 = por %p297, %p298
    %p300 = scmp.ne.s32.totalorder %s291, %s292
    %p301 = scmp.eq.s32.totalorder %s35, 0
    %p302 = por %p300, %p301
    %p303 = scmp.ne.s32.totalorder %s291, %s292
    %p304 = scmp.eq.s32.totalorder %s36, 1
    %p305 = por %p303, %p304
    %p307 = scmp.ne.s32.totalorder %s292, %s306
    %p308 = scmp.eq.s32.totalorder %s36, 0
    %p309 = por %p307, %p308
    %s311 = sadd.s32 %s310, 1
    %p314 = scmp.eq.s32.totalorder %s30, 1
    %p315 = scmp.ne.s32.totalorder %s310, %s312
    %p316 = scmp.eq.s32.totalorder %s30, 0
    %p317 = por %p315, %p316
    %p318 = scmp.ne.s32.totalorder %s310, %s312
    %p319 = scmp.eq.s32.totalorder %s35, 1
    %p320 = por %p318, %p319
    %p321 = scmp.ne.s32.totalorder %s312, %s313
    %p322 = scmp.eq.s32.totalorder %s35, 0
    %p323 = por %p321, %p322
    %p324 = scmp.ne.s32.totalorder %s312, %s313
    %p325 = scmp.eq.s32.totalorder %s36, 1
    %p326 = por %p324, %p325
    %p328 = scmp.ne.s32.totalorder %s313, %s327
    %p329 = scmp.eq.s32.totalorder %s36, 0
    %p330 = por %p328, %p329
    %s332 = sadd.s32 %s331, 1
    %p335 = scmp.eq.s32.totalorder %s30, 1
    %p336 = scmp.ne.s32.totalorder %s331, %s333
    %p337 = scmp.eq.s32.totalorder %s30, 0
    %p338 = por %p336, %p337
    %p339 = scmp.ne.s32.totalorder %s331, %s333
    %p340 = scmp.eq.s32.totalorder %s35, 1
    %p341 = por %p339, %p340
    %p342 = scmp.ne.s32.totalorder %s333, %s334
    %p343 = scmp.eq.s32.totalorder %s35, 0
    %p344 = por %p342, %p343
    %p345 = scmp.ne.s32.totalorder %s333, %s334
    %p346 = scmp.eq.s32.totalorder %s36, 1
    %p347 = por %p345, %p346
    %p349 = scmp.ne.s32.totalorder %s334, %s348
    %p350 = scmp.eq.s32.totalorder %s36, 0
    %p351 = por %p349, %p350
    %s353 = sadd.s32 %s352, 1
    %p356 = scmp.eq.s32.totalorder %s30, 1
    %p357 = scmp.ne.s32.totalorder %s352, %s354
    %p358 = scmp.eq.s32.totalorder %s30, 0
    %p359 = por %p357, %p358
    %p360 = scmp.ne.s32.totalorder %s352, %s354
    %p361 = scmp.eq.s32.totalorder %s35, 1
    %p362 = por %p360, %p361
    %p363 = scmp.ne.s32.totalorder %s354, %s355
    %p364 = scmp.eq.s32.totalorder %s35, 0
    %p365 = por %p363, %p364
    %p366 = scmp.ne.s32.totalorder %s354, %s355
    %p367 = scmp.eq.s32.totalorder %s36, 1
    %p368 = por %p366, %p367
    %p370 = scmp.ne.s32.totalorder %s355, %s369
    %p371 = scmp.eq.s32.totalorder %s36, 0
    %p372 = por %p370, %p371
    %s374 = sadd.s32 %s373, 1
    %p377 = scmp.eq.s32.totalorder %s30, 1
    %p378 = scmp.ne.s32.totalorder %s373, %s375
    %p379 = scmp.eq.s32.totalorder %s30, 0
    %p380 = por %p378, %p379
    %p381 = scmp.ne.s32.totalorder %s373, %s375
    %p382 = scmp.eq.s32.totalorder %s35, 1
    %p383 = por %p381, %p382
    %p384 = scmp.ne.s32.totalorder %s375, %s376
    %p385 = scmp.eq.s32.totalorder %s35, 0
    %p386 = por %p384, %p385
    %p387 = scmp.ne.s32.totalorder %s375, %s376
    %p388 = scmp.eq.s32.totalorder %s36, 1
    %p389 = por %p387, %p388
    %p391 = scmp.ne.s32.totalorder %s376, %s390
    %p392 = scmp.eq.s32.totalorder %s36, 0
    %p393 = por %p391, %p392
    %s395 = sadd.s32 %s394, 1
    %p398 = scmp.eq.s32.totalorder %s30, 1
    %p399 = scmp.ne.s32.totalorder %s394, %s396
    %p400 = scmp.eq.s32.totalorder %s30, 0
    %p401 = por %p399, %p400
    %p402 = scmp.ne.s32.totalorder %s394, %s396
    %p403 = scmp.eq.s32.totalorder %s35, 1
    %p404 = por %p402, %p403
    %p405 = scmp.ne.s32.totalorder %s396, %s397
    %p406 = scmp.eq.s32.totalorder %s35, 0
    %p407 = por %p405, %p406
    %p408 = scmp.ne.s32.totalorder %s396, %s397
    %p409 = scmp.eq.s32.totalorder %s36, 1
    %p410 = por %p408, %p409
    %p412 = scmp.ne.s32.totalorder %s397, %s411
    %p413 = scmp.eq.s32.totalorder %s36, 0
    %p414 = por %p412, %p413
    %s416 = sadd.s32 %s415, 1
    %p419 = scmp.eq.s32.totalorder %s30, 1
    %p420 = scmp.ne.s32.totalorder %s415, %s417
    %p421 = scmp.eq.s32.totalorder %s30, 0
    %p422 = por %p420, %p421
    %p423 = scmp.ne.s32.totalorder %s415, %s417
    %p424 = scmp.eq.s32.totalorder %s35, 1
    %p425 = por %p423, %p424
    %p426 = scmp.ne.s32.totalorder %s417, %s418
    %p427 = scmp.eq.s32.totalorder %s35, 0
    %p428 = por %p426, %p427
    %p429 = scmp.ne.s32.totalorder %s417, %s418
    %p430 = scmp.eq.s32.totalorder %s36, 1
    %p431 = por %p429, %p430
    %p433 = scmp.ne.s32.totalorder %s418, %s432
    %p434 = scmp.eq.s32.totalorder %s36, 0
    %p435 = por %p433, %p434
    %s437 = sadd.s32 %s436, 1
    %p440 = scmp.eq.s32.totalorder %s30, 1
    %p441 = scmp.ne.s32.totalorder %s436, %s438
    %p442 = scmp.eq.s32.totalorder %s30, 0
    %p443 = por %p441, %p442
    %p444 = scmp.ne.s32.totalorder %s436, %s438
    %p445 = scmp.eq.s32.totalorder %s35, 1
    %p446 = por %p444, %p445
    %p447 = scmp.ne.s32.totalorder %s438, %s439
    %p448 = scmp.eq.s32.totalorder %s35, 0
    %p449 = por %p447, %p448
    %p450 = scmp.ne.s32.totalorder %s438, %s439
    %p451 = scmp.eq.s32.totalorder %s36, 1
    %p452 = por %p450, %p451
    %p454 = scmp.ne.s32.totalorder %s439, %s453
    %p455 = scmp.eq.s32.totalorder %s36, 0
    %p456 = por %p454, %p455
    %s458 = sadd.s32 %s457, 1
    %p461 = scmp.eq.s32.totalorder %s30, 1
    %p462 = scmp.ne.s32.totalorder %s457, %s459
    %p463 = scmp.eq.s32.totalorder %s30, 0
    %p464 = por %p462, %p463
    %p465 = scmp.ne.s32.totalorder %s457, %s459
    %p466 = scmp.eq.s32.totalorder %s35, 1
    %p467 = por %p465, %p466
    %p468 = scmp.ne.s32.totalorder %s459, %s460
    %p469 = scmp.eq.s32.totalorder %s35, 0
    %p470 = por %p468, %p469
    %p471 = scmp.ne.s32.totalorder %s459, %s460
    %p472 = scmp.eq.s32.totalorder %s36, 1
    %p473 = por %p471, %p472
    %p475 = scmp.ne.s32.totalorder %s460, %s474
    %p476 = scmp.eq.s32.totalorder %s36, 0
    %p477 = por %p475, %p476
    %s479 = sadd.s32 %s478, 1
    %p482 = scmp.eq.s32.totalorder %s30, 1
    %p483 = scmp.ne.s32.totalorder %s478, %s480
    %p484 = scmp.eq.s32.totalorder %s30, 0
    %p485 = por %p483, %p484
    %p486 = scmp.ne.s32.totalorder %s478, %s480
    %p487 = scmp.eq.s32.totalorder %s35, 1
    %p488 = por %p486, %p487
    %p489 = scmp.ne.s32.totalorder %s480, %s481
    %p490 = scmp.eq.s32.totalorder %s35, 0
    %p491 = por %p489, %p490
    %p492 = scmp.ne.s32.totalorder %s480, %s481
    %p493 = scmp.eq.s32.totalorder %s36, 1
    %p494 = por %p492, %p493
    %p496 = scmp.ne.s32.totalorder %s481, %s495
    %p497 = scmp.eq.s32.totalorder %s36, 0
    %p498 = por %p496, %p497
    %s500 = sadd.s32 %s499, 1
    %p503 = scmp.eq.s32.totalorder %s30, 1
    %p504 = scmp.ne.s32.totalorder %s499, %s501
    %p505 = scmp.eq.s32.totalorder %s30, 0
    %p506 = por %p504, %p505
    %p507 = scmp.ne.s32.totalorder %s499, %s501
    %p508 = scmp.eq.s32.totalorder %s35, 1
    %p509 = por %p507, %p508
    %p510 = scmp.ne.s32.totalorder %s501, %s502
    %p511 = scmp.eq.s32.totalorder %s35, 0
    %p512 = por %p510, %p511
    %p513 = scmp.ne.s32.totalorder %s501, %s502
    %p514 = scmp.eq.s32.totalorder %s36, 1
    %p515 = por %p513, %p514
    %p517 = scmp.ne.s32.totalorder %s502, %s516
    %p518 = scmp.eq.s32.totalorder %s36, 0
    %p519 = por %p517, %p518
    %s521 = sadd.s32 %s520, 1
    %p524 = scmp.eq.s32.totalorder %s30, 1
    %p525 = scmp.ne.s32.totalorder %s520, %s522
    %p526 = scmp.eq.s32.totalorder %s30, 0
    %p527 = por %p525, %p526
    %p528 = scmp.ne.s32.totalorder %s520, %s522
    %p529 = scmp.eq.s32.totalorder %s35, 1
    %p530 = por %p528, %p529
    %p531 = scmp.ne.s32.totalorder %s522, %s523
    %p532 = scmp.eq.s32.totalorder %s35, 0
    %p533 = por %p531, %p532
    %p534 = scmp.ne.s32.totalorder %s522, %s523
    %p535 = scmp.eq.s32.totalorder %s36, 1
    %p536 = por %p534, %p535
    %p538 = scmp.ne.s32.totalorder %s523, %s537
    %p539 = scmp.eq.s32.totalorder %s36, 0
    %p540 = por %p538, %p539
    %s542 = sadd.s32 %s541, 1
    %p545 = scmp.eq.s32.totalorder %s30, 1
    %p546 = scmp.ne.s32.totalorder %s541, %s543
    %p547 = scmp.eq.s32.totalorder %s30, 0
    %p548 = por %p546, %p547
    %p549 = scmp.ne.s32.totalorder %s541, %s543
    %p550 = scmp.eq.s32.totalorder %s35, 1
    %p551 = por %p549, %p550
    %p552 = scmp.ne.s32.totalorder %s543, %s544
    %p553 = scmp.eq.s32.totalorder %s35, 0
    %p554 = por %p552, %p553
    %p555 = scmp.ne.s32.totalorder %s543, %s544
    %p556 = scmp.eq.s32.totalorder %s36, 1
    %p557 = por %p555, %p556
    %p559 = scmp.ne.s32.totalorder %s544, %s558
    %p560 = scmp.eq.s32.totalorder %s36, 0
    %p561 = por %p559, %p560
    %s562 = ssub.s32 %s30, %s37
    %p563 = scmp.eq.s32.totalorder %s562, 0
    %s565 = sadd.s32 %s564, 1
    %s566 = scalar_select %p563, %s564, %s565
    %p569 = pneg %p563
    %p570 = scmp.eq.s32.totalorder %s30, 1
    %p571 = por %p569, %p570
    %p572 = scmp.ne.s32.totalorder %s564, %s567
    %p573 = scmp.eq.s32.totalorder %s30, 0
    %p574 = por %p572, %p573
    %p575 = scmp.ne.s32.totalorder %s564, %s567
    %p576 = scmp.eq.s32.totalorder %s35, 1
    %p577 = por %p575, %p576
    %p578 = scmp.ne.s32.totalorder %s567, %s568
    %p579 = scmp.eq.s32.totalorder %s35, 0
    %p580 = por %p578, %p579
    %p581 = scmp.ne.s32.totalorder %s567, %s568
    %p582 = scmp.eq.s32.totalorder %s36, 1
    %p583 = por %p581, %p582
    %p585 = scmp.ne.s32.totalorder %s568, %s584
    %p586 = scmp.eq.s32.totalorder %s36, 0
    %p587 = por %p585, %p586
    %p588 = scmp.le.s32.totalorder 1, %s30
    %p589 = scmp.lt.s32.totalorder %s30, 3
    %p590 = pnand %p588, %p589
    %p591 = pneg %p590
    // Predicated region
    $region9: #{transformer_decoder_forward.3} parent=5 // pred_check
      _
    $region10: #{transformer_decoder_forward.3} parent=5 // pred_check_branch
      %593 = sbr.rel (%p590) target = $region12
    $region11: #{transformer_decoder_forward.3} parent=5 // pred_region
      %s594 = ssub.s32 %s30, 1
      // Predicated region
      $region13: #{transformer_decoder_forward.3} parent=11 // pred_check
        %p595 = pneg %p155
      $region14: #{transformer_decoder_forward.3} parent=11 // pred_check_branch
        %597 = sbr.rel (%p595) target = $region16
      $region15: #{transformer_decoder_forward.3} parent=11 // pred_region
        _
      $region16: #{transformer_decoder_forward.3} parent=11 // pred_fallthru
        _
      // Predicated region
      $region17: #{transformer_decoder_forward.3} parent=11 // pred_check
        %p598 = pneg %p176
      $region18: #{transformer_decoder_forward.3} parent=11 // pred_check_branch
        %600 = sbr.rel (%p598) target = $region20
      $region19: #{transformer_decoder_forward.3} parent=11 // pred_region
        _
      $region20: #{transformer_decoder_forward.3} parent=11 // pred_fallthru
        _
      // Predicated region
      $region21: #{transformer_decoder_forward.3} parent=11 // pred_check
        %p601 = pneg %p197
      $region22: #{transformer_decoder_forward.3} parent=11 // pred_check_branch
        %603 = sbr.rel (%p601) target = $region24
      $region23: #{transformer_decoder_forward.3} parent=11 // pred_region
        _
      $region24: #{transformer_decoder_forward.3} parent=11 // pred_fallthru
        _
      // Predicated region
      $region25: #{transformer_decoder_forward.3} parent=11 // pred_check
        %p604 = pneg %p218
      $region26: #{transformer_decoder_forward.3} parent=11 // pred_check_branch
        %606 = sbr.rel (%p604) target = $region28
      $region27: #{transformer_decoder_forward.3} parent=11 // pred_region
        _
      $region28: #{transformer_decoder_forward.3} parent=11 // pred_fallthru
        _
      // Predicated region
      $region29: #{transformer_decoder_forward.3} parent=11 // pred_check
        %p607 = pneg %p239
      $region30: #{transformer_decoder_forward.3} parent=11 // pred_check_branch
        %609 = sbr.rel (%p607) target = $region32
      $region31: #{transformer_decoder_forward.3} parent=11 // pred_region
        _
      $region32: #{transformer_decoder_forward.3} parent=11 // pred_fallthru
        _
      // Predicated region
      $region33: #{transformer_decoder_forward.3} parent=11 // pred_check
        %p610 = pneg %p260
      $region34: #{transformer_decoder_forward.3} parent=11 // pred_check_branch
        %612 = sbr.rel (%p610) target = $region36
      $region35: #{transformer_decoder_forward.3} parent=11 // pred_region
        _
      $region36: #{transformer_decoder_forward.3} parent=11 // pred_fallthru
        _
      // Predicated region
      $region37: #{transformer_decoder_forward.3} parent=11 // pred_check
        %p613 = pneg %p281
      $region38: #{transformer_decoder_forward.3} parent=11 // pred_check_branch
        %615 = sbr.rel (%p613) target = $region40
      $region39: #{transformer_decoder_forward.3} parent=11 // pred_region
        _
      $region40: #{transformer_decoder_forward.3} parent=11 // pred_fallthru
        _
      // Predicated region
      $region41: #{transformer_decoder_forward.3} parent=11 // pred_check
        %p616 = pneg %p302
      $region42: #{transformer_decoder_forward.3} parent=11 // pred_check_branch
        %618 = sbr.rel (%p616) target = $region44
      $region43: #{transformer_decoder_forward.3} parent=11 // pred_region
        _
      $region44: #{transformer_decoder_forward.3} parent=11 // pred_fallthru
        _
      // Predicated region
      $region45: #{transformer_decoder_forward.3} parent=11 // pred_check
        %p619 = pneg %p323
      $region46: #{transformer_decoder_forward.3} parent=11 // pred_check_branch
        %621 = sbr.rel (%p619) target = $region48
      $region47: #{transformer_decoder_forward.3} parent=11 // pred_region
        _
      $region48: #{transformer_decoder_forward.3} parent=11 // pred_fallthru
        _
      // Predicated region
      $region49: #{transformer_decoder_forward.3} parent=11 // pred_check
        %p622 = pneg %p344
      $region50: #{transformer_decoder_forward.3} parent=11 // pred_check_branch
        %624 = sbr.rel (%p622) target = $region52
      $region51: #{transformer_decoder_forward.3} parent=11 // pred_region
        _
      $region52: #{transformer_decoder_forward.3} parent=11 // pred_fallthru
        _
      // Predicated region
      $region53: #{transformer_decoder_forward.3} parent=11 // pred_check
        %p625 = pneg %p365
      $region54: #{transformer_decoder_forward.3} parent=11 // pred_check_branch
        %627 = sbr.rel (%p625) target = $region56
      $region55: #{transformer_decoder_forward.3} parent=11 // pred_region
        _
      $region56: #{transformer_decoder_forward.3} parent=11 // pred_fallthru
        _
      // Predicated region
      $region57: #{transformer_decoder_forward.3} parent=11 // pred_check
        %p628 = pneg %p386
      $region58: #{transformer_decoder_forward.3} parent=11 // pred_check_branch
        %630 = sbr.rel (%p628) target = $region60
      $region59: #{transformer_decoder_forward.3} parent=11 // pred_region
        _
      $region60: #{transformer_decoder_forward.3} parent=11 // pred_fallthru
        _
      // Predicated region
      $region61: #{transformer_decoder_forward.3} parent=11 // pred_check
        %p631 = pneg %p407
      $region62: #{transformer_decoder_forward.3} parent=11 // pred_check_branch
        %633 = sbr.rel (%p631) target = $region64
      $region63: #{transformer_decoder_forward.3} parent=11 // pred_region
        _
      $region64: #{transformer_decoder_forward.3} parent=11 // pred_fallthru
        _
      // Predicated region
      $region65: #{transformer_decoder_forward.3} parent=11 // pred_check
        %p634 = pneg %p428
      $region66: #{transformer_decoder_forward.3} parent=11 // pred_check_branch
        %636 = sbr.rel (%p634) target = $region68
      $region67: #{transformer_decoder_forward.3} parent=11 // pred_region
        _
      $region68: #{transformer_decoder_forward.3} parent=11 // pred_fallthru
        _
      // Predicated region
      $region69: #{transformer_decoder_forward.3} parent=11 // pred_check
        %p637 = pneg %p449
      $region70: #{transformer_decoder_forward.3} parent=11 // pred_check_branch
        %639 = sbr.rel (%p637) target = $region72
      $region71: #{transformer_decoder_forward.3} parent=11 // pred_region
        _
      $region72: #{transformer_decoder_forward.3} parent=11 // pred_fallthru
        _
      // Predicated region
      $region73: #{transformer_decoder_forward.3} parent=11 // pred_check
        %p640 = pneg %p470
      $region74: #{transformer_decoder_forward.3} parent=11 // pred_check_branch
        %642 = sbr.rel (%p640) target = $region76
      $region75: #{transformer_decoder_forward.3} parent=11 // pred_region
        _
      $region76: #{transformer_decoder_forward.3} parent=11 // pred_fallthru
        _
      // Predicated region
      $region77: #{transformer_decoder_forward.3} parent=11 // pred_check
        %p643 = pneg %p491
      $region78: #{transformer_decoder_forward.3} parent=11 // pred_check_branch
        %645 = sbr.rel (%p643) target = $region80
      $region79: #{transformer_decoder_forward.3} parent=11 // pred_region
        _
      $region80: #{transformer_decoder_forward.3} parent=11 // pred_fallthru
        _
      // Predicated region
      $region81: #{transformer_decoder_forward.3} parent=11 // pred_check
        %p646 = pneg %p512
      $region82: #{transformer_decoder_forward.3} parent=11 // pred_check_branch
        %648 = sbr.rel (%p646) target = $region84
      $region83: #{transformer_decoder_forward.3} parent=11 // pred_region
        _
      $region84: #{transformer_decoder_forward.3} parent=11 // pred_fallthru
        _
      // Predicated region
      $region85: #{transformer_decoder_forward.3} parent=11 // pred_check
        %p649 = pneg %p533
      $region86: #{transformer_decoder_forward.3} parent=11 // pred_check_branch
        %651 = sbr.rel (%p649) target = $region88
      $region87: #{transformer_decoder_forward.3} parent=11 // pred_region
        _
      $region88: #{transformer_decoder_forward.3} parent=11 // pred_fallthru
        _
      // Predicated region
      $region89: #{transformer_decoder_forward.3} parent=11 // pred_check
        %p652 = pneg %p554
      $region90: #{transformer_decoder_forward.3} parent=11 // pred_check_branch
        %654 = sbr.rel (%p652) target = $region92
      $region91: #{transformer_decoder_forward.3} parent=11 // pred_region
        _
      $region92: #{transformer_decoder_forward.3} parent=11 // pred_fallthru
        _
    $region12: #{transformer_decoder_forward.3} parent=5 // pred_fallthru
      _
    %p655 = scmp.lt.s32.totalorder %s30, 2
    // Predicated region
    $region93: #{transformer_decoder_forward.3} parent=5 // pred_check
      %p656 = pneg %p655
    $region94: #{transformer_decoder_forward.3} parent=5 // pred_check_branch
      %658 = sbr.rel (%p656) target = $region96
    $region95: #{transformer_decoder_forward.3} parent=5 // pred_region
      // Predicated region
      $region97: #{transformer_decoder_forward.3} parent=95 // pred_check
        %p659 = pneg %p50
      $region98: #{transformer_decoder_forward.3} parent=95 // pred_check_branch
        %661 = sbr.rel (%p659) target = $region100
      $region99: #{transformer_decoder_forward.3} parent=95 // pred_region
        %p662 = scmp.lt.s32.totalorder %s30, 1
        %s663 = scalar_select %p662, %s30, 1
        %s664 = smul.addr %s663, 8
        %s665 = scalar_lea.vmem %s0, %s664
      $region100: #{transformer_decoder_forward.3} parent=95 // pred_fallthru
        _
      // Predicated region
      $region101: #{transformer_decoder_forward.3} parent=95 // pred_check
        %p666 = pneg %p76
      $region102: #{transformer_decoder_forward.3} parent=95 // pred_check_branch
        %668 = sbr.rel (%p666) target = $region104
      $region103: #{transformer_decoder_forward.3} parent=95 // pred_region
        %p669 = scmp.lt.s32.totalorder %s30, 1
        %s670 = scalar_select %p669, %s30, 1
        %s671 = smul.addr %s670, 4
        %s672 = scalar_lea.vmem %s1, %s671
      $region104: #{transformer_decoder_forward.3} parent=95 // pred_fallthru
        _
      // Predicated region
      $region105: #{transformer_decoder_forward.3} parent=95 // pred_check
        %p673 = pneg %p102
      $region106: #{transformer_decoder_forward.3} parent=95 // pred_check_branch
        %675 = sbr.rel (%p673) target = $region108
      $region107: #{transformer_decoder_forward.3} parent=95 // pred_region
        %p676 = scmp.lt.s32.totalorder %s30, 1
        %s677 = scalar_select %p676, %s30, 1
        %s678 = smul.addr %s677, 2
        %s679 = smul.addr %s678, 8
        %s680 = scalar_lea.vmem %s2, %s679
      $region108: #{transformer_decoder_forward.3} parent=95 // pred_fallthru
        _
      // Predicated region
      $region109: #{transformer_decoder_forward.3} parent=95 // pred_check
        %p681 = pneg %p128
      $region110: #{transformer_decoder_forward.3} parent=95 // pred_check_branch
        %683 = sbr.rel (%p681) target = $region112
      $region111: #{transformer_decoder_forward.3} parent=95 // pred_region
        %p684 = scmp.lt.s32.totalorder %s30, 1
        %s685 = scalar_select %p684, %s30, 1
        %s686 = scalar_lea.vmem %s3, %s685
      $region112: #{transformer_decoder_forward.3} parent=95 // pred_fallthru
        _
    $region96: #{transformer_decoder_forward.3} parent=5 // pred_fallthru
      _
    %p687 = scmp.le.s32.totalorder 1, %s30
    %p688 = scmp.lt.s32.totalorder %s30, 3
    %p689 = pnand %p687, %p688
    %p690 = pneg %p689
    // Predicated region
    $region113: #{transformer_decoder_forward.3} parent=5 // pred_check
      _
    $region114: #{transformer_decoder_forward.3} parent=5 // pred_check_branch
      %692 = sbr.rel (%p689) target = $region116
    $region115: #{transformer_decoder_forward.3} parent=5 // pred_region
      %s693 = ssub.s32 %s30, 1
      %p694 = scmp.lt.s32.totalorder %s35, 1
      %s695 = scalar_select %p694, %s35, 1
      %s696 = smul.addr %s695, 8
      %s697 = scalar_lea.vmem %s0, %s696
      %p698 = pneg %p56
      %p699 = pneg %p53
      %p700 = scmp.lt.s32.totalorder %s35, 1
      %s701 = scalar_select %p700, %s35, 1
      %s702 = smul.addr %s701, 4
      %s703 = scalar_lea.vmem %s1, %s702
      %p704 = pneg %p82
      %p705 = pneg %p79
      %p706 = scmp.lt.s32.totalorder %s35, 1
      %s707 = scalar_select %p706, %s35, 1
      %s708 = smul.addr %s707, 2
      %s709 = smul.addr %s708, 8
      %s710 = scalar_lea.vmem %s2, %s709
      %p711 = pneg %p108
      %p712 = pneg %p105
      %p713 = scmp.lt.s32.totalorder %s35, 1
      %s714 = scalar_select %p713, %s35, 1
      %s715 = scalar_lea.vmem %s3, %s714
      %p716 = pneg %p134
      %p717 = pneg %p131
      %p718 = pneg %p155
      %p719 = pneg %p152
      %p720 = pneg %p176
      %p721 = pneg %p173
      %p722 = pneg %p197
      %p723 = pneg %p194
      %p724 = pneg %p218
      %p725 = pneg %p215
      %p726 = pneg %p239
      %p727 = pneg %p236
      %p728 = pneg %p260
      %p729 = pneg %p257
      %p730 = pneg %p281
      %p731 = pneg %p278
      %p732 = pneg %p302
      %p733 = pneg %p299
      %p734 = pneg %p323
      %p735 = pneg %p320
      %p736 = pneg %p344
      %p737 = pneg %p341
      %p738 = pneg %p365
      %p739 = pneg %p362
      %p740 = pneg %p386
      %p741 = pneg %p383
      %p742 = pneg %p407
      %p743 = pneg %p404
      %p744 = pneg %p428
      %p745 = pneg %p425
      %p746 = pneg %p449
      %p747 = pneg %p446
      %p748 = pneg %p470
      %p749 = pneg %p467
      %p750 = pneg %p491
      %p751 = pneg %p488
      %p752 = pneg %p512
      %p753 = pneg %p509
      %p754 = pneg %p533
      %p755 = pneg %p530
      %p756 = pneg %p554
      %p757 = pneg %p551
      %p758 = pneg %p580
      %p759 = pneg %p577
      %p760 = scmp.lt.s32.totalorder %s35, 1
      %s761 = scalar_select %p760, %s35, 1
      %s762 = smul.addr %s761, 8
      %s763 = scalar_lea.vmem %s24, %s762
      %p764 = scmp.lt.s32.totalorder %s35, 1
      %s765 = scalar_select %p764, %s35, 1
      %s766 = smul.addr %s765, 8
      %s767 = scalar_lea.vmem %s0, %s766
      %p768 = scmp.lt.s32.totalorder %s35, 1
      %s769 = scalar_select %p768, %s35, 1
      %s770 = smul.addr %s769, 4
      %s771 = scalar_lea.vmem %s1, %s770
      %p772 = scmp.lt.s32.totalorder %s35, 1
      %s773 = scalar_select %p772, %s35, 1
      %s774 = smul.addr %s773, 2
      %s775 = smul.addr %s774, 8
      %s776 = scalar_lea.vmem %s2, %s775
      %p777 = scmp.lt.s32.totalorder %s35, 1
      %s778 = scalar_select %p777, %s35, 1
      %s779 = scalar_lea.vmem %s3, %s778
      %p780 = scmp.lt.s32.totalorder %s35, 1
      %s781 = scalar_select %p780, %s35, 1
      %s782 = smul.addr %s781, 8
      %s783 = scalar_lea.vmem %s24, %s782
      %v785 = vld [vmem:[%s767] sm:$0xff]
      %v786 = vld [vmem:[%s771] sm:$0xf]
      %v787 = vunpack.c.l.bf16 %v786
      %v788 = vsub.f32 1.0, %v787
      %v789 = vmul.f32 %v788, -1e+30
      %v790 = vld [vmem:[%s4] sm:$0x1]
      %v791 = vld [vmem:[%s5] sm:$0x1]
      %vm792 = vcmask 261120
      %v793 = vsel %vm792, %v785, 0.0
      %794 = vadd.xlane.f32.xlu0 %v793
      %v795 = vpop.xlane.xlu0 %794
      %v796 = vrcp.pop 32.0
      %v797 = vmul.f32 %v795, %v796
      %v798 = vsub.f32 %v785, %v797
      %v799 = vmul.f32 %v798, %v798
      %v800 = vsel %vm792, %v799, 0.0
      %801 = vadd.xlane.f32.xlu0 %v800
      %v802 = vpop.xlane.xlu0 %801
      %v803 = vmul.f32 %v802, %v796
      %v804 = vadd.f32 %v803, 1e-12
      %v805 = vrsqrt.pop %v804
      %v806 = vmul.f32 %v798, %v805
      %v808 = vlaneseq
      %v809 = vshrl.u32 %v808, 7
      %v810 = vsub.s32 0, %v809
      %v811 = vrot.slane %v790, %v810
      %v813 = vmul.f32 %v806, %v811
      %v815 = vlaneseq
      %v816 = vshrl.u32 %v815, 7
      %v817 = vsub.s32 0, %v816
      %v818 = vrot.slane %v791, %v817
      %v820 = vadd.f32 %v813, %v818
      %v821 = vld [vmem:[%s6] sm:$0xf]
      %v822 = vld [vmem:[%s6 + $0x4] sm:$0xf]
      %v823 = vld [vmem:[%s6 + $0x8] sm:$0xf]
      %v824 = vld [vmem:[%s6 + $0xc] sm:$0xf]
      %v825 = vpack.c.bf16 %v820, %v820
      %v826 = vld [vmem:[%s7] sm:$0x1]
      %v828 = vlaneseq
      %v829 = vshrl.u32 %v828, 7
      %v830 = vsub.s32 0, %v829
      %v831 = vrot.slane %v826, %v830
      %v837 = vunpack.c.l.b16 %v821
      %v838 = vunpack.c.l.b16 %v822
      %v839 = vunpack.c.l.b16 %v823
      %v840 = vunpack.c.l.b16 %v824
      %v841 = vpack.c.b16 %v838, %v837
      %v842 = vpack.c.b16 %v840, %v839
      %v846 = vsel %vm792, %v825, 0
      %848 = vmatprep.subr.bf16.mxu0 0
      %849 = vmatpush1.bf16.msra.mxu0 0
      %850 = vmatprep.subr.bf16.mxu0 0
      %851 = vmatpush1.bf16.msra.mxu0 0
      %852 = vmatprep.subr.bf16.mxu0 0
      %853 = vmatpush1.bf16.msra.mxu0 0
      %854 = vmatprep.subr.bf16.mxu0 0
      %855 = vmatpush1.bf16.msra.mxu0 0
      %856 = vmatprep.subr.bf16.mxu0 0
      %857 = vmatpush1.bf16.msra.mxu0 0
      %858 = vmatprep.subr.bf16.mxu0 0
      %859 = vmatpush1.bf16.msra.mxu0 0
      %860 = vmatprep.subr.bf16.mxu0 0
      %861 = vmatpush1.bf16.msra.mxu0 %v842
      %862 = vmatprep.subr.bf16.mxu0 0
      %863 = vmatpush1.bf16.msra.mxu0 %v841
      %864 = vmatprep.subr.bf16.mxu0 0
      %865 = vmatpush2.bf16.msra.mxu0 0
      %866 = vmatprep.subr.bf16.mxu0 0
      %867 = vmatpush2.bf16.msra.mxu0 0
      %868 = vmatprep.subr.bf16.mxu0 0
      %869 = vmatpush2.bf16.msra.mxu0 0
      %870 = vmatprep.subr.bf16.mxu0 0
      %871 = vmatpush2.bf16.msra.mxu0 0
      %872 = vmatprep.subr.bf16.mxu0 0
      %873 = vmatpush2.bf16.msra.mxu0 0
      %874 = vmatprep.subr.bf16.mxu0 0
      %875 = vmatpush2.bf16.msra.mxu0 0
      %876 = vmatprep.subr.bf16.mxu0 0
      %877 = vmatpush2.bf16.msra.mxu0 0
      %878 = vmatprep.subr.bf16.mxu0 0
      %879 = vmatpush2.bf16.msra.mxu0 0
      %880 = vmatprep.mubr.bf16.mxu0 0
      %881 = vmatmul.mubr.bf16.gmra.mxu0 %v846
      %v882 = vpop.f32.mrf.mxu0
      %v883 = vadd.f32 %v831, %v882
      %v884 = vpop.f32.mrf.mxu0
      %v885 = vpop.f32.mrf.mxu0
      %v886 = vpop.f32.mrf.mxu0
      %887 = vdwg.mxu0
      %v888 = vmul.f32 %v883, 0.35355338
      %v889 = vpack.c.bf16 %v888, %v888
      %v890 = vpack.c.bf16 %v883, %v883
      %892 = vrot.lane.b32.xlu0 %v890, 96
      %v893 = vpop.permute.xlu0 %892
      %vm894 = vcmask 64512
      %v896 = vsel %vm894, %v889, 0
      %v899 = vsel %vm894, %v893, 0
      %901 = vmatprep.subr.bf16.mxu0 0
      %902 = vmatpush1.bf16.xpose.msra.mxu0 0
      %903 = vmatprep.subr.bf16.mxu0 0
      %904 = vmatpush1.bf16.xpose.msra.mxu0 0
      %905 = vmatprep.subr.bf16.mxu0 0
      %906 = vmatpush1.bf16.xpose.msra.mxu0 0
      %907 = vmatprep.subr.bf16.mxu0 0
      %908 = vmatpush1.bf16.xpose.msra.mxu0 0
      %909 = vmatprep.subr.bf16.mxu0 0
      %910 = vmatpush1.bf16.xpose.msra.mxu0 0
      %911 = vmatprep.subr.bf16.mxu0 0
      %912 = vmatpush1.bf16.xpose.msra.mxu0 0
      %913 = vmatprep.subr.bf16.mxu0 0
      %914 = vmatpush1.bf16.xpose.msra.mxu0 0
      %915 = vmatprep.subr.bf16.mxu0 0
      %916 = vmatpush1.bf16.xpose.msra.mxu0 %v899
      %917 = vmatprep.subr.bf16.mxu0 0
      %918 = vmatpush2.bf16.xpose.msra.mxu0 0
      %919 = vmatprep.subr.bf16.mxu0 0
      %920 = vmatpush2.bf16.xpose.msra.mxu0 0
      %921 = vmatprep.subr.bf16.mxu0 0
      %922 = vmatpush2.bf16.xpose.msra.mxu0 0
      %923 = vmatprep.subr.bf16.mxu0 0
      %924 = vmatpush2.bf16.xpose.msra.mxu0 0
      %925 = vmatprep.subr.bf16.mxu0 0
      %926 = vmatpush2.bf16.xpose.msra.mxu0 0
      %927 = vmatprep.subr.bf16.mxu0 0
      %928 = vmatpush2.bf16.xpose.msra.mxu0 0
      %929 = vmatprep.subr.bf16.mxu0 0
      %930 = vmatpush2.bf16.xpose.msra.mxu0 0
      %931 = vmatprep.subr.bf16.mxu0 0
      %932 = vmatpush2.bf16.xpose.msra.mxu0 0
      %933 = vmatprep.mubr.bf16.mxu0 0
      %934 = vmatmul.mubr.bf16.gmra.mxu0 %v896
      %v935 = vpop.f32.mrf.mxu0
      %v936 = vadd.f32 %v789, %v935
      %v937 = vpop.f32.mrf.mxu0
      %v938 = vpop.f32.mrf.mxu0
      %v939 = vpop.f32.mrf.mxu0
      %940 = vdwg.mxu0
      %v941 = vsel %vm894, %v936, -inf
      %942 = vmax.xlane.f32.xlu0 %v941
      %v943 = vpop.xlane.xlu0 %942
      %v944 = vsub.f32 %v936, %v943
      %v945 = vmul.f32 %v944, 1.442695
      %v946 = vpow.pop %v945
      %v947 = vsel %vm894, %v946, 0.0
      %948 = vadd.xlane.f32.xlu0 %v947
      %v949 = vpop.xlane.xlu0 %948
      %v950 = vrcp.pop %v949
      %v951 = vmul.f32 %v946, %v950
      %v952 = vmul.f32 %v951, %v787
      %v953 = vpack.c.bf16 %v952, %v952
      %954 = vrot.lane.b32.xlu0 %v890, 64
      %v955 = vpop.permute.xlu0 %954
      %v957 = vsel %vm894, %v953, 0
      %vm959 = vcmask 1043456
      %v961 = vsel %vm959, %v955, 0
      %963 = vmatprep.subr.bf16.mxu0 0
      %964 = vmatpush1.bf16.msra.mxu0 0
      %965 = vmatprep.subr.bf16.mxu0 0
      %966 = vmatpush1.bf16.msra.mxu0 0
      %967 = vmatprep.subr.bf16.mxu0 0
      %968 = vmatpush1.bf16.msra.mxu0 0
      %969 = vmatprep.subr.bf16.mxu0 0
      %970 = vmatpush1.bf16.msra.mxu0 0
      %971 = vmatprep.subr.bf16.mxu0 0
      %972 = vmatpush1.bf16.msra.mxu0 0
      %973 = vmatprep.subr.bf16.mxu0 0
      %974 = vmatpush1.bf16.msra.mxu0 0
      %975 = vmatprep.subr.bf16.mxu0 0
      %976 = vmatpush1.bf16.msra.mxu0 0
      %977 = vmatprep.subr.bf16.mxu0 0
      %978 = vmatpush1.bf16.msra.mxu0 %v961
      %979 = vmatprep.subr.bf16.mxu0 0
      %980 = vmatpush2.bf16.msra.mxu0 0
      %981 = vmatprep.subr.bf16.mxu0 0
      %982 = vmatpush2.bf16.msra.mxu0 0
      %983 = vmatprep.subr.bf16.mxu0 0
      %984 = vmatpush2.bf16.msra.mxu0 0
      %985 = vmatprep.subr.bf16.mxu0 0
      %986 = vmatpush2.bf16.msra.mxu0 0
      %987 = vmatprep.subr.bf16.mxu0 0
      %988 = vmatpush2.bf16.msra.mxu0 0
      %989 = vmatprep.subr.bf16.mxu0 0
      %990 = vmatpush2.bf16.msra.mxu0 0
      %991 = vmatprep.subr.bf16.mxu0 0
      %992 = vmatpush2.bf16.msra.mxu0 0
      %993 = vmatprep.subr.bf16.mxu0 0
      %994 = vmatpush2.bf16.msra.mxu0 0
      %995 = vmatprep.mubr.bf16.mxu0 0
      %996 = vmatmul.mubr.bf16.gmra.mxu0 %v957
      %v997 = vpop.f32.mrf.mxu0
      %v998 = vadd.f32 0.0, %v997
      %v999 = vpop.f32.mrf.mxu0
      %v1000 = vpop.f32.mrf.mxu0
      %v1001 = vpop.f32.mrf.mxu0
      %1002 = vdwg.mxu0
      %1004 = vrot.lane.b32.xlu0 %v889, 120
      %v1005 = vpop.permute.xlu0 %1004
      %1006 = vrot.lane.b32.xlu0 %v890, 88
      %v1007 = vpop.permute.xlu0 %1006
      %v1009 = vsel %vm894, %v1005, 0
      %v1012 = vsel %vm894, %v1007, 0
      %1014 = vmatprep.subr.bf16.mxu0 0
      %1015 = vmatpush1.bf16.xpose.msra.mxu0 0
      %1016 = vmatprep.subr.bf16.mxu0 0
      %1017 = vmatpush1.bf16.xpose.msra.mxu0 0
      %1018 = vmatprep.subr.bf16.mxu0 0
      %1019 = vmatpush1.bf16.xpose.msra.mxu0 0
      %1020 = vmatprep.subr.bf16.mxu0 0
      %1021 = vmatpush1.bf16.xpose.msra.mxu0 0
      %1022 = vmatprep.subr.bf16.mxu0 0
      %1023 = vmatpush1.bf16.xpose.msra.mxu0 0
      %1024 = vmatprep.subr.bf16.mxu0 0
      %1025 = vmatpush1.bf16.xpose.msra.mxu0 0
      %1026 = vmatprep.subr.bf16.mxu0 0
      %1027 = vmatpush1.bf16.xpose.msra.mxu0 0
      %1028 = vmatprep.subr.bf16.mxu0 0
      %1029 = vmatpush1.bf16.xpose.msra.mxu0 %v1012
      %1030 = vmatprep.subr.bf16.mxu0 0
      %1031 = vmatpush2.bf16.xpose.msra.mxu0 0
      %1032 = vmatprep.subr.bf16.mxu0 0
      %1033 = vmatpush2.bf16.xpose.msra.mxu0 0
      %1034 = vmatprep.subr.bf16.mxu0 0
      %1035 = vmatpush2.bf16.xpose.msra.mxu0 0
      %1036 = vmatprep.subr.bf16.mxu0 0
      %1037 = vmatpush2.bf16.xpose.msra.mxu0 0
      %1038 = vmatprep.subr.bf16.mxu0 0
      %1039 = vmatpush2.bf16.xpose.msra.mxu0 0
      %1040 = vmatprep.subr.bf16.mxu0 0
      %1041 = vmatpush2.bf16.xpose.msra.mxu0 0
      %1042 = vmatprep.subr.bf16.mxu0 0
      %1043 = vmatpush2.bf16.xpose.msra.mxu0 0
      %1044 = vmatprep.subr.bf16.mxu0 0
      %1045 = vmatpush2.bf16.xpose.msra.mxu0 0
      %1046 = vmatprep.mubr.bf16.mxu0 0
      %1047 = vmatmul.mubr.bf16.gmra.mxu0 %v1009
      %v1048 = vpop.f32.mrf.mxu0
      %v1049 = vadd.f32 %v789, %v1048
      %v1050 = vpop.f32.mrf.mxu0
      %v1051 = vpop.f32.mrf.mxu0
      %v1052 = vpop.f32.mrf.mxu0
      %1053 = vdwg.mxu0
      %v1054 = vsel %vm894, %v1049, -inf
      %1055 = vmax.xlane.f32.xlu0 %v1054
      %v1056 = vpop.xlane.xlu0 %1055
      %v1057 = vsub.f32 %v1049, %v1056
      %v1058 = vmul.f32 %v1057, 1.442695
      %v1059 = vpow.pop %v1058
      %v1060 = vsel %vm894, %v1059, 0.0
      %1061 = vadd.xlane.f32.xlu0 %v1060
      %v1062 = vpop.xlane.xlu0 %1061
      %v1063 = vrcp.pop %v1062
      %v1064 = vmul.f32 %v1059, %v1063
      %v1065 = vmul.f32 %v1064, %v787
      %v1066 = vpack.c.bf16 %v1065, %v1065
      %1067 = vrot.lane.b32.xlu0 %v890, 56
      %v1068 = vpop.permute.xlu0 %1067
      %v1070 = vsel %vm894, %v1066, 0
      %v1073 = vsel %vm959, %v1068, 0
      %1075 = vmatprep.subr.bf16.mxu0 0
      %1076 = vmatpush1.bf16.msra.mxu0 0
      %1077 = vmatprep.subr.bf16.mxu0 0
      %1078 = vmatpush1.bf16.msra.mxu0 0
      %1079 = vmatprep.subr.bf16.mxu0 0
      %1080 = vmatpush1.bf16.msra.mxu0 0
      %1081 = vmatprep.subr.bf16.mxu0 0
      %1082 = vmatpush1.bf16.msra.mxu0 0
      %1083 = vmatprep.subr.bf16.mxu0 0
      %1084 = vmatpush1.bf16.msra.mxu0 0
      %1085 = vmatprep.subr.bf16.mxu0 0
      %1086 = vmatpush1.bf16.msra.mxu0 0
      %1087 = vmatprep.subr.bf16.mxu0 0
      %1088 = vmatpush1.bf16.msra.mxu0 0
      %1089 = vmatprep.subr.bf16.mxu0 0
      %1090 = vmatpush1.bf16.msra.mxu0 %v1073
      %1091 = vmatprep.subr.bf16.mxu0 0
      %1092 = vmatpush2.bf16.msra.mxu0 0
      %1093 = vmatprep.subr.bf16.mxu0 0
      %1094 = vmatpush2.bf16.msra.mxu0 0
      %1095 = vmatprep.subr.bf16.mxu0 0
      %1096 = vmatpush2.bf16.msra.mxu0 0
      %1097 = vmatprep.subr.bf16.mxu0 0
      %1098 = vmatpush2.bf16.msra.mxu0 0
      %1099 = vmatprep.subr.bf16.mxu0 0
      %1100 = vmatpush2.bf16.msra.mxu0 0
      %1101 = vmatprep.subr.bf16.mxu0 0
      %1102 = vmatpush2.bf16.msra.mxu0 0
      %1103 = vmatprep.subr.bf16.mxu0 0
      %1104 = vmatpush2.bf16.msra.mxu0 0
      %1105 = vmatprep.subr.bf16.mxu0 0
      %1106 = vmatpush2.bf16.msra.mxu0 0
      %1107 = vmatprep.mubr.bf16.mxu0 0
      %1108 = vmatmul.mubr.bf16.gmra.mxu0 %v1070
      %v1109 = vpop.f32.mrf.mxu0
      %v1110 = vadd.f32 0.0, %v1109
      %v1111 = vpop.f32.mrf.mxu0
      %v1112 = vpop.f32.mrf.mxu0
      %v1113 = vpop.f32.mrf.mxu0
      %1114 = vdwg.mxu0
      %1115 = vrot.lane.b32.xlu0 %v889, 112
      %v1116 = vpop.permute.xlu0 %1115
      %1117 = vrot.lane.b32.xlu0 %v890, 80
      %v1118 = vpop.permute.xlu0 %1117
      %v1120 = vsel %vm894, %v1116, 0
      %v1123 = vsel %vm894, %v1118, 0
      %1125 = vmatprep.subr.bf16.mxu0 0
      %1126 = vmatpush1.bf16.xpose.msra.mxu0 0
      %1127 = vmatprep.subr.bf16.mxu0 0
      %1128 = vmatpush1.bf16.xpose.msra.mxu0 0
      %1129 = vmatprep.subr.bf16.mxu0 0
      %1130 = vmatpush1.bf16.xpose.msra.mxu0 0
      %1131 = vmatprep.subr.bf16.mxu0 0
      %1132 = vmatpush1.bf16.xpose.msra.mxu0 0
      %1133 = vmatprep.subr.bf16.mxu0 0
      %1134 = vmatpush1.bf16.xpose.msra.mxu0 0
      %1135 = vmatprep.subr.bf16.mxu0 0
      %1136 = vmatpush1.bf16.xpose.msra.mxu0 0
      %1137 = vmatprep.subr.bf16.mxu0 0
      %1138 = vmatpush1.bf16.xpose.msra.mxu0 0
      %1139 = vmatprep.subr.bf16.mxu0 0
      %1140 = vmatpush1.bf16.xpose.msra.mxu0 %v1123
      %1141 = vmatprep.subr.bf16.mxu0 0
      %1142 = vmatpush2.bf16.xpose.msra.mxu0 0
      %1143 = vmatprep.subr.bf16.mxu0 0
      %1144 = vmatpush2.bf16.xpose.msra.mxu0 0
      %1145 = vmatprep.subr.bf16.mxu0 0
      %1146 = vmatpush2.bf16.xpose.msra.mxu0 0
      %1147 = vmatprep.subr.bf16.mxu0 0
      %1148 = vmatpush2.bf16.xpose.msra.mxu0 0
      %1149 = vmatprep.subr.bf16.mxu0 0
      %1150 = vmatpush2.bf16.xpose.msra.mxu0 0
      %1151 = vmatprep.subr.bf16.mxu0 0
      %1152 = vmatpush2.bf16.xpose.msra.mxu0 0
      %1153 = vmatprep.subr.bf16.mxu0 0
      %1154 = vmatpush2.bf16.xpose.msra.mxu0 0
      %1155 = vmatprep.subr.bf16.mxu0 0
      %1156 = vmatpush2.bf16.xpose.msra.mxu0 0
      %1157 = vmatprep.mubr.bf16.mxu0 0
      %1158 = vmatmul.mubr.bf16.gmra.mxu0 %v1120
      %v1159 = vpop.f32.mrf.mxu0
      %v1160 = vadd.f32 %v789, %v1159
      %v1161 = vpop.f32.mrf.mxu0
      %v1162 = vpop.f32.mrf.mxu0
      %v1163 = vpop.f32.mrf.mxu0
      %1164 = vdwg.mxu0
      %v1165 = vsel %vm894, %v1160, -inf
      %1166 = vmax.xlane.f32.xlu0 %v1165
      %v1167 = vpop.xlane.xlu0 %1166
      %v1168 = vsub.f32 %v1160, %v1167
      %v1169 = vmul.f32 %v1168, 1.442695
      %v1170 = vpow.pop %v1169
      %v1171 = vsel %vm894, %v1170, 0.0
      %1172 = vadd.xlane.f32.xlu0 %v1171
      %v1173 = vpop.xlane.xlu0 %1172
      %v1174 = vrcp.pop %v1173
      %v1175 = vmul.f32 %v1170, %v1174
      %v1176 = vmul.f32 %v1175, %v787
      %v1177 = vpack.c.bf16 %v1176, %v1176
      %1178 = vrot.lane.b32.xlu0 %v890, 48
      %v1179 = vpop.permute.xlu0 %1178
      %v1181 = vsel %vm894, %v1177, 0
      %v1184 = vsel %vm959, %v1179, 0
      %1186 = vmatprep.subr.bf16.mxu0 0
      %1187 = vmatpush1.bf16.msra.mxu0 0
      %1188 = vmatprep.subr.bf16.mxu0 0
      %1189 = vmatpush1.bf16.msra.mxu0 0
      %1190 = vmatprep.subr.bf16.mxu0 0
      %1191 = vmatpush1.bf16.msra.mxu0 0
      %1192 = vmatprep.subr.bf16.mxu0 0
      %1193 = vmatpush1.bf16.msra.mxu0 0
      %1194 = vmatprep.subr.bf16.mxu0 0
      %1195 = vmatpush1.bf16.msra.mxu0 0
      %1196 = vmatprep.subr.bf16.mxu0 0
      %1197 = vmatpush1.bf16.msra.mxu0 0
      %1198 = vmatprep.subr.bf16.mxu0 0
      %1199 = vmatpush1.bf16.msra.mxu0 0
      %1200 = vmatprep.subr.bf16.mxu0 0
      %1201 = vmatpush1.bf16.msra.mxu0 %v1184
      %1202 = vmatprep.subr.bf16.mxu0 0
      %1203 = vmatpush2.bf16.msra.mxu0 0
      %1204 = vmatprep.subr.bf16.mxu0 0
      %1205 = vmatpush2.bf16.msra.mxu0 0
      %1206 = vmatprep.subr.bf16.mxu0 0
      %1207 = vmatpush2.bf16.msra.mxu0 0
      %1208 = vmatprep.subr.bf16.mxu0 0
      %1209 = vmatpush2.bf16.msra.mxu0 0
      %1210 = vmatprep.subr.bf16.mxu0 0
      %1211 = vmatpush2.bf16.msra.mxu0 0
      %1212 = vmatprep.subr.bf16.mxu0 0
      %1213 = vmatpush2.bf16.msra.mxu0 0
      %1214 = vmatprep.subr.bf16.mxu0 0
      %1215 = vmatpush2.bf16.msra.mxu0 0
      %1216 = vmatprep.subr.bf16.mxu0 0
      %1217 = vmatpush2.bf16.msra.mxu0 0
      %1218 = vmatprep.mubr.bf16.mxu0 0
      %1219 = vmatmul.mubr.bf16.gmra.mxu0 %v1181
      %v1220 = vpop.f32.mrf.mxu0
      %v1221 = vadd.f32 0.0, %v1220
      %v1222 = vpop.f32.mrf.mxu0
      %v1223 = vpop.f32.mrf.mxu0
      %v1224 = vpop.f32.mrf.mxu0
      %1225 = vdwg.mxu0
      %1226 = vrot.lane.b32.xlu0 %v889, 104
      %v1227 = vpop.permute.xlu0 %1226
      %1228 = vrot.lane.b32.xlu0 %v890, 72
      %v1229 = vpop.permute.xlu0 %1228
      %v1231 = vsel %vm894, %v1227, 0
      %v1234 = vsel %vm894, %v1229, 0
      %1236 = vmatprep.subr.bf16.mxu0 0
      %1237 = vmatpush1.bf16.xpose.msra.mxu0 0
      %1238 = vmatprep.subr.bf16.mxu0 0
      %1239 = vmatpush1.bf16.xpose.msra.mxu0 0
      %1240 = vmatprep.subr.bf16.mxu0 0
      %1241 = vmatpush1.bf16.xpose.msra.mxu0 0
      %1242 = vmatprep.subr.bf16.mxu0 0
      %1243 = vmatpush1.bf16.xpose.msra.mxu0 0
      %1244 = vmatprep.subr.bf16.mxu0 0
      %1245 = vmatpush1.bf16.xpose.msra.mxu0 0
      %1246 = vmatprep.subr.bf16.mxu0 0
      %1247 = vmatpush1.bf16.xpose.msra.mxu0 0
      %1248 = vmatprep.subr.bf16.mxu0 0
      %1249 = vmatpush1.bf16.xpose.msra.mxu0 0
      %1250 = vmatprep.subr.bf16.mxu0 0
      %1251 = vmatpush1.bf16.xpose.msra.mxu0 %v1234
      %1252 = vmatprep.subr.bf16.mxu0 0
      %1253 = vmatpush2.bf16.xpose.msra.mxu0 0
      %1254 = vmatprep.subr.bf16.mxu0 0
      %1255 = vmatpush2.bf16.xpose.msra.mxu0 0
      %1256 = vmatprep.subr.bf16.mxu0 0
      %1257 = vmatpush2.bf16.xpose.msra.mxu0 0
      %1258 = vmatprep.subr.bf16.mxu0 0
      %1259 = vmatpush2.bf16.xpose.msra.mxu0 0
      %1260 = vmatprep.subr.bf16.mxu0 0
      %1261 = vmatpush2.bf16.xpose.msra.mxu0 0
      %1262 = vmatprep.subr.bf16.mxu0 0
      %1263 = vmatpush2.bf16.xpose.msra.mxu0 0
      %1264 = vmatprep.subr.bf16.mxu0 0
      %1265 = vmatpush2.bf16.xpose.msra.mxu0 0
      %1266 = vmatprep.subr.bf16.mxu0 0
      %1267 = vmatpush2.bf16.xpose.msra.mxu0 0
      %1268 = vmatprep.mubr.bf16.mxu0 0
      %1269 = vmatmul.mubr.bf16.gmra.mxu0 %v1231
      %v1270 = vpop.f32.mrf.mxu0
      %v1271 = vadd.f32 %v789, %v1270
      %v1272 = vpop.f32.mrf.mxu0
      %v1273 = vpop.f32.mrf.mxu0
      %v1274 = vpop.f32.mrf.mxu0
      %1275 = vdwg.mxu0
      %v1276 = vsel %vm894, %v1271, -inf
      %1277 = vmax.xlane.f32.xlu0 %v1276
      %v1278 = vpop.xlane.xlu0 %1277
      %v1279 = vsub.f32 %v1271, %v1278
      %v1280 = vmul.f32 %v1279, 1.442695
      %v1281 = vpow.pop %v1280
      %v1282 = vsel %vm894, %v1281, 0.0
      %1283 = vadd.xlane.f32.xlu0 %v1282
      %v1284 = vpop.xlane.xlu0 %1283
      %v1285 = vrcp.pop %v1284
      %v1286 = vmul.f32 %v1281, %v1285
      %v1287 = vmul.f32 %v1286, %v787
      %v1288 = vpack.c.bf16 %v1287, %v1287
      %1289 = vrot.lane.b32.xlu0 %v890, 40
      %v1290 = vpop.permute.xlu0 %1289
      %v1292 = vsel %vm894, %v1288, 0
      %v1295 = vsel %vm959, %v1290, 0
      %1297 = vmatprep.subr.bf16.mxu0 0
      %1298 = vmatpush1.bf16.msra.mxu0 0
      %1299 = vmatprep.subr.bf16.mxu0 0
      %1300 = vmatpush1.bf16.msra.mxu0 0
      %1301 = vmatprep.subr.bf16.mxu0 0
      %1302 = vmatpush1.bf16.msra.mxu0 0
      %1303 = vmatprep.subr.bf16.mxu0 0
      %1304 = vmatpush1.bf16.msra.mxu0 0
      %1305 = vmatprep.subr.bf16.mxu0 0
      %1306 = vmatpush1.bf16.msra.mxu0 0
      %1307 = vmatprep.subr.bf16.mxu0 0
      %1308 = vmatpush1.bf16.msra.mxu0 0
      %1309 = vmatprep.subr.bf16.mxu0 0
      %1310 = vmatpush1.bf16.msra.mxu0 0
      %1311 = vmatprep.subr.bf16.mxu0 0
      %1312 = vmatpush1.bf16.msra.mxu0 %v1295
      %1313 = vmatprep.subr.bf16.mxu0 0
      %1314 = vmatpush2.bf16.msra.mxu0 0
      %1315 = vmatprep.subr.bf16.mxu0 0
      %1316 = vmatpush2.bf16.msra.mxu0 0
      %1317 = vmatprep.subr.bf16.mxu0 0
      %1318 = vmatpush2.bf16.msra.mxu0 0
      %1319 = vmatprep.subr.bf16.mxu0 0
      %1320 = vmatpush2.bf16.msra.mxu0 0
      %1321 = vmatprep.subr.bf16.mxu0 0
      %1322 = vmatpush2.bf16.msra.mxu0 0
      %1323 = vmatprep.subr.bf16.mxu0 0
      %1324 = vmatpush2.bf16.msra.mxu0 0
      %1325 = vmatprep.subr.bf16.mxu0 0
      %1326 = vmatpush2.bf16.msra.mxu0 0
      %1327 = vmatprep.subr.bf16.mxu0 0
      %1328 = vmatpush2.bf16.msra.mxu0 0
      %1329 = vmatprep.mubr.bf16.mxu0 0
      %1330 = vmatmul.mubr.bf16.gmra.mxu0 %v1292
      %v1331 = vpop.f32.mrf.mxu0
      %v1332 = vadd.f32 0.0, %v1331
      %v1333 = vpop.f32.mrf.mxu0
      %v1334 = vpop.f32.mrf.mxu0
      %v1335 = vpop.f32.mrf.mxu0
      %1336 = vdwg.mxu0
      %1338 = vrot.lane.b32.xlu0 %v1110, 8
      %v1339 = vpop.permute.xlu0 %1338
      %1342 = vrot.lane.b32.xlu0 %v1221, 16
      %v1343 = vpop.permute.xlu0 %1342
      %1346 = vrot.lane.b32.xlu0 %v1332, 24
      %v1347 = vpop.permute.xlu0 %1346
      %v1349 = vsel %vm894, %v998, %v1339
      %vm1350 = vcmask 130048
      %v1351 = vsel %vm1350, %v1349, %v1343
      %vm1352 = vcmask 195584
      %v1353 = vsel %vm1352, %v1351, %v1347
      %v1354 = vld [vmem:[%s8] sm:$0xf]
      %v1355 = vld [vmem:[%s8 + $0x4] sm:$0xf]
      %v1356 = vld [vmem:[%s8 + $0x8] sm:$0xf]
      %v1357 = vld [vmem:[%s8 + $0xc] sm:$0xf]
      %v1358 = vpack.c.bf16 %v1353, %v1353
      %v1363 = vunpack.c.l.b16 %v1354
      %v1364 = vunpack.c.l.b16 %v1355
      %v1365 = vunpack.c.l.b16 %v1356
      %v1366 = vunpack.c.l.b16 %v1357
      %v1367 = vpack.c.b16 %v1364, %v1363
      %v1368 = vpack.c.b16 %v1366, %v1365
      %v1372 = vsel %vm792, %v1358, 0
      %1374 = vmatprep.subr.bf16.mxu0 0
      %1375 = vmatpush1.bf16.msra.mxu0 0
      %1376 = vmatprep.subr.bf16.mxu0 0
      %1377 = vmatpush1.bf16.msra.mxu0 0
      %1378 = vmatprep.subr.bf16.mxu0 0
      %1379 = vmatpush1.bf16.msra.mxu0 0
      %1380 = vmatprep.subr.bf16.mxu0 0
      %1381 = vmatpush1.bf16.msra.mxu0 0
      %1382 = vmatprep.subr.bf16.mxu0 0
      %1383 = vmatpush1.bf16.msra.mxu0 0
      %1384 = vmatprep.subr.bf16.mxu0 0
      %1385 = vmatpush1.bf16.msra.mxu0 0
      %1386 = vmatprep.subr.bf16.mxu0 0
      %1387 = vmatpush1.bf16.msra.mxu0 %v1368
      %1388 = vmatprep.subr.bf16.mxu0 0
      %1389 = vmatpush1.bf16.msra.mxu0 %v1367
      %1390 = vmatprep.subr.bf16.mxu0 0
      %1391 = vmatpush2.bf16.msra.mxu0 0
      %1392 = vmatprep.subr.bf16.mxu0 0
      %1393 = vmatpush2.bf16.msra.mxu0 0
      %1394 = vmatprep.subr.bf16.mxu0 0
      %1395 = vmatpush2.bf16.msra.mxu0 0
      %1396 = vmatprep.subr.bf16.mxu0 0
      %1397 = vmatpush2.bf16.msra.mxu0 0
      %1398 = vmatprep.subr.bf16.mxu0 0
      %1399 = vmatpush2.bf16.msra.mxu0 0
      %1400 = vmatprep.subr.bf16.mxu0 0
      %1401 = vmatpush2.bf16.msra.mxu0 0
      %1402 = vmatprep.subr.bf16.mxu0 0
      %1403 = vmatpush2.bf16.msra.mxu0 0
      %1404 = vmatprep.subr.bf16.mxu0 0
      %1405 = vmatpush2.bf16.msra.mxu0 0
      %1406 = vmatprep.mubr.bf16.mxu0 0
      %1407 = vmatmul.mubr.bf16.gmra.mxu0 %v1372
      %v1408 = vpop.f32.mrf.mxu0
      %v1409 = vadd.f32 0.0, %v1408
      %v1410 = vpop.f32.mrf.mxu0
      %v1411 = vpop.f32.mrf.mxu0
      %v1412 = vpop.f32.mrf.mxu0
      %1413 = vdwg.mxu0
      %v1414 = vadd.f32 %v785, %v1409
      %v1415 = vld [vmem:[%s9] sm:$0x1]
      %v1417 = vlaneseq
      %v1418 = vshrl.u32 %v1417, 7
      %v1419 = vsub.s32 0, %v1418
      %v1420 = vrot.slane %v1415, %v1419
      %v1422 = vadd.f32 %v1414, %v1420
      %v1423 = vld [vmem:[%s776] sm:$0xff]
      %v1424 = vld [vmem:[%s776 + $0x8] sm:$0xf]
      %v1425 = vld [vmem:[%s779] sm:$0x1]
      %v1426 = vunpack.c.l.bf16 %v1425
      %v1427 = vsub.f32 1.0, %v1426
      %v1428 = vmul.f32 %v1427, -1e+30
      %v1429 = vld [vmem:[%s10] sm:$0x1]
      %v1430 = vld [vmem:[%s11] sm:$0x1]
      %v1431 = vsel %vm792, %v1422, 0.0
      %1432 = vadd.xlane.f32.xlu0 %v1431
      %v1433 = vpop.xlane.xlu0 %1432
      %v1434 = vmul.f32 %v1433, %v796
      %v1435 = vsub.f32 %v1422, %v1434
      %v1436 = vmul.f32 %v1435, %v1435
      %v1437 = vsel %vm792, %v1436, 0.0
      %1438 = vadd.xlane.f32.xlu0 %v1437
      %v1439 = vpop.xlane.xlu0 %1438
      %v1440 = vmul.f32 %v1439, %v796
      %v1441 = vadd.f32 %v1440, 1e-12
      %v1442 = vrsqrt.pop %v1441
      %v1443 = vmul.f32 %v1435, %v1442
      %v1445 = vlaneseq
      %v1446 = vshrl.u32 %v1445, 7
      %v1447 = vsub.s32 0, %v1446
      %v1448 = vrot.slane %v1429, %v1447
      %v1450 = vmul.f32 %v1443, %v1448
      %v1452 = vlaneseq
      %v1453 = vshrl.u32 %v1452, 7
      %v1454 = vsub.s32 0, %v1453
      %v1455 = vrot.slane %v1430, %v1454
      %v1457 = vadd.f32 %v1450, %v1455
      %v1458 = vld [vmem:[%s12] sm:$0xf]
      %v1459 = vld [vmem:[%s12 + $0x4] sm:$0xf]
      %v1460 = vld [vmem:[%s12 + $0x8] sm:$0xf]
      %v1461 = vld [vmem:[%s12 + $0xc] sm:$0xf]
      %v1462 = vpack.c.bf16 %v1457, %v1457
      %v1463 = vld [vmem:[%s13] sm:$0x1]
      %v1465 = vlaneseq
      %v1466 = vshrl.u32 %v1465, 7
      %v1467 = vsub.s32 0, %v1466
      %v1468 = vrot.slane %v1463, %v1467
      %v1474 = vunpack.c.l.b16 %v1458
      %v1475 = vunpack.c.l.b16 %v1459
      %v1476 = vunpack.c.l.b16 %v1460
      %v1477 = vunpack.c.l.b16 %v1461
      %v1478 = vpack.c.b16 %v1475, %v1474
      %v1479 = vpack.c.b16 %v1477, %v1476
      %v1483 = vsel %vm792, %v1462, 0
      %1485 = vmatprep.subr.bf16.mxu0 0
      %1486 = vmatpush1.bf16.msra.mxu0 0
      %1487 = vmatprep.subr.bf16.mxu0 0
      %1488 = vmatpush1.bf16.msra.mxu0 0
      %1489 = vmatprep.subr.bf16.mxu0 0
      %1490 = vmatpush1.bf16.msra.mxu0 0
      %1491 = vmatprep.subr.bf16.mxu0 0
      %1492 = vmatpush1.bf16.msra.mxu0 0
      %1493 = vmatprep.subr.bf16.mxu0 0
      %1494 = vmatpush1.bf16.msra.mxu0 0
      %1495 = vmatprep.subr.bf16.mxu0 0
      %1496 = vmatpush1.bf16.msra.mxu0 0
      %1497 = vmatprep.subr.bf16.mxu0 0
      %1498 = vmatpush1.bf16.msra.mxu0 %v1479
      %1499 = vmatprep.subr.bf16.mxu0 0
      %1500 = vmatpush1.bf16.msra.mxu0 %v1478
      %1501 = vmatprep.subr.bf16.mxu0 0
      %1502 = vmatpush2.bf16.msra.mxu0 0
      %1503 = vmatprep.subr.bf16.mxu0 0
      %1504 = vmatpush2.bf16.msra.mxu0 0
      %1505 = vmatprep.subr.bf16.mxu0 0
      %1506 = vmatpush2.bf16.msra.mxu0 0
      %1507 = vmatprep.subr.bf16.mxu0 0
      %1508 = vmatpush2.bf16.msra.mxu0 0
      %1509 = vmatprep.subr.bf16.mxu0 0
      %1510 = vmatpush2.bf16.msra.mxu0 0
      %1511 = vmatprep.subr.bf16.mxu0 0
      %1512 = vmatpush2.bf16.msra.mxu0 0
      %1513 = vmatprep.subr.bf16.mxu0 0
      %1514 = vmatpush2.bf16.msra.mxu0 0
      %1515 = vmatprep.subr.bf16.mxu0 0
      %1516 = vmatpush2.bf16.msra.mxu0 0
      %1517 = vmatprep.mubr.bf16.mxu0 0
      %1518 = vmatmul.mubr.bf16.gmra.mxu0 %v1483
      %v1519 = vpop.f32.mrf.mxu0
      %v1520 = vadd.f32 %v1468, %v1519
      %v1521 = vpop.f32.mrf.mxu0
      %v1522 = vpop.f32.mrf.mxu0
      %v1523 = vpop.f32.mrf.mxu0
      %1524 = vdwg.mxu0
      %v1525 = vmul.f32 %v1520, 0.35355338
      %v1526 = vpack.c.bf16 %v1525, %v1525
      %v1527 = vld [vmem:[%s14] sm:$0xf]
      %v1528 = vld [vmem:[%s14 + $0x4] sm:$0xf]
      %v1529 = vld [vmem:[%s14 + $0x8] sm:$0xf]
      %v1530 = vld [vmem:[%s14 + $0xc] sm:$0xf]
      %v1531 = vpack.c.bf16 %v1424, %v1423
      %v1532 = vld [vmem:[%s15] sm:$0x1]
      %v1534 = vlaneseq
      %v1535 = vshrl.u32 %v1534, 7
      %v1536 = vsub.s32 0, %v1535
      %v1537 = vrot.slane %v1532, %v1536
      %v1543 = vunpack.c.l.b16 %v1527
      %v1544 = vunpack.c.l.b16 %v1528
      %v1545 = vunpack.c.l.b16 %v1529
      %v1546 = vunpack.c.l.b16 %v1530
      %v1547 = vpack.c.b16 %v1544, %v1543
      %v1548 = vpack.c.b16 %v1546, %v1545
      %v1552 = vsel %vm792, %v1531, 0
      %1554 = vmatprep.subr.bf16.mxu0 0
      %1555 = vmatpush1.bf16.msra.mxu0 0
      %1556 = vmatprep.subr.bf16.mxu0 0
      %1557 = vmatpush1.bf16.msra.mxu0 0
      %1558 = vmatprep.subr.bf16.mxu0 0
      %1559 = vmatpush1.bf16.msra.mxu0 0
      %1560 = vmatprep.subr.bf16.mxu0 0
      %1561 = vmatpush1.bf16.msra.mxu0 0
      %1562 = vmatprep.subr.bf16.mxu0 0
      %1563 = vmatpush1.bf16.msra.mxu0 0
      %1564 = vmatprep.subr.bf16.mxu0 0
      %1565 = vmatpush1.bf16.msra.mxu0 0
      %1566 = vmatprep.subr.bf16.mxu0 0
      %1567 = vmatpush1.bf16.msra.mxu0 %v1548
      %1568 = vmatprep.subr.bf16.mxu0 0
      %1569 = vmatpush1.bf16.msra.mxu0 %v1547
      %1570 = vmatprep.subr.bf16.mxu0 0
      %1571 = vmatpush2.bf16.msra.mxu0 0
      %1572 = vmatprep.subr.bf16.mxu0 0
      %1573 = vmatpush2.bf16.msra.mxu0 0
      %1574 = vmatprep.subr.bf16.mxu0 0
      %1575 = vmatpush2.bf16.msra.mxu0 0
      %1576 = vmatprep.subr.bf16.mxu0 0
      %1577 = vmatpush2.bf16.msra.mxu0 0
      %1578 = vmatprep.subr.bf16.mxu0 0
      %1579 = vmatpush2.bf16.msra.mxu0 0
      %1580 = vmatprep.subr.bf16.mxu0 0
      %1581 = vmatpush2.bf16.msra.mxu0 0
      %1582 = vmatprep.subr.bf16.mxu0 0
      %1583 = vmatpush2.bf16.msra.mxu0 0
      %1584 = vmatprep.subr.bf16.mxu0 0
      %1585 = vmatpush2.bf16.msra.mxu0 0
      %1586 = vmatprep.mubr.bf16.mxu0 0
      %1587 = vmatmul.mubr.bf16.gmra.mxu0 %v1552
      %v1588 = vpop.f32.mrf.mxu0
      %v1589 = vadd.f32 %v1537, %v1588
      %v1590 = vpop.f32.mrf.mxu0
      %v1591 = vpop.f32.mrf.mxu0
      %v1592 = vadd.f32 %v1537, %v1591
      %v1593 = vpop.f32.mrf.mxu0
      %1594 = vdwg.mxu0
      %v1595 = vpack.c.bf16 %v1592, %v1589
      %v1596 = vlaneseq
      %v1597 = vshrl.u32 %v1596, 7
      %v1598 = vsub.s32 0, %v1597
      %v1599 = vrot.slane %v1428, %v1598
      %v1601 = vsel %vm894, %v1526, 0
      %v1604 = vsel %vm894, %v1595, 0
      %1606 = vmatprep.subr.bf16.mxu0 0
      %1607 = vmatpush1.bf16.xpose.msra.mxu0 0
      %1608 = vmatprep.subr.bf16.mxu0 0
      %1609 = vmatpush1.bf16.xpose.msra.mxu0 0
      %1610 = vmatprep.subr.bf16.mxu0 0
      %1611 = vmatpush1.bf16.xpose.msra.mxu0 0
      %1612 = vmatprep.subr.bf16.mxu0 0
      %1613 = vmatpush1.bf16.xpose.msra.mxu0 0
      %1614 = vmatprep.subr.bf16.mxu0 0
      %1615 = vmatpush1.bf16.xpose.msra.mxu0 0
      %1616 = vmatprep.subr.bf16.mxu0 0
      %1617 = vmatpush1.bf16.xpose.msra.mxu0 0
      %1618 = vmatprep.subr.bf16.mxu0 0
      %1619 = vmatpush1.bf16.xpose.msra.mxu0 0
      %1620 = vmatprep.subr.bf16.mxu0 0
      %1621 = vmatpush1.bf16.xpose.msra.mxu0 %v1604
      %1622 = vmatprep.subr.bf16.mxu0 0
      %1623 = vmatpush2.bf16.xpose.msra.mxu0 0
      %1624 = vmatprep.subr.bf16.mxu0 0
      %1625 = vmatpush2.bf16.xpose.msra.mxu0 0
      %1626 = vmatprep.subr.bf16.mxu0 0
      %1627 = vmatpush2.bf16.xpose.msra.mxu0 0
      %1628 = vmatprep.subr.bf16.mxu0 0
      %1629 = vmatpush2.bf16.xpose.msra.mxu0 0
      %1630 = vmatprep.subr.bf16.mxu0 0
      %1631 = vmatpush2.bf16.xpose.msra.mxu0 0
      %1632 = vmatprep.subr.bf16.mxu0 0
      %1633 = vmatpush2.bf16.xpose.msra.mxu0 0
      %1634 = vmatprep.subr.bf16.mxu0 0
      %1635 = vmatpush2.bf16.xpose.msra.mxu0 0
      %1636 = vmatprep.subr.bf16.mxu0 0
      %1637 = vmatpush2.bf16.xpose.msra.mxu0 0
      %1638 = vmatprep.mubr.bf16.mxu0 0
      %1639 = vmatmul.mubr.bf16.gmra.mxu0 %v1601
      %v1640 = vpop.f32.mrf.mxu0
      %v1641 = vadd.f32 %v1599, %v1640
      %v1642 = vpop.f32.mrf.mxu0
      %v1643 = vpop.f32.mrf.mxu0
      %v1644 = vpop.f32.mrf.mxu0
      %1645 = vdwg.mxu0
      %vm1646 = vcmask 97280
      %v1647 = vsel %vm1646, %v1641, -inf
      %1648 = vmax.xlane.f32.xlu0 %v1647
      %v1649 = vpop.xlane.xlu0 %1648
      %v1650 = vsub.f32 %v1641, %v1649
      %v1651 = vmul.f32 %v1650, 1.442695
      %v1652 = vpow.pop %v1651
      %v1653 = vsel %vm1646, %v1652, 0.0
      %1654 = vadd.xlane.f32.xlu0 %v1653
      %v1655 = vpop.xlane.xlu0 %1654
      %v1656 = vrcp.pop %v1655
      %v1657 = vmul.f32 %v1652, %v1656
      %v1658 = vlaneseq
      %v1659 = vshrl.u32 %v1658, 7
      %v1660 = vsub.s32 0, %v1659
      %v1661 = vrot.slane %v1426, %v1660
      %v1662 = vmul.f32 %v1657, %v1661
      %v1663 = vpack.c.bf16 %v1662, %v1662
      %1665 = vrot.lane.b32.xlu0 %v1595, 96
      %v1666 = vpop.permute.xlu0 %1665
      %v1668 = vsel %vm1646, %v1663, 0
      %vm1670 = vcmask 1045504
      %v1672 = vsel %vm1670, %v1666, 0
      %1674 = vmatprep.subr.bf16.mxu0 0
      %1675 = vmatpush1.bf16.msra.mxu0 0
      %1676 = vmatprep.subr.bf16.mxu0 0
      %1677 = vmatpush1.bf16.msra.mxu0 0
      %1678 = vmatprep.subr.bf16.mxu0 0
      %1679 = vmatpush1.bf16.msra.mxu0 0
      %1680 = vmatprep.subr.bf16.mxu0 0
      %1681 = vmatpush1.bf16.msra.mxu0 0
      %1682 = vmatprep.subr.bf16.mxu0 0
      %1683 = vmatpush1.bf16.msra.mxu0 0
      %1684 = vmatprep.subr.bf16.mxu0 0
      %1685 = vmatpush1.bf16.msra.mxu0 0
      %1686 = vmatprep.subr.bf16.mxu0 0
      %1687 = vmatpush1.bf16.msra.mxu0 0
      %1688 = vmatprep.subr.bf16.mxu0 0
      %1689 = vmatpush1.bf16.msra.mxu0 %v1672
      %1690 = vmatprep.subr.bf16.mxu0 0
      %1691 = vmatpush2.bf16.msra.mxu0 0
      %1692 = vmatprep.subr.bf16.mxu0 0
      %1693 = vmatpush2.bf16.msra.mxu0 0
      %1694 = vmatprep.subr.bf16.mxu0 0
      %1695 = vmatpush2.bf16.msra.mxu0 0
      %1696 = vmatprep.subr.bf16.mxu0 0
      %1697 = vmatpush2.bf16.msra.mxu0 0
      %1698 = vmatprep.subr.bf16.mxu0 0
      %1699 = vmatpush2.bf16.msra.mxu0 0
      %1700 = vmatprep.subr.bf16.mxu0 0
      %1701 = vmatpush2.bf16.msra.mxu0 0
      %1702 = vmatprep.subr.bf16.mxu0 0
      %1703 = vmatpush2.bf16.msra.mxu0 0
      %1704 = vmatprep.subr.bf16.mxu0 0
      %1705 = vmatpush2.bf16.msra.mxu0 0
      %1706 = vmatprep.mubr.bf16.mxu0 0
      %1707 = vmatmul.mubr.bf16.gmra.mxu0 %v1668
      %v1708 = vpop.f32.mrf.mxu0
      %v1709 = vadd.f32 0.0, %v1708
      %v1710 = vpop.f32.mrf.mxu0
      %v1711 = vpop.f32.mrf.mxu0
      %v1712 = vpop.f32.mrf.mxu0
      %1713 = vdwg.mxu0
      %1715 = vrot.lane.b32.xlu0 %v1526, 120
      %v1716 = vpop.permute.xlu0 %1715
      %1717 = vrot.lane.b32.xlu0 %v1595, 120
      %v1718 = vpop.permute.xlu0 %1717
      %v1720 = vsel %vm894, %v1716, 0
      %v1723 = vsel %vm894, %v1718, 0
      %1725 = vmatprep.subr.bf16.mxu0 0
      %1726 = vmatpush1.bf16.xpose.msra.mxu0 0
      %1727 = vmatprep.subr.bf16.mxu0 0
      %1728 = vmatpush1.bf16.xpose.msra.mxu0 0
      %1729 = vmatprep.subr.bf16.mxu0 0
      %1730 = vmatpush1.bf16.xpose.msra.mxu0 0
      %1731 = vmatprep.subr.bf16.mxu0 0
      %1732 = vmatpush1.bf16.xpose.msra.mxu0 0
      %1733 = vmatprep.subr.bf16.mxu0 0
      %1734 = vmatpush1.bf16.xpose.msra.mxu0 0
      %1735 = vmatprep.subr.bf16.mxu0 0
      %1736 = vmatpush1.bf16.xpose.msra.mxu0 0
      %1737 = vmatprep.subr.bf16.mxu0 0
      %1738 = vmatpush1.bf16.xpose.msra.mxu0 0
      %1739 = vmatprep.subr.bf16.mxu0 0
      %1740 = vmatpush1.bf16.xpose.msra.mxu0 %v1723
      %1741 = vmatprep.subr.bf16.mxu0 0
      %1742 = vmatpush2.bf16.xpose.msra.mxu0 0
      %1743 = vmatprep.subr.bf16.mxu0 0
      %1744 = vmatpush2.bf16.xpose.msra.mxu0 0
      %1745 = vmatprep.subr.bf16.mxu0 0
      %1746 = vmatpush2.bf16.xpose.msra.mxu0 0
      %1747 = vmatprep.subr.bf16.mxu0 0
      %1748 = vmatpush2.bf16.xpose.msra.mxu0 0
      %1749 = vmatprep.subr.bf16.mxu0 0
      %1750 = vmatpush2.bf16.xpose.msra.mxu0 0
      %1751 = vmatprep.subr.bf16.mxu0 0
      %1752 = vmatpush2.bf16.xpose.msra.mxu0 0
      %1753 = vmatprep.subr.bf16.mxu0 0
      %1754 = vmatpush2.bf16.xpose.msra.mxu0 0
      %1755 = vmatprep.subr.bf16.mxu0 0
      %1756 = vmatpush2.bf16.xpose.msra.mxu0 0
      %1757 = vmatprep.mubr.bf16.mxu0 0
      %1758 = vmatmul.mubr.bf16.gmra.mxu0 %v1720
      %v1759 = vpop.f32.mrf.mxu0
      %v1760 = vadd.f32 %v1599, %v1759
      %v1761 = vpop.f32.mrf.mxu0
      %v1762 = vpop.f32.mrf.mxu0
      %v1763 = vpop.f32.mrf.mxu0
      %1764 = vdwg.mxu0
      %v1765 = vsel %vm1646, %v1760, -inf
      %1766 = vmax.xlane.f32.xlu0 %v1765
      %v1767 = vpop.xlane.xlu0 %1766
      %v1768 = vsub.f32 %v1760, %v1767
      %v1769 = vmul.f32 %v1768, 1.442695
      %v1770 = vpow.pop %v1769
      %v1771 = vsel %vm1646, %v1770, 0.0
      %1772 = vadd.xlane.f32.xlu0 %v1771
      %v1773 = vpop.xlane.xlu0 %1772
      %v1774 = vrcp.pop %v1773
      %v1775 = vmul.f32 %v1770, %v1774
      %v1776 = vmul.f32 %v1775, %v1661
      %v1777 = vpack.c.bf16 %v1776, %v1776
      %1778 = vrot.lane.b32.xlu0 %v1595, 88
      %v1779 = vpop.permute.xlu0 %1778
      %v1781 = vsel %vm1646, %v1777, 0
      %v1784 = vsel %vm1670, %v1779, 0
      %1786 = vmatprep.subr.bf16.mxu0 0
      %1787 = vmatpush1.bf16.msra.mxu0 0
      %1788 = vmatprep.subr.bf16.mxu0 0
      %1789 = vmatpush1.bf16.msra.mxu0 0
      %1790 = vmatprep.subr.bf16.mxu0 0
      %1791 = vmatpush1.bf16.msra.mxu0 0
      %1792 = vmatprep.subr.bf16.mxu0 0
      %1793 = vmatpush1.bf16.msra.mxu0 0
      %1794 = vmatprep.subr.bf16.mxu0 0
      %1795 = vmatpush1.bf16.msra.mxu0 0
      %1796 = vmatprep.subr.bf16.mxu0 0
      %1797 = vmatpush1.bf16.msra.mxu0 0
      %1798 = vmatprep.subr.bf16.mxu0 0
      %1799 = vmatpush1.bf16.msra.mxu0 0
      %1800 = vmatprep.subr.bf16.mxu0 0
      %1801 = vmatpush1.bf16.msra.mxu0 %v1784
      %1802 = vmatprep.subr.bf16.mxu0 0
      %1803 = vmatpush2.bf16.msra.mxu0 0
      %1804 = vmatprep.subr.bf16.mxu0 0
      %1805 = vmatpush2.bf16.msra.mxu0 0
      %1806 = vmatprep.subr.bf16.mxu0 0
      %1807 = vmatpush2.bf16.msra.mxu0 0
      %1808 = vmatprep.subr.bf16.mxu0 0
      %1809 = vmatpush2.bf16.msra.mxu0 0
      %1810 = vmatprep.subr.bf16.mxu0 0
      %1811 = vmatpush2.bf16.msra.mxu0 0
      %1812 = vmatprep.subr.bf16.mxu0 0
      %1813 = vmatpush2.bf16.msra.mxu0 0
      %1814 = vmatprep.subr.bf16.mxu0 0
      %1815 = vmatpush2.bf16.msra.mxu0 0
      %1816 = vmatprep.subr.bf16.mxu0 0
      %1817 = vmatpush2.bf16.msra.mxu0 0
      %1818 = vmatprep.mubr.bf16.mxu0 0
      %1819 = vmatmul.mubr.bf16.gmra.mxu0 %v1781
      %v1820 = vpop.f32.mrf.mxu0
      %v1821 = vadd.f32 0.0, %v1820
      %v1822 = vpop.f32.mrf.mxu0
      %v1823 = vpop.f32.mrf.mxu0
      %v1824 = vpop.f32.mrf.mxu0
      %1825 = vdwg.mxu0
      %1826 = vrot.lane.b32.xlu0 %v1526, 112
      %v1827 = vpop.permute.xlu0 %1826
      %1828 = vrot.lane.b32.xlu0 %v1595, 112
      %v1829 = vpop.permute.xlu0 %1828
      %v1831 = vsel %vm894, %v1827, 0
      %v1834 = vsel %vm894, %v1829, 0
      %1836 = vmatprep.subr.bf16.mxu0 0
      %1837 = vmatpush1.bf16.xpose.msra.mxu0 0
      %1838 = vmatprep.subr.bf16.mxu0 0
      %1839 = vmatpush1.bf16.xpose.msra.mxu0 0
      %1840 = vmatprep.subr.bf16.mxu0 0
      %1841 = vmatpush1.bf16.xpose.msra.mxu0 0
      %1842 = vmatprep.subr.bf16.mxu0 0
      %1843 = vmatpush1.bf16.xpose.msra.mxu0 0
      %1844 = vmatprep.subr.bf16.mxu0 0
      %1845 = vmatpush1.bf16.xpose.msra.mxu0 0
      %1846 = vmatprep.subr.bf16.mxu0 0
      %1847 = vmatpush1.bf16.xpose.msra.mxu0 0
      %1848 = vmatprep.subr.bf16.mxu0 0
      %1849 = vmatpush1.bf16.xpose.msra.mxu0 0
      %1850 = vmatprep.subr.bf16.mxu0 0
      %1851 = vmatpush1.bf16.xpose.msra.mxu0 %v1834
      %1852 = vmatprep.subr.bf16.mxu0 0
      %1853 = vmatpush2.bf16.xpose.msra.mxu0 0
      %1854 = vmatprep.subr.bf16.mxu0 0
      %1855 = vmatpush2.bf16.xpose.msra.mxu0 0
      %1856 = vmatprep.subr.bf16.mxu0 0
      %1857 = vmatpush2.bf16.xpose.msra.mxu0 0
      %1858 = vmatprep.subr.bf16.mxu0 0
      %1859 = vmatpush2.bf16.xpose.msra.mxu0 0
      %1860 = vmatprep.subr.bf16.mxu0 0
      %1861 = vmatpush2.bf16.xpose.msra.mxu0 0
      %1862 = vmatprep.subr.bf16.mxu0 0
      %1863 = vmatpush2.bf16.xpose.msra.mxu0 0
      %1864 = vmatprep.subr.bf16.mxu0 0
      %1865 = vmatpush2.bf16.xpose.msra.mxu0 0
      %1866 = vmatprep.subr.bf16.mxu0 0
      %1867 = vmatpush2.bf16.xpose.msra.mxu0 0
      %1868 = vmatprep.mubr.bf16.mxu0 0
      %1869 = vmatmul.mubr.bf16.gmra.mxu0 %v1831
      %v1870 = vpop.f32.mrf.mxu0
      %v1871 = vadd.f32 %v1599, %v1870
      %v1872 = vpop.f32.mrf.mxu0
      %v1873 = vpop.f32.mrf.mxu0
      %v1874 = vpop.f32.mrf.mxu0
      %1875 = vdwg.mxu0
      %v1876 = vsel %vm1646, %v1871, -inf
      %1877 = vmax.xlane.f32.xlu0 %v1876
      %v1878 = vpop.xlane.xlu0 %1877
      %v1879 = vsub.f32 %v1871, %v1878
      %v1880 = vmul.f32 %v1879, 1.442695
      %v1881 = vpow.pop %v1880
      %v1882 = vsel %vm1646, %v1881, 0.0
      %1883 = vadd.xlane.f32.xlu0 %v1882
      %v1884 = vpop.xlane.xlu0 %1883
      %v1885 = vrcp.pop %v1884
      %v1886 = vmul.f32 %v1881, %v1885
      %v1887 = vmul.f32 %v1886, %v1661
      %v1888 = vpack.c.bf16 %v1887, %v1887
      %1889 = vrot.lane.b32.xlu0 %v1595, 80
      %v1890 = vpop.permute.xlu0 %1889
      %v1892 = vsel %vm1646, %v1888, 0
      %v1895 = vsel %vm1670, %v1890, 0
      %1897 = vmatprep.subr.bf16.mxu0 0
      %1898 = vmatpush1.bf16.msra.mxu0 0
      %1899 = vmatprep.subr.bf16.mxu0 0
      %1900 = vmatpush1.bf16.msra.mxu0 0
      %1901 = vmatprep.subr.bf16.mxu0 0
      %1902 = vmatpush1.bf16.msra.mxu0 0
      %1903 = vmatprep.subr.bf16.mxu0 0
      %1904 = vmatpush1.bf16.msra.mxu0 0
      %1905 = vmatprep.subr.bf16.mxu0 0
      %1906 = vmatpush1.bf16.msra.mxu0 0
      %1907 = vmatprep.subr.bf16.mxu0 0
      %1908 = vmatpush1.bf16.msra.mxu0 0
      %1909 = vmatprep.subr.bf16.mxu0 0
      %1910 = vmatpush1.bf16.msra.mxu0 0
      %1911 = vmatprep.subr.bf16.mxu0 0
      %1912 = vmatpush1.bf16.msra.mxu0 %v1895
      %1913 = vmatprep.subr.bf16.mxu0 0
      %1914 = vmatpush2.bf16.msra.mxu0 0
      %1915 = vmatprep.subr.bf16.mxu0 0
      %1916 = vmatpush2.bf16.msra.mxu0 0
      %1917 = vmatprep.subr.bf16.mxu0 0
      %1918 = vmatpush2.bf16.msra.mxu0 0
      %1919 = vmatprep.subr.bf16.mxu0 0
      %1920 = vmatpush2.bf16.msra.mxu0 0
      %1921 = vmatprep.subr.bf16.mxu0 0
      %1922 = vmatpush2.bf16.msra.mxu0 0
      %1923 = vmatprep.subr.bf16.mxu0 0
      %1924 = vmatpush2.bf16.msra.mxu0 0
      %1925 = vmatprep.subr.bf16.mxu0 0
      %1926 = vmatpush2.bf16.msra.mxu0 0
      %1927 = vmatprep.subr.bf16.mxu0 0
      %1928 = vmatpush2.bf16.msra.mxu0 0
      %1929 = vmatprep.mubr.bf16.mxu0 0
      %1930 = vmatmul.mubr.bf16.gmra.mxu0 %v1892
      %v1931 = vpop.f32.mrf.mxu0
      %v1932 = vadd.f32 0.0, %v1931
      %v1933 = vpop.f32.mrf.mxu0
      %v1934 = vpop.f32.mrf.mxu0
      %v1935 = vpop.f32.mrf.mxu0
      %1936 = vdwg.mxu0
      %1937 = vrot.lane.b32.xlu0 %v1526, 104
      %v1938 = vpop.permute.xlu0 %1937
      %1939 = vrot.lane.b32.xlu0 %v1595, 104
      %v1940 = vpop.permute.xlu0 %1939
      %v1942 = vsel %vm894, %v1938, 0
      %v1945 = vsel %vm894, %v1940, 0
      %1947 = vmatprep.subr.bf16.mxu0 0
      %1948 = vmatpush1.bf16.xpose.msra.mxu0 0
      %1949 = vmatprep.subr.bf16.mxu0 0
      %1950 = vmatpush1.bf16.xpose.msra.mxu0 0
      %1951 = vmatprep.subr.bf16.mxu0 0
      %1952 = vmatpush1.bf16.xpose.msra.mxu0 0
      %1953 = vmatprep.subr.bf16.mxu0 0
      %1954 = vmatpush1.bf16.xpose.msra.mxu0 0
      %1955 = vmatprep.subr.bf16.mxu0 0
      %1956 = vmatpush1.bf16.xpose.msra.mxu0 0
      %1957 = vmatprep.subr.bf16.mxu0 0
      %1958 = vmatpush1.bf16.xpose.msra.mxu0 0
      %1959 = vmatprep.subr.bf16.mxu0 0
      %1960 = vmatpush1.bf16.xpose.msra.mxu0 0
      %1961 = vmatprep.subr.bf16.mxu0 0
      %1962 = vmatpush1.bf16.xpose.msra.mxu0 %v1945
      %1963 = vmatprep.subr.bf16.mxu0 0
      %1964 = vmatpush2.bf16.xpose.msra.mxu0 0
      %1965 = vmatprep.subr.bf16.mxu0 0
      %1966 = vmatpush2.bf16.xpose.msra.mxu0 0
      %1967 = vmatprep.subr.bf16.mxu0 0
      %1968 = vmatpush2.bf16.xpose.msra.mxu0 0
      %1969 = vmatprep.subr.bf16.mxu0 0
      %1970 = vmatpush2.bf16.xpose.msra.mxu0 0
      %1971 = vmatprep.subr.bf16.mxu0 0
      %1972 = vmatpush2.bf16.xpose.msra.mxu0 0
      %1973 = vmatprep.subr.bf16.mxu0 0
      %1974 = vmatpush2.bf16.xpose.msra.mxu0 0
      %1975 = vmatprep.subr.bf16.mxu0 0
      %1976 = vmatpush2.bf16.xpose.msra.mxu0 0
      %1977 = vmatprep.subr.bf16.mxu0 0
      %1978 = vmatpush2.bf16.xpose.msra.mxu0 0
      %1979 = vmatprep.mubr.bf16.mxu0 0
      %1980 = vmatmul.mubr.bf16.gmra.mxu0 %v1942
      %v1981 = vpop.f32.mrf.mxu0
      %v1982 = vadd.f32 %v1599, %v1981
      %v1983 = vpop.f32.mrf.mxu0
      %v1984 = vpop.f32.mrf.mxu0
      %v1985 = vpop.f32.mrf.mxu0
      %1986 = vdwg.mxu0
      %v1987 = vsel %vm1646, %v1982, -inf
      %1988 = vmax.xlane.f32.xlu0 %v1987
      %v1989 = vpop.xlane.xlu0 %1988
      %v1990 = vsub.f32 %v1982, %v1989
      %v1991 = vmul.f32 %v1990, 1.442695
      %v1992 = vpow.pop %v1991
      %v1993 = vsel %vm1646, %v1992, 0.0
      %1994 = vadd.xlane.f32.xlu0 %v1993
      %v1995 = vpop.xlane.xlu0 %1994
      %v1996 = vrcp.pop %v1995
      %v1997 = vmul.f32 %v1992, %v1996
      %v1998 = vmul.f32 %v1997, %v1661
      %v1999 = vpack.c.bf16 %v1998, %v1998
      %2000 = vrot.lane.b32.xlu0 %v1595, 72
      %v2001 = vpop.permute.xlu0 %2000
      %v2003 = vsel %vm1646, %v1999, 0
      %v2006 = vsel %vm1670, %v2001, 0
      %2008 = vmatprep.subr.bf16.mxu0 0
      %2009 = vmatpush1.bf16.msra.mxu0 0
      %2010 = vmatprep.subr.bf16.mxu0 0
      %2011 = vmatpush1.bf16.msra.mxu0 0
      %2012 = vmatprep.subr.bf16.mxu0 0
      %2013 = vmatpush1.bf16.msra.mxu0 0
      %2014 = vmatprep.subr.bf16.mxu0 0
      %2015 = vmatpush1.bf16.msra.mxu0 0
      %2016 = vmatprep.subr.bf16.mxu0 0
      %2017 = vmatpush1.bf16.msra.mxu0 0
      %2018 = vmatprep.subr.bf16.mxu0 0
      %2019 = vmatpush1.bf16.msra.mxu0 0
      %2020 = vmatprep.subr.bf16.mxu0 0
      %2021 = vmatpush1.bf16.msra.mxu0 0
      %2022 = vmatprep.subr.bf16.mxu0 0
      %2023 = vmatpush1.bf16.msra.mxu0 %v2006
      %2024 = vmatprep.subr.bf16.mxu0 0
      %2025 = vmatpush2.bf16.msra.mxu0 0
      %2026 = vmatprep.subr.bf16.mxu0 0
      %2027 = vmatpush2.bf16.msra.mxu0 0
      %2028 = vmatprep.subr.bf16.mxu0 0
      %2029 = vmatpush2.bf16.msra.mxu0 0
      %2030 = vmatprep.subr.bf16.mxu0 0
      %2031 = vmatpush2.bf16.msra.mxu0 0
      %2032 = vmatprep.subr.bf16.mxu0 0
      %2033 = vmatpush2.bf16.msra.mxu0 0
      %2034 = vmatprep.subr.bf16.mxu0 0
      %2035 = vmatpush2.bf16.msra.mxu0 0
      %2036 = vmatprep.subr.bf16.mxu0 0
      %2037 = vmatpush2.bf16.msra.mxu0 0
      %2038 = vmatprep.subr.bf16.mxu0 0
      %2039 = vmatpush2.bf16.msra.mxu0 0
      %2040 = vmatprep.mubr.bf16.mxu0 0
      %2041 = vmatmul.mubr.bf16.gmra.mxu0 %v2003
      %v2042 = vpop.f32.mrf.mxu0
      %v2043 = vadd.f32 0.0, %v2042
      %v2044 = vpop.f32.mrf.mxu0
      %v2045 = vpop.f32.mrf.mxu0
      %v2046 = vpop.f32.mrf.mxu0
      %2047 = vdwg.mxu0
      %2049 = vrot.lane.b32.xlu0 %v1821, 8
      %v2050 = vpop.permute.xlu0 %2049
      %2053 = vrot.lane.b32.xlu0 %v1932, 16
      %v2054 = vpop.permute.xlu0 %2053
      %2057 = vrot.lane.b32.xlu0 %v2043, 24
      %v2058 = vpop.permute.xlu0 %2057
      %v2060 = vsel %vm894, %v1709, %v2050
      %v2061 = vsel %vm1350, %v2060, %v2054
      %v2062 = vsel %vm1352, %v2061, %v2058
      %v2063 = vld [vmem:[%s16] sm:$0xf]
      %v2064 = vld [vmem:[%s16 + $0x4] sm:$0xf]
      %v2065 = vld [vmem:[%s16 + $0x8] sm:$0xf]
      %v2066 = vld [vmem:[%s16 + $0xc] sm:$0xf]
      %v2067 = vpack.c.bf16 %v2062, %v2062
      %v2072 = vunpack.c.l.b16 %v2063
      %v2073 = vunpack.c.l.b16 %v2064
      %v2074 = vunpack.c.l.b16 %v2065
      %v2075 = vunpack.c.l.b16 %v2066
      %v2076 = vpack.c.b16 %v2073, %v2072
      %v2077 = vpack.c.b16 %v2075, %v2074
      %v2081 = vsel %vm792, %v2067, 0
      %2083 = vmatprep.subr.bf16.mxu0 0
      %2084 = vmatpush1.bf16.msra.mxu0 0
      %2085 = vmatprep.subr.bf16.mxu0 0
      %2086 = vmatpush1.bf16.msra.mxu0 0
      %2087 = vmatprep.subr.bf16.mxu0 0
      %2088 = vmatpush1.bf16.msra.mxu0 0
      %2089 = vmatprep.subr.bf16.mxu0 0
      %2090 = vmatpush1.bf16.msra.mxu0 0
      %2091 = vmatprep.subr.bf16.mxu0 0
      %2092 = vmatpush1.bf16.msra.mxu0 0
      %2093 = vmatprep.subr.bf16.mxu0 0
      %2094 = vmatpush1.bf16.msra.mxu0 0
      %2095 = vmatprep.subr.bf16.mxu0 0
      %2096 = vmatpush1.bf16.msra.mxu0 %v2077
      %2097 = vmatprep.subr.bf16.mxu0 0
      %2098 = vmatpush1.bf16.msra.mxu0 %v2076
      %2099 = vmatprep.subr.bf16.mxu0 0
      %2100 = vmatpush2.bf16.msra.mxu0 0
      %2101 = vmatprep.subr.bf16.mxu0 0
      %2102 = vmatpush2.bf16.msra.mxu0 0
      %2103 = vmatprep.subr.bf16.mxu0 0
      %2104 = vmatpush2.bf16.msra.mxu0 0
      %2105 = vmatprep.subr.bf16.mxu0 0
      %2106 = vmatpush2.bf16.msra.mxu0 0
      %2107 = vmatprep.subr.bf16.mxu0 0
      %2108 = vmatpush2.bf16.msra.mxu0 0
      %2109 = vmatprep.subr.bf16.mxu0 0
      %2110 = vmatpush2.bf16.msra.mxu0 0
      %2111 = vmatprep.subr.bf16.mxu0 0
      %2112 = vmatpush2.bf16.msra.mxu0 0
      %2113 = vmatprep.subr.bf16.mxu0 0
      %2114 = vmatpush2.bf16.msra.mxu0 0
      %2115 = vmatprep.mubr.bf16.mxu0 0
      %2116 = vmatmul.mubr.bf16.gmra.mxu0 %v2081
      %v2117 = vpop.f32.mrf.mxu0
      %v2118 = vadd.f32 0.0, %v2117
      %v2119 = vpop.f32.mrf.mxu0
      %v2120 = vpop.f32.mrf.mxu0
      %v2121 = vpop.f32.mrf.mxu0
      %2122 = vdwg.mxu0
      %v2123 = vadd.f32 %v1422, %v2118
      %v2124 = vld [vmem:[%s17] sm:$0x1]
      %v2126 = vlaneseq
      %v2127 = vshrl.u32 %v2126, 7
      %v2128 = vsub.s32 0, %v2127
      %v2129 = vrot.slane %v2124, %v2128
      %v2131 = vadd.f32 %v2123, %v2129
      %v2132 = vld [vmem:[%s18] sm:$0x1]
      %v2133 = vld [vmem:[%s19] sm:$0x1]
      %v2134 = vsel %vm792, %v2131, 0.0
      %2135 = vadd.xlane.f32.xlu0 %v2134
      %v2136 = vpop.xlane.xlu0 %2135
      %v2137 = vmul.f32 %v2136, %v796
      %v2138 = vsub.f32 %v2131, %v2137
      %v2139 = vmul.f32 %v2138, %v2138
      %v2140 = vsel %vm792, %v2139, 0.0
      %2141 = vadd.xlane.f32.xlu0 %v2140
      %v2142 = vpop.xlane.xlu0 %2141
      %v2143 = vmul.f32 %v2142, %v796
      %v2144 = vadd.f32 %v2143, 1e-12
      %v2145 = vrsqrt.pop %v2144
      %v2146 = vmul.f32 %v2138, %v2145
      %v2148 = vlaneseq
      %v2149 = vshrl.u32 %v2148, 7
      %v2150 = vsub.s32 0, %v2149
      %v2151 = vrot.slane %v2132, %v2150
      %v2153 = vmul.f32 %v2146, %v2151
      %v2155 = vlaneseq
      %v2156 = vshrl.u32 %v2155, 7
      %v2157 = vsub.s32 0, %v2156
      %v2158 = vrot.slane %v2133, %v2157
      %v2160 = vadd.f32 %v2153, %v2158
      %v2161 = vld [vmem:[%s20] sm:$0xf]
      %v2162 = vld [vmem:[%s20 + $0x4] sm:$0xf]
      %v2163 = vld [vmem:[%s20 + $0x8] sm:$0xf]
      %v2164 = vld [vmem:[%s20 + $0xc] sm:$0xf]
      %v2165 = vpack.c.bf16 %v2160, %v2160
      %v2166 = vld [vmem:[%s21] sm:$0x1]
      %v2168 = vlaneseq
      %v2169 = vshrl.u32 %v2168, 7
      %v2170 = vsub.s32 0, %v2169
      %v2171 = vrot.slane %v2166, %v2170
      %v2177 = vunpack.c.l.b16 %v2161
      %v2178 = vunpack.c.l.b16 %v2162
      %v2179 = vunpack.c.l.b16 %v2163
      %v2180 = vunpack.c.l.b16 %v2164
      %v2181 = vpack.c.b16 %v2178, %v2177
      %v2182 = vpack.c.b16 %v2180, %v2179
      %v2186 = vsel %vm792, %v2165, 0
      %2188 = vmatprep.subr.bf16.mxu0 0
      %2189 = vmatpush1.bf16.msra.mxu0 0
      %2190 = vmatprep.subr.bf16.mxu0 0
      %2191 = vmatpush1.bf16.msra.mxu0 0
      %2192 = vmatprep.subr.bf16.mxu0 0
      %2193 = vmatpush1.bf16.msra.mxu0 0
      %2194 = vmatprep.subr.bf16.mxu0 0
      %2195 = vmatpush1.bf16.msra.mxu0 0
      %2196 = vmatprep.subr.bf16.mxu0 0
      %2197 = vmatpush1.bf16.msra.mxu0 0
      %2198 = vmatprep.subr.bf16.mxu0 0
      %2199 = vmatpush1.bf16.msra.mxu0 0
      %2200 = vmatprep.subr.bf16.mxu0 0
      %2201 = vmatpush1.bf16.msra.mxu0 %v2182
      %2202 = vmatprep.subr.bf16.mxu0 0
      %2203 = vmatpush1.bf16.msra.mxu0 %v2181
      %2204 = vmatprep.subr.bf16.mxu0 0
      %2205 = vmatpush2.bf16.msra.mxu0 0
      %2206 = vmatprep.subr.bf16.mxu0 0
      %2207 = vmatpush2.bf16.msra.mxu0 0
      %2208 = vmatprep.subr.bf16.mxu0 0
      %2209 = vmatpush2.bf16.msra.mxu0 0
      %2210 = vmatprep.subr.bf16.mxu0 0
      %2211 = vmatpush2.bf16.msra.mxu0 0
      %2212 = vmatprep.subr.bf16.mxu0 0
      %2213 = vmatpush2.bf16.msra.mxu0 0
      %2214 = vmatprep.subr.bf16.mxu0 0
      %2215 = vmatpush2.bf16.msra.mxu0 0
      %2216 = vmatprep.subr.bf16.mxu0 0
      %2217 = vmatpush2.bf16.msra.mxu0 0
      %2218 = vmatprep.subr.bf16.mxu0 0
      %2219 = vmatpush2.bf16.msra.mxu0 0
      %2220 = vmatprep.mubr.bf16.mxu0 0
      %2221 = vmatmul.mubr.bf16.gmra.mxu0 %v2186
      %v2222 = vpop.f32.mrf.mxu0
      %v2223 = vadd.f32 %v2171, %v2222
      %v2224 = vpop.f32.mrf.mxu0
      %v2225 = vpop.f32.mrf.mxu0
      %v2226 = vpop.f32.mrf.mxu0
      %2227 = vdwg.mxu0
      %v2228 = vmax.f32 %v2223, 0.0
      %v2229 = vld [vmem:[%s22] sm:$0xf]
      %v2230 = vld [vmem:[%s22 + $0x4] sm:$0xf]
      %v2231 = vld [vmem:[%s22 + $0x8] sm:$0xf]
      %v2232 = vld [vmem:[%s22 + $0xc] sm:$0xf]
      %v2233 = vld [vmem:[%s22 + $0x10] sm:$0xf]
      %v2234 = vld [vmem:[%s22 + $0x14] sm:$0xf]
      %v2235 = vld [vmem:[%s22 + $0x18] sm:$0xf]
      %v2236 = vld [vmem:[%s22 + $0x1c] sm:$0xf]
      %v2237 = vpack.c.bf16 %v2228, %v2228
      %v2246 = vunpack.c.l.b16 %v2229
      %v2247 = vunpack.c.l.b16 %v2230
      %v2248 = vunpack.c.l.b16 %v2231
      %v2249 = vunpack.c.l.b16 %v2232
      %v2250 = vunpack.c.l.b16 %v2233
      %v2251 = vunpack.c.l.b16 %v2234
      %v2252 = vunpack.c.l.b16 %v2235
      %v2253 = vunpack.c.l.b16 %v2236
      %v2254 = vpack.c.b16 %v2247, %v2246
      %v2255 = vpack.c.b16 %v2249, %v2248
      %v2256 = vpack.c.b16 %v2251, %v2250
      %v2257 = vpack.c.b16 %v2253, %v2252
      %vm2262 = vcmask 523264
      %v2264 = vsel %vm2262, %v2237, 0
      %2266 = vmatprep.subr.bf16.mxu0 0
      %2267 = vmatpush1.bf16.msra.mxu0 0
      %2268 = vmatprep.subr.bf16.mxu0 0
      %2269 = vmatpush1.bf16.msra.mxu0 0
      %2270 = vmatprep.subr.bf16.mxu0 0
      %2271 = vmatpush1.bf16.msra.mxu0 0
      %2272 = vmatprep.subr.bf16.mxu0 0
      %2273 = vmatpush1.bf16.msra.mxu0 0
      %2274 = vmatprep.subr.bf16.mxu0 0
      %2275 = vmatpush1.bf16.msra.mxu0 %v2257
      %2276 = vmatprep.subr.bf16.mxu0 0
      %2277 = vmatpush1.bf16.msra.mxu0 %v2256
      %2278 = vmatprep.subr.bf16.mxu0 0
      %2279 = vmatpush1.bf16.msra.mxu0 %v2255
      %2280 = vmatprep.subr.bf16.mxu0 0
      %2281 = vmatpush1.bf16.msra.mxu0 %v2254
      %2282 = vmatprep.subr.bf16.mxu0 0
      %2283 = vmatpush2.bf16.msra.mxu0 0
      %2284 = vmatprep.subr.bf16.mxu0 0
      %2285 = vmatpush2.bf16.msra.mxu0 0
      %2286 = vmatprep.subr.bf16.mxu0 0
      %2287 = vmatpush2.bf16.msra.mxu0 0
      %2288 = vmatprep.subr.bf16.mxu0 0
      %2289 = vmatpush2.bf16.msra.mxu0 0
      %2290 = vmatprep.subr.bf16.mxu0 0
      %2291 = vmatpush2.bf16.msra.mxu0 0
      %2292 = vmatprep.subr.bf16.mxu0 0
      %2293 = vmatpush2.bf16.msra.mxu0 0
      %2294 = vmatprep.subr.bf16.mxu0 0
      %2295 = vmatpush2.bf16.msra.mxu0 0
      %2296 = vmatprep.subr.bf16.mxu0 0
      %2297 = vmatpush2.bf16.msra.mxu0 0
      %2298 = vmatprep.mubr.bf16.mxu0 0
      %2299 = vmatmul.mubr.bf16.gmra.mxu0 %v2264
      %v2300 = vpop.f32.mrf.mxu0
      %v2301 = vadd.f32 0.0, %v2300
      %v2302 = vpop.f32.mrf.mxu0
      %v2303 = vpop.f32.mrf.mxu0
      %v2304 = vpop.f32.mrf.mxu0
      %2305 = vdwg.mxu0
      %v2306 = vadd.f32 %v2131, %v2301
      %v2307 = vld [vmem:[%s23] sm:$0x1]
      %v2309 = vlaneseq
      %v2310 = vshrl.u32 %v2309, 7
      %v2311 = vsub.s32 0, %v2310
      %v2312 = vrot.slane %v2307, %v2311
      %v2314 = vadd.f32 %v2306, %v2312
      %2315 = vst.msk [vmem:[%s783] sm:$0xff] %vm792, %v2314
      %p2316 = scmp.lt.s32.totalorder %s35, 1
      %s2317 = scalar_select %p2316, %s35, 1
      %s2318 = smul.addr %s2317, 8
      %s2319 = scalar_lea.vmem %s24, %s2318
      // Predicated region
      $region117: #{transformer_decoder_forward.3} parent=115 // pred_check
        %p2320 = pneg %p577
      $region118: #{transformer_decoder_forward.3} parent=115 // pred_check_branch
        %2322 = sbr.rel (%p2320) target = $region120
      $region119: #{transformer_decoder_forward.3} parent=115 // pred_region
        _
      $region120: #{transformer_decoder_forward.3} parent=115 // pred_fallthru
        _
    $region116: #{transformer_decoder_forward.3} parent=5 // pred_fallthru
      _
    %p2323 = scmp.le.s32.totalorder 2, %s30
    // Predicated region
    $region121: #{transformer_decoder_forward.3} parent=5 // pred_check
      %p2324 = pneg %p2323
    $region122: #{transformer_decoder_forward.3} parent=5 // pred_check_branch
      %2326 = sbr.rel (%p2324) target = $region124
    $region123: #{transformer_decoder_forward.3} parent=5 // pred_region
      %s2327 = ssub.s32 %s30, 2
      // Predicated region
      $region125: #{transformer_decoder_forward.3} parent=123 // pred_check
        %p2328 = pneg %p583
      $region126: #{transformer_decoder_forward.3} parent=123 // pred_check_branch
        %2330 = sbr.rel (%p2328) target = $region128
      $region127: #{transformer_decoder_forward.3} parent=123 // pred_region
        %p2331 = scmp.lt.s32.totalorder %s36, 1
        %s2332 = scalar_select %p2331, %s36, 1
        %s2333 = smul.addr %s2332, 8
        %s2334 = scalar_lea.vmem %s24, %s2333
      $region128: #{transformer_decoder_forward.3} parent=123 // pred_fallthru
        _
    $region124: #{transformer_decoder_forward.3} parent=5 // pred_fallthru
      _
  $region6: #{transformer_decoder_forward.3} parent=0 // loop_footer
    %s34 = sadd.s32 1, %s30
  $region7: #{transformer_decoder_forward.3} parent=0 // loop_footer_branch
    %29 = sbr.rel target = $region3
  $region8: #{transformer_decoder_forward.3} parent=0 // loop_exit
    _

// kernel: transformer_decoder_forward.4
$region0: #{transformer_decoder_forward.4}
  #allocation0 [shape = 'u32[]', space=smem, size = 0x4, offset = 0x4, fixed_abs, tag = 'smem constant byte address 0x4 - core index']
  #allocation1 [shape = 'u32[144,128]{1,0:T(1,128)}', space=vmem, size = 0x12000, scoped, tag = 'internal scratch']
  %s0 = inlined_call_operand.vmem [shape: f32[2,8,32], index: 0, kind: input, shape index: {}]
  %s1 = inlined_call_operand.vmem [shape: bf16[2,8,8], index: 1, kind: input, shape index: {}]
  %s2 = inlined_call_operand.vmem [shape: f32[2,12,32], index: 2, kind: input, shape index: {}]
  %s3 = inlined_call_operand.vmem [shape: bf16[2,1,12], index: 3, kind: input, shape index: {}]
  %s4 = inlined_call_operand.vmem [shape: f32[1,32], index: 4, kind: input, shape index: {}]
  %s5 = inlined_call_operand.vmem [shape: f32[1,32], index: 5, kind: input, shape index: {}]
  %s6 = inlined_call_operand.vmem [shape: bf16[32,96], index: 6, kind: input, shape index: {}]
  %s7 = inlined_call_operand.vmem [shape: f32[1,96], index: 7, kind: input, shape index: {}]
  %s8 = inlined_call_operand.vmem [shape: bf16[32,32], index: 8, kind: input, shape index: {}]
  %s9 = inlined_call_operand.vmem [shape: f32[1,32], index: 9, kind: input, shape index: {}]
  %s10 = inlined_call_operand.vmem [shape: f32[1,32], index: 10, kind: input, shape index: {}]
  %s11 = inlined_call_operand.vmem [shape: f32[1,32], index: 11, kind: input, shape index: {}]
  %s12 = inlined_call_operand.vmem [shape: bf16[32,32], index: 12, kind: input, shape index: {}]
  %s13 = inlined_call_operand.vmem [shape: f32[1,32], index: 13, kind: input, shape index: {}]
  %s14 = inlined_call_operand.vmem [shape: bf16[32,64], index: 14, kind: input, shape index: {}]
  %s15 = inlined_call_operand.vmem [shape: f32[1,64], index: 15, kind: input, shape index: {}]
  %s16 = inlined_call_operand.vmem [shape: bf16[32,32], index: 16, kind: input, shape index: {}]
  %s17 = inlined_call_operand.vmem [shape: f32[1,32], index: 17, kind: input, shape index: {}]
  %s18 = inlined_call_operand.vmem [shape: f32[1,32], index: 18, kind: input, shape index: {}]
  %s19 = inlined_call_operand.hbm [shape: f32[1,32], index: 19, kind: input, shape index: {}]
  %s20 = inlined_call_operand.vmem [shape: bf16[32,64], index: 20, kind: input, shape index: {}]
  %s21 = inlined_call_operand.hbm [shape: f32[1,64], index: 21, kind: input, shape index: {}]
  %s22 = inlined_call_operand.vmem [shape: bf16[64,32], index: 22, kind: input, shape index: {}]
  %s23 = inlined_call_operand.hbm [shape: f32[1,32], index: 23, kind: input, shape index: {}]
  %s24 = inlined_call_operand.vmem [shape: f32[2,8,32], index: 24, kind: output, shape index: {}]
  %s25 = sld [smem:[#allocation0]]
  $region141: #{transformer_decoder_forward.4} parent=0
    _
  %s27 = ssub.s32 1, %s25
  %s28 = scalar_select 0, %s27, %s25
  $region1: #{transformer_decoder_forward.4} parent=0
    #allocation2 [shape = 'u8[512]{0}', space=vmem, size = 0x400, scoped, tag = 'input window, operand 19, single buffered']
    #allocation3 [shape = 's32[2]{0}', space=sflag, size = 0x8, scoped, tag = 'scoped memory for transformer_decoder_forward.4']
    #allocation4 [shape = 'u8[512]{0}', space=vmem, size = 0x400, scoped, tag = 'input window, operand 21, single buffered']
    #allocation5 [shape = 's32[1]{0}', space=sflag, size = 0x4, scoped, tag = 'scoped memory for transformer_decoder_forward.4']
    #allocation6 [shape = 'u8[512]{0}', space=vmem, size = 0x400, scoped, tag = 'input window, operand 23, single buffered']
    %29 = vsyncpa [#allocation3], 0
    %30 = vsyncpa [#allocation5], 0
    loop: start=0, step=1, limit=4
    $region2: #{transformer_decoder_forward.4} parent=1 // loop_pre_header
      _
    $region3: #{transformer_decoder_forward.4} parent=1 // loop_header
      %s32 = sphi 0, %s36
      %p33 = scmp.ge.s32.totalorder %s32, 4
      %s42 = sphi 0, %s44
      %s45 = sphi 0, %s42
      %s46 = sphi 0, %s45
      %s62 = sphi 0, %s46
      %s68 = sphi 0, %s70
      %s71 = sphi 0, %s68
      %s72 = sphi 0, %s71
      %s88 = sphi 0, %s72
      %s94 = sphi 0, %s96
      %s97 = sphi 0, %s94
      %s98 = sphi 0, %s97
      %s114 = sphi 0, %s98
      %s120 = sphi 0, %s122
      %s123 = sphi 0, %s120
      %s124 = sphi 0, %s123
      %s140 = sphi 0, %s124
      %s144 = sphi 0, %s144
      %s146 = sphi 0, %s144
      %s147 = sphi 0, %s146
      %s161 = sphi 0, %s147
      %s165 = sphi 0, %s165
      %s167 = sphi 0, %s165
      %s168 = sphi 0, %s167
      %s182 = sphi 0, %s168
      %s186 = sphi 0, %s186
      %s188 = sphi 0, %s186
      %s189 = sphi 0, %s188
      %s203 = sphi 0, %s189
      %s207 = sphi 0, %s207
      %s209 = sphi 0, %s207
      %s210 = sphi 0, %s209
      %s224 = sphi 0, %s210
      %s228 = sphi 0, %s228
      %s230 = sphi 0, %s228
      %s231 = sphi 0, %s230
      %s245 = sphi 0, %s231
      %s249 = sphi 0, %s249
      %s251 = sphi 0, %s249
      %s252 = sphi 0, %s251
      %s266 = sphi 0, %s252
      %s270 = sphi 0, %s270
      %s272 = sphi 0, %s270
      %s273 = sphi 0, %s272
      %s287 = sphi 0, %s273
      %s291 = sphi 0, %s291
      %s293 = sphi 0, %s291
      %s294 = sphi 0, %s293
      %s308 = sphi 0, %s294
      %s312 = sphi 0, %s312
      %s314 = sphi 0, %s312
      %s315 = sphi 0, %s314
      %s329 = sphi 0, %s315
      %s333 = sphi 0, %s333
      %s335 = sphi 0, %s333
      %s336 = sphi 0, %s335
      %s350 = sphi 0, %s336
      %s354 = sphi 0, %s354
      %s356 = sphi 0, %s354
      %s357 = sphi 0, %s356
      %s371 = sphi 0, %s357
      %s375 = sphi 0, %s375
      %s377 = sphi 0, %s375
      %s378 = sphi 0, %s377
      %s392 = sphi 0, %s378
      %s396 = sphi 0, %s396
      %s398 = sphi 0, %s396
      %s399 = sphi 0, %s398
      %s413 = sphi 0, %s399
      %s417 = sphi 0, %s417
      %s419 = sphi 0, %s417
      %s420 = sphi 0, %s419
      %s434 = sphi 0, %s420
      %s438 = sphi 0, %s438
      %s440 = sphi 0, %s438
      %s441 = sphi 0, %s440
      %s455 = sphi 0, %s441
      %s459 = sphi 0, %s459
      %s461 = sphi 0, %s459
      %s462 = sphi 0, %s461
      %s476 = sphi 0, %s462
      %s480 = sphi 0, %s480
      %s482 = sphi 0, %s480
      %s483 = sphi 0, %s482
      %s497 = sphi 0, %s483
      %s501 = sphi 0, %s501
      %s503 = sphi 0, %s501
      %s504 = sphi 0, %s503
      %s518 = sphi 0, %s504
      %s522 = sphi 0, %s522
      %s524 = sphi 0, %s522
      %s525 = sphi 0, %s524
      %s539 = sphi 0, %s525
      %s543 = sphi 0, %s543
      %s545 = sphi 0, %s543
      %s546 = sphi 0, %s545
      %s560 = sphi 0, %s546
      %s566 = sphi 0, %s568
      %s569 = sphi 0, %s566
      %s570 = sphi 0, %s569
      %s586 = sphi 0, %s570
    $region4: #{transformer_decoder_forward.4} parent=1 // loop_header_branch
      %35 = sbr.rel (%p33) target = $region8
    $region5: #{transformer_decoder_forward.4} parent=1 // loop_body
      %s37 = ssub.s32 %s32, 1
      %s38 = ssub.s32 %s32, 2
      %s39 = sadd.s32 %s32, 1
      %s40 = ssub.s32 %s32, %s39
      %p41 = scmp.eq.s32.totalorder %s40, 0
      %s43 = sadd.s32 %s42, 1
      %s44 = scalar_select %p41, %s42, %s43
      %p47 = pneg %p41
      %p48 = scmp.eq.s32.totalorder %s32, 1
      %p49 = por %p47, %p48
      %p50 = scmp.ne.s32.totalorder %s42, %s45
      %p51 = scmp.eq.s32.totalorder %s32, 0
      %p52 = por %p50, %p51
      %p53 = scmp.ne.s32.totalorder %s42, %s45
      %p54 = scmp.eq.s32.totalorder %s37, 1
      %p55 = por %p53, %p54
      %p56 = scmp.ne.s32.totalorder %s45, %s46
      %p57 = scmp.eq.s32.totalorder %s37, 0
      %p58 = por %p56, %p57
      %p59 = scmp.ne.s32.totalorder %s45, %s46
      %p60 = scmp.eq.s32.totalorder %s38, 1
      %p61 = por %p59, %p60
      %p63 = scmp.ne.s32.totalorder %s46, %s62
      %p64 = scmp.eq.s32.totalorder %s38, 0
      %p65 = por %p63, %p64
      %s66 = ssub.s32 %s32, %s39
      %p67 = scmp.eq.s32.totalorder %s66, 0
      %s69 = sadd.s32 %s68, 1
      %s70 = scalar_select %p67, %s68, %s69
      %p73 = pneg %p67
      %p74 = scmp.eq.s32.totalorder %s32, 1
      %p75 = por %p73, %p74
      %p76 = scmp.ne.s32.totalorder %s68, %s71
      %p77 = scmp.eq.s32.totalorder %s32, 0
      %p78 = por %p76, %p77
      %p79 = scmp.ne.s32.totalorder %s68, %s71
      %p80 = scmp.eq.s32.totalorder %s37, 1
      %p81 = por %p79, %p80
      %p82 = scmp.ne.s32.totalorder %s71, %s72
      %p83 = scmp.eq.s32.totalorder %s37, 0
      %p84 = por %p82, %p83
      %p85 = scmp.ne.s32.totalorder %s71, %s72
      %p86 = scmp.eq.s32.totalorder %s38, 1
      %p87 = por %p85, %p86
      %p89 = scmp.ne.s32.totalorder %s72, %s88
      %p90 = scmp.eq.s32.totalorder %s38, 0
      %p91 = por %p89, %p90
      %s92 = ssub.s32 %s32, %s39
      %p93 = scmp.eq.s32.totalorder %s92, 0
      %s95 = sadd.s32 %s94, 1
      %s96 = scalar_select %p93, %s94, %s95
      %p99 = pneg %p93
      %p100 = scmp.eq.s32.totalorder %s32, 1
      %p101 = por %p99, %p100
      %p102 = scmp.ne.s32.totalorder %s94, %s97
      %p103 = scmp.eq.s32.totalorder %s32, 0
      %p104 = por %p102, %p103
      %p105 = scmp.ne.s32.totalorder %s94, %s97
      %p106 = scmp.eq.s32.totalorder %s37, 1
      %p107 = por %p105, %p106
      %p108 = scmp.ne.s32.totalorder %s97, %s98
      %p109 = scmp.eq.s32.totalorder %s37, 0
      %p110 = por %p108, %p109
      %p111 = scmp.ne.s32.totalorder %s97, %s98
      %p112 = scmp.eq.s32.totalorder %s38, 1
      %p113 = por %p111, %p112
      %p115 = scmp.ne.s32.totalorder %s98, %s114
      %p116 = scmp.eq.s32.totalorder %s38, 0
      %p117 = por %p115, %p116
      %s118 = ssub.s32 %s32, %s39
      %p119 = scmp.eq.s32.totalorder %s118, 0
      %s121 = sadd.s32 %s120, 1
      %s122 = scalar_select %p119, %s120, %s121
      %p125 = pneg %p119
      %p126 = scmp.eq.s32.totalorder %s32, 1
      %p127 = por %p125, %p126
      %p128 = scmp.ne.s32.totalorder %s120, %s123
      %p129 = scmp.eq.s32.totalorder %s32, 0
      %p130 = por %p128, %p129
      %p131 = scmp.ne.s32.totalorder %s120, %s123
      %p132 = scmp.eq.s32.totalorder %s37, 1
      %p133 = por %p131, %p132
      %p134 = scmp.ne.s32.totalorder %s123, %s124
      %p135 = scmp.eq.s32.totalorder %s37, 0
      %p136 = por %p134, %p135
      %p137 = scmp.ne.s32.totalorder %s123, %s124
      %p138 = scmp.eq.s32.totalorder %s38, 1
      %p139 = por %p137, %p138
      %p141 = scmp.ne.s32.totalorder %s124, %s140
      %p142 = scmp.eq.s32.totalorder %s38, 0
      %p143 = por %p141, %p142
      %s145 = sadd.s32 %s144, 1
      %p148 = scmp.eq.s32.totalorder %s32, 1
      %p149 = scmp.ne.s32.totalorder %s144, %s146
      %p150 = scmp.eq.s32.totalorder %s32, 0
      %p151 = por %p149, %p150
      %p152 = scmp.ne.s32.totalorder %s144, %s146
      %p153 = scmp.eq.s32.totalorder %s37, 1
      %p154 = por %p152, %p153
      %p155 = scmp.ne.s32.totalorder %s146, %s147
      %p156 = scmp.eq.s32.totalorder %s37, 0
      %p157 = por %p155, %p156
      %p158 = scmp.ne.s32.totalorder %s146, %s147
      %p159 = scmp.eq.s32.totalorder %s38, 1
      %p160 = por %p158, %p159
      %p162 = scmp.ne.s32.totalorder %s147, %s161
      %p163 = scmp.eq.s32.totalorder %s38, 0
      %p164 = por %p162, %p163
      %s166 = sadd.s32 %s165, 1
      %p169 = scmp.eq.s32.totalorder %s32, 1
      %p170 = scmp.ne.s32.totalorder %s165, %s167
      %p171 = scmp.eq.s32.totalorder %s32, 0
      %p172 = por %p170, %p171
      %p173 = scmp.ne.s32.totalorder %s165, %s167
      %p174 = scmp.eq.s32.totalorder %s37, 1
      %p175 = por %p173, %p174
      %p176 = scmp.ne.s32.totalorder %s167, %s168
      %p177 = scmp.eq.s32.totalorder %s37, 0
      %p178 = por %p176, %p177
      %p179 = scmp.ne.s32.totalorder %s167, %s168
      %p180 = scmp.eq.s32.totalorder %s38, 1
      %p181 = por %p179, %p180
      %p183 = scmp.ne.s32.totalorder %s168, %s182
      %p184 = scmp.eq.s32.totalorder %s38, 0
      %p185 = por %p183, %p184
      %s187 = sadd.s32 %s186, 1
      %p190 = scmp.eq.s32.totalorder %s32, 1
      %p191 = scmp.ne.s32.totalorder %s186, %s188
      %p192 = scmp.eq.s32.totalorder %s32, 0
      %p193 = por %p191, %p192
      %p194 = scmp.ne.s32.totalorder %s186, %s188
      %p195 = scmp.eq.s32.totalorder %s37, 1
      %p196 = por %p194, %p195
      %p197 = scmp.ne.s32.totalorder %s188, %s189
      %p198 = scmp.eq.s32.totalorder %s37, 0
      %p199 = por %p197, %p198
      %p200 = scmp.ne.s32.totalorder %s188, %s189
      %p201 = scmp.eq.s32.totalorder %s38, 1
      %p202 = por %p200, %p201
      %p204 = scmp.ne.s32.totalorder %s189, %s203
      %p205 = scmp.eq.s32.totalorder %s38, 0
      %p206 = por %p204, %p205
      %s208 = sadd.s32 %s207, 1
      %p211 = scmp.eq.s32.totalorder %s32, 1
      %p212 = scmp.ne.s32.totalorder %s207, %s209
      %p213 = scmp.eq.s32.totalorder %s32, 0
      %p214 = por %p212, %p213
      %p215 = scmp.ne.s32.totalorder %s207, %s209
      %p216 = scmp.eq.s32.totalorder %s37, 1
      %p217 = por %p215, %p216
      %p218 = scmp.ne.s32.totalorder %s209, %s210
      %p219 = scmp.eq.s32.totalorder %s37, 0
      %p220 = por %p218, %p219
      %p221 = scmp.ne.s32.totalorder %s209, %s210
      %p222 = scmp.eq.s32.totalorder %s38, 1
      %p223 = por %p221, %p222
      %p225 = scmp.ne.s32.totalorder %s210, %s224
      %p226 = scmp.eq.s32.totalorder %s38, 0
      %p227 = por %p225, %p226
      %s229 = sadd.s32 %s228, 1
      %p232 = scmp.eq.s32.totalorder %s32, 1
      %p233 = scmp.ne.s32.totalorder %s228, %s230
      %p234 = scmp.eq.s32.totalorder %s32, 0
      %p235 = por %p233, %p234
      %p236 = scmp.ne.s32.totalorder %s228, %s230
      %p237 = scmp.eq.s32.totalorder %s37, 1
      %p238 = por %p236, %p237
      %p239 = scmp.ne.s32.totalorder %s230, %s231
      %p240 = scmp.eq.s32.totalorder %s37, 0
      %p241 = por %p239, %p240
      %p242 = scmp.ne.s32.totalorder %s230, %s231
      %p243 = scmp.eq.s32.totalorder %s38, 1
      %p244 = por %p242, %p243
      %p246 = scmp.ne.s32.totalorder %s231, %s245
      %p247 = scmp.eq.s32.totalorder %s38, 0
      %p248 = por %p246, %p247
      %s250 = sadd.s32 %s249, 1
      %p253 = scmp.eq.s32.totalorder %s32, 1
      %p254 = scmp.ne.s32.totalorder %s249, %s251
      %p255 = scmp.eq.s32.totalorder %s32, 0
      %p256 = por %p254, %p255
      %p257 = scmp.ne.s32.totalorder %s249, %s251
      %p258 = scmp.eq.s32.totalorder %s37, 1
      %p259 = por %p257, %p258
      %p260 = scmp.ne.s32.totalorder %s251, %s252
      %p261 = scmp.eq.s32.totalorder %s37, 0
      %p262 = por %p260, %p261
      %p263 = scmp.ne.s32.totalorder %s251, %s252
      %p264 = scmp.eq.s32.totalorder %s38, 1
      %p265 = por %p263, %p264
      %p267 = scmp.ne.s32.totalorder %s252, %s266
      %p268 = scmp.eq.s32.totalorder %s38, 0
      %p269 = por %p267, %p268
      %s271 = sadd.s32 %s270, 1
      %p274 = scmp.eq.s32.totalorder %s32, 1
      %p275 = scmp.ne.s32.totalorder %s270, %s272
      %p276 = scmp.eq.s32.totalorder %s32, 0
      %p277 = por %p275, %p276
      %p278 = scmp.ne.s32.totalorder %s270, %s272
      %p279 = scmp.eq.s32.totalorder %s37, 1
      %p280 = por %p278, %p279
      %p281 = scmp.ne.s32.totalorder %s272, %s273
      %p282 = scmp.eq.s32.totalorder %s37, 0
      %p283 = por %p281, %p282
      %p284 = scmp.ne.s32.totalorder %s272, %s273
      %p285 = scmp.eq.s32.totalorder %s38, 1
      %p286 = por %p284, %p285
      %p288 = scmp.ne.s32.totalorder %s273, %s287
      %p289 = scmp.eq.s32.totalorder %s38, 0
      %p290 = por %p288, %p289
      %s292 = sadd.s32 %s291, 1
      %p295 = scmp.eq.s32.totalorder %s32, 1
      %p296 = scmp.ne.s32.totalorder %s291, %s293
      %p297 = scmp.eq.s32.totalorder %s32, 0
      %p298 = por %p296, %p297
      %p299 = scmp.ne.s32.totalorder %s291, %s293
      %p300 = scmp.eq.s32.totalorder %s37, 1
      %p301 = por %p299, %p300
      %p302 = scmp.ne.s32.totalorder %s293, %s294
      %p303 = scmp.eq.s32.totalorder %s37, 0
      %p304 = por %p302, %p303
      %p305 = scmp.ne.s32.totalorder %s293, %s294
      %p306 = scmp.eq.s32.totalorder %s38, 1
      %p307 = por %p305, %p306
      %p309 = scmp.ne.s32.totalorder %s294, %s308
      %p310 = scmp.eq.s32.totalorder %s38, 0
      %p311 = por %p309, %p310
      %s313 = sadd.s32 %s312, 1
      %p316 = scmp.eq.s32.totalorder %s32, 1
      %p317 = scmp.ne.s32.totalorder %s312, %s314
      %p318 = scmp.eq.s32.totalorder %s32, 0
      %p319 = por %p317, %p318
      %p320 = scmp.ne.s32.totalorder %s312, %s314
      %p321 = scmp.eq.s32.totalorder %s37, 1
      %p322 = por %p320, %p321
      %p323 = scmp.ne.s32.totalorder %s314, %s315
      %p324 = scmp.eq.s32.totalorder %s37, 0
      %p325 = por %p323, %p324
      %p326 = scmp.ne.s32.totalorder %s314, %s315
      %p327 = scmp.eq.s32.totalorder %s38, 1
      %p328 = por %p326, %p327
      %p330 = scmp.ne.s32.totalorder %s315, %s329
      %p331 = scmp.eq.s32.totalorder %s38, 0
      %p332 = por %p330, %p331
      %s334 = sadd.s32 %s333, 1
      %p337 = scmp.eq.s32.totalorder %s32, 1
      %p338 = scmp.ne.s32.totalorder %s333, %s335
      %p339 = scmp.eq.s32.totalorder %s32, 0
      %p340 = por %p338, %p339
      %p341 = scmp.ne.s32.totalorder %s333, %s335
      %p342 = scmp.eq.s32.totalorder %s37, 1
      %p343 = por %p341, %p342
      %p344 = scmp.ne.s32.totalorder %s335, %s336
      %p345 = scmp.eq.s32.totalorder %s37, 0
      %p346 = por %p344, %p345
      %p347 = scmp.ne.s32.totalorder %s335, %s336
      %p348 = scmp.eq.s32.totalorder %s38, 1
      %p349 = por %p347, %p348
      %p351 = scmp.ne.s32.totalorder %s336, %s350
      %p352 = scmp.eq.s32.totalorder %s38, 0
      %p353 = por %p351, %p352
      %s355 = sadd.s32 %s354, 1
      %p358 = scmp.eq.s32.totalorder %s32, 1
      %p359 = scmp.ne.s32.totalorder %s354, %s356
      %p360 = scmp.eq.s32.totalorder %s32, 0
      %p361 = por %p359, %p360
      %p362 = scmp.ne.s32.totalorder %s354, %s356
      %p363 = scmp.eq.s32.totalorder %s37, 1
      %p364 = por %p362, %p363
      %p365 = scmp.ne.s32.totalorder %s356, %s357
      %p366 = scmp.eq.s32.totalorder %s37, 0
      %p367 = por %p365, %p366
      %p368 = scmp.ne.s32.totalorder %s356, %s357
      %p369 = scmp.eq.s32.totalorder %s38, 1
      %p370 = por %p368, %p369
      %p372 = scmp.ne.s32.totalorder %s357, %s371
      %p373 = scmp.eq.s32.totalorder %s38, 0
      %p374 = por %p372, %p373
      %s376 = sadd.s32 %s375, 1
      %p379 = scmp.eq.s32.totalorder %s32, 1
      %p380 = scmp.ne.s32.totalorder %s375, %s377
      %p381 = scmp.eq.s32.totalorder %s32, 0
      %p382 = por %p380, %p381
      %p383 = scmp.ne.s32.totalorder %s375, %s377
      %p384 = scmp.eq.s32.totalorder %s37, 1
      %p385 = por %p383, %p384
      %p386 = scmp.ne.s32.totalorder %s377, %s378
      %p387 = scmp.eq.s32.totalorder %s37, 0
      %p388 = por %p386, %p387
      %p389 = scmp.ne.s32.totalorder %s377, %s378
      %p390 = scmp.eq.s32.totalorder %s38, 1
      %p391 = por %p389, %p390
      %p393 = scmp.ne.s32.totalorder %s378, %s392
      %p394 = scmp.eq.s32.totalorder %s38, 0
      %p395 = por %p393, %p394
      %s397 = sadd.s32 %s396, 1
      %p400 = scmp.eq.s32.totalorder %s32, 1
      %p401 = scmp.ne.s32.totalorder %s396, %s398
      %p402 = scmp.eq.s32.totalorder %s32, 0
      %p403 = por %p401, %p402
      %p404 = scmp.ne.s32.totalorder %s396, %s398
      %p405 = scmp.eq.s32.totalorder %s37, 1
      %p406 = por %p404, %p405
      %p407 = scmp.ne.s32.totalorder %s398, %s399
      %p408 = scmp.eq.s32.totalorder %s37, 0
      %p409 = por %p407, %p408
      %p410 = scmp.ne.s32.totalorder %s398, %s399
      %p411 = scmp.eq.s32.totalorder %s38, 1
      %p412 = por %p410, %p411
      %p414 = scmp.ne.s32.totalorder %s399, %s413
      %p415 = scmp.eq.s32.totalorder %s38, 0
      %p416 = por %p414, %p415
      %s418 = sadd.s32 %s417, 1
      %p421 = scmp.eq.s32.totalorder %s32, 1
      %p422 = scmp.ne.s32.totalorder %s417, %s419
      %p423 = scmp.eq.s32.totalorder %s32, 0
      %p424 = por %p422, %p423
      %p425 = scmp.ne.s32.totalorder %s417, %s419
      %p426 = scmp.eq.s32.totalorder %s37, 1
      %p427 = por %p425, %p426
      %p428 = scmp.ne.s32.totalorder %s419, %s420
      %p429 = scmp.eq.s32.totalorder %s37, 0
      %p430 = por %p428, %p429
      %p431 = scmp.ne.s32.totalorder %s419, %s420
      %p432 = scmp.eq.s32.totalorder %s38, 1
      %p433 = por %p431, %p432
      %p435 = scmp.ne.s32.totalorder %s420, %s434
      %p436 = scmp.eq.s32.totalorder %s38, 0
      %p437 = por %p435, %p436
      %s439 = sadd.s32 %s438, 1
      %p442 = scmp.eq.s32.totalorder %s32, 1
      %p443 = scmp.ne.s32.totalorder %s438, %s440
      %p444 = scmp.eq.s32.totalorder %s32, 0
      %p445 = por %p443, %p444
      %p446 = scmp.ne.s32.totalorder %s438, %s440
      %p447 = scmp.eq.s32.totalorder %s37, 1
      %p448 = por %p446, %p447
      %p449 = scmp.ne.s32.totalorder %s440, %s441
      %p450 = scmp.eq.s32.totalorder %s37, 0
      %p451 = por %p449, %p450
      %p452 = scmp.ne.s32.totalorder %s440, %s441
      %p453 = scmp.eq.s32.totalorder %s38, 1
      %p454 = por %p452, %p453
      %p456 = scmp.ne.s32.totalorder %s441, %s455
      %p457 = scmp.eq.s32.totalorder %s38, 0
      %p458 = por %p456, %p457
      %s460 = sadd.s32 %s459, 1
      %p463 = scmp.eq.s32.totalorder %s32, 1
      %p464 = scmp.ne.s32.totalorder %s459, %s461
      %p465 = scmp.eq.s32.totalorder %s32, 0
      %p466 = por %p464, %p465
      %p467 = scmp.ne.s32.totalorder %s459, %s461
      %p468 = scmp.eq.s32.totalorder %s37, 1
      %p469 = por %p467, %p468
      %p470 = scmp.ne.s32.totalorder %s461, %s462
      %p471 = scmp.eq.s32.totalorder %s37, 0
      %p472 = por %p470, %p471
      %p473 = scmp.ne.s32.totalorder %s461, %s462
      %p474 = scmp.eq.s32.totalorder %s38, 1
      %p475 = por %p473, %p474
      %p477 = scmp.ne.s32.totalorder %s462, %s476
      %p478 = scmp.eq.s32.totalorder %s38, 0
      %p479 = por %p477, %p478
      %s481 = sadd.s32 %s480, 1
      %p484 = scmp.eq.s32.totalorder %s32, 1
      %p485 = scmp.ne.s32.totalorder %s480, %s482
      %p486 = scmp.eq.s32.totalorder %s32, 0
      %p487 = por %p485, %p486
      %p488 = scmp.ne.s32.totalorder %s480, %s482
      %p489 = scmp.eq.s32.totalorder %s37, 1
      %p490 = por %p488, %p489
      %p491 = scmp.ne.s32.totalorder %s482, %s483
      %p492 = scmp.eq.s32.totalorder %s37, 0
      %p493 = por %p491, %p492
      %p494 = scmp.ne.s32.totalorder %s482, %s483
      %p495 = scmp.eq.s32.totalorder %s38, 1
      %p496 = por %p494, %p495
      %p498 = scmp.ne.s32.totalorder %s483, %s497
      %p499 = scmp.eq.s32.totalorder %s38, 0
      %p500 = por %p498, %p499
      %s502 = sadd.s32 %s501, 1
      %p505 = scmp.eq.s32.totalorder %s32, 1
      %p506 = scmp.ne.s32.totalorder %s501, %s503
      %p507 = scmp.eq.s32.totalorder %s32, 0
      %p508 = por %p506, %p507
      %p509 = scmp.ne.s32.totalorder %s501, %s503
      %p510 = scmp.eq.s32.totalorder %s37, 1
      %p511 = por %p509, %p510
      %p512 = scmp.ne.s32.totalorder %s503, %s504
      %p513 = scmp.eq.s32.totalorder %s37, 0
      %p514 = por %p512, %p513
      %p515 = scmp.ne.s32.totalorder %s503, %s504
      %p516 = scmp.eq.s32.totalorder %s38, 1
      %p517 = por %p515, %p516
      %p519 = scmp.ne.s32.totalorder %s504, %s518
      %p520 = scmp.eq.s32.totalorder %s38, 0
      %p521 = por %p519, %p520
      %s523 = sadd.s32 %s522, 1
      %p526 = scmp.eq.s32.totalorder %s32, 1
      %p527 = scmp.ne.s32.totalorder %s522, %s524
      %p528 = scmp.eq.s32.totalorder %s32, 0
      %p529 = por %p527, %p528
      %p530 = scmp.ne.s32.totalorder %s522, %s524
      %p531 = scmp.eq.s32.totalorder %s37, 1
      %p532 = por %p530, %p531
      %p533 = scmp.ne.s32.totalorder %s524, %s525
      %p534 = scmp.eq.s32.totalorder %s37, 0
      %p535 = por %p533, %p534
      %p536 = scmp.ne.s32.totalorder %s524, %s525
      %p537 = scmp.eq.s32.totalorder %s38, 1
      %p538 = por %p536, %p537
      %p540 = scmp.ne.s32.totalorder %s525, %s539
      %p541 = scmp.eq.s32.totalorder %s38, 0
      %p542 = por %p540, %p541
      %s544 = sadd.s32 %s543, 1
      %p547 = scmp.eq.s32.totalorder %s32, 1
      %p548 = scmp.ne.s32.totalorder %s543, %s545
      %p549 = scmp.eq.s32.totalorder %s32, 0
      %p550 = por %p548, %p549
      %p551 = scmp.ne.s32.totalorder %s543, %s545
      %p552 = scmp.eq.s32.totalorder %s37, 1
      %p553 = por %p551, %p552
      %p554 = scmp.ne.s32.totalorder %s545, %s546
      %p555 = scmp.eq.s32.totalorder %s37, 0
      %p556 = por %p554, %p555
      %p557 = scmp.ne.s32.totalorder %s545, %s546
      %p558 = scmp.eq.s32.totalorder %s38, 1
      %p559 = por %p557, %p558
      %p561 = scmp.ne.s32.totalorder %s546, %s560
      %p562 = scmp.eq.s32.totalorder %s38, 0
      %p563 = por %p561, %p562
      %s564 = ssub.s32 %s32, %s39
      %p565 = scmp.eq.s32.totalorder %s564, 0
      %s567 = sadd.s32 %s566, 1
      %s568 = scalar_select %p565, %s566, %s567
      %p571 = pneg %p565
      %p572 = scmp.eq.s32.totalorder %s32, 1
      %p573 = por %p571, %p572
      %p574 = scmp.ne.s32.totalorder %s566, %s569
      %p575 = scmp.eq.s32.totalorder %s32, 0
      %p576 = por %p574, %p575
      %p577 = scmp.ne.s32.totalorder %s566, %s569
      %p578 = scmp.eq.s32.totalorder %s37, 1
      %p579 = por %p577, %p578
      %p580 = scmp.ne.s32.totalorder %s569, %s570
      %p581 = scmp.eq.s32.totalorder %s37, 0
      %p582 = por %p580, %p581
      %p583 = scmp.ne.s32.totalorder %s569, %s570
      %p584 = scmp.eq.s32.totalorder %s38, 1
      %p585 = por %p583, %p584
      %p587 = scmp.ne.s32.totalorder %s570, %s586
      %p588 = scmp.eq.s32.totalorder %s38, 0
      %p589 = por %p587, %p588
      %p590 = scmp.le.s32.totalorder 1, %s32
      %p591 = scmp.lt.s32.totalorder %s32, 3
      %p592 = pnand %p590, %p591
      %p593 = pneg %p592
      // Predicated region
      $region9: #{transformer_decoder_forward.4} parent=5 // pred_check
        _
      $region10: #{transformer_decoder_forward.4} parent=5 // pred_check_branch
        %595 = sbr.rel (%p592) target = $region12
      $region11: #{transformer_decoder_forward.4} parent=5 // pred_region
        %s596 = ssub.s32 %s32, 1
        // Predicated region
        $region13: #{transformer_decoder_forward.4} parent=11 // pred_check
          %p597 = pneg %p157
        $region14: #{transformer_decoder_forward.4} parent=11 // pred_check_branch
          %599 = sbr.rel (%p597) target = $region16
        $region15: #{transformer_decoder_forward.4} parent=11 // pred_region
          _
        $region16: #{transformer_decoder_forward.4} parent=11 // pred_fallthru
          _
        // Predicated region
        $region17: #{transformer_decoder_forward.4} parent=11 // pred_check
          %p600 = pneg %p178
        $region18: #{transformer_decoder_forward.4} parent=11 // pred_check_branch
          %602 = sbr.rel (%p600) target = $region20
        $region19: #{transformer_decoder_forward.4} parent=11 // pred_region
          _
        $region20: #{transformer_decoder_forward.4} parent=11 // pred_fallthru
          _
        // Predicated region
        $region21: #{transformer_decoder_forward.4} parent=11 // pred_check
          %p603 = pneg %p199
        $region22: #{transformer_decoder_forward.4} parent=11 // pred_check_branch
          %605 = sbr.rel (%p603) target = $region24
        $region23: #{transformer_decoder_forward.4} parent=11 // pred_region
          _
        $region24: #{transformer_decoder_forward.4} parent=11 // pred_fallthru
          _
        // Predicated region
        $region25: #{transformer_decoder_forward.4} parent=11 // pred_check
          %p606 = pneg %p220
        $region26: #{transformer_decoder_forward.4} parent=11 // pred_check_branch
          %608 = sbr.rel (%p606) target = $region28
        $region27: #{transformer_decoder_forward.4} parent=11 // pred_region
          _
        $region28: #{transformer_decoder_forward.4} parent=11 // pred_fallthru
          _
        // Predicated region
        $region29: #{transformer_decoder_forward.4} parent=11 // pred_check
          %p609 = pneg %p241
        $region30: #{transformer_decoder_forward.4} parent=11 // pred_check_branch
          %611 = sbr.rel (%p609) target = $region32
        $region31: #{transformer_decoder_forward.4} parent=11 // pred_region
          _
        $region32: #{transformer_decoder_forward.4} parent=11 // pred_fallthru
          _
        // Predicated region
        $region33: #{transformer_decoder_forward.4} parent=11 // pred_check
          %p612 = pneg %p262
        $region34: #{transformer_decoder_forward.4} parent=11 // pred_check_branch
          %614 = sbr.rel (%p612) target = $region36
        $region35: #{transformer_decoder_forward.4} parent=11 // pred_region
          _
        $region36: #{transformer_decoder_forward.4} parent=11 // pred_fallthru
          _
        // Predicated region
        $region37: #{transformer_decoder_forward.4} parent=11 // pred_check
          %p615 = pneg %p283
        $region38: #{transformer_decoder_forward.4} parent=11 // pred_check_branch
          %617 = sbr.rel (%p615) target = $region40
        $region39: #{transformer_decoder_forward.4} parent=11 // pred_region
          _
        $region40: #{transformer_decoder_forward.4} parent=11 // pred_fallthru
          _
        // Predicated region
        $region41: #{transformer_decoder_forward.4} parent=11 // pred_check
          %p618 = pneg %p304
        $region42: #{transformer_decoder_forward.4} parent=11 // pred_check_branch
          %620 = sbr.rel (%p618) target = $region44
        $region43: #{transformer_decoder_forward.4} parent=11 // pred_region
          _
        $region44: #{transformer_decoder_forward.4} parent=11 // pred_fallthru
          _
        // Predicated region
        $region45: #{transformer_decoder_forward.4} parent=11 // pred_check
          %p621 = pneg %p325
        $region46: #{transformer_decoder_forward.4} parent=11 // pred_check_branch
          %623 = sbr.rel (%p621) target = $region48
        $region47: #{transformer_decoder_forward.4} parent=11 // pred_region
          _
        $region48: #{transformer_decoder_forward.4} parent=11 // pred_fallthru
          _
        // Predicated region
        $region49: #{transformer_decoder_forward.4} parent=11 // pred_check
          %p624 = pneg %p346
        $region50: #{transformer_decoder_forward.4} parent=11 // pred_check_branch
          %626 = sbr.rel (%p624) target = $region52
        $region51: #{transformer_decoder_forward.4} parent=11 // pred_region
          _
        $region52: #{transformer_decoder_forward.4} parent=11 // pred_fallthru
          _
        // Predicated region
        $region53: #{transformer_decoder_forward.4} parent=11 // pred_check
          %p627 = pneg %p367
        $region54: #{transformer_decoder_forward.4} parent=11 // pred_check_branch
          %629 = sbr.rel (%p627) target = $region56
        $region55: #{transformer_decoder_forward.4} parent=11 // pred_region
          _
        $region56: #{transformer_decoder_forward.4} parent=11 // pred_fallthru
          _
        // Predicated region
        $region57: #{transformer_decoder_forward.4} parent=11 // pred_check
          %p630 = pneg %p388
        $region58: #{transformer_decoder_forward.4} parent=11 // pred_check_branch
          %632 = sbr.rel (%p630) target = $region60
        $region59: #{transformer_decoder_forward.4} parent=11 // pred_region
          _
        $region60: #{transformer_decoder_forward.4} parent=11 // pred_fallthru
          _
        // Predicated region
        $region61: #{transformer_decoder_forward.4} parent=11 // pred_check
          %p633 = pneg %p409
        $region62: #{transformer_decoder_forward.4} parent=11 // pred_check_branch
          %635 = sbr.rel (%p633) target = $region64
        $region63: #{transformer_decoder_forward.4} parent=11 // pred_region
          _
        $region64: #{transformer_decoder_forward.4} parent=11 // pred_fallthru
          _
        // Predicated region
        $region65: #{transformer_decoder_forward.4} parent=11 // pred_check
          %p636 = pneg %p430
        $region66: #{transformer_decoder_forward.4} parent=11 // pred_check_branch
          %638 = sbr.rel (%p636) target = $region68
        $region67: #{transformer_decoder_forward.4} parent=11 // pred_region
          _
        $region68: #{transformer_decoder_forward.4} parent=11 // pred_fallthru
          _
        // Predicated region
        $region69: #{transformer_decoder_forward.4} parent=11 // pred_check
          %p639 = pneg %p451
        $region70: #{transformer_decoder_forward.4} parent=11 // pred_check_branch
          %641 = sbr.rel (%p639) target = $region72
        $region71: #{transformer_decoder_forward.4} parent=11 // pred_region
          _
        $region72: #{transformer_decoder_forward.4} parent=11 // pred_fallthru
          _
        // Predicated region
        $region73: #{transformer_decoder_forward.4} parent=11 // pred_check
          %p642 = pneg %p472
        $region74: #{transformer_decoder_forward.4} parent=11 // pred_check_branch
          %644 = sbr.rel (%p642) target = $region76
        $region75: #{transformer_decoder_forward.4} parent=11 // pred_region
          %s646 = ssub.s32 16, 16
          %647 = vsyncadd [#allocation3], %s646
          %s649 = sshll.u32 [#allocation2], 4
          %s650 = int_to_ptr.vmem [resolvable:$true] %s649
          %652 = dma.hbm_to_vmem [thread:$0]  %s19, 16, %s650, [#allocation3]
        $region76: #{transformer_decoder_forward.4} parent=11 // pred_fallthru
          _
        // Predicated region
        $region77: #{transformer_decoder_forward.4} parent=11 // pred_check
          %p653 = pneg %p493
        $region78: #{transformer_decoder_forward.4} parent=11 // pred_check_branch
          %655 = sbr.rel (%p653) target = $region80
        $region79: #{transformer_decoder_forward.4} parent=11 // pred_region
          _
        $region80: #{transformer_decoder_forward.4} parent=11 // pred_fallthru
          _
        // Predicated region
        $region81: #{transformer_decoder_forward.4} parent=11 // pred_check
          %p656 = pneg %p514
        $region82: #{transformer_decoder_forward.4} parent=11 // pred_check_branch
          %658 = sbr.rel (%p656) target = $region84
        $region83: #{transformer_decoder_forward.4} parent=11 // pred_region
          %s660 = ssub.s32 16, 16
          %661 = vsyncadd [#allocation5], %s660
          %s663 = sshll.u32 [#allocation4], 4
          %s664 = int_to_ptr.vmem [resolvable:$true] %s663
          %666 = dma.hbm_to_vmem [thread:$0]  %s21, 16, %s664, [#allocation5]
        $region84: #{transformer_decoder_forward.4} parent=11 // pred_fallthru
          _
        // Predicated region
        $region85: #{transformer_decoder_forward.4} parent=11 // pred_check
          %p667 = pneg %p535
        $region86: #{transformer_decoder_forward.4} parent=11 // pred_check_branch
          %669 = sbr.rel (%p667) target = $region88
        $region87: #{transformer_decoder_forward.4} parent=11 // pred_region
          _
        $region88: #{transformer_decoder_forward.4} parent=11 // pred_fallthru
          _
        // Predicated region
        $region89: #{transformer_decoder_forward.4} parent=11 // pred_check
          %p670 = pneg %p556
        $region90: #{transformer_decoder_forward.4} parent=11 // pred_check_branch
          %672 = sbr.rel (%p670) target = $region92
        $region91: #{transformer_decoder_forward.4} parent=11 // pred_region
          %s674 = ssub.s32 16, 16
          %675 = vsyncadd [#allocation5], %s674
          %s677 = sshll.u32 [#allocation6], 4
          %s678 = int_to_ptr.vmem [resolvable:$true] %s677
          %680 = dma.hbm_to_vmem [thread:$0]  %s23, 16, %s678, [#allocation5]
        $region92: #{transformer_decoder_forward.4} parent=11 // pred_fallthru
          _
      $region12: #{transformer_decoder_forward.4} parent=5 // pred_fallthru
        _
      %p681 = scmp.lt.s32.totalorder %s32, 2
      // Predicated region
      $region93: #{transformer_decoder_forward.4} parent=5 // pred_check
        %p682 = pneg %p681
      $region94: #{transformer_decoder_forward.4} parent=5 // pred_check_branch
        %684 = sbr.rel (%p682) target = $region96
      $region95: #{transformer_decoder_forward.4} parent=5 // pred_region
        // Predicated region
        $region97: #{transformer_decoder_forward.4} parent=95 // pred_check
          %p685 = pneg %p52
        $region98: #{transformer_decoder_forward.4} parent=95 // pred_check_branch
          %687 = sbr.rel (%p685) target = $region100
        $region99: #{transformer_decoder_forward.4} parent=95 // pred_region
          %p688 = scmp.lt.s32.totalorder %s32, 1
          %s689 = scalar_select %p688, %s32, 1
          %s690 = smul.addr %s689, 8
          %s691 = scalar_lea.vmem %s0, %s690
        $region100: #{transformer_decoder_forward.4} parent=95 // pred_fallthru
          _
        // Predicated region
        $region101: #{transformer_decoder_forward.4} parent=95 // pred_check
          %p692 = pneg %p78
        $region102: #{transformer_decoder_forward.4} parent=95 // pred_check_branch
          %694 = sbr.rel (%p692) target = $region104
        $region103: #{transformer_decoder_forward.4} parent=95 // pred_region
          %p695 = scmp.lt.s32.totalorder %s32, 1
          %s696 = scalar_select %p695, %s32, 1
          %s697 = smul.addr %s696, 4
          %s698 = scalar_lea.vmem %s1, %s697
        $region104: #{transformer_decoder_forward.4} parent=95 // pred_fallthru
          _
        // Predicated region
        $region105: #{transformer_decoder_forward.4} parent=95 // pred_check
          %p699 = pneg %p104
        $region106: #{transformer_decoder_forward.4} parent=95 // pred_check_branch
          %701 = sbr.rel (%p699) target = $region108
        $region107: #{transformer_decoder_forward.4} parent=95 // pred_region
          %p702 = scmp.lt.s32.totalorder %s32, 1
          %s703 = scalar_select %p702, %s32, 1
          %s704 = smul.addr %s703, 2
          %s705 = smul.addr %s704, 8
          %s706 = scalar_lea.vmem %s2, %s705
        $region108: #{transformer_decoder_forward.4} parent=95 // pred_fallthru
          _
        // Predicated region
        $region109: #{transformer_decoder_forward.4} parent=95 // pred_check
          %p707 = pneg %p130
        $region110: #{transformer_decoder_forward.4} parent=95 // pred_check_branch
          %709 = sbr.rel (%p707) target = $region112
        $region111: #{transformer_decoder_forward.4} parent=95 // pred_region
          %p710 = scmp.lt.s32.totalorder %s32, 1
          %s711 = scalar_select %p710, %s32, 1
          %s712 = scalar_lea.vmem %s3, %s711
        $region112: #{transformer_decoder_forward.4} parent=95 // pred_fallthru
          _
      $region96: #{transformer_decoder_forward.4} parent=5 // pred_fallthru
        _
      %p713 = scmp.le.s32.totalorder 1, %s32
      %p714 = scmp.lt.s32.totalorder %s32, 3
      %p715 = pnand %p713, %p714
      %p716 = pneg %p715
      // Predicated region
      $region113: #{transformer_decoder_forward.4} parent=5 // pred_check
        _
      $region114: #{transformer_decoder_forward.4} parent=5 // pred_check_branch
        %718 = sbr.rel (%p715) target = $region116
      $region115: #{transformer_decoder_forward.4} parent=5 // pred_region
        %s719 = ssub.s32 %s32, 1
        // Predicated region
        $region117: #{transformer_decoder_forward.4} parent=115 // pred_check
          %p720 = pneg %p472
        $region118: #{transformer_decoder_forward.4} parent=115 // pred_check_branch
          %722 = sbr.rel (%p720) target = $region120
        $region119: #{transformer_decoder_forward.4} parent=115 // pred_region
          %723 = dma.done [#allocation3], 16
        $region120: #{transformer_decoder_forward.4} parent=115 // pred_fallthru
          _
        // Predicated region
        $region121: #{transformer_decoder_forward.4} parent=115 // pred_check
          %p724 = pneg %p514
        $region122: #{transformer_decoder_forward.4} parent=115 // pred_check_branch
          %726 = sbr.rel (%p724) target = $region124
        $region123: #{transformer_decoder_forward.4} parent=115 // pred_region
          %727 = dma.done [#allocation5], 16
        $region124: #{transformer_decoder_forward.4} parent=115 // pred_fallthru
          _
        // Predicated region
        $region125: #{transformer_decoder_forward.4} parent=115 // pred_check
          %p728 = pneg %p556
        $region126: #{transformer_decoder_forward.4} parent=115 // pred_check_branch
          %730 = sbr.rel (%p728) target = $region128
        $region127: #{transformer_decoder_forward.4} parent=115 // pred_region
          %731 = dma.done [#allocation5], 16
        $region128: #{transformer_decoder_forward.4} parent=115 // pred_fallthru
          _
        %p732 = scmp.lt.s32.totalorder %s37, 1
        %s733 = scalar_select %p732, %s37, 1
        %s734 = smul.addr %s733, 8
        %s735 = scalar_lea.vmem %s0, %s734
        %p736 = pneg %p58
        %p737 = pneg %p55
        %p738 = scmp.lt.s32.totalorder %s37, 1
        %s739 = scalar_select %p738, %s37, 1
        %s740 = smul.addr %s739, 4
        %s741 = scalar_lea.vmem %s1, %s740
        %p742 = pneg %p84
        %p743 = pneg %p81
        %p744 = scmp.lt.s32.totalorder %s37, 1
        %s745 = scalar_select %p744, %s37, 1
        %s746 = smul.addr %s745, 2
        %s747 = smul.addr %s746, 8
        %s748 = scalar_lea.vmem %s2, %s747
        %p749 = pneg %p110
        %p750 = pneg %p107
        %p751 = scmp.lt.s32.totalorder %s37, 1
        %s752 = scalar_select %p751, %s37, 1
        %s753 = scalar_lea.vmem %s3, %s752
        %p754 = pneg %p136
        %p755 = pneg %p133
        %p756 = pneg %p157
        %p757 = pneg %p154
        %p758 = pneg %p178
        %p759 = pneg %p175
        %p760 = pneg %p199
        %p761 = pneg %p196
        %p762 = pneg %p220
        %p763 = pneg %p217
        %p764 = pneg %p241
        %p765 = pneg %p238
        %p766 = pneg %p262
        %p767 = pneg %p259
        %p768 = pneg %p283
        %p769 = pneg %p280
        %p770 = pneg %p304
        %p771 = pneg %p301
        %p772 = pneg %p325
        %p773 = pneg %p322
        %p774 = pneg %p346
        %p775 = pneg %p343
        %p776 = pneg %p367
        %p777 = pneg %p364
        %p778 = pneg %p388
        %p779 = pneg %p385
        %p780 = pneg %p409
        %p781 = pneg %p406
        %p782 = pneg %p430
        %p783 = pneg %p427
        %p784 = pneg %p451
        %p785 = pneg %p448
        %p786 = pneg %p472
        %p787 = pneg %p469
        %p788 = pneg %p493
        %p789 = pneg %p490
        %p790 = pneg %p514
        %p791 = pneg %p511
        %p792 = pneg %p535
        %p793 = pneg %p532
        %p794 = pneg %p556
        %p795 = pneg %p553
        %p796 = pneg %p582
        %p797 = pneg %p579
        %p798 = scmp.lt.s32.totalorder %s37, 1
        %s799 = scalar_select %p798, %s37, 1
        %s800 = smul.addr %s799, 8
        %s801 = scalar_lea.vmem %s24, %s800
        %p802 = scmp.lt.s32.totalorder %s37, 1
        %s803 = scalar_select %p802, %s37, 1
        %s804 = smul.addr %s803, 8
        %s805 = scalar_lea.vmem %s0, %s804
        %p806 = scmp.lt.s32.totalorder %s37, 1
        %s807 = scalar_select %p806, %s37, 1
        %s808 = smul.addr %s807, 4
        %s809 = scalar_lea.vmem %s1, %s808
        %p810 = scmp.lt.s32.totalorder %s37, 1
        %s811 = scalar_select %p810, %s37, 1
        %s812 = smul.addr %s811, 2
        %s813 = smul.addr %s812, 8
        %s814 = scalar_lea.vmem %s2, %s813
        %p815 = scmp.lt.s32.totalorder %s37, 1
        %s816 = scalar_select %p815, %s37, 1
        %s817 = scalar_lea.vmem %s3, %s816
        %p818 = scmp.lt.s32.totalorder %s37, 1
        %s819 = scalar_select %p818, %s37, 1
        %s820 = smul.addr %s819, 8
        %s821 = scalar_lea.vmem %s24, %s820
        %v823 = vld [vmem:[%s805] sm:$0xff]
        %v824 = vld [vmem:[%s809] sm:$0xf]
        %v825 = vunpack.c.l.bf16 %v824
        %v826 = vsub.f32 1.0, %v825
        %v827 = vmul.f32 %v826, -1e+30
        %v828 = vld [vmem:[%s4] sm:$0x1]
        %v829 = vld [vmem:[%s5] sm:$0x1]
        %vm830 = vcmask 261120
        %v831 = vsel %vm830, %v823, 0.0
        %832 = vadd.xlane.f32.xlu0 %v831
        %v833 = vpop.xlane.xlu0 %832
        %v834 = vrcp.pop 32.0
        %v835 = vmul.f32 %v833, %v834
        %v836 = vsub.f32 %v823, %v835
        %v837 = vmul.f32 %v836, %v836
        %v838 = vsel %vm830, %v837, 0.0
        %839 = vadd.xlane.f32.xlu0 %v838
        %v840 = vpop.xlane.xlu0 %839
        %v841 = vmul.f32 %v840, %v834
        %v842 = vadd.f32 %v841, 1e-12
        %v843 = vrsqrt.pop %v842
        %v844 = vmul.f32 %v836, %v843
        %v846 = vlaneseq
        %v847 = vshrl.u32 %v846, 7
        %v848 = vsub.s32 0, %v847
        %v849 = vrot.slane %v828, %v848
        %v851 = vmul.f32 %v844, %v849
        %v853 = vlaneseq
        %v854 = vshrl.u32 %v853, 7
        %v855 = vsub.s32 0, %v854
        %v856 = vrot.slane %v829, %v855
        %v858 = vadd.f32 %v851, %v856
        %v859 = vld [vmem:[%s6] sm:$0xf]
        %v860 = vld [vmem:[%s6 + $0x4] sm:$0xf]
        %v861 = vld [vmem:[%s6 + $0x8] sm:$0xf]
        %v862 = vld [vmem:[%s6 + $0xc] sm:$0xf]
        %v863 = vpack.c.bf16 %v858, %v858
        %v864 = vld [vmem:[%s7] sm:$0x1]
        %v866 = vlaneseq
        %v867 = vshrl.u32 %v866, 7
        %v868 = vsub.s32 0, %v867
        %v869 = vrot.slane %v864, %v868
        %v875 = vunpack.c.l.b16 %v859
        %v876 = vunpack.c.l.b16 %v860
        %v877 = vunpack.c.l.b16 %v861
        %v878 = vunpack.c.l.b16 %v862
        %v879 = vpack.c.b16 %v876, %v875
        %v880 = vpack.c.b16 %v878, %v877
        %v884 = vsel %vm830, %v863, 0
        %886 = vmatprep.subr.bf16.mxu0 0
        %887 = vmatpush1.bf16.msra.mxu0 0
        %888 = vmatprep.subr.bf16.mxu0 0
        %889 = vmatpush1.bf16.msra.mxu0 0
        %890 = vmatprep.subr.bf16.mxu0 0
        %891 = vmatpush1.bf16.msra.mxu0 0
        %892 = vmatprep.subr.bf16.mxu0 0
        %893 = vmatpush1.bf16.msra.mxu0 0
        %894 = vmatprep.subr.bf16.mxu0 0
        %895 = vmatpush1.bf16.msra.mxu0 0
        %896 = vmatprep.subr.bf16.mxu0 0
        %897 = vmatpush1.bf16.msra.mxu0 0
        %898 = vmatprep.subr.bf16.mxu0 0
        %899 = vmatpush1.bf16.msra.mxu0 %v880
        %900 = vmatprep.subr.bf16.mxu0 0
        %901 = vmatpush1.bf16.msra.mxu0 %v879
        %902 = vmatprep.subr.bf16.mxu0 0
        %903 = vmatpush2.bf16.msra.mxu0 0
        %904 = vmatprep.subr.bf16.mxu0 0
        %905 = vmatpush2.bf16.msra.mxu0 0
        %906 = vmatprep.subr.bf16.mxu0 0
        %907 = vmatpush2.bf16.msra.mxu0 0
        %908 = vmatprep.subr.bf16.mxu0 0
        %909 = vmatpush2.bf16.msra.mxu0 0
        %910 = vmatprep.subr.bf16.mxu0 0
        %911 = vmatpush2.bf16.msra.mxu0 0
        %912 = vmatprep.subr.bf16.mxu0 0
        %913 = vmatpush2.bf16.msra.mxu0 0
        %914 = vmatprep.subr.bf16.mxu0 0
        %915 = vmatpush2.bf16.msra.mxu0 0
        %916 = vmatprep.subr.bf16.mxu0 0
        %917 = vmatpush2.bf16.msra.mxu0 0
        %918 = vmatprep.mubr.bf16.mxu0 0
        %919 = vmatmul.mubr.bf16.gmra.mxu0 %v884
        %v920 = vpop.f32.mrf.mxu0
        %v921 = vadd.f32 %v869, %v920
        %v922 = vpop.f32.mrf.mxu0
        %v923 = vpop.f32.mrf.mxu0
        %v924 = vpop.f32.mrf.mxu0
        %925 = vdwg.mxu0
        %v926 = vmul.f32 %v921, 0.35355338
        %v927 = vpack.c.bf16 %v926, %v926
        %v928 = vpack.c.bf16 %v921, %v921
        %930 = vrot.lane.b32.xlu0 %v928, 96
        %v931 = vpop.permute.xlu0 %930
        %vm932 = vcmask 64512
        %v934 = vsel %vm932, %v927, 0
        %v937 = vsel %vm932, %v931, 0
        %939 = vmatprep.subr.bf16.mxu0 0
        %940 = vmatpush1.bf16.xpose.msra.mxu0 0
        %941 = vmatprep.subr.bf16.mxu0 0
        %942 = vmatpush1.bf16.xpose.msra.mxu0 0
        %943 = vmatprep.subr.bf16.mxu0 0
        %944 = vmatpush1.bf16.xpose.msra.mxu0 0
        %945 = vmatprep.subr.bf16.mxu0 0
        %946 = vmatpush1.bf16.xpose.msra.mxu0 0
        %947 = vmatprep.subr.bf16.mxu0 0
        %948 = vmatpush1.bf16.xpose.msra.mxu0 0
        %949 = vmatprep.subr.bf16.mxu0 0
        %950 = vmatpush1.bf16.xpose.msra.mxu0 0
        %951 = vmatprep.subr.bf16.mxu0 0
        %952 = vmatpush1.bf16.xpose.msra.mxu0 0
        %953 = vmatprep.subr.bf16.mxu0 0
        %954 = vmatpush1.bf16.xpose.msra.mxu0 %v937
        %955 = vmatprep.subr.bf16.mxu0 0
        %956 = vmatpush2.bf16.xpose.msra.mxu0 0
        %957 = vmatprep.subr.bf16.mxu0 0
        %958 = vmatpush2.bf16.xpose.msra.mxu0 0
        %959 = vmatprep.subr.bf16.mxu0 0
        %960 = vmatpush2.bf16.xpose.msra.mxu0 0
        %961 = vmatprep.subr.bf16.mxu0 0
        %962 = vmatpush2.bf16.xpose.msra.mxu0 0
        %963 = vmatprep.subr.bf16.mxu0 0
        %964 = vmatpush2.bf16.xpose.msra.mxu0 0
        %965 = vmatprep.subr.bf16.mxu0 0
        %966 = vmatpush2.bf16.xpose.msra.mxu0 0
        %967 = vmatprep.subr.bf16.mxu0 0
        %968 = vmatpush2.bf16.xpose.msra.mxu0 0
        %969 = vmatprep.subr.bf16.mxu0 0
        %970 = vmatpush2.bf16.xpose.msra.mxu0 0
        %971 = vmatprep.mubr.bf16.mxu0 0
        %972 = vmatmul.mubr.bf16.gmra.mxu0 %v934
        %v973 = vpop.f32.mrf.mxu0
        %v974 = vadd.f32 %v827, %v973
        %v975 = vpop.f32.mrf.mxu0
        %v976 = vpop.f32.mrf.mxu0
        %v977 = vpop.f32.mrf.mxu0
        %978 = vdwg.mxu0
        %v979 = vsel %vm932, %v974, -inf
        %980 = vmax.xlane.f32.xlu0 %v979
        %v981 = vpop.xlane.xlu0 %980
        %v982 = vsub.f32 %v974, %v981
        %v983 = vmul.f32 %v982, 1.442695
        %v984 = vpow.pop %v983
        %v985 = vsel %vm932, %v984, 0.0
        %986 = vadd.xlane.f32.xlu0 %v985
        %v987 = vpop.xlane.xlu0 %986
        %v988 = vrcp.pop %v987
        %v989 = vmul.f32 %v984, %v988
        %v990 = vmul.f32 %v989, %v825
        %v991 = vpack.c.bf16 %v990, %v990
        %992 = vrot.lane.b32.xlu0 %v928, 64
        %v993 = vpop.permute.xlu0 %992
        %v995 = vsel %vm932, %v991, 0
        %vm997 = vcmask 1043456
        %v999 = vsel %vm997, %v993, 0
        %1001 = vmatprep.subr.bf16.mxu0 0
        %1002 = vmatpush1.bf16.msra.mxu0 0
        %1003 = vmatprep.subr.bf16.mxu0 0
        %1004 = vmatpush1.bf16.msra.mxu0 0
        %1005 = vmatprep.subr.bf16.mxu0 0
        %1006 = vmatpush1.bf16.msra.mxu0 0
        %1007 = vmatprep.subr.bf16.mxu0 0
        %1008 = vmatpush1.bf16.msra.mxu0 0
        %1009 = vmatprep.subr.bf16.mxu0 0
        %1010 = vmatpush1.bf16.msra.mxu0 0
        %1011 = vmatprep.subr.bf16.mxu0 0
        %1012 = vmatpush1.bf16.msra.mxu0 0
        %1013 = vmatprep.subr.bf16.mxu0 0
        %1014 = vmatpush1.bf16.msra.mxu0 0
        %1015 = vmatprep.subr.bf16.mxu0 0
        %1016 = vmatpush1.bf16.msra.mxu0 %v999
        %1017 = vmatprep.subr.bf16.mxu0 0
        %1018 = vmatpush2.bf16.msra.mxu0 0
        %1019 = vmatprep.subr.bf16.mxu0 0
        %1020 = vmatpush2.bf16.msra.mxu0 0
        %1021 = vmatprep.subr.bf16.mxu0 0
        %1022 = vmatpush2.bf16.msra.mxu0 0
        %1023 = vmatprep.subr.bf16.mxu0 0
        %1024 = vmatpush2.bf16.msra.mxu0 0
        %1025 = vmatprep.subr.bf16.mxu0 0
        %1026 = vmatpush2.bf16.msra.mxu0 0
        %1027 = vmatprep.subr.bf16.mxu0 0
        %1028 = vmatpush2.bf16.msra.mxu0 0
        %1029 = vmatprep.subr.bf16.mxu0 0
        %1030 = vmatpush2.bf16.msra.mxu0 0
        %1031 = vmatprep.subr.bf16.mxu0 0
        %1032 = vmatpush2.bf16.msra.mxu0 0
        %1033 = vmatprep.mubr.bf16.mxu0 0
        %1034 = vmatmul.mubr.bf16.gmra.mxu0 %v995
        %v1035 = vpop.f32.mrf.mxu0
        %v1036 = vadd.f32 0.0, %v1035
        %v1037 = vpop.f32.mrf.mxu0
        %v1038 = vpop.f32.mrf.mxu0
        %v1039 = vpop.f32.mrf.mxu0
        %1040 = vdwg.mxu0
        %1042 = vrot.lane.b32.xlu0 %v927, 120
        %v1043 = vpop.permute.xlu0 %1042
        %1044 = vrot.lane.b32.xlu0 %v928, 88
        %v1045 = vpop.permute.xlu0 %1044
        %v1047 = vsel %vm932, %v1043, 0
        %v1050 = vsel %vm932, %v1045, 0
        %1052 = vmatprep.subr.bf16.mxu0 0
        %1053 = vmatpush1.bf16.xpose.msra.mxu0 0
        %1054 = vmatprep.subr.bf16.mxu0 0
        %1055 = vmatpush1.bf16.xpose.msra.mxu0 0
        %1056 = vmatprep.subr.bf16.mxu0 0
        %1057 = vmatpush1.bf16.xpose.msra.mxu0 0
        %1058 = vmatprep.subr.bf16.mxu0 0
        %1059 = vmatpush1.bf16.xpose.msra.mxu0 0
        %1060 = vmatprep.subr.bf16.mxu0 0
        %1061 = vmatpush1.bf16.xpose.msra.mxu0 0
        %1062 = vmatprep.subr.bf16.mxu0 0
        %1063 = vmatpush1.bf16.xpose.msra.mxu0 0
        %1064 = vmatprep.subr.bf16.mxu0 0
        %1065 = vmatpush1.bf16.xpose.msra.mxu0 0
        %1066 = vmatprep.subr.bf16.mxu0 0
        %1067 = vmatpush1.bf16.xpose.msra.mxu0 %v1050
        %1068 = vmatprep.subr.bf16.mxu0 0
        %1069 = vmatpush2.bf16.xpose.msra.mxu0 0
        %1070 = vmatprep.subr.bf16.mxu0 0
        %1071 = vmatpush2.bf16.xpose.msra.mxu0 0
        %1072 = vmatprep.subr.bf16.mxu0 0
        %1073 = vmatpush2.bf16.xpose.msra.mxu0 0
        %1074 = vmatprep.subr.bf16.mxu0 0
        %1075 = vmatpush2.bf16.xpose.msra.mxu0 0
        %1076 = vmatprep.subr.bf16.mxu0 0
        %1077 = vmatpush2.bf16.xpose.msra.mxu0 0
        %1078 = vmatprep.subr.bf16.mxu0 0
        %1079 = vmatpush2.bf16.xpose.msra.mxu0 0
        %1080 = vmatprep.subr.bf16.mxu0 0
        %1081 = vmatpush2.bf16.xpose.msra.mxu0 0
        %1082 = vmatprep.subr.bf16.mxu0 0
        %1083 = vmatpush2.bf16.xpose.msra.mxu0 0
        %1084 = vmatprep.mubr.bf16.mxu0 0
        %1085 = vmatmul.mubr.bf16.gmra.mxu0 %v1047
        %v1086 = vpop.f32.mrf.mxu0
        %v1087 = vadd.f32 %v827, %v1086
        %v1088 = vpop.f32.mrf.mxu0
        %v1089 = vpop.f32.mrf.mxu0
        %v1090 = vpop.f32.mrf.mxu0
        %1091 = vdwg.mxu0
        %v1092 = vsel %vm932, %v1087, -inf
        %1093 = vmax.xlane.f32.xlu0 %v1092
        %v1094 = vpop.xlane.xlu0 %1093
        %v1095 = vsub.f32 %v1087, %v1094
        %v1096 = vmul.f32 %v1095, 1.442695
        %v1097 = vpow.pop %v1096
        %v1098 = vsel %vm932, %v1097, 0.0
        %1099 = vadd.xlane.f32.xlu0 %v1098
        %v1100 = vpop.xlane.xlu0 %1099
        %v1101 = vrcp.pop %v1100
        %v1102 = vmul.f32 %v1097, %v1101
        %v1103 = vmul.f32 %v1102, %v825
        %v1104 = vpack.c.bf16 %v1103, %v1103
        %1105 = vrot.lane.b32.xlu0 %v928, 56
        %v1106 = vpop.permute.xlu0 %1105
        %v1108 = vsel %vm932, %v1104, 0
        %v1111 = vsel %vm997, %v1106, 0
        %1113 = vmatprep.subr.bf16.mxu0 0
        %1114 = vmatpush1.bf16.msra.mxu0 0
        %1115 = vmatprep.subr.bf16.mxu0 0
        %1116 = vmatpush1.bf16.msra.mxu0 0
        %1117 = vmatprep.subr.bf16.mxu0 0
        %1118 = vmatpush1.bf16.msra.mxu0 0
        %1119 = vmatprep.subr.bf16.mxu0 0
        %1120 = vmatpush1.bf16.msra.mxu0 0
        %1121 = vmatprep.subr.bf16.mxu0 0
        %1122 = vmatpush1.bf16.msra.mxu0 0
        %1123 = vmatprep.subr.bf16.mxu0 0
        %1124 = vmatpush1.bf16.msra.mxu0 0
        %1125 = vmatprep.subr.bf16.mxu0 0
        %1126 = vmatpush1.bf16.msra.mxu0 0
        %1127 = vmatprep.subr.bf16.mxu0 0
        %1128 = vmatpush1.bf16.msra.mxu0 %v1111
        %1129 = vmatprep.subr.bf16.mxu0 0
        %1130 = vmatpush2.bf16.msra.mxu0 0
        %1131 = vmatprep.subr.bf16.mxu0 0
        %1132 = vmatpush2.bf16.msra.mxu0 0
        %1133 = vmatprep.subr.bf16.mxu0 0
        %1134 = vmatpush2.bf16.msra.mxu0 0
        %1135 = vmatprep.subr.bf16.mxu0 0
        %1136 = vmatpush2.bf16.msra.mxu0 0
        %1137 = vmatprep.subr.bf16.mxu0 0
        %1138 = vmatpush2.bf16.msra.mxu0 0
        %1139 = vmatprep.subr.bf16.mxu0 0
        %1140 = vmatpush2.bf16.msra.mxu0 0
        %1141 = vmatprep.subr.bf16.mxu0 0
        %1142 = vmatpush2.bf16.msra.mxu0 0
        %1143 = vmatprep.subr.bf16.mxu0 0
        %1144 = vmatpush2.bf16.msra.mxu0 0
        %1145 = vmatprep.mubr.bf16.mxu0 0
        %1146 = vmatmul.mubr.bf16.gmra.mxu0 %v1108
        %v1147 = vpop.f32.mrf.mxu0
        %v1148 = vadd.f32 0.0, %v1147
        %v1149 = vpop.f32.mrf.mxu0
        %v1150 = vpop.f32.mrf.mxu0
        %v1151 = vpop.f32.mrf.mxu0
        %1152 = vdwg.mxu0
        %1153 = vrot.lane.b32.xlu0 %v927, 112
        %v1154 = vpop.permute.xlu0 %1153
        %1155 = vrot.lane.b32.xlu0 %v928, 80
        %v1156 = vpop.permute.xlu0 %1155
        %v1158 = vsel %vm932, %v1154, 0
        %v1161 = vsel %vm932, %v1156, 0
        %1163 = vmatprep.subr.bf16.mxu0 0
        %1164 = vmatpush1.bf16.xpose.msra.mxu0 0
        %1165 = vmatprep.subr.bf16.mxu0 0
        %1166 = vmatpush1.bf16.xpose.msra.mxu0 0
        %1167 = vmatprep.subr.bf16.mxu0 0
        %1168 = vmatpush1.bf16.xpose.msra.mxu0 0
        %1169 = vmatprep.subr.bf16.mxu0 0
        %1170 = vmatpush1.bf16.xpose.msra.mxu0 0
        %1171 = vmatprep.subr.bf16.mxu0 0
        %1172 = vmatpush1.bf16.xpose.msra.mxu0 0
        %1173 = vmatprep.subr.bf16.mxu0 0
        %1174 = vmatpush1.bf16.xpose.msra.mxu0 0
        %1175 = vmatprep.subr.bf16.mxu0 0
        %1176 = vmatpush1.bf16.xpose.msra.mxu0 0
        %1177 = vmatprep.subr.bf16.mxu0 0
        %1178 = vmatpush1.bf16.xpose.msra.mxu0 %v1161
        %1179 = vmatprep.subr.bf16.mxu0 0
        %1180 = vmatpush2.bf16.xpose.msra.mxu0 0
        %1181 = vmatprep.subr.bf16.mxu0 0
        %1182 = vmatpush2.bf16.xpose.msra.mxu0 0
        %1183 = vmatprep.subr.bf16.mxu0 0
        %1184 = vmatpush2.bf16.xpose.msra.mxu0 0
        %1185 = vmatprep.subr.bf16.mxu0 0
        %1186 = vmatpush2.bf16.xpose.msra.mxu0 0
        %1187 = vmatprep.subr.bf16.mxu0 0
        %1188 = vmatpush2.bf16.xpose.msra.mxu0 0
        %1189 = vmatprep.subr.bf16.mxu0 0
        %1190 = vmatpush2.bf16.xpose.msra.mxu0 0
        %1191 = vmatprep.subr.bf16.mxu0 0
        %1192 = vmatpush2.bf16.xpose.msra.mxu0 0
        %1193 = vmatprep.subr.bf16.mxu0 0
        %1194 = vmatpush2.bf16.xpose.msra.mxu0 0
        %1195 = vmatprep.mubr.bf16.mxu0 0
        %1196 = vmatmul.mubr.bf16.gmra.mxu0 %v1158
        %v1197 = vpop.f32.mrf.mxu0
        %v1198 = vadd.f32 %v827, %v1197
        %v1199 = vpop.f32.mrf.mxu0
        %v1200 = vpop.f32.mrf.mxu0
        %v1201 = vpop.f32.mrf.mxu0
        %1202 = vdwg.mxu0
        %v1203 = vsel %vm932, %v1198, -inf
        %1204 = vmax.xlane.f32.xlu0 %v1203
        %v1205 = vpop.xlane.xlu0 %1204
        %v1206 = vsub.f32 %v1198, %v1205
        %v1207 = vmul.f32 %v1206, 1.442695
        %v1208 = vpow.pop %v1207
        %v1209 = vsel %vm932, %v1208, 0.0
        %1210 = vadd.xlane.f32.xlu0 %v1209
        %v1211 = vpop.xlane.xlu0 %1210
        %v1212 = vrcp.pop %v1211
        %v1213 = vmul.f32 %v1208, %v1212
        %v1214 = vmul.f32 %v1213, %v825
        %v1215 = vpack.c.bf16 %v1214, %v1214
        %1216 = vrot.lane.b32.xlu0 %v928, 48
        %v1217 = vpop.permute.xlu0 %1216
        %v1219 = vsel %vm932, %v1215, 0
        %v1222 = vsel %vm997, %v1217, 0
        %1224 = vmatprep.subr.bf16.mxu0 0
        %1225 = vmatpush1.bf16.msra.mxu0 0
        %1226 = vmatprep.subr.bf16.mxu0 0
        %1227 = vmatpush1.bf16.msra.mxu0 0
        %1228 = vmatprep.subr.bf16.mxu0 0
        %1229 = vmatpush1.bf16.msra.mxu0 0
        %1230 = vmatprep.subr.bf16.mxu0 0
        %1231 = vmatpush1.bf16.msra.mxu0 0
        %1232 = vmatprep.subr.bf16.mxu0 0
        %1233 = vmatpush1.bf16.msra.mxu0 0
        %1234 = vmatprep.subr.bf16.mxu0 0
        %1235 = vmatpush1.bf16.msra.mxu0 0
        %1236 = vmatprep.subr.bf16.mxu0 0
        %1237 = vmatpush1.bf16.msra.mxu0 0
        %1238 = vmatprep.subr.bf16.mxu0 0
        %1239 = vmatpush1.bf16.msra.mxu0 %v1222
        %1240 = vmatprep.subr.bf16.mxu0 0
        %1241 = vmatpush2.bf16.msra.mxu0 0
        %1242 = vmatprep.subr.bf16.mxu0 0
        %1243 = vmatpush2.bf16.msra.mxu0 0
        %1244 = vmatprep.subr.bf16.mxu0 0
        %1245 = vmatpush2.bf16.msra.mxu0 0
        %1246 = vmatprep.subr.bf16.mxu0 0
        %1247 = vmatpush2.bf16.msra.mxu0 0
        %1248 = vmatprep.subr.bf16.mxu0 0
        %1249 = vmatpush2.bf16.msra.mxu0 0
        %1250 = vmatprep.subr.bf16.mxu0 0
        %1251 = vmatpush2.bf16.msra.mxu0 0
        %1252 = vmatprep.subr.bf16.mxu0 0
        %1253 = vmatpush2.bf16.msra.mxu0 0
        %1254 = vmatprep.subr.bf16.mxu0 0
        %1255 = vmatpush2.bf16.msra.mxu0 0
        %1256 = vmatprep.mubr.bf16.mxu0 0
        %1257 = vmatmul.mubr.bf16.gmra.mxu0 %v1219
        %v1258 = vpop.f32.mrf.mxu0
        %v1259 = vadd.f32 0.0, %v1258
        %v1260 = vpop.f32.mrf.mxu0
        %v1261 = vpop.f32.mrf.mxu0
        %v1262 = vpop.f32.mrf.mxu0
        %1263 = vdwg.mxu0
        %1264 = vrot.lane.b32.xlu0 %v927, 104
        %v1265 = vpop.permute.xlu0 %1264
        %1266 = vrot.lane.b32.xlu0 %v928, 72
        %v1267 = vpop.permute.xlu0 %1266
        %v1269 = vsel %vm932, %v1265, 0
        %v1272 = vsel %vm932, %v1267, 0
        %1274 = vmatprep.subr.bf16.mxu0 0
        %1275 = vmatpush1.bf16.xpose.msra.mxu0 0
        %1276 = vmatprep.subr.bf16.mxu0 0
        %1277 = vmatpush1.bf16.xpose.msra.mxu0 0
        %1278 = vmatprep.subr.bf16.mxu0 0
        %1279 = vmatpush1.bf16.xpose.msra.mxu0 0
        %1280 = vmatprep.subr.bf16.mxu0 0
        %1281 = vmatpush1.bf16.xpose.msra.mxu0 0
        %1282 = vmatprep.subr.bf16.mxu0 0
        %1283 = vmatpush1.bf16.xpose.msra.mxu0 0
        %1284 = vmatprep.subr.bf16.mxu0 0
        %1285 = vmatpush1.bf16.xpose.msra.mxu0 0
        %1286 = vmatprep.subr.bf16.mxu0 0
        %1287 = vmatpush1.bf16.xpose.msra.mxu0 0
        %1288 = vmatprep.subr.bf16.mxu0 0
        %1289 = vmatpush1.bf16.xpose.msra.mxu0 %v1272
        %1290 = vmatprep.subr.bf16.mxu0 0
        %1291 = vmatpush2.bf16.xpose.msra.mxu0 0
        %1292 = vmatprep.subr.bf16.mxu0 0
        %1293 = vmatpush2.bf16.xpose.msra.mxu0 0
        %1294 = vmatprep.subr.bf16.mxu0 0
        %1295 = vmatpush2.bf16.xpose.msra.mxu0 0
        %1296 = vmatprep.subr.bf16.mxu0 0
        %1297 = vmatpush2.bf16.xpose.msra.mxu0 0
        %1298 = vmatprep.subr.bf16.mxu0 0
        %1299 = vmatpush2.bf16.xpose.msra.mxu0 0
        %1300 = vmatprep.subr.bf16.mxu0 0
        %1301 = vmatpush2.bf16.xpose.msra.mxu0 0
        %1302 = vmatprep.subr.bf16.mxu0 0
        %1303 = vmatpush2.bf16.xpose.msra.mxu0 0
        %1304 = vmatprep.subr.bf16.mxu0 0
        %1305 = vmatpush2.bf16.xpose.msra.mxu0 0
        %1306 = vmatprep.mubr.bf16.mxu0 0
        %1307 = vmatmul.mubr.bf16.gmra.mxu0 %v1269
        %v1308 = vpop.f32.mrf.mxu0
        %v1309 = vadd.f32 %v827, %v1308
        %v1310 = vpop.f32.mrf.mxu0
        %v1311 = vpop.f32.mrf.mxu0
        %v1312 = vpop.f32.mrf.mxu0
        %1313 = vdwg.mxu0
        %v1314 = vsel %vm932, %v1309, -inf
        %1315 = vmax.xlane.f32.xlu0 %v1314
        %v1316 = vpop.xlane.xlu0 %1315
        %v1317 = vsub.f32 %v1309, %v1316
        %v1318 = vmul.f32 %v1317, 1.442695
        %v1319 = vpow.pop %v1318
        %v1320 = vsel %vm932, %v1319, 0.0
        %1321 = vadd.xlane.f32.xlu0 %v1320
        %v1322 = vpop.xlane.xlu0 %1321
        %v1323 = vrcp.pop %v1322
        %v1324 = vmul.f32 %v1319, %v1323
        %v1325 = vmul.f32 %v1324, %v825
        %v1326 = vpack.c.bf16 %v1325, %v1325
        %1327 = vrot.lane.b32.xlu0 %v928, 40
        %v1328 = vpop.permute.xlu0 %1327
        %v1330 = vsel %vm932, %v1326, 0
        %v1333 = vsel %vm997, %v1328, 0
        %1335 = vmatprep.subr.bf16.mxu0 0
        %1336 = vmatpush1.bf16.msra.mxu0 0
        %1337 = vmatprep.subr.bf16.mxu0 0
        %1338 = vmatpush1.bf16.msra.mxu0 0
        %1339 = vmatprep.subr.bf16.mxu0 0
        %1340 = vmatpush1.bf16.msra.mxu0 0
        %1341 = vmatprep.subr.bf16.mxu0 0
        %1342 = vmatpush1.bf16.msra.mxu0 0
        %1343 = vmatprep.subr.bf16.mxu0 0
        %1344 = vmatpush1.bf16.msra.mxu0 0
        %1345 = vmatprep.subr.bf16.mxu0 0
        %1346 = vmatpush1.bf16.msra.mxu0 0
        %1347 = vmatprep.subr.bf16.mxu0 0
        %1348 = vmatpush1.bf16.msra.mxu0 0
        %1349 = vmatprep.subr.bf16.mxu0 0
        %1350 = vmatpush1.bf16.msra.mxu0 %v1333
        %1351 = vmatprep.subr.bf16.mxu0 0
        %1352 = vmatpush2.bf16.msra.mxu0 0
        %1353 = vmatprep.subr.bf16.mxu0 0
        %1354 = vmatpush2.bf16.msra.mxu0 0
        %1355 = vmatprep.subr.bf16.mxu0 0
        %1356 = vmatpush2.bf16.msra.mxu0 0
        %1357 = vmatprep.subr.bf16.mxu0 0
        %1358 = vmatpush2.bf16.msra.mxu0 0
        %1359 = vmatprep.subr.bf16.mxu0 0
        %1360 = vmatpush2.bf16.msra.mxu0 0
        %1361 = vmatprep.subr.bf16.mxu0 0
        %1362 = vmatpush2.bf16.msra.mxu0 0
        %1363 = vmatprep.subr.bf16.mxu0 0
        %1364 = vmatpush2.bf16.msra.mxu0 0
        %1365 = vmatprep.subr.bf16.mxu0 0
        %1366 = vmatpush2.bf16.msra.mxu0 0
        %1367 = vmatprep.mubr.bf16.mxu0 0
        %1368 = vmatmul.mubr.bf16.gmra.mxu0 %v1330
        %v1369 = vpop.f32.mrf.mxu0
        %v1370 = vadd.f32 0.0, %v1369
        %v1371 = vpop.f32.mrf.mxu0
        %v1372 = vpop.f32.mrf.mxu0
        %v1373 = vpop.f32.mrf.mxu0
        %1374 = vdwg.mxu0
        %1376 = vrot.lane.b32.xlu0 %v1148, 8
        %v1377 = vpop.permute.xlu0 %1376
        %1380 = vrot.lane.b32.xlu0 %v1259, 16
        %v1381 = vpop.permute.xlu0 %1380
        %1384 = vrot.lane.b32.xlu0 %v1370, 24
        %v1385 = vpop.permute.xlu0 %1384
        %v1387 = vsel %vm932, %v1036, %v1377
        %vm1388 = vcmask 130048
        %v1389 = vsel %vm1388, %v1387, %v1381
        %vm1390 = vcmask 195584
        %v1391 = vsel %vm1390, %v1389, %v1385
        %v1392 = vld [vmem:[%s8] sm:$0xf]
        %v1393 = vld [vmem:[%s8 + $0x4] sm:$0xf]
        %v1394 = vld [vmem:[%s8 + $0x8] sm:$0xf]
        %v1395 = vld [vmem:[%s8 + $0xc] sm:$0xf]
        %v1396 = vpack.c.bf16 %v1391, %v1391
        %v1401 = vunpack.c.l.b16 %v1392
        %v1402 = vunpack.c.l.b16 %v1393
        %v1403 = vunpack.c.l.b16 %v1394
        %v1404 = vunpack.c.l.b16 %v1395
        %v1405 = vpack.c.b16 %v1402, %v1401
        %v1406 = vpack.c.b16 %v1404, %v1403
        %v1410 = vsel %vm830, %v1396, 0
        %1412 = vmatprep.subr.bf16.mxu0 0
        %1413 = vmatpush1.bf16.msra.mxu0 0
        %1414 = vmatprep.subr.bf16.mxu0 0
        %1415 = vmatpush1.bf16.msra.mxu0 0
        %1416 = vmatprep.subr.bf16.mxu0 0
        %1417 = vmatpush1.bf16.msra.mxu0 0
        %1418 = vmatprep.subr.bf16.mxu0 0
        %1419 = vmatpush1.bf16.msra.mxu0 0
        %1420 = vmatprep.subr.bf16.mxu0 0
        %1421 = vmatpush1.bf16.msra.mxu0 0
        %1422 = vmatprep.subr.bf16.mxu0 0
        %1423 = vmatpush1.bf16.msra.mxu0 0
        %1424 = vmatprep.subr.bf16.mxu0 0
        %1425 = vmatpush1.bf16.msra.mxu0 %v1406
        %1426 = vmatprep.subr.bf16.mxu0 0
        %1427 = vmatpush1.bf16.msra.mxu0 %v1405
        %1428 = vmatprep.subr.bf16.mxu0 0
        %1429 = vmatpush2.bf16.msra.mxu0 0
        %1430 = vmatprep.subr.bf16.mxu0 0
        %1431 = vmatpush2.bf16.msra.mxu0 0
        %1432 = vmatprep.subr.bf16.mxu0 0
        %1433 = vmatpush2.bf16.msra.mxu0 0
        %1434 = vmatprep.subr.bf16.mxu0 0
        %1435 = vmatpush2.bf16.msra.mxu0 0
        %1436 = vmatprep.subr.bf16.mxu0 0
        %1437 = vmatpush2.bf16.msra.mxu0 0
        %1438 = vmatprep.subr.bf16.mxu0 0
        %1439 = vmatpush2.bf16.msra.mxu0 0
        %1440 = vmatprep.subr.bf16.mxu0 0
        %1441 = vmatpush2.bf16.msra.mxu0 0
        %1442 = vmatprep.subr.bf16.mxu0 0
        %1443 = vmatpush2.bf16.msra.mxu0 0
        %1444 = vmatprep.mubr.bf16.mxu0 0
        %1445 = vmatmul.mubr.bf16.gmra.mxu0 %v1410
        %v1446 = vpop.f32.mrf.mxu0
        %v1447 = vadd.f32 0.0, %v1446
        %v1448 = vpop.f32.mrf.mxu0
        %v1449 = vpop.f32.mrf.mxu0
        %v1450 = vpop.f32.mrf.mxu0
        %1451 = vdwg.mxu0
        %v1452 = vadd.f32 %v823, %v1447
        %v1453 = vld [vmem:[%s9] sm:$0x1]
        %v1455 = vlaneseq
        %v1456 = vshrl.u32 %v1455, 7
        %v1457 = vsub.s32 0, %v1456
        %v1458 = vrot.slane %v1453, %v1457
        %v1460 = vadd.f32 %v1452, %v1458
        %v1461 = vld [vmem:[%s814] sm:$0xff]
        %v1462 = vld [vmem:[%s814 + $0x8] sm:$0xf]
        %v1463 = vld [vmem:[%s817] sm:$0x1]
        %v1464 = vunpack.c.l.bf16 %v1463
        %v1465 = vsub.f32 1.0, %v1464
        %v1466 = vmul.f32 %v1465, -1e+30
        %v1467 = vld [vmem:[%s10] sm:$0x1]
        %v1468 = vld [vmem:[%s11] sm:$0x1]
        %v1469 = vsel %vm830, %v1460, 0.0
        %1470 = vadd.xlane.f32.xlu0 %v1469
        %v1471 = vpop.xlane.xlu0 %1470
        %v1472 = vmul.f32 %v1471, %v834
        %v1473 = vsub.f32 %v1460, %v1472
        %v1474 = vmul.f32 %v1473, %v1473
        %v1475 = vsel %vm830, %v1474, 0.0
        %1476 = vadd.xlane.f32.xlu0 %v1475
        %v1477 = vpop.xlane.xlu0 %1476
        %v1478 = vmul.f32 %v1477, %v834
        %v1479 = vadd.f32 %v1478, 1e-12
        %v1480 = vrsqrt.pop %v1479
        %v1481 = vmul.f32 %v1473, %v1480
        %v1483 = vlaneseq
        %v1484 = vshrl.u32 %v1483, 7
        %v1485 = vsub.s32 0, %v1484
        %v1486 = vrot.slane %v1467, %v1485
        %v1488 = vmul.f32 %v1481, %v1486
        %v1490 = vlaneseq
        %v1491 = vshrl.u32 %v1490, 7
        %v1492 = vsub.s32 0, %v1491
        %v1493 = vrot.slane %v1468, %v1492
        %v1495 = vadd.f32 %v1488, %v1493
        %v1496 = vld [vmem:[%s12] sm:$0xf]
        %v1497 = vld [vmem:[%s12 + $0x4] sm:$0xf]
        %v1498 = vld [vmem:[%s12 + $0x8] sm:$0xf]
        %v1499 = vld [vmem:[%s12 + $0xc] sm:$0xf]
        %v1500 = vpack.c.bf16 %v1495, %v1495
        %v1501 = vld [vmem:[%s13] sm:$0x1]
        %v1503 = vlaneseq
        %v1504 = vshrl.u32 %v1503, 7
        %v1505 = vsub.s32 0, %v1504
        %v1506 = vrot.slane %v1501, %v1505
        %v1512 = vunpack.c.l.b16 %v1496
        %v1513 = vunpack.c.l.b16 %v1497
        %v1514 = vunpack.c.l.b16 %v1498
        %v1515 = vunpack.c.l.b16 %v1499
        %v1516 = vpack.c.b16 %v1513, %v1512
        %v1517 = vpack.c.b16 %v1515, %v1514
        %v1521 = vsel %vm830, %v1500, 0
        %1523 = vmatprep.subr.bf16.mxu0 0
        %1524 = vmatpush1.bf16.msra.mxu0 0
        %1525 = vmatprep.subr.bf16.mxu0 0
        %1526 = vmatpush1.bf16.msra.mxu0 0
        %1527 = vmatprep.subr.bf16.mxu0 0
        %1528 = vmatpush1.bf16.msra.mxu0 0
        %1529 = vmatprep.subr.bf16.mxu0 0
        %1530 = vmatpush1.bf16.msra.mxu0 0
        %1531 = vmatprep.subr.bf16.mxu0 0
        %1532 = vmatpush1.bf16.msra.mxu0 0
        %1533 = vmatprep.subr.bf16.mxu0 0
        %1534 = vmatpush1.bf16.msra.mxu0 0
        %1535 = vmatprep.subr.bf16.mxu0 0
        %1536 = vmatpush1.bf16.msra.mxu0 %v1517
        %1537 = vmatprep.subr.bf16.mxu0 0
        %1538 = vmatpush1.bf16.msra.mxu0 %v1516
        %1539 = vmatprep.subr.bf16.mxu0 0
        %1540 = vmatpush2.bf16.msra.mxu0 0
        %1541 = vmatprep.subr.bf16.mxu0 0
        %1542 = vmatpush2.bf16.msra.mxu0 0
        %1543 = vmatprep.subr.bf16.mxu0 0
        %1544 = vmatpush2.bf16.msra.mxu0 0
        %1545 = vmatprep.subr.bf16.mxu0 0
        %1546 = vmatpush2.bf16.msra.mxu0 0
        %1547 = vmatprep.subr.bf16.mxu0 0
        %1548 = vmatpush2.bf16.msra.mxu0 0
        %1549 = vmatprep.subr.bf16.mxu0 0
        %1550 = vmatpush2.bf16.msra.mxu0 0
        %1551 = vmatprep.subr.bf16.mxu0 0
        %1552 = vmatpush2.bf16.msra.mxu0 0
        %1553 = vmatprep.subr.bf16.mxu0 0
        %1554 = vmatpush2.bf16.msra.mxu0 0
        %1555 = vmatprep.mubr.bf16.mxu0 0
        %1556 = vmatmul.mubr.bf16.gmra.mxu0 %v1521
        %v1557 = vpop.f32.mrf.mxu0
        %v1558 = vadd.f32 %v1506, %v1557
        %v1559 = vpop.f32.mrf.mxu0
        %v1560 = vpop.f32.mrf.mxu0
        %v1561 = vpop.f32.mrf.mxu0
        %1562 = vdwg.mxu0
        %v1563 = vmul.f32 %v1558, 0.35355338
        %v1564 = vpack.c.bf16 %v1563, %v1563
        %v1565 = vld [vmem:[%s14] sm:$0xf]
        %v1566 = vld [vmem:[%s14 + $0x4] sm:$0xf]
        %v1567 = vld [vmem:[%s14 + $0x8] sm:$0xf]
        %v1568 = vld [vmem:[%s14 + $0xc] sm:$0xf]
        %v1569 = vpack.c.bf16 %v1462, %v1461
        %v1570 = vld [vmem:[%s15] sm:$0x1]
        %v1572 = vlaneseq
        %v1573 = vshrl.u32 %v1572, 7
        %v1574 = vsub.s32 0, %v1573
        %v1575 = vrot.slane %v1570, %v1574
        %v1581 = vunpack.c.l.b16 %v1565
        %v1582 = vunpack.c.l.b16 %v1566
        %v1583 = vunpack.c.l.b16 %v1567
        %v1584 = vunpack.c.l.b16 %v1568
        %v1585 = vpack.c.b16 %v1582, %v1581
        %v1586 = vpack.c.b16 %v1584, %v1583
        %v1590 = vsel %vm830, %v1569, 0
        %1592 = vmatprep.subr.bf16.mxu0 0
        %1593 = vmatpush1.bf16.msra.mxu0 0
        %1594 = vmatprep.subr.bf16.mxu0 0
        %1595 = vmatpush1.bf16.msra.mxu0 0
        %1596 = vmatprep.subr.bf16.mxu0 0
        %1597 = vmatpush1.bf16.msra.mxu0 0
        %1598 = vmatprep.subr.bf16.mxu0 0
        %1599 = vmatpush1.bf16.msra.mxu0 0
        %1600 = vmatprep.subr.bf16.mxu0 0
        %1601 = vmatpush1.bf16.msra.mxu0 0
        %1602 = vmatprep.subr.bf16.mxu0 0
        %1603 = vmatpush1.bf16.msra.mxu0 0
        %1604 = vmatprep.subr.bf16.mxu0 0
        %1605 = vmatpush1.bf16.msra.mxu0 %v1586
        %1606 = vmatprep.subr.bf16.mxu0 0
        %1607 = vmatpush1.bf16.msra.mxu0 %v1585
        %1608 = vmatprep.subr.bf16.mxu0 0
        %1609 = vmatpush2.bf16.msra.mxu0 0
        %1610 = vmatprep.subr.bf16.mxu0 0
        %1611 = vmatpush2.bf16.msra.mxu0 0
        %1612 = vmatprep.subr.bf16.mxu0 0
        %1613 = vmatpush2.bf16.msra.mxu0 0
        %1614 = vmatprep.subr.bf16.mxu0 0
        %1615 = vmatpush2.bf16.msra.mxu0 0
        %1616 = vmatprep.subr.bf16.mxu0 0
        %1617 = vmatpush2.bf16.msra.mxu0 0
        %1618 = vmatprep.subr.bf16.mxu0 0
        %1619 = vmatpush2.bf16.msra.mxu0 0
        %1620 = vmatprep.subr.bf16.mxu0 0
        %1621 = vmatpush2.bf16.msra.mxu0 0
        %1622 = vmatprep.subr.bf16.mxu0 0
        %1623 = vmatpush2.bf16.msra.mxu0 0
        %1624 = vmatprep.mubr.bf16.mxu0 0
        %1625 = vmatmul.mubr.bf16.gmra.mxu0 %v1590
        %v1626 = vpop.f32.mrf.mxu0
        %v1627 = vadd.f32 %v1575, %v1626
        %v1628 = vpop.f32.mrf.mxu0
        %v1629 = vpop.f32.mrf.mxu0
        %v1630 = vadd.f32 %v1575, %v1629
        %v1631 = vpop.f32.mrf.mxu0
        %1632 = vdwg.mxu0
        %v1633 = vpack.c.bf16 %v1630, %v1627
        %v1634 = vlaneseq
        %v1635 = vshrl.u32 %v1634, 7
        %v1636 = vsub.s32 0, %v1635
        %v1637 = vrot.slane %v1466, %v1636
        %v1639 = vsel %vm932, %v1564, 0
        %v1642 = vsel %vm932, %v1633, 0
        %1644 = vmatprep.subr.bf16.mxu0 0
        %1645 = vmatpush1.bf16.xpose.msra.mxu0 0
        %1646 = vmatprep.subr.bf16.mxu0 0
        %1647 = vmatpush1.bf16.xpose.msra.mxu0 0
        %1648 = vmatprep.subr.bf16.mxu0 0
        %1649 = vmatpush1.bf16.xpose.msra.mxu0 0
        %1650 = vmatprep.subr.bf16.mxu0 0
        %1651 = vmatpush1.bf16.xpose.msra.mxu0 0
        %1652 = vmatprep.subr.bf16.mxu0 0
        %1653 = vmatpush1.bf16.xpose.msra.mxu0 0
        %1654 = vmatprep.subr.bf16.mxu0 0
        %1655 = vmatpush1.bf16.xpose.msra.mxu0 0
        %1656 = vmatprep.subr.bf16.mxu0 0
        %1657 = vmatpush1.bf16.xpose.msra.mxu0 0
        %1658 = vmatprep.subr.bf16.mxu0 0
        %1659 = vmatpush1.bf16.xpose.msra.mxu0 %v1642
        %1660 = vmatprep.subr.bf16.mxu0 0
        %1661 = vmatpush2.bf16.xpose.msra.mxu0 0
        %1662 = vmatprep.subr.bf16.mxu0 0
        %1663 = vmatpush2.bf16.xpose.msra.mxu0 0
        %1664 = vmatprep.subr.bf16.mxu0 0
        %1665 = vmatpush2.bf16.xpose.msra.mxu0 0
        %1666 = vmatprep.subr.bf16.mxu0 0
        %1667 = vmatpush2.bf16.xpose.msra.mxu0 0
        %1668 = vmatprep.subr.bf16.mxu0 0
        %1669 = vmatpush2.bf16.xpose.msra.mxu0 0
        %1670 = vmatprep.subr.bf16.mxu0 0
        %1671 = vmatpush2.bf16.xpose.msra.mxu0 0
        %1672 = vmatprep.subr.bf16.mxu0 0
        %1673 = vmatpush2.bf16.xpose.msra.mxu0 0
        %1674 = vmatprep.subr.bf16.mxu0 0
        %1675 = vmatpush2.bf16.xpose.msra.mxu0 0
        %1676 = vmatprep.mubr.bf16.mxu0 0
        %1677 = vmatmul.mubr.bf16.gmra.mxu0 %v1639
        %v1678 = vpop.f32.mrf.mxu0
        %v1679 = vadd.f32 %v1637, %v1678
        %v1680 = vpop.f32.mrf.mxu0
        %v1681 = vpop.f32.mrf.mxu0
        %v1682 = vpop.f32.mrf.mxu0
        %1683 = vdwg.mxu0
        %vm1684 = vcmask 97280
        %v1685 = vsel %vm1684, %v1679, -inf
        %1686 = vmax.xlane.f32.xlu0 %v1685
        %v1687 = vpop.xlane.xlu0 %1686
        %v1688 = vsub.f32 %v1679, %v1687
        %v1689 = vmul.f32 %v1688, 1.442695
        %v1690 = vpow.pop %v1689
        %v1691 = vsel %vm1684, %v1690, 0.0
        %1692 = vadd.xlane.f32.xlu0 %v1691
        %v1693 = vpop.xlane.xlu0 %1692
        %v1694 = vrcp.pop %v1693
        %v1695 = vmul.f32 %v1690, %v1694
        %v1696 = vlaneseq
        %v1697 = vshrl.u32 %v1696, 7
        %v1698 = vsub.s32 0, %v1697
        %v1699 = vrot.slane %v1464, %v1698
        %v1700 = vmul.f32 %v1695, %v1699
        %v1701 = vpack.c.bf16 %v1700, %v1700
        %1703 = vrot.lane.b32.xlu0 %v1633, 96
        %v1704 = vpop.permute.xlu0 %1703
        %v1706 = vsel %vm1684, %v1701, 0
        %vm1708 = vcmask 1045504
        %v1710 = vsel %vm1708, %v1704, 0
        %1712 = vmatprep.subr.bf16.mxu0 0
        %1713 = vmatpush1.bf16.msra.mxu0 0
        %1714 = vmatprep.subr.bf16.mxu0 0
        %1715 = vmatpush1.bf16.msra.mxu0 0
        %1716 = vmatprep.subr.bf16.mxu0 0
        %1717 = vmatpush1.bf16.msra.mxu0 0
        %1718 = vmatprep.subr.bf16.mxu0 0
        %1719 = vmatpush1.bf16.msra.mxu0 0
        %1720 = vmatprep.subr.bf16.mxu0 0
        %1721 = vmatpush1.bf16.msra.mxu0 0
        %1722 = vmatprep.subr.bf16.mxu0 0
        %1723 = vmatpush1.bf16.msra.mxu0 0
        %1724 = vmatprep.subr.bf16.mxu0 0
        %1725 = vmatpush1.bf16.msra.mxu0 0
        %1726 = vmatprep.subr.bf16.mxu0 0
        %1727 = vmatpush1.bf16.msra.mxu0 %v1710
        %1728 = vmatprep.subr.bf16.mxu0 0
        %1729 = vmatpush2.bf16.msra.mxu0 0
        %1730 = vmatprep.subr.bf16.mxu0 0
        %1731 = vmatpush2.bf16.msra.mxu0 0
        %1732 = vmatprep.subr.bf16.mxu0 0
        %1733 = vmatpush2.bf16.msra.mxu0 0
        %1734 = vmatprep.subr.bf16.mxu0 0
        %1735 = vmatpush2.bf16.msra.mxu0 0
        %1736 = vmatprep.subr.bf16.mxu0 0
        %1737 = vmatpush2.bf16.msra.mxu0 0
        %1738 = vmatprep.subr.bf16.mxu0 0
        %1739 = vmatpush2.bf16.msra.mxu0 0
        %1740 = vmatprep.subr.bf16.mxu0 0
        %1741 = vmatpush2.bf16.msra.mxu0 0
        %1742 = vmatprep.subr.bf16.mxu0 0
        %1743 = vmatpush2.bf16.msra.mxu0 0
        %1744 = vmatprep.mubr.bf16.mxu0 0
        %1745 = vmatmul.mubr.bf16.gmra.mxu0 %v1706
        %v1746 = vpop.f32.mrf.mxu0
        %v1747 = vadd.f32 0.0, %v1746
        %v1748 = vpop.f32.mrf.mxu0
        %v1749 = vpop.f32.mrf.mxu0
        %v1750 = vpop.f32.mrf.mxu0
        %1751 = vdwg.mxu0
        %1753 = vrot.lane.b32.xlu0 %v1564, 120
        %v1754 = vpop.permute.xlu0 %1753
        %1755 = vrot.lane.b32.xlu0 %v1633, 120
        %v1756 = vpop.permute.xlu0 %1755
        %v1758 = vsel %vm932, %v1754, 0
        %v1761 = vsel %vm932, %v1756, 0
        %1763 = vmatprep.subr.bf16.mxu0 0
        %1764 = vmatpush1.bf16.xpose.msra.mxu0 0
        %1765 = vmatprep.subr.bf16.mxu0 0
        %1766 = vmatpush1.bf16.xpose.msra.mxu0 0
        %1767 = vmatprep.subr.bf16.mxu0 0
        %1768 = vmatpush1.bf16.xpose.msra.mxu0 0
        %1769 = vmatprep.subr.bf16.mxu0 0
        %1770 = vmatpush1.bf16.xpose.msra.mxu0 0
        %1771 = vmatprep.subr.bf16.mxu0 0
        %1772 = vmatpush1.bf16.xpose.msra.mxu0 0
        %1773 = vmatprep.subr.bf16.mxu0 0
        %1774 = vmatpush1.bf16.xpose.msra.mxu0 0
        %1775 = vmatprep.subr.bf16.mxu0 0
        %1776 = vmatpush1.bf16.xpose.msra.mxu0 0
        %1777 = vmatprep.subr.bf16.mxu0 0
        %1778 = vmatpush1.bf16.xpose.msra.mxu0 %v1761
        %1779 = vmatprep.subr.bf16.mxu0 0
        %1780 = vmatpush2.bf16.xpose.msra.mxu0 0
        %1781 = vmatprep.subr.bf16.mxu0 0
        %1782 = vmatpush2.bf16.xpose.msra.mxu0 0
        %1783 = vmatprep.subr.bf16.mxu0 0
        %1784 = vmatpush2.bf16.xpose.msra.mxu0 0
        %1785 = vmatprep.subr.bf16.mxu0 0
        %1786 = vmatpush2.bf16.xpose.msra.mxu0 0
        %1787 = vmatprep.subr.bf16.mxu0 0
        %1788 = vmatpush2.bf16.xpose.msra.mxu0 0
        %1789 = vmatprep.subr.bf16.mxu0 0
        %1790 = vmatpush2.bf16.xpose.msra.mxu0 0
        %1791 = vmatprep.subr.bf16.mxu0 0
        %1792 = vmatpush2.bf16.xpose.msra.mxu0 0
        %1793 = vmatprep.subr.bf16.mxu0 0
        %1794 = vmatpush2.bf16.xpose.msra.mxu0 0
        %1795 = vmatprep.mubr.bf16.mxu0 0
        %1796 = vmatmul.mubr.bf16.gmra.mxu0 %v1758
        %v1797 = vpop.f32.mrf.mxu0
        %v1798 = vadd.f32 %v1637, %v1797
        %v1799 = vpop.f32.mrf.mxu0
        %v1800 = vpop.f32.mrf.mxu0
        %v1801 = vpop.f32.mrf.mxu0
        %1802 = vdwg.mxu0
        %v1803 = vsel %vm1684, %v1798, -inf
        %1804 = vmax.xlane.f32.xlu0 %v1803
        %v1805 = vpop.xlane.xlu0 %1804
        %v1806 = vsub.f32 %v1798, %v1805
        %v1807 = vmul.f32 %v1806, 1.442695
        %v1808 = vpow.pop %v1807
        %v1809 = vsel %vm1684, %v1808, 0.0
        %1810 = vadd.xlane.f32.xlu0 %v1809
        %v1811 = vpop.xlane.xlu0 %1810
        %v1812 = vrcp.pop %v1811
        %v1813 = vmul.f32 %v1808, %v1812
        %v1814 = vmul.f32 %v1813, %v1699
        %v1815 = vpack.c.bf16 %v1814, %v1814
        %1816 = vrot.lane.b32.xlu0 %v1633, 88
        %v1817 = vpop.permute.xlu0 %1816
        %v1819 = vsel %vm1684, %v1815, 0
        %v1822 = vsel %vm1708, %v1817, 0
        %1824 = vmatprep.subr.bf16.mxu0 0
        %1825 = vmatpush1.bf16.msra.mxu0 0
        %1826 = vmatprep.subr.bf16.mxu0 0
        %1827 = vmatpush1.bf16.msra.mxu0 0
        %1828 = vmatprep.subr.bf16.mxu0 0
        %1829 = vmatpush1.bf16.msra.mxu0 0
        %1830 = vmatprep.subr.bf16.mxu0 0
        %1831 = vmatpush1.bf16.msra.mxu0 0
        %1832 = vmatprep.subr.bf16.mxu0 0
        %1833 = vmatpush1.bf16.msra.mxu0 0
        %1834 = vmatprep.subr.bf16.mxu0 0
        %1835 = vmatpush1.bf16.msra.mxu0 0
        %1836 = vmatprep.subr.bf16.mxu0 0
        %1837 = vmatpush1.bf16.msra.mxu0 0
        %1838 = vmatprep.subr.bf16.mxu0 0
        %1839 = vmatpush1.bf16.msra.mxu0 %v1822
        %1840 = vmatprep.subr.bf16.mxu0 0
        %1841 = vmatpush2.bf16.msra.mxu0 0
        %1842 = vmatprep.subr.bf16.mxu0 0
        %1843 = vmatpush2.bf16.msra.mxu0 0
        %1844 = vmatprep.subr.bf16.mxu0 0
        %1845 = vmatpush2.bf16.msra.mxu0 0
        %1846 = vmatprep.subr.bf16.mxu0 0
        %1847 = vmatpush2.bf16.msra.mxu0 0
        %1848 = vmatprep.subr.bf16.mxu0 0
        %1849 = vmatpush2.bf16.msra.mxu0 0
        %1850 = vmatprep.subr.bf16.mxu0 0
        %1851 = vmatpush2.bf16.msra.mxu0 0
        %1852 = vmatprep.subr.bf16.mxu0 0
        %1853 = vmatpush2.bf16.msra.mxu0 0
        %1854 = vmatprep.subr.bf16.mxu0 0
        %1855 = vmatpush2.bf16.msra.mxu0 0
        %1856 = vmatprep.mubr.bf16.mxu0 0
        %1857 = vmatmul.mubr.bf16.gmra.mxu0 %v1819
        %v1858 = vpop.f32.mrf.mxu0
        %v1859 = vadd.f32 0.0, %v1858
        %v1860 = vpop.f32.mrf.mxu0
        %v1861 = vpop.f32.mrf.mxu0
        %v1862 = vpop.f32.mrf.mxu0
        %1863 = vdwg.mxu0
        %1864 = vrot.lane.b32.xlu0 %v1564, 112
        %v1865 = vpop.permute.xlu0 %1864
        %1866 = vrot.lane.b32.xlu0 %v1633, 112
        %v1867 = vpop.permute.xlu0 %1866
        %v1869 = vsel %vm932, %v1865, 0
        %v1872 = vsel %vm932, %v1867, 0
        %1874 = vmatprep.subr.bf16.mxu0 0
        %1875 = vmatpush1.bf16.xpose.msra.mxu0 0
        %1876 = vmatprep.subr.bf16.mxu0 0
        %1877 = vmatpush1.bf16.xpose.msra.mxu0 0
        %1878 = vmatprep.subr.bf16.mxu0 0
        %1879 = vmatpush1.bf16.xpose.msra.mxu0 0
        %1880 = vmatprep.subr.bf16.mxu0 0
        %1881 = vmatpush1.bf16.xpose.msra.mxu0 0
        %1882 = vmatprep.subr.bf16.mxu0 0
        %1883 = vmatpush1.bf16.xpose.msra.mxu0 0
        %1884 = vmatprep.subr.bf16.mxu0 0
        %1885 = vmatpush1.bf16.xpose.msra.mxu0 0
        %1886 = vmatprep.subr.bf16.mxu0 0
        %1887 = vmatpush1.bf16.xpose.msra.mxu0 0
        %1888 = vmatprep.subr.bf16.mxu0 0
        %1889 = vmatpush1.bf16.xpose.msra.mxu0 %v1872
        %1890 = vmatprep.subr.bf16.mxu0 0
        %1891 = vmatpush2.bf16.xpose.msra.mxu0 0
        %1892 = vmatprep.subr.bf16.mxu0 0
        %1893 = vmatpush2.bf16.xpose.msra.mxu0 0
        %1894 = vmatprep.subr.bf16.mxu0 0
        %1895 = vmatpush2.bf16.xpose.msra.mxu0 0
        %1896 = vmatprep.subr.bf16.mxu0 0
        %1897 = vmatpush2.bf16.xpose.msra.mxu0 0
        %1898 = vmatprep.subr.bf16.mxu0 0
        %1899 = vmatpush2.bf16.xpose.msra.mxu0 0
        %1900 = vmatprep.subr.bf16.mxu0 0
        %1901 = vmatpush2.bf16.xpose.msra.mxu0 0
        %1902 = vmatprep.subr.bf16.mxu0 0
        %1903 = vmatpush2.bf16.xpose.msra.mxu0 0
        %1904 = vmatprep.subr.bf16.mxu0 0
        %1905 = vmatpush2.bf16.xpose.msra.mxu0 0
        %1906 = vmatprep.mubr.bf16.mxu0 0
        %1907 = vmatmul.mubr.bf16.gmra.mxu0 %v1869
        %v1908 = vpop.f32.mrf.mxu0
        %v1909 = vadd.f32 %v1637, %v1908
        %v1910 = vpop.f32.mrf.mxu0
        %v1911 = vpop.f32.mrf.mxu0
        %v1912 = vpop.f32.mrf.mxu0
        %1913 = vdwg.mxu0
        %v1914 = vsel %vm1684, %v1909, -inf
        %1915 = vmax.xlane.f32.xlu0 %v1914
        %v1916 = vpop.xlane.xlu0 %1915
        %v1917 = vsub.f32 %v1909, %v1916
        %v1918 = vmul.f32 %v1917, 1.442695
        %v1919 = vpow.pop %v1918
        %v1920 = vsel %vm1684, %v1919, 0.0
        %1921 = vadd.xlane.f32.xlu0 %v1920
        %v1922 = vpop.xlane.xlu0 %1921
        %v1923 = vrcp.pop %v1922
        %v1924 = vmul.f32 %v1919, %v1923
        %v1925 = vmul.f32 %v1924, %v1699
        %v1926 = vpack.c.bf16 %v1925, %v1925
        %1927 = vrot.lane.b32.xlu0 %v1633, 80
        %v1928 = vpop.permute.xlu0 %1927
        %v1930 = vsel %vm1684, %v1926, 0
        %v1933 = vsel %vm1708, %v1928, 0
        %1935 = vmatprep.subr.bf16.mxu0 0
        %1936 = vmatpush1.bf16.msra.mxu0 0
        %1937 = vmatprep.subr.bf16.mxu0 0
        %1938 = vmatpush1.bf16.msra.mxu0 0
        %1939 = vmatprep.subr.bf16.mxu0 0
        %1940 = vmatpush1.bf16.msra.mxu0 0
        %1941 = vmatprep.subr.bf16.mxu0 0
        %1942 = vmatpush1.bf16.msra.mxu0 0
        %1943 = vmatprep.subr.bf16.mxu0 0
        %1944 = vmatpush1.bf16.msra.mxu0 0
        %1945 = vmatprep.subr.bf16.mxu0 0
        %1946 = vmatpush1.bf16.msra.mxu0 0
        %1947 = vmatprep.subr.bf16.mxu0 0
        %1948 = vmatpush1.bf16.msra.mxu0 0
        %1949 = vmatprep.subr.bf16.mxu0 0
        %1950 = vmatpush1.bf16.msra.mxu0 %v1933
        %1951 = vmatprep.subr.bf16.mxu0 0
        %1952 = vmatpush2.bf16.msra.mxu0 0
        %1953 = vmatprep.subr.bf16.mxu0 0
        %1954 = vmatpush2.bf16.msra.mxu0 0
        %1955 = vmatprep.subr.bf16.mxu0 0
        %1956 = vmatpush2.bf16.msra.mxu0 0
        %1957 = vmatprep.subr.bf16.mxu0 0
        %1958 = vmatpush2.bf16.msra.mxu0 0
        %1959 = vmatprep.subr.bf16.mxu0 0
        %1960 = vmatpush2.bf16.msra.mxu0 0
        %1961 = vmatprep.subr.bf16.mxu0 0
        %1962 = vmatpush2.bf16.msra.mxu0 0
        %1963 = vmatprep.subr.bf16.mxu0 0
        %1964 = vmatpush2.bf16.msra.mxu0 0
        %1965 = vmatprep.subr.bf16.mxu0 0
        %1966 = vmatpush2.bf16.msra.mxu0 0
        %1967 = vmatprep.mubr.bf16.mxu0 0
        %1968 = vmatmul.mubr.bf16.gmra.mxu0 %v1930
        %v1969 = vpop.f32.mrf.mxu0
        %v1970 = vadd.f32 0.0, %v1969
        %v1971 = vpop.f32.mrf.mxu0
        %v1972 = vpop.f32.mrf.mxu0
        %v1973 = vpop.f32.mrf.mxu0
        %1974 = vdwg.mxu0
        %1975 = vrot.lane.b32.xlu0 %v1564, 104
        %v1976 = vpop.permute.xlu0 %1975
        %1977 = vrot.lane.b32.xlu0 %v1633, 104
        %v1978 = vpop.permute.xlu0 %1977
        %v1980 = vsel %vm932, %v1976, 0
        %v1983 = vsel %vm932, %v1978, 0
        %1985 = vmatprep.subr.bf16.mxu0 0
        %1986 = vmatpush1.bf16.xpose.msra.mxu0 0
        %1987 = vmatprep.subr.bf16.mxu0 0
        %1988 = vmatpush1.bf16.xpose.msra.mxu0 0
        %1989 = vmatprep.subr.bf16.mxu0 0
        %1990 = vmatpush1.bf16.xpose.msra.mxu0 0
        %1991 = vmatprep.subr.bf16.mxu0 0
        %1992 = vmatpush1.bf16.xpose.msra.mxu0 0
        %1993 = vmatprep.subr.bf16.mxu0 0
        %1994 = vmatpush1.bf16.xpose.msra.mxu0 0
        %1995 = vmatprep.subr.bf16.mxu0 0
        %1996 = vmatpush1.bf16.xpose.msra.mxu0 0
        %1997 = vmatprep.subr.bf16.mxu0 0
        %1998 = vmatpush1.bf16.xpose.msra.mxu0 0
        %1999 = vmatprep.subr.bf16.mxu0 0
        %2000 = vmatpush1.bf16.xpose.msra.mxu0 %v1983
        %2001 = vmatprep.subr.bf16.mxu0 0
        %2002 = vmatpush2.bf16.xpose.msra.mxu0 0
        %2003 = vmatprep.subr.bf16.mxu0 0
        %2004 = vmatpush2.bf16.xpose.msra.mxu0 0
        %2005 = vmatprep.subr.bf16.mxu0 0
        %2006 = vmatpush2.bf16.xpose.msra.mxu0 0
        %2007 = vmatprep.subr.bf16.mxu0 0
        %2008 = vmatpush2.bf16.xpose.msra.mxu0 0
        %2009 = vmatprep.subr.bf16.mxu0 0
        %2010 = vmatpush2.bf16.xpose.msra.mxu0 0
        %2011 = vmatprep.subr.bf16.mxu0 0
        %2012 = vmatpush2.bf16.xpose.msra.mxu0 0
        %2013 = vmatprep.subr.bf16.mxu0 0
        %2014 = vmatpush2.bf16.xpose.msra.mxu0 0
        %2015 = vmatprep.subr.bf16.mxu0 0
        %2016 = vmatpush2.bf16.xpose.msra.mxu0 0
        %2017 = vmatprep.mubr.bf16.mxu0 0
        %2018 = vmatmul.mubr.bf16.gmra.mxu0 %v1980
        %v2019 = vpop.f32.mrf.mxu0
        %v2020 = vadd.f32 %v1637, %v2019
        %v2021 = vpop.f32.mrf.mxu0
        %v2022 = vpop.f32.mrf.mxu0
        %v2023 = vpop.f32.mrf.mxu0
        %2024 = vdwg.mxu0
        %v2025 = vsel %vm1684, %v2020, -inf
        %2026 = vmax.xlane.f32.xlu0 %v2025
        %v2027 = vpop.xlane.xlu0 %2026
        %v2028 = vsub.f32 %v2020, %v2027
        %v2029 = vmul.f32 %v2028, 1.442695
        %v2030 = vpow.pop %v2029
        %v2031 = vsel %vm1684, %v2030, 0.0
        %2032 = vadd.xlane.f32.xlu0 %v2031
        %v2033 = vpop.xlane.xlu0 %2032
        %v2034 = vrcp.pop %v2033
        %v2035 = vmul.f32 %v2030, %v2034
        %v2036 = vmul.f32 %v2035, %v1699
        %v2037 = vpack.c.bf16 %v2036, %v2036
        %2038 = vrot.lane.b32.xlu0 %v1633, 72
        %v2039 = vpop.permute.xlu0 %2038
        %v2041 = vsel %vm1684, %v2037, 0
        %v2044 = vsel %vm1708, %v2039, 0
        %2046 = vmatprep.subr.bf16.mxu0 0
        %2047 = vmatpush1.bf16.msra.mxu0 0
        %2048 = vmatprep.subr.bf16.mxu0 0
        %2049 = vmatpush1.bf16.msra.mxu0 0
        %2050 = vmatprep.subr.bf16.mxu0 0
        %2051 = vmatpush1.bf16.msra.mxu0 0
        %2052 = vmatprep.subr.bf16.mxu0 0
        %2053 = vmatpush1.bf16.msra.mxu0 0
        %2054 = vmatprep.subr.bf16.mxu0 0
        %2055 = vmatpush1.bf16.msra.mxu0 0
        %2056 = vmatprep.subr.bf16.mxu0 0
        %2057 = vmatpush1.bf16.msra.mxu0 0
        %2058 = vmatprep.subr.bf16.mxu0 0
        %2059 = vmatpush1.bf16.msra.mxu0 0
        %2060 = vmatprep.subr.bf16.mxu0 0
        %2061 = vmatpush1.bf16.msra.mxu0 %v2044
        %2062 = vmatprep.subr.bf16.mxu0 0
        %2063 = vmatpush2.bf16.msra.mxu0 0
        %2064 = vmatprep.subr.bf16.mxu0 0
        %2065 = vmatpush2.bf16.msra.mxu0 0
        %2066 = vmatprep.subr.bf16.mxu0 0
        %2067 = vmatpush2.bf16.msra.mxu0 0
        %2068 = vmatprep.subr.bf16.mxu0 0
        %2069 = vmatpush2.bf16.msra.mxu0 0
        %2070 = vmatprep.subr.bf16.mxu0 0
        %2071 = vmatpush2.bf16.msra.mxu0 0
        %2072 = vmatprep.subr.bf16.mxu0 0
        %2073 = vmatpush2.bf16.msra.mxu0 0
        %2074 = vmatprep.subr.bf16.mxu0 0
        %2075 = vmatpush2.bf16.msra.mxu0 0
        %2076 = vmatprep.subr.bf16.mxu0 0
        %2077 = vmatpush2.bf16.msra.mxu0 0
        %2078 = vmatprep.mubr.bf16.mxu0 0
        %2079 = vmatmul.mubr.bf16.gmra.mxu0 %v2041
        %v2080 = vpop.f32.mrf.mxu0
        %v2081 = vadd.f32 0.0, %v2080
        %v2082 = vpop.f32.mrf.mxu0
        %v2083 = vpop.f32.mrf.mxu0
        %v2084 = vpop.f32.mrf.mxu0
        %2085 = vdwg.mxu0
        %2087 = vrot.lane.b32.xlu0 %v1859, 8
        %v2088 = vpop.permute.xlu0 %2087
        %2091 = vrot.lane.b32.xlu0 %v1970, 16
        %v2092 = vpop.permute.xlu0 %2091
        %2095 = vrot.lane.b32.xlu0 %v2081, 24
        %v2096 = vpop.permute.xlu0 %2095
        %v2098 = vsel %vm932, %v1747, %v2088
        %v2099 = vsel %vm1388, %v2098, %v2092
        %v2100 = vsel %vm1390, %v2099, %v2096
        %v2101 = vld [vmem:[%s16] sm:$0xf]
        %v2102 = vld [vmem:[%s16 + $0x4] sm:$0xf]
        %v2103 = vld [vmem:[%s16 + $0x8] sm:$0xf]
        %v2104 = vld [vmem:[%s16 + $0xc] sm:$0xf]
        %v2105 = vpack.c.bf16 %v2100, %v2100
        %v2110 = vunpack.c.l.b16 %v2101
        %v2111 = vunpack.c.l.b16 %v2102
        %v2112 = vunpack.c.l.b16 %v2103
        %v2113 = vunpack.c.l.b16 %v2104
        %v2114 = vpack.c.b16 %v2111, %v2110
        %v2115 = vpack.c.b16 %v2113, %v2112
        %v2119 = vsel %vm830, %v2105, 0
        %2121 = vmatprep.subr.bf16.mxu0 0
        %2122 = vmatpush1.bf16.msra.mxu0 0
        %2123 = vmatprep.subr.bf16.mxu0 0
        %2124 = vmatpush1.bf16.msra.mxu0 0
        %2125 = vmatprep.subr.bf16.mxu0 0
        %2126 = vmatpush1.bf16.msra.mxu0 0
        %2127 = vmatprep.subr.bf16.mxu0 0
        %2128 = vmatpush1.bf16.msra.mxu0 0
        %2129 = vmatprep.subr.bf16.mxu0 0
        %2130 = vmatpush1.bf16.msra.mxu0 0
        %2131 = vmatprep.subr.bf16.mxu0 0
        %2132 = vmatpush1.bf16.msra.mxu0 0
        %2133 = vmatprep.subr.bf16.mxu0 0
        %2134 = vmatpush1.bf16.msra.mxu0 %v2115
        %2135 = vmatprep.subr.bf16.mxu0 0
        %2136 = vmatpush1.bf16.msra.mxu0 %v2114
        %2137 = vmatprep.subr.bf16.mxu0 0
        %2138 = vmatpush2.bf16.msra.mxu0 0
        %2139 = vmatprep.subr.bf16.mxu0 0
        %2140 = vmatpush2.bf16.msra.mxu0 0
        %2141 = vmatprep.subr.bf16.mxu0 0
        %2142 = vmatpush2.bf16.msra.mxu0 0
        %2143 = vmatprep.subr.bf16.mxu0 0
        %2144 = vmatpush2.bf16.msra.mxu0 0
        %2145 = vmatprep.subr.bf16.mxu0 0
        %2146 = vmatpush2.bf16.msra.mxu0 0
        %2147 = vmatprep.subr.bf16.mxu0 0
        %2148 = vmatpush2.bf16.msra.mxu0 0
        %2149 = vmatprep.subr.bf16.mxu0 0
        %2150 = vmatpush2.bf16.msra.mxu0 0
        %2151 = vmatprep.subr.bf16.mxu0 0
        %2152 = vmatpush2.bf16.msra.mxu0 0
        %2153 = vmatprep.mubr.bf16.mxu0 0
        %2154 = vmatmul.mubr.bf16.gmra.mxu0 %v2119
        %v2155 = vpop.f32.mrf.mxu0
        %v2156 = vadd.f32 0.0, %v2155
        %v2157 = vpop.f32.mrf.mxu0
        %v2158 = vpop.f32.mrf.mxu0
        %v2159 = vpop.f32.mrf.mxu0
        %2160 = vdwg.mxu0
        %v2161 = vadd.f32 %v1460, %v2156
        %v2162 = vld [vmem:[%s17] sm:$0x1]
        %v2164 = vlaneseq
        %v2165 = vshrl.u32 %v2164, 7
        %v2166 = vsub.s32 0, %v2165
        %v2167 = vrot.slane %v2162, %v2166
        %v2169 = vadd.f32 %v2161, %v2167
        %v2170 = vld [vmem:[%s18] sm:$0x1]
        %v2171 = vld [vmem:[#allocation2] sm:$0x1]
        %v2172 = vsel %vm830, %v2169, 0.0
        %2173 = vadd.xlane.f32.xlu0 %v2172
        %v2174 = vpop.xlane.xlu0 %2173
        %v2175 = vmul.f32 %v2174, %v834
        %v2176 = vsub.f32 %v2169, %v2175
        %v2177 = vmul.f32 %v2176, %v2176
        %v2178 = vsel %vm830, %v2177, 0.0
        %2179 = vadd.xlane.f32.xlu0 %v2178
        %v2180 = vpop.xlane.xlu0 %2179
        %v2181 = vmul.f32 %v2180, %v834
        %v2182 = vadd.f32 %v2181, 1e-12
        %v2183 = vrsqrt.pop %v2182
        %v2184 = vmul.f32 %v2176, %v2183
        %v2186 = vlaneseq
        %v2187 = vshrl.u32 %v2186, 7
        %v2188 = vsub.s32 0, %v2187
        %v2189 = vrot.slane %v2170, %v2188
        %v2191 = vmul.f32 %v2184, %v2189
        %v2193 = vlaneseq
        %v2194 = vshrl.u32 %v2193, 7
        %v2195 = vsub.s32 0, %v2194
        %v2196 = vrot.slane %v2171, %v2195
        %v2198 = vadd.f32 %v2191, %v2196
        %v2199 = vld [vmem:[%s20] sm:$0xf]
        %v2200 = vld [vmem:[%s20 + $0x4] sm:$0xf]
        %v2201 = vld [vmem:[%s20 + $0x8] sm:$0xf]
        %v2202 = vld [vmem:[%s20 + $0xc] sm:$0xf]
        %v2203 = vpack.c.bf16 %v2198, %v2198
        %v2204 = vld [vmem:[#allocation4] sm:$0x1]
        %v2206 = vlaneseq
        %v2207 = vshrl.u32 %v2206, 7
        %v2208 = vsub.s32 0, %v2207
        %v2209 = vrot.slane %v2204, %v2208
        %v2215 = vunpack.c.l.b16 %v2199
        %v2216 = vunpack.c.l.b16 %v2200
        %v2217 = vunpack.c.l.b16 %v2201
        %v2218 = vunpack.c.l.b16 %v2202
        %v2219 = vpack.c.b16 %v2216, %v2215
        %v2220 = vpack.c.b16 %v2218, %v2217
        %v2224 = vsel %vm830, %v2203, 0
        %2226 = vmatprep.subr.bf16.mxu0 0
        %2227 = vmatpush1.bf16.msra.mxu0 0
        %2228 = vmatprep.subr.bf16.mxu0 0
        %2229 = vmatpush1.bf16.msra.mxu0 0
        %2230 = vmatprep.subr.bf16.mxu0 0
        %2231 = vmatpush1.bf16.msra.mxu0 0
        %2232 = vmatprep.subr.bf16.mxu0 0
        %2233 = vmatpush1.bf16.msra.mxu0 0
        %2234 = vmatprep.subr.bf16.mxu0 0
        %2235 = vmatpush1.bf16.msra.mxu0 0
        %2236 = vmatprep.subr.bf16.mxu0 0
        %2237 = vmatpush1.bf16.msra.mxu0 0
        %2238 = vmatprep.subr.bf16.mxu0 0
        %2239 = vmatpush1.bf16.msra.mxu0 %v2220
        %2240 = vmatprep.subr.bf16.mxu0 0
        %2241 = vmatpush1.bf16.msra.mxu0 %v2219
        %2242 = vmatprep.subr.bf16.mxu0 0
        %2243 = vmatpush2.bf16.msra.mxu0 0
        %2244 = vmatprep.subr.bf16.mxu0 0
        %2245 = vmatpush2.bf16.msra.mxu0 0
        %2246 = vmatprep.subr.bf16.mxu0 0
        %2247 = vmatpush2.bf16.msra.mxu0 0
        %2248 = vmatprep.subr.bf16.mxu0 0
        %2249 = vmatpush2.bf16.msra.mxu0 0
        %2250 = vmatprep.subr.bf16.mxu0 0
        %2251 = vmatpush2.bf16.msra.mxu0 0
        %2252 = vmatprep.subr.bf16.mxu0 0
        %2253 = vmatpush2.bf16.msra.mxu0 0
        %2254 = vmatprep.subr.bf16.mxu0 0
        %2255 = vmatpush2.bf16.msra.mxu0 0
        %2256 = vmatprep.subr.bf16.mxu0 0
        %2257 = vmatpush2.bf16.msra.mxu0 0
        %2258 = vmatprep.mubr.bf16.mxu0 0
        %2259 = vmatmul.mubr.bf16.gmra.mxu0 %v2224
        %v2260 = vpop.f32.mrf.mxu0
        %v2261 = vadd.f32 %v2209, %v2260
        %v2262 = vpop.f32.mrf.mxu0
        %v2263 = vpop.f32.mrf.mxu0
        %v2264 = vpop.f32.mrf.mxu0
        %2265 = vdwg.mxu0
        %v2266 = vmax.f32 %v2261, 0.0
        %v2267 = vld [vmem:[%s22] sm:$0xf]
        %v2268 = vld [vmem:[%s22 + $0x4] sm:$0xf]
        %v2269 = vld [vmem:[%s22 + $0x8] sm:$0xf]
        %v2270 = vld [vmem:[%s22 + $0xc] sm:$0xf]
        %v2271 = vld [vmem:[%s22 + $0x10] sm:$0xf]
        %v2272 = vld [vmem:[%s22 + $0x14] sm:$0xf]
        %v2273 = vld [vmem:[%s22 + $0x18] sm:$0xf]
        %v2274 = vld [vmem:[%s22 + $0x1c] sm:$0xf]
        %v2275 = vpack.c.bf16 %v2266, %v2266
        %v2284 = vunpack.c.l.b16 %v2267
        %v2285 = vunpack.c.l.b16 %v2268
        %v2286 = vunpack.c.l.b16 %v2269
        %v2287 = vunpack.c.l.b16 %v2270
        %v2288 = vunpack.c.l.b16 %v2271
        %v2289 = vunpack.c.l.b16 %v2272
        %v2290 = vunpack.c.l.b16 %v2273
        %v2291 = vunpack.c.l.b16 %v2274
        %v2292 = vpack.c.b16 %v2285, %v2284
        %v2293 = vpack.c.b16 %v2287, %v2286
        %v2294 = vpack.c.b16 %v2289, %v2288
        %v2295 = vpack.c.b16 %v2291, %v2290
        %vm2300 = vcmask 523264
        %v2302 = vsel %vm2300, %v2275, 0
        %2304 = vmatprep.subr.bf16.mxu0 0
        %2305 = vmatpush1.bf16.msra.mxu0 0
        %2306 = vmatprep.subr.bf16.mxu0 0
        %2307 = vmatpush1.bf16.msra.mxu0 0
        %2308 = vmatprep.subr.bf16.mxu0 0
        %2309 = vmatpush1.bf16.msra.mxu0 0
        %2310 = vmatprep.subr.bf16.mxu0 0
        %2311 = vmatpush1.bf16.msra.mxu0 0
        %2312 = vmatprep.subr.bf16.mxu0 0
        %2313 = vmatpush1.bf16.msra.mxu0 %v2295
        %2314 = vmatprep.subr.bf16.mxu0 0
        %2315 = vmatpush1.bf16.msra.mxu0 %v2294
        %2316 = vmatprep.subr.bf16.mxu0 0
        %2317 = vmatpush1.bf16.msra.mxu0 %v2293
        %2318 = vmatprep.subr.bf16.mxu0 0
        %2319 = vmatpush1.bf16.msra.mxu0 %v2292
        %2320 = vmatprep.subr.bf16.mxu0 0
        %2321 = vmatpush2.bf16.msra.mxu0 0
        %2322 = vmatprep.subr.bf16.mxu0 0
        %2323 = vmatpush2.bf16.msra.mxu0 0
        %2324 = vmatprep.subr.bf16.mxu0 0
        %2325 = vmatpush2.bf16.msra.mxu0 0
        %2326 = vmatprep.subr.bf16.mxu0 0
        %2327 = vmatpush2.bf16.msra.mxu0 0
        %2328 = vmatprep.subr.bf16.mxu0 0
        %2329 = vmatpush2.bf16.msra.mxu0 0
        %2330 = vmatprep.subr.bf16.mxu0 0
        %2331 = vmatpush2.bf16.msra.mxu0 0
        %2332 = vmatprep.subr.bf16.mxu0 0
        %2333 = vmatpush2.bf16.msra.mxu0 0
        %2334 = vmatprep.subr.bf16.mxu0 0
        %2335 = vmatpush2.bf16.msra.mxu0 0
        %2336 = vmatprep.mubr.bf16.mxu0 0
        %2337 = vmatmul.mubr.bf16.gmra.mxu0 %v2302
        %v2338 = vpop.f32.mrf.mxu0
        %v2339 = vadd.f32 0.0, %v2338
        %v2340 = vpop.f32.mrf.mxu0
        %v2341 = vpop.f32.mrf.mxu0
        %v2342 = vpop.f32.mrf.mxu0
        %2343 = vdwg.mxu0
        %v2344 = vadd.f32 %v2169, %v2339
        %v2345 = vld [vmem:[#allocation6] sm:$0x1]
        %v2347 = vlaneseq
        %v2348 = vshrl.u32 %v2347, 7
        %v2349 = vsub.s32 0, %v2348
        %v2350 = vrot.slane %v2345, %v2349
        %v2352 = vadd.f32 %v2344, %v2350
        %2353 = vst.msk [vmem:[%s821] sm:$0xff] %vm830, %v2352
        %p2354 = scmp.lt.s32.totalorder %s37, 1
        %s2355 = scalar_select %p2354, %s37, 1
        %s2356 = smul.addr %s2355, 8
        %s2357 = scalar_lea.vmem %s24, %s2356
        // Predicated region
        $region129: #{transformer_decoder_forward.4} parent=115 // pred_check
          %p2358 = pneg %p579
        $region130: #{transformer_decoder_forward.4} parent=115 // pred_check_branch
          %2360 = sbr.rel (%p2358) target = $region132
        $region131: #{transformer_decoder_forward.4} parent=115 // pred_region
          _
        $region132: #{transformer_decoder_forward.4} parent=115 // pred_fallthru
          _
      $region116: #{transformer_decoder_forward.4} parent=5 // pred_fallthru
        _
      %p2361 = scmp.le.s32.totalorder 2, %s32
      // Predicated region
      $region133: #{transformer_decoder_forward.4} parent=5 // pred_check
        %p2362 = pneg %p2361
      $region134: #{transformer_decoder_forward.4} parent=5 // pred_check_branch
        %2364 = sbr.rel (%p2362) target = $region136
      $region135: #{transformer_decoder_forward.4} parent=5 // pred_region
        %s2365 = ssub.s32 %s32, 2
        // Predicated region
        $region137: #{transformer_decoder_forward.4} parent=135 // pred_check
          %p2366 = pneg %p585
        $region138: #{transformer_decoder_forward.4} parent=135 // pred_check_branch
          %2368 = sbr.rel (%p2366) target = $region140
        $region139: #{transformer_decoder_forward.4} parent=135 // pred_region
          %p2369 = scmp.lt.s32.totalorder %s38, 1
          %s2370 = scalar_select %p2369, %s38, 1
          %s2371 = smul.addr %s2370, 8
          %s2372 = scalar_lea.vmem %s24, %s2371
        $region140: #{transformer_decoder_forward.4} parent=135 // pred_fallthru
          _
      $region136: #{transformer_decoder_forward.4} parent=5 // pred_fallthru
        _
    $region6: #{transformer_decoder_forward.4} parent=1 // loop_footer
      %s36 = sadd.s32 1, %s32
    $region7: #{transformer_decoder_forward.4} parent=1 // loop_footer_branch
      %31 = sbr.rel target = $region3
    $region8: #{transformer_decoder_forward.4} parent=1 // loop_exit
      _
    %2373 = vsyncpa [#allocation3], 1
    %s2374 = scalar_lea.sflag [#allocation3], 1
    %2375 = vsyncpa %s2374, 1
    %2376 = vsyncpa [#allocation5], 1

</llo_original>
